<compile_context>
chip_gen: v7x
topology: tpu7x:2x2x1
jax: 0.10.0
libtpu: 0.0.40
codegen_flags: <defaults>
</compile_context>

<pallas_src>
import jax
import jax.numpy as jnp
from jax.experimental import pallas as pl
from jax.experimental.pallas import tpu as pltpu


IN_PAD = 8        # padded input feature dim (real features = 3)
TB = 512          # default batch tile


def fan_split_kernel(x_ref,
                     w1, b1, w2, b2, w3, b3, w4, b4, w5, b5,
                     wh1, bh1, wh2, bh2, wfin, bfin,
                     out_ref):
    def lin(h, w_ref, b_ref):
        # bf16 matmul inputs, f32 accumulation on the MXU, f32 bias add.
        return jnp.dot(h.astype(jnp.bfloat16), w_ref[...],
                       preferred_element_type=jnp.float32) + b_ref[...]

    def lin_relu(h, w_ref, b_ref):
        return jnp.maximum(lin(h, w_ref, b_ref), 0.0)

    h = x_ref[...]                       # (TB, IN_PAD) f32
    # shared trunk
    h = lin_relu(h, w1, b1)              # (TB, 512)
    h = lin_relu(h, w2, b2)              # (TB, 512)
    h = lin_relu(h, w3, b3)              # (TB, 256)
    h = lin_relu(h, w4, b4)              # (TB, 256)
    shared = lin_relu(h, w5, b5)         # (TB, 256)

    # fused pressure + flow heads (Dropout -> identity at inference)
    hh = lin_relu(shared, wh1, bh1)      # (TB, 384) = [p1 | q1]
    hh = lin_relu(hh, wh2, bh2)          # (TB, 384) = [p2 | q2] (block-diag W)
    out_ref[...] = lin(hh, wfin, bfin)   # (TB, 2)   = cat([p, q], dim=1)


def _fuse_params(params):
    """Fuse the two head branches into 3 wide layers (numerically exact)."""
    trunk = list(params[:5])
    (pw1, pb1), (pw2, pb2), (pw3, pb3) = params[5:8]
    (fw1, fb1), (fw2, fb2), (fw3, fb3) = params[8:11]

    wh1 = jnp.concatenate([pw1, fw1], axis=1)                      # (256, 384)
    bh1 = jnp.concatenate([pb1, fb1])                              # (384,)

    wh2 = jnp.zeros((384, 384), jnp.float32)
    wh2 = wh2.at[:256, :256].set(pw2).at[256:, 256:].set(fw2)      # block-diag
    bh2 = jnp.concatenate([pb2, fb2])                              # (384,)

    wfin = jnp.zeros((384, 2), jnp.float32)
    wfin = wfin.at[:256, 0:1].set(pw3).at[256:, 1:2].set(fw3)      # (384, 2)
    bfin = jnp.concatenate([pb3, fb3])                             # (2,)

    return trunk + [(wh1, bh1), (wh2, bh2), (wfin, bfin)]


def fan_split_net(x, params, tb=TB):
    """x: (B, 3) float32. params: 11 (w, b) pairs with w in (in, out) layout."""
    B = x.shape[0]
    # Don't over-pad tiny batches, but keep tiles large for big B.
    tb = min(tb, max(128, ((B + 127) // 128) * 128))
    B_pad = ((B + tb - 1) // tb) * tb

    # zero-pad input features 3 -> IN_PAD and batch B -> B_pad (exact: zero
    # rows/cols of W1 & x contribute 0; padded rows are sliced off at the end)
    x_p = jnp.zeros((B_pad, IN_PAD), jnp.float32).at[:B, :3].set(x)

    fused = _fuse_params(params)
    flat = []
    for li, (w, b) in enumerate(fused):
        if li == 0:  # pad W1 rows 3 -> IN_PAD
            w = jnp.zeros((IN_PAD, w.shape[1]), jnp.float32).at[:3, :].set(w)
        flat.append(w.astype(jnp.bfloat16))      # matmul operand in bf16
        flat.append(b.reshape(1, -1).astype(jnp.float32))  # bias stays f32

    weight_spec = lambda a: pl.BlockSpec(a.shape, lambda i: (0, 0))
    in_specs = [pl.BlockSpec((tb, IN_PAD), lambda i: (i, 0))]
    in_specs += [weight_spec(a) for a in flat]

    out = pl.pallas_call(
        fan_split_kernel,
        out_shape=jax.ShapeDtypeStruct((B_pad, 2), jnp.float32),
        grid_spec=pltpu.PrefetchScalarGridSpec(
            num_scalar_prefetch=0,
            grid=(B_pad // tb,),
            in_specs=in_specs,
            out_specs=pl.BlockSpec((tb, 2), lambda i: (i, 0)),
        ),
        compiler_params=pltpu.CompilerParams(
            dimension_semantics=("parallel",)),
    )(x_p, *flat)
    return out[:B]


def init_params(key):
    """Deterministic params. Layer sizes match FanSplitNet.__init__.
    Weights stored as (in_features, out_features)."""
    dims = [
        # shared trunk
        (3, 512), (512, 512), (512, 256), (256, 256), (256, 256),
        # pressure head
        (256, 256), (256, 256), (256, 1),
        # flow head
        (256, 128), (128, 128), (128, 1),
    ]
    params = []
    for (din, dout) in dims:
        key, kw, kb = jax.random.split(key, 3)
        scale = 1.0 / jnp.sqrt(jnp.float32(din))
        w = jax.random.uniform(kw, (din, dout), jnp.float32, -scale, scale)
        b = jax.random.uniform(kb, (dout,), jnp.float32, -scale, scale)
        params.append((w, b))
    return params


def reference_forward(x, params):
    """Pure-JAX reference mirroring the PyTorch forward (eval mode), using the
    same bf16-matmul / f32-accumulate numerics as the kernel."""
    def lin(h, w, b):
        return jnp.dot(h.astype(jnp.bfloat16), w.astype(jnp.bfloat16),
                       preferred_element_type=jnp.float32) + b

    relu = lambda v: jnp.maximum(v, 0.0)
    h = x
    for (w, b) in params[:5]:
        h = relu(lin(h, w, b))
    shared = h
    p = shared
    for (w, b) in params[5:7]:
        p = relu(lin(p, w, b))
    p = lin(p, params[7][0], params[7][1])
    q = shared
    for (w, b) in params[8:10]:
        q = relu(lin(q, w, b))
    q = lin(q, params[10][0], params[10][1])
    return jnp.concatenate([p, q], axis=1)


if __name__ == "__main__":
    key = jax.random.PRNGKey(0)
    kx, kp = jax.random.split(key)

    B = 1000  # non-multiple of TB: exercises the padding path; grid = 2 tiles
    x = jax.random.normal(kx, (B, 3), jnp.float32)
    params = init_params(kp)

    out = fan_split_net(x, params)
    out = jax.block_until_ready(out)

    ref = reference_forward(x, params)
    assert out.shape == (B, 2)
    assert jnp.allclose(out, ref, atol=1e-2, rtol=1e-2), "mismatch vs reference"

    print("KERNEL_OK")
</pallas_src>

<mosaic_0001>
module attributes {stable_mosaic.version = 11 : i64} {
  func.func @fan_split_kernel(%arg0: i32, %arg1: memref<512x8xf32, #tpu.memory_space<vmem>>, %arg2: memref<8x512xbf16, #tpu.memory_space<vmem>>, %arg3: memref<1x512xf32, #tpu.memory_space<vmem>>, %arg4: memref<512x512xbf16, #tpu.memory_space<vmem>>, %arg5: memref<1x512xf32, #tpu.memory_space<vmem>>, %arg6: memref<512x256xbf16, #tpu.memory_space<vmem>>, %arg7: memref<1x256xf32, #tpu.memory_space<vmem>>, %arg8: memref<256x256xbf16, #tpu.memory_space<vmem>>, %arg9: memref<1x256xf32, #tpu.memory_space<vmem>>, %arg10: memref<256x256xbf16, #tpu.memory_space<vmem>>, %arg11: memref<1x256xf32, #tpu.memory_space<vmem>>, %arg12: memref<256x384xbf16, #tpu.memory_space<vmem>>, %arg13: memref<1x384xf32, #tpu.memory_space<vmem>>, %arg14: memref<384x384xbf16, #tpu.memory_space<vmem>>, %arg15: memref<1x384xf32, #tpu.memory_space<vmem>>, %arg16: memref<384x2xbf16, #tpu.memory_space<vmem>>, %arg17: memref<1x2xf32, #tpu.memory_space<vmem>>, %arg18: memref<512x2xf32, #tpu.memory_space<vmem>>) attributes {dimension_semantics = [#tpu.dimension_semantics<parallel>], iteration_bounds = array<i64: 2>, scalar_prefetch = 0 : i64, scratch_operands = 0 : i64, tpu.core_type = #tpu.core_type<tc>, window_params = [{transform_indices = @transform_0, window_bounds = array<i64: 512, 8>}, {pipeline_mode = #tpu.pipeline_mode<synchronous>, transform_indices = @transform_1, window_bounds = array<i64: 8, 512>}, {pipeline_mode = #tpu.pipeline_mode<synchronous>, transform_indices = @transform_2, window_bounds = array<i64: 1, 512>}, {pipeline_mode = #tpu.pipeline_mode<synchronous>, transform_indices = @transform_3, window_bounds = array<i64: 512, 512>}, {pipeline_mode = #tpu.pipeline_mode<synchronous>, transform_indices = @transform_4, window_bounds = array<i64: 1, 512>}, {pipeline_mode = #tpu.pipeline_mode<synchronous>, transform_indices = @transform_5, window_bounds = array<i64: 512, 256>}, {pipeline_mode = #tpu.pipeline_mode<synchronous>, transform_indices = @transform_6, window_bounds = array<i64: 1, 256>}, {pipeline_mode = #tpu.pipeline_mode<synchronous>, transform_indices = @transform_7, window_bounds = array<i64: 256, 256>}, {pipeline_mode = #tpu.pipeline_mode<synchronous>, transform_indices = @transform_8, window_bounds = array<i64: 1, 256>}, {pipeline_mode = #tpu.pipeline_mode<synchronous>, transform_indices = @transform_9, window_bounds = array<i64: 256, 256>}, {pipeline_mode = #tpu.pipeline_mode<synchronous>, transform_indices = @transform_10, window_bounds = array<i64: 1, 256>}, {pipeline_mode = #tpu.pipeline_mode<synchronous>, transform_indices = @transform_11, window_bounds = array<i64: 256, 384>}, {pipeline_mode = #tpu.pipeline_mode<synchronous>, transform_indices = @transform_12, window_bounds = array<i64: 1, 384>}, {pipeline_mode = #tpu.pipeline_mode<synchronous>, transform_indices = @transform_13, window_bounds = array<i64: 384, 384>}, {pipeline_mode = #tpu.pipeline_mode<synchronous>, transform_indices = @transform_14, window_bounds = array<i64: 1, 384>}, {pipeline_mode = #tpu.pipeline_mode<synchronous>, transform_indices = @transform_15, window_bounds = array<i64: 384, 2>}, {pipeline_mode = #tpu.pipeline_mode<synchronous>, transform_indices = @transform_16, window_bounds = array<i64: 1, 2>}, {transform_indices = @transform_17, window_bounds = array<i64: 512, 2>}]} {
    %c0 = arith.constant 0 : index
    %c0_0 = arith.constant 0 : index
    %0 = vector.load %arg1[%c0, %c0_0] : memref<512x8xf32, #tpu.memory_space<vmem>>, vector<512x8xf32>
    %1 = arith.truncf %0 : vector<512x8xf32> to vector<512x8xbf16>
    %c0_1 = arith.constant 0 : index
    %c0_2 = arith.constant 0 : index
    %2 = vector.load %arg2[%c0_1, %c0_2] : memref<8x512xbf16, #tpu.memory_space<vmem>>, vector<8x512xbf16>
    %cst = arith.constant dense<0.000000e+00> : vector<512x512xf32>
    %3 = tpu.matmul %1, %2, %cst {dimension_numbers = #tpu.dot_dimension_numbers<[1], [0], [0], [1], [0, 0, 1, 1], [], []>} : vector<512x8xbf16>, vector<8x512xbf16>, vector<512x512xf32> -> vector<512x512xf32>
    %c0_3 = arith.constant 0 : index
    %c0_4 = arith.constant 0 : index
    %4 = vector.load %arg3[%c0_3, %c0_4] : memref<1x512xf32, #tpu.memory_space<vmem>>, vector<1x512xf32>
    %5 = vector.broadcast %4 : vector<1x512xf32> to vector<512x512xf32>
    %6 = arith.addf %3, %5 : vector<512x512xf32>
    %cst_5 = arith.constant 0.000000e+00 : f32
    %7 = vector.broadcast %cst_5 : f32 to vector<512x512xf32>
    %8 = arith.maximumf %6, %7 : vector<512x512xf32>
    %9 = arith.truncf %8 : vector<512x512xf32> to vector<512x512xbf16>
    %c0_6 = arith.constant 0 : index
    %c0_7 = arith.constant 0 : index
    %10 = vector.load %arg4[%c0_6, %c0_7] : memref<512x512xbf16, #tpu.memory_space<vmem>>, vector<512x512xbf16>
    %cst_8 = arith.constant dense<0.000000e+00> : vector<512x512xf32>
    %11 = tpu.matmul %9, %10, %cst_8 {dimension_numbers = #tpu.dot_dimension_numbers<[1], [0], [0], [1], [0, 0, 1, 1], [], []>} : vector<512x512xbf16>, vector<512x512xbf16>, vector<512x512xf32> -> vector<512x512xf32>
    %c0_9 = arith.constant 0 : index
    %c0_10 = arith.constant 0 : index
    %12 = vector.load %arg5[%c0_9, %c0_10] : memref<1x512xf32, #tpu.memory_space<vmem>>, vector<1x512xf32>
    %13 = vector.broadcast %12 : vector<1x512xf32> to vector<512x512xf32>
    %14 = arith.addf %11, %13 : vector<512x512xf32>
    %cst_11 = arith.constant 0.000000e+00 : f32
    %15 = vector.broadcast %cst_11 : f32 to vector<512x512xf32>
    %16 = arith.maximumf %14, %15 : vector<512x512xf32>
    %17 = arith.truncf %16 : vector<512x512xf32> to vector<512x512xbf16>
    %c0_12 = arith.constant 0 : index
    %c0_13 = arith.constant 0 : index
    %18 = vector.load %arg6[%c0_12, %c0_13] : memref<512x256xbf16, #tpu.memory_space<vmem>>, vector<512x256xbf16>
    %cst_14 = arith.constant dense<0.000000e+00> : vector<512x256xf32>
    %19 = tpu.matmul %17, %18, %cst_14 {dimension_numbers = #tpu.dot_dimension_numbers<[1], [0], [0], [1], [0, 0, 1, 1], [], []>} : vector<512x512xbf16>, vector<512x256xbf16>, vector<512x256xf32> -> vector<512x256xf32>
    %c0_15 = arith.constant 0 : index
    %c0_16 = arith.constant 0 : index
    %20 = vector.load %arg7[%c0_15, %c0_16] : memref<1x256xf32, #tpu.memory_space<vmem>>, vector<1x256xf32>
    %21 = vector.broadcast %20 : vector<1x256xf32> to vector<512x256xf32>
    %22 = arith.addf %19, %21 : vector<512x256xf32>
    %cst_17 = arith.constant 0.000000e+00 : f32
    %23 = vector.broadcast %cst_17 : f32 to vector<512x256xf32>
    %24 = arith.maximumf %22, %23 : vector<512x256xf32>
    %25 = arith.truncf %24 : vector<512x256xf32> to vector<512x256xbf16>
    %c0_18 = arith.constant 0 : index
    %c0_19 = arith.constant 0 : index
    %26 = vector.load %arg8[%c0_18, %c0_19] : memref<256x256xbf16, #tpu.memory_space<vmem>>, vector<256x256xbf16>
    %cst_20 = arith.constant dense<0.000000e+00> : vector<512x256xf32>
    %27 = tpu.matmul %25, %26, %cst_20 {dimension_numbers = #tpu.dot_dimension_numbers<[1], [0], [0], [1], [0, 0, 1, 1], [], []>} : vector<512x256xbf16>, vector<256x256xbf16>, vector<512x256xf32> -> vector<512x256xf32>
    %c0_21 = arith.constant 0 : index
    %c0_22 = arith.constant 0 : index
    %28 = vector.load %arg9[%c0_21, %c0_22] : memref<1x256xf32, #tpu.memory_space<vmem>>, vector<1x256xf32>
    %29 = vector.broadcast %28 : vector<1x256xf32> to vector<512x256xf32>
    %30 = arith.addf %27, %29 : vector<512x256xf32>
    %cst_23 = arith.constant 0.000000e+00 : f32
    %31 = vector.broadcast %cst_23 : f32 to vector<512x256xf32>
    %32 = arith.maximumf %30, %31 : vector<512x256xf32>
    %33 = arith.truncf %32 : vector<512x256xf32> to vector<512x256xbf16>
    %c0_24 = arith.constant 0 : index
    %c0_25 = arith.constant 0 : index
    %34 = vector.load %arg10[%c0_24, %c0_25] : memref<256x256xbf16, #tpu.memory_space<vmem>>, vector<256x256xbf16>
    %cst_26 = arith.constant dense<0.000000e+00> : vector<512x256xf32>
    %35 = tpu.matmul %33, %34, %cst_26 {dimension_numbers = #tpu.dot_dimension_numbers<[1], [0], [0], [1], [0, 0, 1, 1], [], []>} : vector<512x256xbf16>, vector<256x256xbf16>, vector<512x256xf32> -> vector<512x256xf32>
    %c0_27 = arith.constant 0 : index
    %c0_28 = arith.constant 0 : index
    %36 = vector.load %arg11[%c0_27, %c0_28] : memref<1x256xf32, #tpu.memory_space<vmem>>, vector<1x256xf32>
    %37 = vector.broadcast %36 : vector<1x256xf32> to vector<512x256xf32>
    %38 = arith.addf %35, %37 : vector<512x256xf32>
    %cst_29 = arith.constant 0.000000e+00 : f32
    %39 = vector.broadcast %cst_29 : f32 to vector<512x256xf32>
    %40 = arith.maximumf %38, %39 : vector<512x256xf32>
    %41 = arith.truncf %40 : vector<512x256xf32> to vector<512x256xbf16>
    %c0_30 = arith.constant 0 : index
    %c0_31 = arith.constant 0 : index
    %42 = vector.load %arg12[%c0_30, %c0_31] : memref<256x384xbf16, #tpu.memory_space<vmem>>, vector<256x384xbf16>
    %cst_32 = arith.constant dense<0.000000e+00> : vector<512x384xf32>
    %43 = tpu.matmul %41, %42, %cst_32 {dimension_numbers = #tpu.dot_dimension_numbers<[1], [0], [0], [1], [0, 0, 1, 1], [], []>} : vector<512x256xbf16>, vector<256x384xbf16>, vector<512x384xf32> -> vector<512x384xf32>
    %c0_33 = arith.constant 0 : index
    %c0_34 = arith.constant 0 : index
    %44 = vector.load %arg13[%c0_33, %c0_34] : memref<1x384xf32, #tpu.memory_space<vmem>>, vector<1x384xf32>
    %45 = vector.broadcast %44 : vector<1x384xf32> to vector<512x384xf32>
    %46 = arith.addf %43, %45 : vector<512x384xf32>
    %cst_35 = arith.constant 0.000000e+00 : f32
    %47 = vector.broadcast %cst_35 : f32 to vector<512x384xf32>
    %48 = arith.maximumf %46, %47 : vector<512x384xf32>
    %49 = arith.truncf %48 : vector<512x384xf32> to vector<512x384xbf16>
    %c0_36 = arith.constant 0 : index
    %c0_37 = arith.constant 0 : index
    %50 = vector.load %arg14[%c0_36, %c0_37] : memref<384x384xbf16, #tpu.memory_space<vmem>>, vector<384x384xbf16>
    %cst_38 = arith.constant dense<0.000000e+00> : vector<512x384xf32>
    %51 = tpu.matmul %49, %50, %cst_38 {dimension_numbers = #tpu.dot_dimension_numbers<[1], [0], [0], [1], [0, 0, 1, 1], [], []>} : vector<512x384xbf16>, vector<384x384xbf16>, vector<512x384xf32> -> vector<512x384xf32>
    %c0_39 = arith.constant 0 : index
    %c0_40 = arith.constant 0 : index
    %52 = vector.load %arg15[%c0_39, %c0_40] : memref<1x384xf32, #tpu.memory_space<vmem>>, vector<1x384xf32>
    %53 = vector.broadcast %52 : vector<1x384xf32> to vector<512x384xf32>
    %54 = arith.addf %51, %53 : vector<512x384xf32>
    %cst_41 = arith.constant 0.000000e+00 : f32
    %55 = vector.broadcast %cst_41 : f32 to vector<512x384xf32>
    %56 = arith.maximumf %54, %55 : vector<512x384xf32>
    %57 = arith.truncf %56 : vector<512x384xf32> to vector<512x384xbf16>
    %c0_42 = arith.constant 0 : index
    %c0_43 = arith.constant 0 : index
    %58 = vector.load %arg16[%c0_42, %c0_43] : memref<384x2xbf16, #tpu.memory_space<vmem>>, vector<384x2xbf16>
    %cst_44 = arith.constant dense<0.000000e+00> : vector<512x2xf32>
    %59 = tpu.matmul %57, %58, %cst_44 {dimension_numbers = #tpu.dot_dimension_numbers<[1], [0], [0], [1], [0, 0, 1, 1], [], []>} : vector<512x384xbf16>, vector<384x2xbf16>, vector<512x2xf32> -> vector<512x2xf32>
    %c0_45 = arith.constant 0 : index
    %c0_46 = arith.constant 0 : index
    %60 = vector.load %arg17[%c0_45, %c0_46] : memref<1x2xf32, #tpu.memory_space<vmem>>, vector<1x2xf32>
    %61 = vector.broadcast %60 : vector<1x2xf32> to vector<512x2xf32>
    %62 = arith.addf %59, %61 : vector<512x2xf32>
    %c0_47 = arith.constant 0 : index
    %c0_48 = arith.constant 0 : index
    %63 = vector.load %arg18[%c0_47, %c0_48] : memref<512x2xf32, #tpu.memory_space<vmem>>, vector<512x2xf32>
    tpu.vector_store %arg18[%c0_47, %c0_48], %62 {strides = array<i32>} : memref<512x2xf32, #tpu.memory_space<vmem>>, vector<512x2xf32>,
    return
  }
  func.func @transform_0(%arg0: i32) -> (i32, i32) {
    %c0_i32 = arith.constant 0 : i32
    %c0_i32_0 = arith.constant 0 : i32
    return %arg0, %c0_i32 : i32, i32
  }
  func.func @transform_1(%arg0: i32) -> (i32, i32) {
    %c0_i32 = arith.constant 0 : i32
    %c0_i32_0 = arith.constant 0 : i32
    %c0_i32_1 = arith.constant 0 : i32
    return %c0_i32, %c0_i32_0 : i32, i32
  }
  func.func @transform_2(%arg0: i32) -> (i32, i32) {
    %c0_i32 = arith.constant 0 : i32
    %c0_i32_0 = arith.constant 0 : i32
    %c0_i32_1 = arith.constant 0 : i32
    return %c0_i32, %c0_i32_0 : i32, i32
  }
  func.func @transform_3(%arg0: i32) -> (i32, i32) {
    %c0_i32 = arith.constant 0 : i32
    %c0_i32_0 = arith.constant 0 : i32
    %c0_i32_1 = arith.constant 0 : i32
    return %c0_i32, %c0_i32_0 : i32, i32
  }
  func.func @transform_4(%arg0: i32) -> (i32, i32) {
    %c0_i32 = arith.constant 0 : i32
    %c0_i32_0 = arith.constant 0 : i32
    %c0_i32_1 = arith.constant 0 : i32
    return %c0_i32, %c0_i32_0 : i32, i32
  }
  func.func @transform_5(%arg0: i32) -> (i32, i32) {
    %c0_i32 = arith.constant 0 : i32
    %c0_i32_0 = arith.constant 0 : i32
    %c0_i32_1 = arith.constant 0 : i32
    return %c0_i32, %c0_i32_0 : i32, i32
  }
  func.func @transform_6(%arg0: i32) -> (i32, i32) {
    %c0_i32 = arith.constant 0 : i32
    %c0_i32_0 = arith.constant 0 : i32
    %c0_i32_1 = arith.constant 0 : i32
    return %c0_i32, %c0_i32_0 : i32, i32
  }
  func.func @transform_7(%arg0: i32) -> (i32, i32) {
    %c0_i32 = arith.constant 0 : i32
    %c0_i32_0 = arith.constant 0 : i32
    %c0_i32_1 = arith.constant 0 : i32
    return %c0_i32, %c0_i32_0 : i32, i32
  }
  func.func @transform_8(%arg0: i32) -> (i32, i32) {
    %c0_i32 = arith.constant 0 : i32
    %c0_i32_0 = arith.constant 0 : i32
    %c0_i32_1 = arith.constant 0 : i32
    return %c0_i32, %c0_i32_0 : i32, i32
  }
  func.func @transform_9(%arg0: i32) -> (i32, i32) {
    %c0_i32 = arith.constant 0 : i32
    %c0_i32_0 = arith.constant 0 : i32
    %c0_i32_1 = arith.constant 0 : i32
    return %c0_i32, %c0_i32_0 : i32, i32
  }
  func.func @transform_10(%arg0: i32) -> (i32, i32) {
    %c0_i32 = arith.constant 0 : i32
    %c0_i32_0 = arith.constant 0 : i32
    %c0_i32_1 = arith.constant 0 : i32
    return %c0_i32, %c0_i32_0 : i32, i32
  }
  func.func @transform_11(%arg0: i32) -> (i32, i32) {
    %c0_i32 = arith.constant 0 : i32
    %c0_i32_0 = arith.constant 0 : i32
    %c0_i32_1 = arith.constant 0 : i32
    return %c0_i32, %c0_i32_0 : i32, i32
  }
  func.func @transform_12(%arg0: i32) -> (i32, i32) {
    %c0_i32 = arith.constant 0 : i32
    %c0_i32_0 = arith.constant 0 : i32
    %c0_i32_1 = arith.constant 0 : i32
    return %c0_i32, %c0_i32_0 : i32, i32
  }
  func.func @transform_13(%arg0: i32) -> (i32, i32) {
    %c0_i32 = arith.constant 0 : i32
    %c0_i32_0 = arith.constant 0 : i32
    %c0_i32_1 = arith.constant 0 : i32
    return %c0_i32, %c0_i32_0 : i32, i32
  }
  func.func @transform_14(%arg0: i32) -> (i32, i32) {
    %c0_i32 = arith.constant 0 : i32
    %c0_i32_0 = arith.constant 0 : i32
    %c0_i32_1 = arith.constant 0 : i32
    return %c0_i32, %c0_i32_0 : i32, i32
  }
  func.func @transform_15(%arg0: i32) -> (i32, i32) {
    %c0_i32 = arith.constant 0 : i32
    %c0_i32_0 = arith.constant 0 : i32
    %c0_i32_1 = arith.constant 0 : i32
    return %c0_i32, %c0_i32_0 : i32, i32
  }
  func.func @transform_16(%arg0: i32) -> (i32, i32) {
    %c0_i32 = arith.constant 0 : i32
    %c0_i32_0 = arith.constant 0 : i32
    %c0_i32_1 = arith.constant 0 : i32
    return %c0_i32, %c0_i32_0 : i32, i32
  }
  func.func @transform_17(%arg0: i32) -> (i32, i32) {
    %c0_i32 = arith.constant 0 : i32
    %c0_i32_0 = arith.constant 0 : i32
    return %arg0, %c0_i32 : i32, i32
  }
}

</mosaic_0001>

<llo_original>
// kernel: tpu_custom_call.1
$region0: #{tpu_custom_call.1}
  #allocation0 [shape = 'u32[]', space=smem, size = 0x4, offset = 0x4, fixed_abs, tag = 'smem constant byte address 0x4 - core index']
  #allocation1 [shape = 'u32[144,128]{1,0:T(1,128)}', space=vmem, size = 0x12000, scoped, tag = 'internal scratch']
  %s0 = inlined_call_operand.vmem [shape: f32[1024,8], index: 0, kind: input, shape index: {}]
  %s1 = inlined_call_operand.hbm [shape: bf16[8,512], index: 1, kind: input, shape index: {}]
  %s2 = inlined_call_operand.vmem [shape: f32[1,512], index: 2, kind: input, shape index: {}]
  %s3 = inlined_call_operand.vmem [shape: bf16[512,512], index: 3, kind: input, shape index: {}]
  %s4 = inlined_call_operand.vmem [shape: f32[1,512], index: 4, kind: input, shape index: {}]
  %s5 = inlined_call_operand.hbm [shape: bf16[512,256], index: 5, kind: input, shape index: {}]
  %s6 = inlined_call_operand.hbm [shape: f32[1,256], index: 6, kind: input, shape index: {}]
  %s7 = inlined_call_operand.vmem [shape: bf16[256,256], index: 7, kind: input, shape index: {}]
  %s8 = inlined_call_operand.vmem [shape: f32[1,256], index: 8, kind: input, shape index: {}]
  %s9 = inlined_call_operand.hbm [shape: bf16[256,256], index: 9, kind: input, shape index: {}]
  %s10 = inlined_call_operand.vmem [shape: f32[1,256], index: 10, kind: input, shape index: {}]
  %s11 = inlined_call_operand.hbm [shape: bf16[256,384], index: 11, kind: input, shape index: {}]
  %s12 = inlined_call_operand.vmem [shape: f32[1,384], index: 12, kind: input, shape index: {}]
  %s13 = inlined_call_operand.hbm [shape: bf16[384,384], index: 13, kind: input, shape index: {}]
  %s14 = inlined_call_operand.vmem [shape: f32[1,384], index: 14, kind: input, shape index: {}]
  %s15 = inlined_call_operand.vmem [shape: bf16[384,2], index: 15, kind: input, shape index: {}]
  %s16 = inlined_call_operand.vmem [shape: f32[1,2], index: 16, kind: input, shape index: {}]
  %s17 = inlined_call_operand.vmem [shape: f32[1024,2], index: 17, kind: output, shape index: {}]
  %s18 = sld [smem:[#allocation0]]
  $region125: #{tpu_custom_call.1} parent=0
    _
  %s20 = ssub.s32 1, %s18
  %s21 = scalar_select 0, %s20, %s18
  $region1: #{tpu_custom_call.1} parent=0
    #allocation2 [shape = 'u8[8192]{0}', space=vmem, size = 0x2000, scoped, tag = 'input window, operand 1, single buffered']
    #allocation3 [shape = 's32[2]{0}', space=sflag, size = 0x8, scoped, tag = 'scoped memory for tpu_custom_call.1']
    #allocation4 [shape = 'u8[262144]{0}', space=vmem, size = 0x40000, scoped, tag = 'input window, operand 5, single buffered']
    #allocation5 [shape = 's32[1]{0}', space=sflag, size = 0x4, scoped, tag = 'scoped memory for tpu_custom_call.1']
    #allocation6 [shape = 'u8[1024]{0}', space=vmem, size = 0x400, scoped, tag = 'input window, operand 6, single buffered']
    #allocation7 [shape = 'u8[131072]{0}', space=vmem, size = 0x20000, scoped, tag = 'input window, operand 9, single buffered']
    #allocation8 [shape = 's32[1]{0}', space=sflag, size = 0x4, scoped, tag = 'scoped memory for tpu_custom_call.1']
    #allocation9 [shape = 'u8[196608]{0}', space=vmem, size = 0x30000, scoped, tag = 'input window, operand 11, single buffered']
    #allocation10 [shape = 'u8[294912]{0}', space=vmem, size = 0x48000, scoped, tag = 'input window, operand 13, single buffered']
    #allocation11 [shape = 's32[1]{0}', space=sflag, size = 0x4, scoped, tag = 'scoped memory for tpu_custom_call.1']
    %22 = vsyncpa [#allocation3], 0
    %23 = vsyncpa [#allocation5], 0
    %24 = vsyncpa [#allocation8], 0
    %25 = vsyncpa [#allocation11], 0
    loop: start=0, step=1, limit=4
    $region2: #{tpu_custom_call.1} parent=1 // loop_pre_header
      _
    $region3: #{tpu_custom_call.1} parent=1 // loop_header
      %s27 = sphi 0, %s31
      %p28 = scmp.ge.s32.totalorder %s27, 4
      %s37 = sphi 0, %s39
      %s40 = sphi 0, %s37
      %s41 = sphi 0, %s40
      %s57 = sphi 0, %s41
      %s61 = sphi 0, %s61
      %s63 = sphi 0, %s61
      %s64 = sphi 0, %s63
      %s78 = sphi 0, %s64
      %s82 = sphi 0, %s82
      %s84 = sphi 0, %s82
      %s85 = sphi 0, %s84
      %s99 = sphi 0, %s85
      %s103 = sphi 0, %s103
      %s105 = sphi 0, %s103
      %s106 = sphi 0, %s105
      %s120 = sphi 0, %s106
      %s124 = sphi 0, %s124
      %s126 = sphi 0, %s124
      %s127 = sphi 0, %s126
      %s141 = sphi 0, %s127
      %s145 = sphi 0, %s145
      %s147 = sphi 0, %s145
      %s148 = sphi 0, %s147
      %s162 = sphi 0, %s148
      %s166 = sphi 0, %s166
      %s168 = sphi 0, %s166
      %s169 = sphi 0, %s168
      %s183 = sphi 0, %s169
      %s187 = sphi 0, %s187
      %s189 = sphi 0, %s187
      %s190 = sphi 0, %s189
      %s204 = sphi 0, %s190
      %s208 = sphi 0, %s208
      %s210 = sphi 0, %s208
      %s211 = sphi 0, %s210
      %s225 = sphi 0, %s211
      %s229 = sphi 0, %s229
      %s231 = sphi 0, %s229
      %s232 = sphi 0, %s231
      %s246 = sphi 0, %s232
      %s250 = sphi 0, %s250
      %s252 = sphi 0, %s250
      %s253 = sphi 0, %s252
      %s267 = sphi 0, %s253
      %s271 = sphi 0, %s271
      %s273 = sphi 0, %s271
      %s274 = sphi 0, %s273
      %s288 = sphi 0, %s274
      %s292 = sphi 0, %s292
      %s294 = sphi 0, %s292
      %s295 = sphi 0, %s294
      %s309 = sphi 0, %s295
      %s313 = sphi 0, %s313
      %s315 = sphi 0, %s313
      %s316 = sphi 0, %s315
      %s330 = sphi 0, %s316
      %s334 = sphi 0, %s334
      %s336 = sphi 0, %s334
      %s337 = sphi 0, %s336
      %s351 = sphi 0, %s337
      %s355 = sphi 0, %s355
      %s357 = sphi 0, %s355
      %s358 = sphi 0, %s357
      %s372 = sphi 0, %s358
      %s376 = sphi 0, %s376
      %s378 = sphi 0, %s376
      %s379 = sphi 0, %s378
      %s393 = sphi 0, %s379
      %s399 = sphi 0, %s401
      %s402 = sphi 0, %s399
      %s403 = sphi 0, %s402
      %s419 = sphi 0, %s403
    $region4: #{tpu_custom_call.1} parent=1 // loop_header_branch
      %30 = sbr.rel (%p28) target = $region8
    $region5: #{tpu_custom_call.1} parent=1 // loop_body
      %s32 = ssub.s32 %s27, 1
      %s33 = ssub.s32 %s27, 2
      %s34 = sadd.s32 %s27, 1
      %s35 = ssub.s32 %s27, %s34
      %p36 = scmp.eq.s32.totalorder %s35, 0
      %s38 = sadd.s32 %s37, 1
      %s39 = scalar_select %p36, %s37, %s38
      %p42 = pneg %p36
      %p43 = scmp.eq.s32.totalorder %s27, 1
      %p44 = por %p42, %p43
      %p45 = scmp.ne.s32.totalorder %s37, %s40
      %p46 = scmp.eq.s32.totalorder %s27, 0
      %p47 = por %p45, %p46
      %p48 = scmp.ne.s32.totalorder %s37, %s40
      %p49 = scmp.eq.s32.totalorder %s32, 1
      %p50 = por %p48, %p49
      %p51 = scmp.ne.s32.totalorder %s40, %s41
      %p52 = scmp.eq.s32.totalorder %s32, 0
      %p53 = por %p51, %p52
      %p54 = scmp.ne.s32.totalorder %s40, %s41
      %p55 = scmp.eq.s32.totalorder %s33, 1
      %p56 = por %p54, %p55
      %p58 = scmp.ne.s32.totalorder %s41, %s57
      %p59 = scmp.eq.s32.totalorder %s33, 0
      %p60 = por %p58, %p59
      %s62 = sadd.s32 %s61, 1
      %p65 = scmp.eq.s32.totalorder %s27, 1
      %p66 = scmp.ne.s32.totalorder %s61, %s63
      %p67 = scmp.eq.s32.totalorder %s27, 0
      %p68 = por %p66, %p67
      %p69 = scmp.ne.s32.totalorder %s61, %s63
      %p70 = scmp.eq.s32.totalorder %s32, 1
      %p71 = por %p69, %p70
      %p72 = scmp.ne.s32.totalorder %s63, %s64
      %p73 = scmp.eq.s32.totalorder %s32, 0
      %p74 = por %p72, %p73
      %p75 = scmp.ne.s32.totalorder %s63, %s64
      %p76 = scmp.eq.s32.totalorder %s33, 1
      %p77 = por %p75, %p76
      %p79 = scmp.ne.s32.totalorder %s64, %s78
      %p80 = scmp.eq.s32.totalorder %s33, 0
      %p81 = por %p79, %p80
      %s83 = sadd.s32 %s82, 1
      %p86 = scmp.eq.s32.totalorder %s27, 1
      %p87 = scmp.ne.s32.totalorder %s82, %s84
      %p88 = scmp.eq.s32.totalorder %s27, 0
      %p89 = por %p87, %p88
      %p90 = scmp.ne.s32.totalorder %s82, %s84
      %p91 = scmp.eq.s32.totalorder %s32, 1
      %p92 = por %p90, %p91
      %p93 = scmp.ne.s32.totalorder %s84, %s85
      %p94 = scmp.eq.s32.totalorder %s32, 0
      %p95 = por %p93, %p94
      %p96 = scmp.ne.s32.totalorder %s84, %s85
      %p97 = scmp.eq.s32.totalorder %s33, 1
      %p98 = por %p96, %p97
      %p100 = scmp.ne.s32.totalorder %s85, %s99
      %p101 = scmp.eq.s32.totalorder %s33, 0
      %p102 = por %p100, %p101
      %s104 = sadd.s32 %s103, 1
      %p107 = scmp.eq.s32.totalorder %s27, 1
      %p108 = scmp.ne.s32.totalorder %s103, %s105
      %p109 = scmp.eq.s32.totalorder %s27, 0
      %p110 = por %p108, %p109
      %p111 = scmp.ne.s32.totalorder %s103, %s105
      %p112 = scmp.eq.s32.totalorder %s32, 1
      %p113 = por %p111, %p112
      %p114 = scmp.ne.s32.totalorder %s105, %s106
      %p115 = scmp.eq.s32.totalorder %s32, 0
      %p116 = por %p114, %p115
      %p117 = scmp.ne.s32.totalorder %s105, %s106
      %p118 = scmp.eq.s32.totalorder %s33, 1
      %p119 = por %p117, %p118
      %p121 = scmp.ne.s32.totalorder %s106, %s120
      %p122 = scmp.eq.s32.totalorder %s33, 0
      %p123 = por %p121, %p122
      %s125 = sadd.s32 %s124, 1
      %p128 = scmp.eq.s32.totalorder %s27, 1
      %p129 = scmp.ne.s32.totalorder %s124, %s126
      %p130 = scmp.eq.s32.totalorder %s27, 0
      %p131 = por %p129, %p130
      %p132 = scmp.ne.s32.totalorder %s124, %s126
      %p133 = scmp.eq.s32.totalorder %s32, 1
      %p134 = por %p132, %p133
      %p135 = scmp.ne.s32.totalorder %s126, %s127
      %p136 = scmp.eq.s32.totalorder %s32, 0
      %p137 = por %p135, %p136
      %p138 = scmp.ne.s32.totalorder %s126, %s127
      %p139 = scmp.eq.s32.totalorder %s33, 1
      %p140 = por %p138, %p139
      %p142 = scmp.ne.s32.totalorder %s127, %s141
      %p143 = scmp.eq.s32.totalorder %s33, 0
      %p144 = por %p142, %p143
      %s146 = sadd.s32 %s145, 1
      %p149 = scmp.eq.s32.totalorder %s27, 1
      %p150 = scmp.ne.s32.totalorder %s145, %s147
      %p151 = scmp.eq.s32.totalorder %s27, 0
      %p152 = por %p150, %p151
      %p153 = scmp.ne.s32.totalorder %s145, %s147
      %p154 = scmp.eq.s32.totalorder %s32, 1
      %p155 = por %p153, %p154
      %p156 = scmp.ne.s32.totalorder %s147, %s148
      %p157 = scmp.eq.s32.totalorder %s32, 0
      %p158 = por %p156, %p157
      %p159 = scmp.ne.s32.totalorder %s147, %s148
      %p160 = scmp.eq.s32.totalorder %s33, 1
      %p161 = por %p159, %p160
      %p163 = scmp.ne.s32.totalorder %s148, %s162
      %p164 = scmp.eq.s32.totalorder %s33, 0
      %p165 = por %p163, %p164
      %s167 = sadd.s32 %s166, 1
      %p170 = scmp.eq.s32.totalorder %s27, 1
      %p171 = scmp.ne.s32.totalorder %s166, %s168
      %p172 = scmp.eq.s32.totalorder %s27, 0
      %p173 = por %p171, %p172
      %p174 = scmp.ne.s32.totalorder %s166, %s168
      %p175 = scmp.eq.s32.totalorder %s32, 1
      %p176 = por %p174, %p175
      %p177 = scmp.ne.s32.totalorder %s168, %s169
      %p178 = scmp.eq.s32.totalorder %s32, 0
      %p179 = por %p177, %p178
      %p180 = scmp.ne.s32.totalorder %s168, %s169
      %p181 = scmp.eq.s32.totalorder %s33, 1
      %p182 = por %p180, %p181
      %p184 = scmp.ne.s32.totalorder %s169, %s183
      %p185 = scmp.eq.s32.totalorder %s33, 0
      %p186 = por %p184, %p185
      %s188 = sadd.s32 %s187, 1
      %p191 = scmp.eq.s32.totalorder %s27, 1
      %p192 = scmp.ne.s32.totalorder %s187, %s189
      %p193 = scmp.eq.s32.totalorder %s27, 0
      %p194 = por %p192, %p193
      %p195 = scmp.ne.s32.totalorder %s187, %s189
      %p196 = scmp.eq.s32.totalorder %s32, 1
      %p197 = por %p195, %p196
      %p198 = scmp.ne.s32.totalorder %s189, %s190
      %p199 = scmp.eq.s32.totalorder %s32, 0
      %p200 = por %p198, %p199
      %p201 = scmp.ne.s32.totalorder %s189, %s190
      %p202 = scmp.eq.s32.totalorder %s33, 1
      %p203 = por %p201, %p202
      %p205 = scmp.ne.s32.totalorder %s190, %s204
      %p206 = scmp.eq.s32.totalorder %s33, 0
      %p207 = por %p205, %p206
      %s209 = sadd.s32 %s208, 1
      %p212 = scmp.eq.s32.totalorder %s27, 1
      %p213 = scmp.ne.s32.totalorder %s208, %s210
      %p214 = scmp.eq.s32.totalorder %s27, 0
      %p215 = por %p213, %p214
      %p216 = scmp.ne.s32.totalorder %s208, %s210
      %p217 = scmp.eq.s32.totalorder %s32, 1
      %p218 = por %p216, %p217
      %p219 = scmp.ne.s32.totalorder %s210, %s211
      %p220 = scmp.eq.s32.totalorder %s32, 0
      %p221 = por %p219, %p220
      %p222 = scmp.ne.s32.totalorder %s210, %s211
      %p223 = scmp.eq.s32.totalorder %s33, 1
      %p224 = por %p222, %p223
      %p226 = scmp.ne.s32.totalorder %s211, %s225
      %p227 = scmp.eq.s32.totalorder %s33, 0
      %p228 = por %p226, %p227
      %s230 = sadd.s32 %s229, 1
      %p233 = scmp.eq.s32.totalorder %s27, 1
      %p234 = scmp.ne.s32.totalorder %s229, %s231
      %p235 = scmp.eq.s32.totalorder %s27, 0
      %p236 = por %p234, %p235
      %p237 = scmp.ne.s32.totalorder %s229, %s231
      %p238 = scmp.eq.s32.totalorder %s32, 1
      %p239 = por %p237, %p238
      %p240 = scmp.ne.s32.totalorder %s231, %s232
      %p241 = scmp.eq.s32.totalorder %s32, 0
      %p242 = por %p240, %p241
      %p243 = scmp.ne.s32.totalorder %s231, %s232
      %p244 = scmp.eq.s32.totalorder %s33, 1
      %p245 = por %p243, %p244
      %p247 = scmp.ne.s32.totalorder %s232, %s246
      %p248 = scmp.eq.s32.totalorder %s33, 0
      %p249 = por %p247, %p248
      %s251 = sadd.s32 %s250, 1
      %p254 = scmp.eq.s32.totalorder %s27, 1
      %p255 = scmp.ne.s32.totalorder %s250, %s252
      %p256 = scmp.eq.s32.totalorder %s27, 0
      %p257 = por %p255, %p256
      %p258 = scmp.ne.s32.totalorder %s250, %s252
      %p259 = scmp.eq.s32.totalorder %s32, 1
      %p260 = por %p258, %p259
      %p261 = scmp.ne.s32.totalorder %s252, %s253
      %p262 = scmp.eq.s32.totalorder %s32, 0
      %p263 = por %p261, %p262
      %p264 = scmp.ne.s32.totalorder %s252, %s253
      %p265 = scmp.eq.s32.totalorder %s33, 1
      %p266 = por %p264, %p265
      %p268 = scmp.ne.s32.totalorder %s253, %s267
      %p269 = scmp.eq.s32.totalorder %s33, 0
      %p270 = por %p268, %p269
      %s272 = sadd.s32 %s271, 1
      %p275 = scmp.eq.s32.totalorder %s27, 1
      %p276 = scmp.ne.s32.totalorder %s271, %s273
      %p277 = scmp.eq.s32.totalorder %s27, 0
      %p278 = por %p276, %p277
      %p279 = scmp.ne.s32.totalorder %s271, %s273
      %p280 = scmp.eq.s32.totalorder %s32, 1
      %p281 = por %p279, %p280
      %p282 = scmp.ne.s32.totalorder %s273, %s274
      %p283 = scmp.eq.s32.totalorder %s32, 0
      %p284 = por %p282, %p283
      %p285 = scmp.ne.s32.totalorder %s273, %s274
      %p286 = scmp.eq.s32.totalorder %s33, 1
      %p287 = por %p285, %p286
      %p289 = scmp.ne.s32.totalorder %s274, %s288
      %p290 = scmp.eq.s32.totalorder %s33, 0
      %p291 = por %p289, %p290
      %s293 = sadd.s32 %s292, 1
      %p296 = scmp.eq.s32.totalorder %s27, 1
      %p297 = scmp.ne.s32.totalorder %s292, %s294
      %p298 = scmp.eq.s32.totalorder %s27, 0
      %p299 = por %p297, %p298
      %p300 = scmp.ne.s32.totalorder %s292, %s294
      %p301 = scmp.eq.s32.totalorder %s32, 1
      %p302 = por %p300, %p301
      %p303 = scmp.ne.s32.totalorder %s294, %s295
      %p304 = scmp.eq.s32.totalorder %s32, 0
      %p305 = por %p303, %p304
      %p306 = scmp.ne.s32.totalorder %s294, %s295
      %p307 = scmp.eq.s32.totalorder %s33, 1
      %p308 = por %p306, %p307
      %p310 = scmp.ne.s32.totalorder %s295, %s309
      %p311 = scmp.eq.s32.totalorder %s33, 0
      %p312 = por %p310, %p311
      %s314 = sadd.s32 %s313, 1
      %p317 = scmp.eq.s32.totalorder %s27, 1
      %p318 = scmp.ne.s32.totalorder %s313, %s315
      %p319 = scmp.eq.s32.totalorder %s27, 0
      %p320 = por %p318, %p319
      %p321 = scmp.ne.s32.totalorder %s313, %s315
      %p322 = scmp.eq.s32.totalorder %s32, 1
      %p323 = por %p321, %p322
      %p324 = scmp.ne.s32.totalorder %s315, %s316
      %p325 = scmp.eq.s32.totalorder %s32, 0
      %p326 = por %p324, %p325
      %p327 = scmp.ne.s32.totalorder %s315, %s316
      %p328 = scmp.eq.s32.totalorder %s33, 1
      %p329 = por %p327, %p328
      %p331 = scmp.ne.s32.totalorder %s316, %s330
      %p332 = scmp.eq.s32.totalorder %s33, 0
      %p333 = por %p331, %p332
      %s335 = sadd.s32 %s334, 1
      %p338 = scmp.eq.s32.totalorder %s27, 1
      %p339 = scmp.ne.s32.totalorder %s334, %s336
      %p340 = scmp.eq.s32.totalorder %s27, 0
      %p341 = por %p339, %p340
      %p342 = scmp.ne.s32.totalorder %s334, %s336
      %p343 = scmp.eq.s32.totalorder %s32, 1
      %p344 = por %p342, %p343
      %p345 = scmp.ne.s32.totalorder %s336, %s337
      %p346 = scmp.eq.s32.totalorder %s32, 0
      %p347 = por %p345, %p346
      %p348 = scmp.ne.s32.totalorder %s336, %s337
      %p349 = scmp.eq.s32.totalorder %s33, 1
      %p350 = por %p348, %p349
      %p352 = scmp.ne.s32.totalorder %s337, %s351
      %p353 = scmp.eq.s32.totalorder %s33, 0
      %p354 = por %p352, %p353
      %s356 = sadd.s32 %s355, 1
      %p359 = scmp.eq.s32.totalorder %s27, 1
      %p360 = scmp.ne.s32.totalorder %s355, %s357
      %p361 = scmp.eq.s32.totalorder %s27, 0
      %p362 = por %p360, %p361
      %p363 = scmp.ne.s32.totalorder %s355, %s357
      %p364 = scmp.eq.s32.totalorder %s32, 1
      %p365 = por %p363, %p364
      %p366 = scmp.ne.s32.totalorder %s357, %s358
      %p367 = scmp.eq.s32.totalorder %s32, 0
      %p368 = por %p366, %p367
      %p369 = scmp.ne.s32.totalorder %s357, %s358
      %p370 = scmp.eq.s32.totalorder %s33, 1
      %p371 = por %p369, %p370
      %p373 = scmp.ne.s32.totalorder %s358, %s372
      %p374 = scmp.eq.s32.totalorder %s33, 0
      %p375 = por %p373, %p374
      %s377 = sadd.s32 %s376, 1
      %p380 = scmp.eq.s32.totalorder %s27, 1
      %p381 = scmp.ne.s32.totalorder %s376, %s378
      %p382 = scmp.eq.s32.totalorder %s27, 0
      %p383 = por %p381, %p382
      %p384 = scmp.ne.s32.totalorder %s376, %s378
      %p385 = scmp.eq.s32.totalorder %s32, 1
      %p386 = por %p384, %p385
      %p387 = scmp.ne.s32.totalorder %s378, %s379
      %p388 = scmp.eq.s32.totalorder %s32, 0
      %p389 = por %p387, %p388
      %p390 = scmp.ne.s32.totalorder %s378, %s379
      %p391 = scmp.eq.s32.totalorder %s33, 1
      %p392 = por %p390, %p391
      %p394 = scmp.ne.s32.totalorder %s379, %s393
      %p395 = scmp.eq.s32.totalorder %s33, 0
      %p396 = por %p394, %p395
      %s397 = ssub.s32 %s27, %s34
      %p398 = scmp.eq.s32.totalorder %s397, 0
      %s400 = sadd.s32 %s399, 1
      %s401 = scalar_select %p398, %s399, %s400
      %p404 = pneg %p398
      %p405 = scmp.eq.s32.totalorder %s27, 1
      %p406 = por %p404, %p405
      %p407 = scmp.ne.s32.totalorder %s399, %s402
      %p408 = scmp.eq.s32.totalorder %s27, 0
      %p409 = por %p407, %p408
      %p410 = scmp.ne.s32.totalorder %s399, %s402
      %p411 = scmp.eq.s32.totalorder %s32, 1
      %p412 = por %p410, %p411
      %p413 = scmp.ne.s32.totalorder %s402, %s403
      %p414 = scmp.eq.s32.totalorder %s32, 0
      %p415 = por %p413, %p414
      %p416 = scmp.ne.s32.totalorder %s402, %s403
      %p417 = scmp.eq.s32.totalorder %s33, 1
      %p418 = por %p416, %p417
      %p420 = scmp.ne.s32.totalorder %s403, %s419
      %p421 = scmp.eq.s32.totalorder %s33, 0
      %p422 = por %p420, %p421
      %p423 = scmp.le.s32.totalorder 1, %s27
      %p424 = scmp.lt.s32.totalorder %s27, 3
      %p425 = pnand %p423, %p424
      %p426 = pneg %p425
      // Predicated region
      $region9: #{tpu_custom_call.1} parent=5 // pred_check
        _
      $region10: #{tpu_custom_call.1} parent=5 // pred_check_branch
        %428 = sbr.rel (%p425) target = $region12
      $region11: #{tpu_custom_call.1} parent=5 // pred_region
        %s429 = ssub.s32 %s27, 1
        // Predicated region
        $region13: #{tpu_custom_call.1} parent=11 // pred_check
          %p430 = pneg %p74
        $region14: #{tpu_custom_call.1} parent=11 // pred_check_branch
          %432 = sbr.rel (%p430) target = $region16
        $region15: #{tpu_custom_call.1} parent=11 // pred_region
          %s434 = ssub.s32 256, 256
          %435 = vsyncadd [#allocation3], %s434
          %s437 = sshll.u32 [#allocation2], 4
          %s438 = int_to_ptr.vmem [resolvable:$true] %s437
          %440 = dma.hbm_to_vmem [thread:$0]  %s1, 256, %s438, [#allocation3]
        $region16: #{tpu_custom_call.1} parent=11 // pred_fallthru
          _
        // Predicated region
        $region17: #{tpu_custom_call.1} parent=11 // pred_check
          %p441 = pneg %p95
        $region18: #{tpu_custom_call.1} parent=11 // pred_check_branch
          %443 = sbr.rel (%p441) target = $region20
        $region19: #{tpu_custom_call.1} parent=11 // pred_region
          _
        $region20: #{tpu_custom_call.1} parent=11 // pred_fallthru
          _
        // Predicated region
        $region21: #{tpu_custom_call.1} parent=11 // pred_check
          %p444 = pneg %p116
        $region22: #{tpu_custom_call.1} parent=11 // pred_check_branch
          %446 = sbr.rel (%p444) target = $region24
        $region23: #{tpu_custom_call.1} parent=11 // pred_region
          _
        $region24: #{tpu_custom_call.1} parent=11 // pred_fallthru
          _
        // Predicated region
        $region25: #{tpu_custom_call.1} parent=11 // pred_check
          %p447 = pneg %p137
        $region26: #{tpu_custom_call.1} parent=11 // pred_check_branch
          %449 = sbr.rel (%p447) target = $region28
        $region27: #{tpu_custom_call.1} parent=11 // pred_region
          _
        $region28: #{tpu_custom_call.1} parent=11 // pred_fallthru
          _
        // Predicated region
        $region29: #{tpu_custom_call.1} parent=11 // pred_check
          %p450 = pneg %p158
        $region30: #{tpu_custom_call.1} parent=11 // pred_check_branch
          %452 = sbr.rel (%p450) target = $region32
        $region31: #{tpu_custom_call.1} parent=11 // pred_region
          %s454 = ssub.s32 8192, 8192
          %455 = vsyncadd [#allocation5], %s454
          %s456 = sshll.u32 [#allocation4], 4
          %s457 = int_to_ptr.vmem [resolvable:$true] %s456
          %462 = dma.hbm_to_vmem [thread:$0]  %s5, 8192, %s457, [#allocation5], 128, 128, 8
        $region32: #{tpu_custom_call.1} parent=11 // pred_fallthru
          _
        // Predicated region
        $region33: #{tpu_custom_call.1} parent=11 // pred_check
          %p463 = pneg %p179
        $region34: #{tpu_custom_call.1} parent=11 // pred_check_branch
          %465 = sbr.rel (%p463) target = $region36
        $region35: #{tpu_custom_call.1} parent=11 // pred_region
          %s467 = ssub.s32 32, 32
          %468 = vsyncadd [#allocation5], %s467
          %s470 = sshll.u32 [#allocation6], 4
          %s471 = int_to_ptr.vmem [resolvable:$true] %s470
          %473 = dma.hbm_to_vmem [thread:$0]  %s6, 32, %s471, [#allocation5]
        $region36: #{tpu_custom_call.1} parent=11 // pred_fallthru
          _
        // Predicated region
        $region37: #{tpu_custom_call.1} parent=11 // pred_check
          %p474 = pneg %p200
        $region38: #{tpu_custom_call.1} parent=11 // pred_check_branch
          %476 = sbr.rel (%p474) target = $region40
        $region39: #{tpu_custom_call.1} parent=11 // pred_region
          _
        $region40: #{tpu_custom_call.1} parent=11 // pred_fallthru
          _
        // Predicated region
        $region41: #{tpu_custom_call.1} parent=11 // pred_check
          %p477 = pneg %p221
        $region42: #{tpu_custom_call.1} parent=11 // pred_check_branch
          %479 = sbr.rel (%p477) target = $region44
        $region43: #{tpu_custom_call.1} parent=11 // pred_region
          _
        $region44: #{tpu_custom_call.1} parent=11 // pred_fallthru
          _
        // Predicated region
        $region45: #{tpu_custom_call.1} parent=11 // pred_check
          %p480 = pneg %p242
        $region46: #{tpu_custom_call.1} parent=11 // pred_check_branch
          %482 = sbr.rel (%p480) target = $region48
        $region47: #{tpu_custom_call.1} parent=11 // pred_region
          %s484 = ssub.s32 4096, 4096
          %485 = vsyncadd [#allocation8], %s484
          %s486 = sshll.u32 [#allocation7], 4
          %s487 = int_to_ptr.vmem [resolvable:$true] %s486
          %492 = dma.hbm_to_vmem [thread:$0]  %s9, 4096, %s487, [#allocation8], 128, 128, 8
        $region48: #{tpu_custom_call.1} parent=11 // pred_fallthru
          _
        // Predicated region
        $region49: #{tpu_custom_call.1} parent=11 // pred_check
          %p493 = pneg %p263
        $region50: #{tpu_custom_call.1} parent=11 // pred_check_branch
          %495 = sbr.rel (%p493) target = $region52
        $region51: #{tpu_custom_call.1} parent=11 // pred_region
          _
        $region52: #{tpu_custom_call.1} parent=11 // pred_fallthru
          _
        // Predicated region
        $region53: #{tpu_custom_call.1} parent=11 // pred_check
          %p496 = pneg %p284
        $region54: #{tpu_custom_call.1} parent=11 // pred_check_branch
          %498 = sbr.rel (%p496) target = $region56
        $region55: #{tpu_custom_call.1} parent=11 // pred_region
          %s500 = ssub.s32 6144, 6144
          %501 = vsyncadd [#allocation8], %s500
          %s502 = sshll.u32 [#allocation9], 4
          %s503 = int_to_ptr.vmem [resolvable:$true] %s502
          %508 = dma.hbm_to_vmem [thread:$0]  %s11, 6144, %s503, [#allocation8], 192, 192, 12
        $region56: #{tpu_custom_call.1} parent=11 // pred_fallthru
          _
        // Predicated region
        $region57: #{tpu_custom_call.1} parent=11 // pred_check
          %p509 = pneg %p305
        $region58: #{tpu_custom_call.1} parent=11 // pred_check_branch
          %511 = sbr.rel (%p509) target = $region60
        $region59: #{tpu_custom_call.1} parent=11 // pred_region
          _
        $region60: #{tpu_custom_call.1} parent=11 // pred_fallthru
          _
        // Predicated region
        $region61: #{tpu_custom_call.1} parent=11 // pred_check
          %p512 = pneg %p326
        $region62: #{tpu_custom_call.1} parent=11 // pred_check_branch
          %514 = sbr.rel (%p512) target = $region64
        $region63: #{tpu_custom_call.1} parent=11 // pred_region
          %s516 = ssub.s32 9216, 9216
          %517 = vsyncadd [#allocation11], %s516
          %s518 = sshll.u32 [#allocation10], 4
          %s519 = int_to_ptr.vmem [resolvable:$true] %s518
          %524 = dma.hbm_to_vmem [thread:$0]  %s13, 9216, %s519, [#allocation11], 192, 192, 12
        $region64: #{tpu_custom_call.1} parent=11 // pred_fallthru
          _
        // Predicated region
        $region65: #{tpu_custom_call.1} parent=11 // pred_check
          %p525 = pneg %p347
        $region66: #{tpu_custom_call.1} parent=11 // pred_check_branch
          %527 = sbr.rel (%p525) target = $region68
        $region67: #{tpu_custom_call.1} parent=11 // pred_region
          _
        $region68: #{tpu_custom_call.1} parent=11 // pred_fallthru
          _
        // Predicated region
        $region69: #{tpu_custom_call.1} parent=11 // pred_check
          %p528 = pneg %p368
        $region70: #{tpu_custom_call.1} parent=11 // pred_check_branch
          %530 = sbr.rel (%p528) target = $region72
        $region71: #{tpu_custom_call.1} parent=11 // pred_region
          _
        $region72: #{tpu_custom_call.1} parent=11 // pred_fallthru
          _
        // Predicated region
        $region73: #{tpu_custom_call.1} parent=11 // pred_check
          %p531 = pneg %p389
        $region74: #{tpu_custom_call.1} parent=11 // pred_check_branch
          %533 = sbr.rel (%p531) target = $region76
        $region75: #{tpu_custom_call.1} parent=11 // pred_region
          _
        $region76: #{tpu_custom_call.1} parent=11 // pred_fallthru
          _
      $region12: #{tpu_custom_call.1} parent=5 // pred_fallthru
        _
      %p534 = scmp.lt.s32.totalorder %s27, 2
      // Predicated region
      $region77: #{tpu_custom_call.1} parent=5 // pred_check
        %p535 = pneg %p534
      $region78: #{tpu_custom_call.1} parent=5 // pred_check_branch
        %537 = sbr.rel (%p535) target = $region80
      $region79: #{tpu_custom_call.1} parent=5 // pred_region
        // Predicated region
        $region81: #{tpu_custom_call.1} parent=79 // pred_check
          %p538 = pneg %p47
        $region82: #{tpu_custom_call.1} parent=79 // pred_check_branch
          %540 = sbr.rel (%p538) target = $region84
        $region83: #{tpu_custom_call.1} parent=79 // pred_region
          %s541 = smul.u32 64, %s27
          %p542 = scmp.lt.s32.totalorder %s541, 127
          %s543 = scalar_select %p542, %s541, 127
          %s544 = smul.addr %s543, 8
          %s545 = scalar_lea.vmem %s0, %s544
          %s546 = smul.u32 64, %s27
        $region84: #{tpu_custom_call.1} parent=79 // pred_fallthru
          _
      $region80: #{tpu_custom_call.1} parent=5 // pred_fallthru
        _
      %p547 = scmp.le.s32.totalorder 1, %s27
      %p548 = scmp.lt.s32.totalorder %s27, 3
      %p549 = pnand %p547, %p548
      %p550 = pneg %p549
      // Predicated region
      $region85: #{tpu_custom_call.1} parent=5 // pred_check
        _
      $region86: #{tpu_custom_call.1} parent=5 // pred_check_branch
        %552 = sbr.rel (%p549) target = $region88
      $region87: #{tpu_custom_call.1} parent=5 // pred_region
        %s553 = ssub.s32 %s27, 1
        // Predicated region
        $region89: #{tpu_custom_call.1} parent=87 // pred_check
          %p554 = pneg %p74
        $region90: #{tpu_custom_call.1} parent=87 // pred_check_branch
          %556 = sbr.rel (%p554) target = $region92
        $region91: #{tpu_custom_call.1} parent=87 // pred_region
          %557 = dma.done [#allocation3], 256
        $region92: #{tpu_custom_call.1} parent=87 // pred_fallthru
          _
        // Predicated region
        $region93: #{tpu_custom_call.1} parent=87 // pred_check
          %p558 = pneg %p158
        $region94: #{tpu_custom_call.1} parent=87 // pred_check_branch
          %560 = sbr.rel (%p558) target = $region96
        $region95: #{tpu_custom_call.1} parent=87 // pred_region
          %561 = dma.done [#allocation5], 8192
        $region96: #{tpu_custom_call.1} parent=87 // pred_fallthru
          _
        // Predicated region
        $region97: #{tpu_custom_call.1} parent=87 // pred_check
          %p562 = pneg %p179
        $region98: #{tpu_custom_call.1} parent=87 // pred_check_branch
          %564 = sbr.rel (%p562) target = $region100
        $region99: #{tpu_custom_call.1} parent=87 // pred_region
          %565 = dma.done [#allocation5], 32
        $region100: #{tpu_custom_call.1} parent=87 // pred_fallthru
          _
        // Predicated region
        $region101: #{tpu_custom_call.1} parent=87 // pred_check
          %p566 = pneg %p242
        $region102: #{tpu_custom_call.1} parent=87 // pred_check_branch
          %568 = sbr.rel (%p566) target = $region104
        $region103: #{tpu_custom_call.1} parent=87 // pred_region
          %569 = dma.done [#allocation8], 4096
        $region104: #{tpu_custom_call.1} parent=87 // pred_fallthru
          _
        // Predicated region
        $region105: #{tpu_custom_call.1} parent=87 // pred_check
          %p570 = pneg %p284
        $region106: #{tpu_custom_call.1} parent=87 // pred_check_branch
          %572 = sbr.rel (%p570) target = $region108
        $region107: #{tpu_custom_call.1} parent=87 // pred_region
          %573 = dma.done [#allocation8], 6144
        $region108: #{tpu_custom_call.1} parent=87 // pred_fallthru
          _
        // Predicated region
        $region109: #{tpu_custom_call.1} parent=87 // pred_check
          %p574 = pneg %p326
        $region110: #{tpu_custom_call.1} parent=87 // pred_check_branch
          %576 = sbr.rel (%p574) target = $region112
        $region111: #{tpu_custom_call.1} parent=87 // pred_region
          %577 = dma.done [#allocation11], 9216
        $region112: #{tpu_custom_call.1} parent=87 // pred_fallthru
          _
        %s578 = smul.u32 64, %s32
        %p579 = scmp.lt.s32.totalorder %s578, 127
        %s580 = scalar_select %p579, %s578, 127
        %s581 = smul.addr %s580, 8
        %s582 = scalar_lea.vmem %s0, %s581
        %p583 = pneg %p53
        %p584 = pneg %p50
        %p585 = pneg %p74
        %p586 = pneg %p71
        %p587 = pneg %p95
        %p588 = pneg %p92
        %p589 = pneg %p116
        %p590 = pneg %p113
        %p591 = pneg %p137
        %p592 = pneg %p134
        %p593 = pneg %p158
        %p594 = pneg %p155
        %p595 = pneg %p179
        %p596 = pneg %p176
        %p597 = pneg %p200
        %p598 = pneg %p197
        %p599 = pneg %p221
        %p600 = pneg %p218
        %p601 = pneg %p242
        %p602 = pneg %p239
        %p603 = pneg %p263
        %p604 = pneg %p260
        %p605 = pneg %p284
        %p606 = pneg %p281
        %p607 = pneg %p305
        %p608 = pneg %p302
        %p609 = pneg %p326
        %p610 = pneg %p323
        %p611 = pneg %p347
        %p612 = pneg %p344
        %p613 = pneg %p368
        %p614 = pneg %p365
        %p615 = pneg %p389
        %p616 = pneg %p386
        %p617 = pneg %p415
        %p618 = pneg %p412
        %s619 = smul.u32 64, %s32
        %p620 = scmp.lt.s32.totalorder %s619, 127
        %s621 = scalar_select %p620, %s619, 127
        %s622 = smul.addr %s621, 8
        %s623 = scalar_lea.vmem %s17, %s622
        %s624 = smul.u32 64, %s32
        %p625 = scmp.lt.s32.totalorder %s624, 127
        %s626 = scalar_select %p625, %s624, 127
        %s627 = smul.addr %s626, 8
        %s628 = scalar_lea.vmem %s0, %s627
        %s629 = smul.u32 64, %s32
        %s630 = smul.u32 64, %s32
        %p631 = scmp.lt.s32.totalorder %s630, 127
        %s632 = scalar_select %p631, %s630, 127
        %s633 = smul.addr %s632, 8
        %s634 = scalar_lea.vmem %s17, %s633
        %s635 = smul.u32 64, %s32
        %v637 = vld [vmem:[%s628] sm:$0xff]
        %v638 = vld [vmem:[%s628 + $0x8] sm:$0xff]
        %v639 = vld [vmem:[%s628 + $0x10] sm:$0xff]
        %v640 = vld [vmem:[%s628 + $0x18] sm:$0xff]
        %v641 = vld [vmem:[%s628 + $0x20] sm:$0xff]
        %v642 = vld [vmem:[%s628 + $0x28] sm:$0xff]
        %v643 = vld [vmem:[%s628 + $0x30] sm:$0xff]
        %v644 = vld [vmem:[%s628 + $0x38] sm:$0xff]
        %v645 = vld [vmem:[%s628 + $0x40] sm:$0xff]
        %v646 = vld [vmem:[%s628 + $0x48] sm:$0xff]
        %v647 = vld [vmem:[%s628 + $0x50] sm:$0xff]
        %v648 = vld [vmem:[%s628 + $0x58] sm:$0xff]
        %v649 = vld [vmem:[%s628 + $0x60] sm:$0xff]
        %v650 = vld [vmem:[%s628 + $0x68] sm:$0xff]
        %v651 = vld [vmem:[%s628 + $0x70] sm:$0xff]
        %v652 = vld [vmem:[%s628 + $0x78] sm:$0xff]
        %v653 = vld [vmem:[%s628 + $0x80] sm:$0xff]
        %v654 = vld [vmem:[%s628 + $0x88] sm:$0xff]
        %v655 = vld [vmem:[%s628 + $0x90] sm:$0xff]
        %v656 = vld [vmem:[%s628 + $0x98] sm:$0xff]
        %v657 = vld [vmem:[%s628 + $0xa0] sm:$0xff]
        %v658 = vld [vmem:[%s628 + $0xa8] sm:$0xff]
        %v659 = vld [vmem:[%s628 + $0xb0] sm:$0xff]
        %v660 = vld [vmem:[%s628 + $0xb8] sm:$0xff]
        %v661 = vld [vmem:[%s628 + $0xc0] sm:$0xff]
        %v662 = vld [vmem:[%s628 + $0xc8] sm:$0xff]
        %v663 = vld [vmem:[%s628 + $0xd0] sm:$0xff]
        %v664 = vld [vmem:[%s628 + $0xd8] sm:$0xff]
        %v665 = vld [vmem:[%s628 + $0xe0] sm:$0xff]
        %v666 = vld [vmem:[%s628 + $0xe8] sm:$0xff]
        %v667 = vld [vmem:[%s628 + $0xf0] sm:$0xff]
        %v668 = vld [vmem:[%s628 + $0xf8] sm:$0xff]
        %v669 = vld [vmem:[%s628 + $0x100] sm:$0xff]
        %v670 = vld [vmem:[%s628 + $0x108] sm:$0xff]
        %v671 = vld [vmem:[%s628 + $0x110] sm:$0xff]
        %v672 = vld [vmem:[%s628 + $0x118] sm:$0xff]
        %v673 = vld [vmem:[%s628 + $0x120] sm:$0xff]
        %v674 = vld [vmem:[%s628 + $0x128] sm:$0xff]
        %v675 = vld [vmem:[%s628 + $0x130] sm:$0xff]
        %v676 = vld [vmem:[%s628 + $0x138] sm:$0xff]
        %v677 = vld [vmem:[%s628 + $0x140] sm:$0xff]
        %v678 = vld [vmem:[%s628 + $0x148] sm:$0xff]
        %v679 = vld [vmem:[%s628 + $0x150] sm:$0xff]
        %v680 = vld [vmem:[%s628 + $0x158] sm:$0xff]
        %v681 = vld [vmem:[%s628 + $0x160] sm:$0xff]
        %v682 = vld [vmem:[%s628 + $0x168] sm:$0xff]
        %v683 = vld [vmem:[%s628 + $0x170] sm:$0xff]
        %v684 = vld [vmem:[%s628 + $0x178] sm:$0xff]
        %v685 = vld [vmem:[%s628 + $0x180] sm:$0xff]
        %v686 = vld [vmem:[%s628 + $0x188] sm:$0xff]
        %v687 = vld [vmem:[%s628 + $0x190] sm:$0xff]
        %v688 = vld [vmem:[%s628 + $0x198] sm:$0xff]
        %v689 = vld [vmem:[%s628 + $0x1a0] sm:$0xff]
        %v690 = vld [vmem:[%s628 + $0x1a8] sm:$0xff]
        %v691 = vld [vmem:[%s628 + $0x1b0] sm:$0xff]
        %v692 = vld [vmem:[%s628 + $0x1b8] sm:$0xff]
        %v693 = vld [vmem:[%s628 + $0x1c0] sm:$0xff]
        %v694 = vld [vmem:[%s628 + $0x1c8] sm:$0xff]
        %v695 = vld [vmem:[%s628 + $0x1d0] sm:$0xff]
        %v696 = vld [vmem:[%s628 + $0x1d8] sm:$0xff]
        %v697 = vld [vmem:[%s628 + $0x1e0] sm:$0xff]
        %v698 = vld [vmem:[%s628 + $0x1e8] sm:$0xff]
        %v699 = vld [vmem:[%s628 + $0x1f0] sm:$0xff]
        %v700 = vld [vmem:[%s628 + $0x1f8] sm:$0xff]
        %v701 = vpack.c.bf16 %v638, %v637
        %v702 = vpack.c.bf16 %v640, %v639
        %v703 = vpack.c.bf16 %v642, %v641
        %v704 = vpack.c.bf16 %v644, %v643
        %v705 = vpack.c.bf16 %v646, %v645
        %v706 = vpack.c.bf16 %v648, %v647
        %v707 = vpack.c.bf16 %v650, %v649
        %v708 = vpack.c.bf16 %v652, %v651
        %v709 = vpack.c.bf16 %v654, %v653
        %v710 = vpack.c.bf16 %v656, %v655
        %v711 = vpack.c.bf16 %v658, %v657
        %v712 = vpack.c.bf16 %v660, %v659
        %v713 = vpack.c.bf16 %v662, %v661
        %v714 = vpack.c.bf16 %v664, %v663
        %v715 = vpack.c.bf16 %v666, %v665
        %v716 = vpack.c.bf16 %v668, %v667
        %v717 = vpack.c.bf16 %v670, %v669
        %v718 = vpack.c.bf16 %v672, %v671
        %v719 = vpack.c.bf16 %v674, %v673
        %v720 = vpack.c.bf16 %v676, %v675
        %v721 = vpack.c.bf16 %v678, %v677
        %v722 = vpack.c.bf16 %v680, %v679
        %v723 = vpack.c.bf16 %v682, %v681
        %v724 = vpack.c.bf16 %v684, %v683
        %v725 = vpack.c.bf16 %v686, %v685
        %v726 = vpack.c.bf16 %v688, %v687
        %v727 = vpack.c.bf16 %v690, %v689
        %v728 = vpack.c.bf16 %v692, %v691
        %v729 = vpack.c.bf16 %v694, %v693
        %v730 = vpack.c.bf16 %v696, %v695
        %v731 = vpack.c.bf16 %v698, %v697
        %v732 = vpack.c.bf16 %v700, %v699
        %v733 = vld [vmem:[#allocation2] sm:$0xff]
        %v734 = vld [vmem:[#allocation2 + $0x8] sm:$0xff]
        %v735 = vld [vmem:[%s2] sm:$0xf]
        %v737 = vlaneseq
        %v738 = vshrl.u32 %v737, 7
        %v739 = vsub.s32 0, %v738
        %v740 = vrot.slane %v735, %v739
        %v741 = vlaneseq
        %v742 = vshrl.u32 %v741, 7
        %v743 = vsub.s32 1, %v742
        %v744 = vrot.slane %v735, %v743
        %v745 = vlaneseq
        %v746 = vshrl.u32 %v745, 7
        %v747 = vsub.s32 2, %v746
        %v748 = vrot.slane %v735, %v747
        %v749 = vlaneseq
        %v750 = vshrl.u32 %v749, 7
        %v751 = vsub.s32 3, %v750
        %v752 = vrot.slane %v735, %v751
        %v759 = vunpack.c.l.b16 %v733
        %v760 = vunpack.c.h.b16 %v733
        %v761 = vunpack.c.l.b16 %v734
        %v762 = vunpack.c.h.b16 %v734
        %v763 = vpack.c.b16 %v759, %v759
        %v764 = vpack.c.b16 %v760, %v760
        %v765 = vpack.c.b16 %v761, %v761
        %v766 = vpack.c.b16 %v762, %v762
        %vm767 = vcmask 64512
        %v769 = vsel %vm767, %v701, 0
        %v772 = vsel %vm767, %v702, 0
        %v775 = vsel %vm767, %v703, 0
        %v778 = vsel %vm767, %v704, 0
        %v781 = vsel %vm767, %v705, 0
        %v784 = vsel %vm767, %v706, 0
        %v787 = vsel %vm767, %v707, 0
        %v790 = vsel %vm767, %v708, 0
        %v793 = vsel %vm767, %v709, 0
        %v796 = vsel %vm767, %v710, 0
        %v799 = vsel %vm767, %v711, 0
        %v802 = vsel %vm767, %v712, 0
        %v805 = vsel %vm767, %v713, 0
        %v808 = vsel %vm767, %v714, 0
        %v811 = vsel %vm767, %v715, 0
        %v814 = vsel %vm767, %v716, 0
        %v817 = vsel %vm767, %v717, 0
        %v820 = vsel %vm767, %v718, 0
        %v823 = vsel %vm767, %v719, 0
        %v826 = vsel %vm767, %v720, 0
        %v829 = vsel %vm767, %v721, 0
        %v832 = vsel %vm767, %v722, 0
        %v835 = vsel %vm767, %v723, 0
        %v838 = vsel %vm767, %v724, 0
        %v841 = vsel %vm767, %v725, 0
        %v844 = vsel %vm767, %v726, 0
        %v847 = vsel %vm767, %v727, 0
        %v850 = vsel %vm767, %v728, 0
        %v853 = vsel %vm767, %v729, 0
        %v856 = vsel %vm767, %v730, 0
        %v859 = vsel %vm767, %v731, 0
        %v862 = vsel %vm767, %v732, 0
        %vm864 = vcmask 1043456
        %v866 = vsel %vm864, %v763, 0
        %v869 = vsel %vm864, %v764, 0
        %v872 = vsel %vm864, %v765, 0
        %v875 = vsel %vm864, %v766, 0
        %877 = vmatprep.subr.bf16.mxu0 %v869
        %878 = vmatpush1.bf16.msra.mxu0 %v866
        %879 = vmatprep.subr.bf16.mxu0 0
        %880 = vmatpush1.bf16.msra.mxu0 0
        %881 = vmatprep.subr.bf16.mxu0 0
        %882 = vmatpush1.bf16.msra.mxu0 0
        %883 = vmatprep.subr.bf16.mxu0 0
        %884 = vmatpush1.bf16.msra.mxu0 0
        %885 = vmatprep.subr.bf16.mxu0 0
        %886 = vmatpush1.bf16.msra.mxu0 0
        %887 = vmatprep.subr.bf16.mxu0 0
        %888 = vmatpush1.bf16.msra.mxu0 0
        %889 = vmatprep.subr.bf16.mxu0 0
        %890 = vmatpush1.bf16.msra.mxu0 0
        %891 = vmatprep.subr.bf16.mxu0 0
        %892 = vmatpush1.bf16.msra.mxu0 0
        %893 = vmatprep.subr.bf16.mxu0 0
        %894 = vmatpush1.bf16.msra.mxu0 0
        %895 = vmatprep.subr.bf16.mxu0 0
        %896 = vmatpush1.bf16.msra.mxu0 0
        %897 = vmatprep.subr.bf16.mxu0 0
        %898 = vmatpush1.bf16.msra.mxu0 0
        %899 = vmatprep.subr.bf16.mxu0 0
        %900 = vmatpush1.bf16.msra.mxu0 0
        %901 = vmatprep.subr.bf16.mxu0 0
        %902 = vmatpush1.bf16.msra.mxu0 0
        %903 = vmatprep.subr.bf16.mxu0 0
        %904 = vmatpush1.bf16.msra.mxu0 0
        %905 = vmatprep.subr.bf16.mxu0 0
        %906 = vmatpush1.bf16.msra.mxu0 0
        %907 = vmatprep.subr.bf16.mxu0 0
        %908 = vmatpush1.bf16.msra.mxu0 0
        %909 = vmatprep.mubr.bf16.mxu0 0
        %910 = vmatmul.mubr.bf16.gmra.mrb[0].mxu0 %v769
        %v911 = vpop.f32.mrb[0].mxu0
        %v912 = vadd.f32 %v740, %v911
        %v913 = vpop.f32.mrb[0].mxu0
        %v914 = vadd.f32 %v744, %v913
        %v915 = vpop.f32.mrb[0].mxu0
        %v916 = vadd.f32 %v740, %v915
        %v917 = vpop.f32.mrb[0].mxu0
        %v918 = vadd.f32 %v744, %v917
        %919 = vmatprep.mubr.bf16.mxu0 0
        %920 = vmatmul.mubr.bf16.gmra.mrb[0].mxu0 %v772
        %v921 = vpop.f32.mrb[0].mxu0
        %v922 = vadd.f32 %v740, %v921
        %v923 = vpop.f32.mrb[0].mxu0
        %v924 = vadd.f32 %v744, %v923
        %v925 = vpop.f32.mrb[0].mxu0
        %v926 = vadd.f32 %v740, %v925
        %v927 = vpop.f32.mrb[0].mxu0
        %v928 = vadd.f32 %v744, %v927
        %929 = vmatprep.mubr.bf16.mxu0 0
        %930 = vmatmul.mubr.bf16.gmra.mrb[0].mxu0 %v775
        %v931 = vpop.f32.mrb[0].mxu0
        %v932 = vadd.f32 %v740, %v931
        %v933 = vpop.f32.mrb[0].mxu0
        %v934 = vadd.f32 %v744, %v933
        %v935 = vpop.f32.mrb[0].mxu0
        %v936 = vadd.f32 %v740, %v935
        %v937 = vpop.f32.mrb[0].mxu0
        %v938 = vadd.f32 %v744, %v937
        %939 = vmatprep.mubr.bf16.mxu0 0
        %940 = vmatmul.mubr.bf16.gmra.mrb[0].mxu0 %v778
        %v941 = vpop.f32.mrb[0].mxu0
        %v942 = vadd.f32 %v740, %v941
        %v943 = vpop.f32.mrb[0].mxu0
        %v944 = vadd.f32 %v744, %v943
        %v945 = vpop.f32.mrb[0].mxu0
        %v946 = vadd.f32 %v740, %v945
        %v947 = vpop.f32.mrb[0].mxu0
        %v948 = vadd.f32 %v744, %v947
        %949 = vmatprep.mubr.bf16.mxu0 0
        %950 = vmatmul.mubr.bf16.gmra.mrb[0].mxu0 %v781
        %v951 = vpop.f32.mrb[0].mxu0
        %v952 = vadd.f32 %v740, %v951
        %v953 = vpop.f32.mrb[0].mxu0
        %v954 = vadd.f32 %v744, %v953
        %v955 = vpop.f32.mrb[0].mxu0
        %v956 = vadd.f32 %v740, %v955
        %v957 = vpop.f32.mrb[0].mxu0
        %v958 = vadd.f32 %v744, %v957
        %959 = vmatprep.mubr.bf16.mxu0 0
        %960 = vmatmul.mubr.bf16.gmra.mrb[0].mxu0 %v784
        %v961 = vpop.f32.mrb[0].mxu0
        %v962 = vadd.f32 %v740, %v961
        %v963 = vpop.f32.mrb[0].mxu0
        %v964 = vadd.f32 %v744, %v963
        %v965 = vpop.f32.mrb[0].mxu0
        %v966 = vadd.f32 %v740, %v965
        %v967 = vpop.f32.mrb[0].mxu0
        %v968 = vadd.f32 %v744, %v967
        %969 = vmatprep.mubr.bf16.mxu0 0
        %970 = vmatmul.mubr.bf16.gmra.mrb[0].mxu0 %v787
        %v971 = vpop.f32.mrb[0].mxu0
        %v972 = vadd.f32 %v740, %v971
        %v973 = vpop.f32.mrb[0].mxu0
        %v974 = vadd.f32 %v744, %v973
        %v975 = vpop.f32.mrb[0].mxu0
        %v976 = vadd.f32 %v740, %v975
        %v977 = vpop.f32.mrb[0].mxu0
        %v978 = vadd.f32 %v744, %v977
        %979 = vmatprep.mubr.bf16.mxu0 0
        %980 = vmatmul.mubr.bf16.gmra.mrb[0].mxu0 %v790
        %v981 = vpop.f32.mrb[0].mxu0
        %v982 = vadd.f32 %v740, %v981
        %v983 = vpop.f32.mrb[0].mxu0
        %v984 = vadd.f32 %v744, %v983
        %v985 = vpop.f32.mrb[0].mxu0
        %v986 = vadd.f32 %v740, %v985
        %v987 = vpop.f32.mrb[0].mxu0
        %v988 = vadd.f32 %v744, %v987
        %989 = vmatprep.mubr.bf16.mxu0 0
        %990 = vmatmul.mubr.bf16.gmra.mrb[0].mxu0 %v793
        %v991 = vpop.f32.mrb[0].mxu0
        %v992 = vadd.f32 %v740, %v991
        %v993 = vpop.f32.mrb[0].mxu0
        %v994 = vadd.f32 %v744, %v993
        %v995 = vpop.f32.mrb[0].mxu0
        %v996 = vadd.f32 %v740, %v995
        %v997 = vpop.f32.mrb[0].mxu0
        %v998 = vadd.f32 %v744, %v997
        %999 = vmatprep.mubr.bf16.mxu0 0
        %1000 = vmatmul.mubr.bf16.gmra.mrb[0].mxu0 %v796
        %v1001 = vpop.f32.mrb[0].mxu0
        %v1002 = vadd.f32 %v740, %v1001
        %v1003 = vpop.f32.mrb[0].mxu0
        %v1004 = vadd.f32 %v744, %v1003
        %v1005 = vpop.f32.mrb[0].mxu0
        %v1006 = vadd.f32 %v740, %v1005
        %v1007 = vpop.f32.mrb[0].mxu0
        %v1008 = vadd.f32 %v744, %v1007
        %1009 = vmatprep.mubr.bf16.mxu0 0
        %1010 = vmatmul.mubr.bf16.gmra.mrb[0].mxu0 %v799
        %v1011 = vpop.f32.mrb[0].mxu0
        %v1012 = vadd.f32 %v740, %v1011
        %v1013 = vpop.f32.mrb[0].mxu0
        %v1014 = vadd.f32 %v744, %v1013
        %v1015 = vpop.f32.mrb[0].mxu0
        %v1016 = vadd.f32 %v740, %v1015
        %v1017 = vpop.f32.mrb[0].mxu0
        %v1018 = vadd.f32 %v744, %v1017
        %1019 = vmatprep.mubr.bf16.mxu0 0
        %1020 = vmatmul.mubr.bf16.gmra.mrb[0].mxu0 %v802
        %v1021 = vpop.f32.mrb[0].mxu0
        %v1022 = vadd.f32 %v740, %v1021
        %v1023 = vpop.f32.mrb[0].mxu0
        %v1024 = vadd.f32 %v744, %v1023
        %v1025 = vpop.f32.mrb[0].mxu0
        %v1026 = vadd.f32 %v740, %v1025
        %v1027 = vpop.f32.mrb[0].mxu0
        %v1028 = vadd.f32 %v744, %v1027
        %1029 = vmatprep.mubr.bf16.mxu0 0
        %1030 = vmatmul.mubr.bf16.gmra.mrb[0].mxu0 %v805
        %v1031 = vpop.f32.mrb[0].mxu0
        %v1032 = vadd.f32 %v740, %v1031
        %v1033 = vpop.f32.mrb[0].mxu0
        %v1034 = vadd.f32 %v744, %v1033
        %v1035 = vpop.f32.mrb[0].mxu0
        %v1036 = vadd.f32 %v740, %v1035
        %v1037 = vpop.f32.mrb[0].mxu0
        %v1038 = vadd.f32 %v744, %v1037
        %1039 = vmatprep.mubr.bf16.mxu0 0
        %1040 = vmatmul.mubr.bf16.gmra.mrb[0].mxu0 %v808
        %v1041 = vpop.f32.mrb[0].mxu0
        %v1042 = vadd.f32 %v740, %v1041
        %v1043 = vpop.f32.mrb[0].mxu0
        %v1044 = vadd.f32 %v744, %v1043
        %v1045 = vpop.f32.mrb[0].mxu0
        %v1046 = vadd.f32 %v740, %v1045
        %v1047 = vpop.f32.mrb[0].mxu0
        %v1048 = vadd.f32 %v744, %v1047
        %1049 = vmatprep.mubr.bf16.mxu0 0
        %1050 = vmatmul.mubr.bf16.gmra.mrb[0].mxu0 %v811
        %v1051 = vpop.f32.mrb[0].mxu0
        %v1052 = vadd.f32 %v740, %v1051
        %v1053 = vpop.f32.mrb[0].mxu0
        %v1054 = vadd.f32 %v744, %v1053
        %v1055 = vpop.f32.mrb[0].mxu0
        %v1056 = vadd.f32 %v740, %v1055
        %v1057 = vpop.f32.mrb[0].mxu0
        %v1058 = vadd.f32 %v744, %v1057
        %1059 = vmatprep.mubr.bf16.mxu0 0
        %1060 = vmatmul.mubr.bf16.gmra.mrb[0].mxu0 %v814
        %v1061 = vpop.f32.mrb[0].mxu0
        %v1062 = vadd.f32 %v740, %v1061
        %v1063 = vpop.f32.mrb[0].mxu0
        %v1064 = vadd.f32 %v744, %v1063
        %v1065 = vpop.f32.mrb[0].mxu0
        %v1066 = vadd.f32 %v740, %v1065
        %v1067 = vpop.f32.mrb[0].mxu0
        %v1068 = vadd.f32 %v744, %v1067
        %1069 = vmatprep.mubr.bf16.mxu0 0
        %1070 = vmatmul.mubr.bf16.gmra.mrb[0].mxu0 %v817
        %v1071 = vpop.f32.mrb[0].mxu0
        %v1072 = vadd.f32 %v740, %v1071
        %v1073 = vpop.f32.mrb[0].mxu0
        %v1074 = vadd.f32 %v744, %v1073
        %v1075 = vpop.f32.mrb[0].mxu0
        %v1076 = vadd.f32 %v740, %v1075
        %v1077 = vpop.f32.mrb[0].mxu0
        %v1078 = vadd.f32 %v744, %v1077
        %1079 = vmatprep.mubr.bf16.mxu0 0
        %1080 = vmatmul.mubr.bf16.gmra.mrb[0].mxu0 %v820
        %v1081 = vpop.f32.mrb[0].mxu0
        %v1082 = vadd.f32 %v740, %v1081
        %v1083 = vpop.f32.mrb[0].mxu0
        %v1084 = vadd.f32 %v744, %v1083
        %v1085 = vpop.f32.mrb[0].mxu0
        %v1086 = vadd.f32 %v740, %v1085
        %v1087 = vpop.f32.mrb[0].mxu0
        %v1088 = vadd.f32 %v744, %v1087
        %1089 = vmatprep.mubr.bf16.mxu0 0
        %1090 = vmatmul.mubr.bf16.gmra.mrb[0].mxu0 %v823
        %v1091 = vpop.f32.mrb[0].mxu0
        %v1092 = vadd.f32 %v740, %v1091
        %v1093 = vpop.f32.mrb[0].mxu0
        %v1094 = vadd.f32 %v744, %v1093
        %v1095 = vpop.f32.mrb[0].mxu0
        %v1096 = vadd.f32 %v740, %v1095
        %v1097 = vpop.f32.mrb[0].mxu0
        %v1098 = vadd.f32 %v744, %v1097
        %1099 = vmatprep.mubr.bf16.mxu0 0
        %1100 = vmatmul.mubr.bf16.gmra.mrb[0].mxu0 %v826
        %v1101 = vpop.f32.mrb[0].mxu0
        %v1102 = vadd.f32 %v740, %v1101
        %v1103 = vpop.f32.mrb[0].mxu0
        %v1104 = vadd.f32 %v744, %v1103
        %v1105 = vpop.f32.mrb[0].mxu0
        %v1106 = vadd.f32 %v740, %v1105
        %v1107 = vpop.f32.mrb[0].mxu0
        %v1108 = vadd.f32 %v744, %v1107
        %1109 = vmatprep.mubr.bf16.mxu0 0
        %1110 = vmatmul.mubr.bf16.gmra.mrb[0].mxu0 %v829
        %v1111 = vpop.f32.mrb[0].mxu0
        %v1112 = vadd.f32 %v740, %v1111
        %v1113 = vpop.f32.mrb[0].mxu0
        %v1114 = vadd.f32 %v744, %v1113
        %v1115 = vpop.f32.mrb[0].mxu0
        %v1116 = vadd.f32 %v740, %v1115
        %v1117 = vpop.f32.mrb[0].mxu0
        %v1118 = vadd.f32 %v744, %v1117
        %1119 = vmatprep.mubr.bf16.mxu0 0
        %1120 = vmatmul.mubr.bf16.gmra.mrb[0].mxu0 %v832
        %v1121 = vpop.f32.mrb[0].mxu0
        %v1122 = vadd.f32 %v740, %v1121
        %v1123 = vpop.f32.mrb[0].mxu0
        %v1124 = vadd.f32 %v744, %v1123
        %v1125 = vpop.f32.mrb[0].mxu0
        %v1126 = vadd.f32 %v740, %v1125
        %v1127 = vpop.f32.mrb[0].mxu0
        %v1128 = vadd.f32 %v744, %v1127
        %1129 = vmatprep.mubr.bf16.mxu0 0
        %1130 = vmatmul.mubr.bf16.gmra.mrb[0].mxu0 %v835
        %v1131 = vpop.f32.mrb[0].mxu0
        %v1132 = vadd.f32 %v740, %v1131
        %v1133 = vpop.f32.mrb[0].mxu0
        %v1134 = vadd.f32 %v744, %v1133
        %v1135 = vpop.f32.mrb[0].mxu0
        %v1136 = vadd.f32 %v740, %v1135
        %v1137 = vpop.f32.mrb[0].mxu0
        %v1138 = vadd.f32 %v744, %v1137
        %1139 = vmatprep.mubr.bf16.mxu0 0
        %1140 = vmatmul.mubr.bf16.gmra.mrb[0].mxu0 %v838
        %v1141 = vpop.f32.mrb[0].mxu0
        %v1142 = vadd.f32 %v740, %v1141
        %v1143 = vpop.f32.mrb[0].mxu0
        %v1144 = vadd.f32 %v744, %v1143
        %v1145 = vpop.f32.mrb[0].mxu0
        %v1146 = vadd.f32 %v740, %v1145
        %v1147 = vpop.f32.mrb[0].mxu0
        %v1148 = vadd.f32 %v744, %v1147
        %1149 = vmatprep.mubr.bf16.mxu0 0
        %1150 = vmatmul.mubr.bf16.gmra.mrb[0].mxu0 %v841
        %v1151 = vpop.f32.mrb[0].mxu0
        %v1152 = vadd.f32 %v740, %v1151
        %v1153 = vpop.f32.mrb[0].mxu0
        %v1154 = vadd.f32 %v744, %v1153
        %v1155 = vpop.f32.mrb[0].mxu0
        %v1156 = vadd.f32 %v740, %v1155
        %v1157 = vpop.f32.mrb[0].mxu0
        %v1158 = vadd.f32 %v744, %v1157
        %1159 = vmatprep.mubr.bf16.mxu0 0
        %1160 = vmatmul.mubr.bf16.gmra.mrb[0].mxu0 %v844
        %v1161 = vpop.f32.mrb[0].mxu0
        %v1162 = vadd.f32 %v740, %v1161
        %v1163 = vpop.f32.mrb[0].mxu0
        %v1164 = vadd.f32 %v744, %v1163
        %v1165 = vpop.f32.mrb[0].mxu0
        %v1166 = vadd.f32 %v740, %v1165
        %v1167 = vpop.f32.mrb[0].mxu0
        %v1168 = vadd.f32 %v744, %v1167
        %1169 = vmatprep.mubr.bf16.mxu0 0
        %1170 = vmatmul.mubr.bf16.gmra.mrb[0].mxu0 %v847
        %v1171 = vpop.f32.mrb[0].mxu0
        %v1172 = vadd.f32 %v740, %v1171
        %v1173 = vpop.f32.mrb[0].mxu0
        %v1174 = vadd.f32 %v744, %v1173
        %v1175 = vpop.f32.mrb[0].mxu0
        %v1176 = vadd.f32 %v740, %v1175
        %v1177 = vpop.f32.mrb[0].mxu0
        %v1178 = vadd.f32 %v744, %v1177
        %1179 = vmatprep.mubr.bf16.mxu0 0
        %1180 = vmatmul.mubr.bf16.gmra.mrb[0].mxu0 %v850
        %v1181 = vpop.f32.mrb[0].mxu0
        %v1182 = vadd.f32 %v740, %v1181
        %v1183 = vpop.f32.mrb[0].mxu0
        %v1184 = vadd.f32 %v744, %v1183
        %v1185 = vpop.f32.mrb[0].mxu0
        %v1186 = vadd.f32 %v740, %v1185
        %v1187 = vpop.f32.mrb[0].mxu0
        %v1188 = vadd.f32 %v744, %v1187
        %1189 = vmatprep.mubr.bf16.mxu0 0
        %1190 = vmatmul.mubr.bf16.gmra.mrb[0].mxu0 %v853
        %v1191 = vpop.f32.mrb[0].mxu0
        %v1192 = vadd.f32 %v740, %v1191
        %v1193 = vpop.f32.mrb[0].mxu0
        %v1194 = vadd.f32 %v744, %v1193
        %v1195 = vpop.f32.mrb[0].mxu0
        %v1196 = vadd.f32 %v740, %v1195
        %v1197 = vpop.f32.mrb[0].mxu0
        %v1198 = vadd.f32 %v744, %v1197
        %1199 = vmatprep.mubr.bf16.mxu0 0
        %1200 = vmatmul.mubr.bf16.gmra.mrb[0].mxu0 %v856
        %v1201 = vpop.f32.mrb[0].mxu0
        %v1202 = vadd.f32 %v740, %v1201
        %v1203 = vpop.f32.mrb[0].mxu0
        %v1204 = vadd.f32 %v744, %v1203
        %v1205 = vpop.f32.mrb[0].mxu0
        %v1206 = vadd.f32 %v740, %v1205
        %v1207 = vpop.f32.mrb[0].mxu0
        %v1208 = vadd.f32 %v744, %v1207
        %1209 = vmatprep.mubr.bf16.mxu0 0
        %1210 = vmatmul.mubr.bf16.gmra.mrb[0].mxu0 %v859
        %v1211 = vpop.f32.mrb[0].mxu0
        %v1212 = vadd.f32 %v740, %v1211
        %v1213 = vpop.f32.mrb[0].mxu0
        %v1214 = vadd.f32 %v744, %v1213
        %v1215 = vpop.f32.mrb[0].mxu0
        %v1216 = vadd.f32 %v740, %v1215
        %v1217 = vpop.f32.mrb[0].mxu0
        %v1218 = vadd.f32 %v744, %v1217
        %1219 = vmatprep.mubr.bf16.mxu0 0
        %1220 = vmatmul.mubr.bf16.gmra.mrb[0].mxu0 %v862
        %v1221 = vpop.f32.mrb[0].mxu0
        %v1222 = vadd.f32 %v740, %v1221
        %v1223 = vpop.f32.mrb[0].mxu0
        %v1224 = vadd.f32 %v744, %v1223
        %v1225 = vpop.f32.mrb[0].mxu0
        %v1226 = vadd.f32 %v740, %v1225
        %v1227 = vpop.f32.mrb[0].mxu0
        %v1228 = vadd.f32 %v744, %v1227
        %1229 = vdwg.mxu0
        %1230 = vmatprep.subr.bf16.mxu0 %v875
        %1231 = vmatpush1.bf16.msra.mxu0 %v872
        %1232 = vmatprep.subr.bf16.mxu0 0
        %1233 = vmatpush1.bf16.msra.mxu0 0
        %1234 = vmatprep.subr.bf16.mxu0 0
        %1235 = vmatpush1.bf16.msra.mxu0 0
        %1236 = vmatprep.subr.bf16.mxu0 0
        %1237 = vmatpush1.bf16.msra.mxu0 0
        %1238 = vmatprep.subr.bf16.mxu0 0
        %1239 = vmatpush1.bf16.msra.mxu0 0
        %1240 = vmatprep.subr.bf16.mxu0 0
        %1241 = vmatpush1.bf16.msra.mxu0 0
        %1242 = vmatprep.subr.bf16.mxu0 0
        %1243 = vmatpush1.bf16.msra.mxu0 0
        %1244 = vmatprep.subr.bf16.mxu0 0
        %1245 = vmatpush1.bf16.msra.mxu0 0
        %1246 = vmatprep.subr.bf16.mxu0 0
        %1247 = vmatpush1.bf16.msra.mxu0 0
        %1248 = vmatprep.subr.bf16.mxu0 0
        %1249 = vmatpush1.bf16.msra.mxu0 0
        %1250 = vmatprep.subr.bf16.mxu0 0
        %1251 = vmatpush1.bf16.msra.mxu0 0
        %1252 = vmatprep.subr.bf16.mxu0 0
        %1253 = vmatpush1.bf16.msra.mxu0 0
        %1254 = vmatprep.subr.bf16.mxu0 0
        %1255 = vmatpush1.bf16.msra.mxu0 0
        %1256 = vmatprep.subr.bf16.mxu0 0
        %1257 = vmatpush1.bf16.msra.mxu0 0
        %1258 = vmatprep.subr.bf16.mxu0 0
        %1259 = vmatpush1.bf16.msra.mxu0 0
        %1260 = vmatprep.subr.bf16.mxu0 0
        %1261 = vmatpush1.bf16.msra.mxu0 0
        %1262 = vmatprep.mubr.bf16.mxu0 0
        %1263 = vmatmul.mubr.bf16.gmra.mrb[0].mxu0 %v769
        %v1264 = vpop.f32.mrb[0].mxu0
        %v1265 = vadd.f32 %v748, %v1264
        %v1266 = vpop.f32.mrb[0].mxu0
        %v1267 = vadd.f32 %v752, %v1266
        %v1268 = vpop.f32.mrb[0].mxu0
        %v1269 = vadd.f32 %v748, %v1268
        %v1270 = vpop.f32.mrb[0].mxu0
        %v1271 = vadd.f32 %v752, %v1270
        %1272 = vmatprep.mubr.bf16.mxu0 0
        %1273 = vmatmul.mubr.bf16.gmra.mrb[0].mxu0 %v772
        %v1274 = vpop.f32.mrb[0].mxu0
        %v1275 = vadd.f32 %v748, %v1274
        %v1276 = vpop.f32.mrb[0].mxu0
        %v1277 = vadd.f32 %v752, %v1276
        %v1278 = vpop.f32.mrb[0].mxu0
        %v1279 = vadd.f32 %v748, %v1278
        %v1280 = vpop.f32.mrb[0].mxu0
        %v1281 = vadd.f32 %v752, %v1280
        %1282 = vmatprep.mubr.bf16.mxu0 0
        %1283 = vmatmul.mubr.bf16.gmra.mrb[0].mxu0 %v775
        %v1284 = vpop.f32.mrb[0].mxu0
        %v1285 = vadd.f32 %v748, %v1284
        %v1286 = vpop.f32.mrb[0].mxu0
        %v1287 = vadd.f32 %v752, %v1286
        %v1288 = vpop.f32.mrb[0].mxu0
        %v1289 = vadd.f32 %v748, %v1288
        %v1290 = vpop.f32.mrb[0].mxu0
        %v1291 = vadd.f32 %v752, %v1290
        %1292 = vmatprep.mubr.bf16.mxu0 0
        %1293 = vmatmul.mubr.bf16.gmra.mrb[0].mxu0 %v778
        %v1294 = vpop.f32.mrb[0].mxu0
        %v1295 = vadd.f32 %v748, %v1294
        %v1296 = vpop.f32.mrb[0].mxu0
        %v1297 = vadd.f32 %v752, %v1296
        %v1298 = vpop.f32.mrb[0].mxu0
        %v1299 = vadd.f32 %v748, %v1298
        %v1300 = vpop.f32.mrb[0].mxu0
        %v1301 = vadd.f32 %v752, %v1300
        %1302 = vmatprep.mubr.bf16.mxu0 0
        %1303 = vmatmul.mubr.bf16.gmra.mrb[0].mxu0 %v781
        %v1304 = vpop.f32.mrb[0].mxu0
        %v1305 = vadd.f32 %v748, %v1304
        %v1306 = vpop.f32.mrb[0].mxu0
        %v1307 = vadd.f32 %v752, %v1306
        %v1308 = vpop.f32.mrb[0].mxu0
        %v1309 = vadd.f32 %v748, %v1308
        %v1310 = vpop.f32.mrb[0].mxu0
        %v1311 = vadd.f32 %v752, %v1310
        %1312 = vmatprep.mubr.bf16.mxu0 0
        %1313 = vmatmul.mubr.bf16.gmra.mrb[0].mxu0 %v784
        %v1314 = vpop.f32.mrb[0].mxu0
        %v1315 = vadd.f32 %v748, %v1314
        %v1316 = vpop.f32.mrb[0].mxu0
        %v1317 = vadd.f32 %v752, %v1316
        %v1318 = vpop.f32.mrb[0].mxu0
        %v1319 = vadd.f32 %v748, %v1318
        %v1320 = vpop.f32.mrb[0].mxu0
        %v1321 = vadd.f32 %v752, %v1320
        %1322 = vmatprep.mubr.bf16.mxu0 0
        %1323 = vmatmul.mubr.bf16.gmra.mrb[0].mxu0 %v787
        %v1324 = vpop.f32.mrb[0].mxu0
        %v1325 = vadd.f32 %v748, %v1324
        %v1326 = vpop.f32.mrb[0].mxu0
        %v1327 = vadd.f32 %v752, %v1326
        %v1328 = vpop.f32.mrb[0].mxu0
        %v1329 = vadd.f32 %v748, %v1328
        %v1330 = vpop.f32.mrb[0].mxu0
        %v1331 = vadd.f32 %v752, %v1330
        %1332 = vmatprep.mubr.bf16.mxu0 0
        %1333 = vmatmul.mubr.bf16.gmra.mrb[0].mxu0 %v790
        %v1334 = vpop.f32.mrb[0].mxu0
        %v1335 = vadd.f32 %v748, %v1334
        %v1336 = vpop.f32.mrb[0].mxu0
        %v1337 = vadd.f32 %v752, %v1336
        %v1338 = vpop.f32.mrb[0].mxu0
        %v1339 = vadd.f32 %v748, %v1338
        %v1340 = vpop.f32.mrb[0].mxu0
        %v1341 = vadd.f32 %v752, %v1340
        %1342 = vmatprep.mubr.bf16.mxu0 0
        %1343 = vmatmul.mubr.bf16.gmra.mrb[0].mxu0 %v793
        %v1344 = vpop.f32.mrb[0].mxu0
        %v1345 = vadd.f32 %v748, %v1344
        %v1346 = vpop.f32.mrb[0].mxu0
        %v1347 = vadd.f32 %v752, %v1346
        %v1348 = vpop.f32.mrb[0].mxu0
        %v1349 = vadd.f32 %v748, %v1348
        %v1350 = vpop.f32.mrb[0].mxu0
        %v1351 = vadd.f32 %v752, %v1350
        %1352 = vmatprep.mubr.bf16.mxu0 0
        %1353 = vmatmul.mubr.bf16.gmra.mrb[0].mxu0 %v796
        %v1354 = vpop.f32.mrb[0].mxu0
        %v1355 = vadd.f32 %v748, %v1354
        %v1356 = vpop.f32.mrb[0].mxu0
        %v1357 = vadd.f32 %v752, %v1356
        %v1358 = vpop.f32.mrb[0].mxu0
        %v1359 = vadd.f32 %v748, %v1358
        %v1360 = vpop.f32.mrb[0].mxu0
        %v1361 = vadd.f32 %v752, %v1360
        %1362 = vmatprep.mubr.bf16.mxu0 0
        %1363 = vmatmul.mubr.bf16.gmra.mrb[0].mxu0 %v799
        %v1364 = vpop.f32.mrb[0].mxu0
        %v1365 = vadd.f32 %v748, %v1364
        %v1366 = vpop.f32.mrb[0].mxu0
        %v1367 = vadd.f32 %v752, %v1366
        %v1368 = vpop.f32.mrb[0].mxu0
        %v1369 = vadd.f32 %v748, %v1368
        %v1370 = vpop.f32.mrb[0].mxu0
        %v1371 = vadd.f32 %v752, %v1370
        %1372 = vmatprep.mubr.bf16.mxu0 0
        %1373 = vmatmul.mubr.bf16.gmra.mrb[0].mxu0 %v802
        %v1374 = vpop.f32.mrb[0].mxu0
        %v1375 = vadd.f32 %v748, %v1374
        %v1376 = vpop.f32.mrb[0].mxu0
        %v1377 = vadd.f32 %v752, %v1376
        %v1378 = vpop.f32.mrb[0].mxu0
        %v1379 = vadd.f32 %v748, %v1378
        %v1380 = vpop.f32.mrb[0].mxu0
        %v1381 = vadd.f32 %v752, %v1380
        %1382 = vmatprep.mubr.bf16.mxu0 0
        %1383 = vmatmul.mubr.bf16.gmra.mrb[0].mxu0 %v805
        %v1384 = vpop.f32.mrb[0].mxu0
        %v1385 = vadd.f32 %v748, %v1384
        %v1386 = vpop.f32.mrb[0].mxu0
        %v1387 = vadd.f32 %v752, %v1386
        %v1388 = vpop.f32.mrb[0].mxu0
        %v1389 = vadd.f32 %v748, %v1388
        %v1390 = vpop.f32.mrb[0].mxu0
        %v1391 = vadd.f32 %v752, %v1390
        %1392 = vmatprep.mubr.bf16.mxu0 0
        %1393 = vmatmul.mubr.bf16.gmra.mrb[0].mxu0 %v808
        %v1394 = vpop.f32.mrb[0].mxu0
        %v1395 = vadd.f32 %v748, %v1394
        %v1396 = vpop.f32.mrb[0].mxu0
        %v1397 = vadd.f32 %v752, %v1396
        %v1398 = vpop.f32.mrb[0].mxu0
        %v1399 = vadd.f32 %v748, %v1398
        %v1400 = vpop.f32.mrb[0].mxu0
        %v1401 = vadd.f32 %v752, %v1400
        %1402 = vmatprep.mubr.bf16.mxu0 0
        %1403 = vmatmul.mubr.bf16.gmra.mrb[0].mxu0 %v811
        %v1404 = vpop.f32.mrb[0].mxu0
        %v1405 = vadd.f32 %v748, %v1404
        %v1406 = vpop.f32.mrb[0].mxu0
        %v1407 = vadd.f32 %v752, %v1406
        %v1408 = vpop.f32.mrb[0].mxu0
        %v1409 = vadd.f32 %v748, %v1408
        %v1410 = vpop.f32.mrb[0].mxu0
        %v1411 = vadd.f32 %v752, %v1410
        %1412 = vmatprep.mubr.bf16.mxu0 0
        %1413 = vmatmul.mubr.bf16.gmra.mrb[0].mxu0 %v814
        %v1414 = vpop.f32.mrb[0].mxu0
        %v1415 = vadd.f32 %v748, %v1414
        %v1416 = vpop.f32.mrb[0].mxu0
        %v1417 = vadd.f32 %v752, %v1416
        %v1418 = vpop.f32.mrb[0].mxu0
        %v1419 = vadd.f32 %v748, %v1418
        %v1420 = vpop.f32.mrb[0].mxu0
        %v1421 = vadd.f32 %v752, %v1420
        %1422 = vmatprep.mubr.bf16.mxu0 0
        %1423 = vmatmul.mubr.bf16.gmra.mrb[0].mxu0 %v817
        %v1424 = vpop.f32.mrb[0].mxu0
        %v1425 = vadd.f32 %v748, %v1424
        %v1426 = vpop.f32.mrb[0].mxu0
        %v1427 = vadd.f32 %v752, %v1426
        %v1428 = vpop.f32.mrb[0].mxu0
        %v1429 = vadd.f32 %v748, %v1428
        %v1430 = vpop.f32.mrb[0].mxu0
        %v1431 = vadd.f32 %v752, %v1430
        %1432 = vmatprep.mubr.bf16.mxu0 0
        %1433 = vmatmul.mubr.bf16.gmra.mrb[0].mxu0 %v820
        %v1434 = vpop.f32.mrb[0].mxu0
        %v1435 = vadd.f32 %v748, %v1434
        %v1436 = vpop.f32.mrb[0].mxu0
        %v1437 = vadd.f32 %v752, %v1436
        %v1438 = vpop.f32.mrb[0].mxu0
        %v1439 = vadd.f32 %v748, %v1438
        %v1440 = vpop.f32.mrb[0].mxu0
        %v1441 = vadd.f32 %v752, %v1440
        %1442 = vmatprep.mubr.bf16.mxu0 0
        %1443 = vmatmul.mubr.bf16.gmra.mrb[0].mxu0 %v823
        %v1444 = vpop.f32.mrb[0].mxu0
        %v1445 = vadd.f32 %v748, %v1444
        %v1446 = vpop.f32.mrb[0].mxu0
        %v1447 = vadd.f32 %v752, %v1446
        %v1448 = vpop.f32.mrb[0].mxu0
        %v1449 = vadd.f32 %v748, %v1448
        %v1450 = vpop.f32.mrb[0].mxu0
        %v1451 = vadd.f32 %v752, %v1450
        %1452 = vmatprep.mubr.bf16.mxu0 0
        %1453 = vmatmul.mubr.bf16.gmra.mrb[0].mxu0 %v826
        %v1454 = vpop.f32.mrb[0].mxu0
        %v1455 = vadd.f32 %v748, %v1454
        %v1456 = vpop.f32.mrb[0].mxu0
        %v1457 = vadd.f32 %v752, %v1456
        %v1458 = vpop.f32.mrb[0].mxu0
        %v1459 = vadd.f32 %v748, %v1458
        %v1460 = vpop.f32.mrb[0].mxu0
        %v1461 = vadd.f32 %v752, %v1460
        %1462 = vmatprep.mubr.bf16.mxu0 0
        %1463 = vmatmul.mubr.bf16.gmra.mrb[0].mxu0 %v829
        %v1464 = vpop.f32.mrb[0].mxu0
        %v1465 = vadd.f32 %v748, %v1464
        %v1466 = vpop.f32.mrb[0].mxu0
        %v1467 = vadd.f32 %v752, %v1466
        %v1468 = vpop.f32.mrb[0].mxu0
        %v1469 = vadd.f32 %v748, %v1468
        %v1470 = vpop.f32.mrb[0].mxu0
        %v1471 = vadd.f32 %v752, %v1470
        %1472 = vmatprep.mubr.bf16.mxu0 0
        %1473 = vmatmul.mubr.bf16.gmra.mrb[0].mxu0 %v832
        %v1474 = vpop.f32.mrb[0].mxu0
        %v1475 = vadd.f32 %v748, %v1474
        %v1476 = vpop.f32.mrb[0].mxu0
        %v1477 = vadd.f32 %v752, %v1476
        %v1478 = vpop.f32.mrb[0].mxu0
        %v1479 = vadd.f32 %v748, %v1478
        %v1480 = vpop.f32.mrb[0].mxu0
        %v1481 = vadd.f32 %v752, %v1480
        %1482 = vmatprep.mubr.bf16.mxu0 0
        %1483 = vmatmul.mubr.bf16.gmra.mrb[0].mxu0 %v835
        %v1484 = vpop.f32.mrb[0].mxu0
        %v1485 = vadd.f32 %v748, %v1484
        %v1486 = vpop.f32.mrb[0].mxu0
        %v1487 = vadd.f32 %v752, %v1486
        %v1488 = vpop.f32.mrb[0].mxu0
        %v1489 = vadd.f32 %v748, %v1488
        %v1490 = vpop.f32.mrb[0].mxu0
        %v1491 = vadd.f32 %v752, %v1490
        %1492 = vmatprep.mubr.bf16.mxu0 0
        %1493 = vmatmul.mubr.bf16.gmra.mrb[0].mxu0 %v838
        %v1494 = vpop.f32.mrb[0].mxu0
        %v1495 = vadd.f32 %v748, %v1494
        %v1496 = vpop.f32.mrb[0].mxu0
        %v1497 = vadd.f32 %v752, %v1496
        %v1498 = vpop.f32.mrb[0].mxu0
        %v1499 = vadd.f32 %v748, %v1498
        %v1500 = vpop.f32.mrb[0].mxu0
        %v1501 = vadd.f32 %v752, %v1500
        %1502 = vmatprep.mubr.bf16.mxu0 0
        %1503 = vmatmul.mubr.bf16.gmra.mrb[0].mxu0 %v841
        %v1504 = vpop.f32.mrb[0].mxu0
        %v1505 = vadd.f32 %v748, %v1504
        %v1506 = vpop.f32.mrb[0].mxu0
        %v1507 = vadd.f32 %v752, %v1506
        %v1508 = vpop.f32.mrb[0].mxu0
        %v1509 = vadd.f32 %v748, %v1508
        %v1510 = vpop.f32.mrb[0].mxu0
        %v1511 = vadd.f32 %v752, %v1510
        %1512 = vmatprep.mubr.bf16.mxu0 0
        %1513 = vmatmul.mubr.bf16.gmra.mrb[0].mxu0 %v844
        %v1514 = vpop.f32.mrb[0].mxu0
        %v1515 = vadd.f32 %v748, %v1514
        %v1516 = vpop.f32.mrb[0].mxu0
        %v1517 = vadd.f32 %v752, %v1516
        %v1518 = vpop.f32.mrb[0].mxu0
        %v1519 = vadd.f32 %v748, %v1518
        %v1520 = vpop.f32.mrb[0].mxu0
        %v1521 = vadd.f32 %v752, %v1520
        %1522 = vmatprep.mubr.bf16.mxu0 0
        %1523 = vmatmul.mubr.bf16.gmra.mrb[0].mxu0 %v847
        %v1524 = vpop.f32.mrb[0].mxu0
        %v1525 = vadd.f32 %v748, %v1524
        %v1526 = vpop.f32.mrb[0].mxu0
        %v1527 = vadd.f32 %v752, %v1526
        %v1528 = vpop.f32.mrb[0].mxu0
        %v1529 = vadd.f32 %v748, %v1528
        %v1530 = vpop.f32.mrb[0].mxu0
        %v1531 = vadd.f32 %v752, %v1530
        %1532 = vmatprep.mubr.bf16.mxu0 0
        %1533 = vmatmul.mubr.bf16.gmra.mrb[0].mxu0 %v850
        %v1534 = vpop.f32.mrb[0].mxu0
        %v1535 = vadd.f32 %v748, %v1534
        %v1536 = vpop.f32.mrb[0].mxu0
        %v1537 = vadd.f32 %v752, %v1536
        %v1538 = vpop.f32.mrb[0].mxu0
        %v1539 = vadd.f32 %v748, %v1538
        %v1540 = vpop.f32.mrb[0].mxu0
        %v1541 = vadd.f32 %v752, %v1540
        %1542 = vmatprep.mubr.bf16.mxu0 0
        %1543 = vmatmul.mubr.bf16.gmra.mrb[0].mxu0 %v853
        %v1544 = vpop.f32.mrb[0].mxu0
        %v1545 = vadd.f32 %v748, %v1544
        %v1546 = vpop.f32.mrb[0].mxu0
        %v1547 = vadd.f32 %v752, %v1546
        %v1548 = vpop.f32.mrb[0].mxu0
        %v1549 = vadd.f32 %v748, %v1548
        %v1550 = vpop.f32.mrb[0].mxu0
        %v1551 = vadd.f32 %v752, %v1550
        %1552 = vmatprep.mubr.bf16.mxu0 0
        %1553 = vmatmul.mubr.bf16.gmra.mrb[0].mxu0 %v856
        %v1554 = vpop.f32.mrb[0].mxu0
        %v1555 = vadd.f32 %v748, %v1554
        %v1556 = vpop.f32.mrb[0].mxu0
        %v1557 = vadd.f32 %v752, %v1556
        %v1558 = vpop.f32.mrb[0].mxu0
        %v1559 = vadd.f32 %v748, %v1558
        %v1560 = vpop.f32.mrb[0].mxu0
        %v1561 = vadd.f32 %v752, %v1560
        %1562 = vmatprep.mubr.bf16.mxu0 0
        %1563 = vmatmul.mubr.bf16.gmra.mrb[0].mxu0 %v859
        %v1564 = vpop.f32.mrb[0].mxu0
        %v1565 = vadd.f32 %v748, %v1564
        %v1566 = vpop.f32.mrb[0].mxu0
        %v1567 = vadd.f32 %v752, %v1566
        %v1568 = vpop.f32.mrb[0].mxu0
        %v1569 = vadd.f32 %v748, %v1568
        %v1570 = vpop.f32.mrb[0].mxu0
        %v1571 = vadd.f32 %v752, %v1570
        %1572 = vmatprep.mubr.bf16.mxu0 0
        %1573 = vmatmul.mubr.bf16.gmra.mrb[0].mxu0 %v862
        %v1574 = vpop.f32.mrb[0].mxu0
        %v1575 = vadd.f32 %v748, %v1574
        %v1576 = vpop.f32.mrb[0].mxu0
        %v1577 = vadd.f32 %v752, %v1576
        %v1578 = vpop.f32.mrb[0].mxu0
        %v1579 = vadd.f32 %v748, %v1578
        %v1580 = vpop.f32.mrb[0].mxu0
        %v1581 = vadd.f32 %v752, %v1580
        %1582 = vdwg.mxu0
        %v1583 = vmax.f32 %v912, 0.0
        %v1584 = vmax.f32 %v914, 0.0
        %v1585 = vmax.f32 %v1265, 0.0
        %v1586 = vmax.f32 %v1267, 0.0
        %v1587 = vmax.f32 %v916, 0.0
        %v1588 = vmax.f32 %v918, 0.0
        %v1589 = vmax.f32 %v1269, 0.0
        %v1590 = vmax.f32 %v1271, 0.0
        %v1591 = vmax.f32 %v922, 0.0
        %v1592 = vmax.f32 %v924, 0.0
        %v1593 = vmax.f32 %v1275, 0.0
        %v1594 = vmax.f32 %v1277, 0.0
        %v1595 = vmax.f32 %v926, 0.0
        %v1596 = vmax.f32 %v928, 0.0
        %v1597 = vmax.f32 %v1279, 0.0
        %v1598 = vmax.f32 %v1281, 0.0
        %v1599 = vmax.f32 %v932, 0.0
        %v1600 = vmax.f32 %v934, 0.0
        %v1601 = vmax.f32 %v1285, 0.0
        %v1602 = vmax.f32 %v1287, 0.0
        %v1603 = vmax.f32 %v936, 0.0
        %v1604 = vmax.f32 %v938, 0.0
        %v1605 = vmax.f32 %v1289, 0.0
        %v1606 = vmax.f32 %v1291, 0.0
        %v1607 = vmax.f32 %v942, 0.0
        %v1608 = vmax.f32 %v944, 0.0
        %v1609 = vmax.f32 %v1295, 0.0
        %v1610 = vmax.f32 %v1297, 0.0
        %v1611 = vmax.f32 %v946, 0.0
        %v1612 = vmax.f32 %v948, 0.0
        %v1613 = vmax.f32 %v1299, 0.0
        %v1614 = vmax.f32 %v1301, 0.0
        %v1615 = vmax.f32 %v952, 0.0
        %v1616 = vmax.f32 %v954, 0.0
        %v1617 = vmax.f32 %v1305, 0.0
        %v1618 = vmax.f32 %v1307, 0.0
        %v1619 = vmax.f32 %v956, 0.0
        %v1620 = vmax.f32 %v958, 0.0
        %v1621 = vmax.f32 %v1309, 0.0
        %v1622 = vmax.f32 %v1311, 0.0
        %v1623 = vmax.f32 %v962, 0.0
        %v1624 = vmax.f32 %v964, 0.0
        %v1625 = vmax.f32 %v1315, 0.0
        %v1626 = vmax.f32 %v1317, 0.0
        %v1627 = vmax.f32 %v966, 0.0
        %v1628 = vmax.f32 %v968, 0.0
        %v1629 = vmax.f32 %v1319, 0.0
        %v1630 = vmax.f32 %v1321, 0.0
        %v1631 = vmax.f32 %v972, 0.0
        %v1632 = vmax.f32 %v974, 0.0
        %v1633 = vmax.f32 %v1325, 0.0
        %v1634 = vmax.f32 %v1327, 0.0
        %v1635 = vmax.f32 %v976, 0.0
        %v1636 = vmax.f32 %v978, 0.0
        %v1637 = vmax.f32 %v1329, 0.0
        %v1638 = vmax.f32 %v1331, 0.0
        %v1639 = vmax.f32 %v982, 0.0
        %v1640 = vmax.f32 %v984, 0.0
        %v1641 = vmax.f32 %v1335, 0.0
        %v1642 = vmax.f32 %v1337, 0.0
        %v1643 = vmax.f32 %v986, 0.0
        %v1644 = vmax.f32 %v988, 0.0
        %v1645 = vmax.f32 %v1339, 0.0
        %v1646 = vmax.f32 %v1341, 0.0
        %v1647 = vmax.f32 %v992, 0.0
        %v1648 = vmax.f32 %v994, 0.0
        %v1649 = vmax.f32 %v1345, 0.0
        %v1650 = vmax.f32 %v1347, 0.0
        %v1651 = vmax.f32 %v996, 0.0
        %v1652 = vmax.f32 %v998, 0.0
        %v1653 = vmax.f32 %v1349, 0.0
        %v1654 = vmax.f32 %v1351, 0.0
        %v1655 = vmax.f32 %v1002, 0.0
        %v1656 = vmax.f32 %v1004, 0.0
        %v1657 = vmax.f32 %v1355, 0.0
        %v1658 = vmax.f32 %v1357, 0.0
        %v1659 = vmax.f32 %v1006, 0.0
        %v1660 = vmax.f32 %v1008, 0.0
        %v1661 = vmax.f32 %v1359, 0.0
        %v1662 = vmax.f32 %v1361, 0.0
        %v1663 = vmax.f32 %v1012, 0.0
        %v1664 = vmax.f32 %v1014, 0.0
        %v1665 = vmax.f32 %v1365, 0.0
        %v1666 = vmax.f32 %v1367, 0.0
        %v1667 = vmax.f32 %v1016, 0.0
        %v1668 = vmax.f32 %v1018, 0.0
        %v1669 = vmax.f32 %v1369, 0.0
        %v1670 = vmax.f32 %v1371, 0.0
        %v1671 = vmax.f32 %v1022, 0.0
        %v1672 = vmax.f32 %v1024, 0.0
        %v1673 = vmax.f32 %v1375, 0.0
        %v1674 = vmax.f32 %v1377, 0.0
        %v1675 = vmax.f32 %v1026, 0.0
        %v1676 = vmax.f32 %v1028, 0.0
        %v1677 = vmax.f32 %v1379, 0.0
        %v1678 = vmax.f32 %v1381, 0.0
        %v1679 = vmax.f32 %v1032, 0.0
        %v1680 = vmax.f32 %v1034, 0.0
        %v1681 = vmax.f32 %v1385, 0.0
        %v1682 = vmax.f32 %v1387, 0.0
        %v1683 = vmax.f32 %v1036, 0.0
        %v1684 = vmax.f32 %v1038, 0.0
        %v1685 = vmax.f32 %v1389, 0.0
        %v1686 = vmax.f32 %v1391, 0.0
        %v1687 = vmax.f32 %v1042, 0.0
        %v1688 = vmax.f32 %v1044, 0.0
        %v1689 = vmax.f32 %v1395, 0.0
        %v1690 = vmax.f32 %v1397, 0.0
        %v1691 = vmax.f32 %v1046, 0.0
        %v1692 = vmax.f32 %v1048, 0.0
        %v1693 = vmax.f32 %v1399, 0.0
        %v1694 = vmax.f32 %v1401, 0.0
        %v1695 = vmax.f32 %v1052, 0.0
        %v1696 = vmax.f32 %v1054, 0.0
        %v1697 = vmax.f32 %v1405, 0.0
        %v1698 = vmax.f32 %v1407, 0.0
        %v1699 = vmax.f32 %v1056, 0.0
        %v1700 = vmax.f32 %v1058, 0.0
        %v1701 = vmax.f32 %v1409, 0.0
        %v1702 = vmax.f32 %v1411, 0.0
        %v1703 = vmax.f32 %v1062, 0.0
        %v1704 = vmax.f32 %v1064, 0.0
        %v1705 = vmax.f32 %v1415, 0.0
        %v1706 = vmax.f32 %v1417, 0.0
        %v1707 = vmax.f32 %v1066, 0.0
        %v1708 = vmax.f32 %v1068, 0.0
        %v1709 = vmax.f32 %v1419, 0.0
        %v1710 = vmax.f32 %v1421, 0.0
        %v1711 = vmax.f32 %v1072, 0.0
        %v1712 = vmax.f32 %v1074, 0.0
        %v1713 = vmax.f32 %v1425, 0.0
        %v1714 = vmax.f32 %v1427, 0.0
        %v1715 = vmax.f32 %v1076, 0.0
        %v1716 = vmax.f32 %v1078, 0.0
        %v1717 = vmax.f32 %v1429, 0.0
        %v1718 = vmax.f32 %v1431, 0.0
        %v1719 = vmax.f32 %v1082, 0.0
        %v1720 = vmax.f32 %v1084, 0.0
        %v1721 = vmax.f32 %v1435, 0.0
        %v1722 = vmax.f32 %v1437, 0.0
        %v1723 = vmax.f32 %v1086, 0.0
        %v1724 = vmax.f32 %v1088, 0.0
        %v1725 = vmax.f32 %v1439, 0.0
        %v1726 = vmax.f32 %v1441, 0.0
        %v1727 = vmax.f32 %v1092, 0.0
        %v1728 = vmax.f32 %v1094, 0.0
        %v1729 = vmax.f32 %v1445, 0.0
        %v1730 = vmax.f32 %v1447, 0.0
        %v1731 = vmax.f32 %v1096, 0.0
        %v1732 = vmax.f32 %v1098, 0.0
        %v1733 = vmax.f32 %v1449, 0.0
        %v1734 = vmax.f32 %v1451, 0.0
        %v1735 = vmax.f32 %v1102, 0.0
        %v1736 = vmax.f32 %v1104, 0.0
        %v1737 = vmax.f32 %v1455, 0.0
        %v1738 = vmax.f32 %v1457, 0.0
        %v1739 = vmax.f32 %v1106, 0.0
        %v1740 = vmax.f32 %v1108, 0.0
        %v1741 = vmax.f32 %v1459, 0.0
        %v1742 = vmax.f32 %v1461, 0.0
        %v1743 = vmax.f32 %v1112, 0.0
        %v1744 = vmax.f32 %v1114, 0.0
        %v1745 = vmax.f32 %v1465, 0.0
        %v1746 = vmax.f32 %v1467, 0.0
        %v1747 = vmax.f32 %v1116, 0.0
        %v1748 = vmax.f32 %v1118, 0.0
        %v1749 = vmax.f32 %v1469, 0.0
        %v1750 = vmax.f32 %v1471, 0.0
        %v1751 = vmax.f32 %v1122, 0.0
        %v1752 = vmax.f32 %v1124, 0.0
        %v1753 = vmax.f32 %v1475, 0.0
        %v1754 = vmax.f32 %v1477, 0.0
        %v1755 = vmax.f32 %v1126, 0.0
        %v1756 = vmax.f32 %v1128, 0.0
        %v1757 = vmax.f32 %v1479, 0.0
        %v1758 = vmax.f32 %v1481, 0.0
        %v1759 = vmax.f32 %v1132, 0.0
        %v1760 = vmax.f32 %v1134, 0.0
        %v1761 = vmax.f32 %v1485, 0.0
        %v1762 = vmax.f32 %v1487, 0.0
        %v1763 = vmax.f32 %v1136, 0.0
        %v1764 = vmax.f32 %v1138, 0.0
        %v1765 = vmax.f32 %v1489, 0.0
        %v1766 = vmax.f32 %v1491, 0.0
        %v1767 = vmax.f32 %v1142, 0.0
        %v1768 = vmax.f32 %v1144, 0.0
        %v1769 = vmax.f32 %v1495, 0.0
        %v1770 = vmax.f32 %v1497, 0.0
        %v1771 = vmax.f32 %v1146, 0.0
        %v1772 = vmax.f32 %v1148, 0.0
        %v1773 = vmax.f32 %v1499, 0.0
        %v1774 = vmax.f32 %v1501, 0.0
        %v1775 = vmax.f32 %v1152, 0.0
        %v1776 = vmax.f32 %v1154, 0.0
        %v1777 = vmax.f32 %v1505, 0.0
        %v1778 = vmax.f32 %v1507, 0.0
        %v1779 = vmax.f32 %v1156, 0.0
        %v1780 = vmax.f32 %v1158, 0.0
        %v1781 = vmax.f32 %v1509, 0.0
        %v1782 = vmax.f32 %v1511, 0.0
        %v1783 = vmax.f32 %v1162, 0.0
        %v1784 = vmax.f32 %v1164, 0.0
        %v1785 = vmax.f32 %v1515, 0.0
        %v1786 = vmax.f32 %v1517, 0.0
        %v1787 = vmax.f32 %v1166, 0.0
        %v1788 = vmax.f32 %v1168, 0.0
        %v1789 = vmax.f32 %v1519, 0.0
        %v1790 = vmax.f32 %v1521, 0.0
        %v1791 = vmax.f32 %v1172, 0.0
        %v1792 = vmax.f32 %v1174, 0.0
        %v1793 = vmax.f32 %v1525, 0.0
        %v1794 = vmax.f32 %v1527, 0.0
        %v1795 = vmax.f32 %v1176, 0.0
        %v1796 = vmax.f32 %v1178, 0.0
        %v1797 = vmax.f32 %v1529, 0.0
        %v1798 = vmax.f32 %v1531, 0.0
        %v1799 = vmax.f32 %v1182, 0.0
        %v1800 = vmax.f32 %v1184, 0.0
        %v1801 = vmax.f32 %v1535, 0.0
        %v1802 = vmax.f32 %v1537, 0.0
        %v1803 = vmax.f32 %v1186, 0.0
        %v1804 = vmax.f32 %v1188, 0.0
        %v1805 = vmax.f32 %v1539, 0.0
        %v1806 = vmax.f32 %v1541, 0.0
        %v1807 = vmax.f32 %v1192, 0.0
        %v1808 = vmax.f32 %v1194, 0.0
        %v1809 = vmax.f32 %v1545, 0.0
        %v1810 = vmax.f32 %v1547, 0.0
        %v1811 = vmax.f32 %v1196, 0.0
        %v1812 = vmax.f32 %v1198, 0.0
        %v1813 = vmax.f32 %v1549, 0.0
        %v1814 = vmax.f32 %v1551, 0.0
        %v1815 = vmax.f32 %v1202, 0.0
        %v1816 = vmax.f32 %v1204, 0.0
        %v1817 = vmax.f32 %v1555, 0.0
        %v1818 = vmax.f32 %v1557, 0.0
        %v1819 = vmax.f32 %v1206, 0.0
        %v1820 = vmax.f32 %v1208, 0.0
        %v1821 = vmax.f32 %v1559, 0.0
        %v1822 = vmax.f32 %v1561, 0.0
        %v1823 = vmax.f32 %v1212, 0.0
        %v1824 = vmax.f32 %v1214, 0.0
        %v1825 = vmax.f32 %v1565, 0.0
        %v1826 = vmax.f32 %v1567, 0.0
        %v1827 = vmax.f32 %v1216, 0.0
        %v1828 = vmax.f32 %v1218, 0.0
        %v1829 = vmax.f32 %v1569, 0.0
        %v1830 = vmax.f32 %v1571, 0.0
        %v1831 = vmax.f32 %v1222, 0.0
        %v1832 = vmax.f32 %v1224, 0.0
        %v1833 = vmax.f32 %v1575, 0.0
        %v1834 = vmax.f32 %v1577, 0.0
        %v1835 = vmax.f32 %v1226, 0.0
        %v1836 = vmax.f32 %v1228, 0.0
        %v1837 = vmax.f32 %v1579, 0.0
        %v1838 = vmax.f32 %v1581, 0.0
        %v1839 = vpack.c.bf16 %v1587, %v1583
        %v1840 = vpack.c.bf16 %v1588, %v1584
        %v1841 = vpack.c.bf16 %v1589, %v1585
        %v1842 = vpack.c.bf16 %v1590, %v1586
        %v1843 = vpack.c.bf16 %v1595, %v1591
        %v1844 = vpack.c.bf16 %v1596, %v1592
        %v1845 = vpack.c.bf16 %v1597, %v1593
        %v1846 = vpack.c.bf16 %v1598, %v1594
        %v1847 = vpack.c.bf16 %v1603, %v1599
        %v1848 = vpack.c.bf16 %v1604, %v1600
        %v1849 = vpack.c.bf16 %v1605, %v1601
        %v1850 = vpack.c.bf16 %v1606, %v1602
        %v1851 = vpack.c.bf16 %v1611, %v1607
        %v1852 = vpack.c.bf16 %v1612, %v1608
        %v1853 = vpack.c.bf16 %v1613, %v1609
        %v1854 = vpack.c.bf16 %v1614, %v1610
        %v1855 = vpack.c.bf16 %v1619, %v1615
        %v1856 = vpack.c.bf16 %v1620, %v1616
        %v1857 = vpack.c.bf16 %v1621, %v1617
        %v1858 = vpack.c.bf16 %v1622, %v1618
        %v1859 = vpack.c.bf16 %v1627, %v1623
        %v1860 = vpack.c.bf16 %v1628, %v1624
        %v1861 = vpack.c.bf16 %v1629, %v1625
        %v1862 = vpack.c.bf16 %v1630, %v1626
        %v1863 = vpack.c.bf16 %v1635, %v1631
        %v1864 = vpack.c.bf16 %v1636, %v1632
        %v1865 = vpack.c.bf16 %v1637, %v1633
        %v1866 = vpack.c.bf16 %v1638, %v1634
        %v1867 = vpack.c.bf16 %v1643, %v1639
        %v1868 = vpack.c.bf16 %v1644, %v1640
        %v1869 = vpack.c.bf16 %v1645, %v1641
        %v1870 = vpack.c.bf16 %v1646, %v1642
        %v1871 = vpack.c.bf16 %v1651, %v1647
        %v1872 = vpack.c.bf16 %v1652, %v1648
        %v1873 = vpack.c.bf16 %v1653, %v1649
        %v1874 = vpack.c.bf16 %v1654, %v1650
        %v1875 = vpack.c.bf16 %v1659, %v1655
        %v1876 = vpack.c.bf16 %v1660, %v1656
        %v1877 = vpack.c.bf16 %v1661, %v1657
        %v1878 = vpack.c.bf16 %v1662, %v1658
        %v1879 = vpack.c.bf16 %v1667, %v1663
        %v1880 = vpack.c.bf16 %v1668, %v1664
        %v1881 = vpack.c.bf16 %v1669, %v1665
        %v1882 = vpack.c.bf16 %v1670, %v1666
        %v1883 = vpack.c.bf16 %v1675, %v1671
        %v1884 = vpack.c.bf16 %v1676, %v1672
        %v1885 = vpack.c.bf16 %v1677, %v1673
        %v1886 = vpack.c.bf16 %v1678, %v1674
        %v1887 = vpack.c.bf16 %v1683, %v1679
        %v1888 = vpack.c.bf16 %v1684, %v1680
        %v1889 = vpack.c.bf16 %v1685, %v1681
        %v1890 = vpack.c.bf16 %v1686, %v1682
        %v1891 = vpack.c.bf16 %v1691, %v1687
        %v1892 = vpack.c.bf16 %v1692, %v1688
        %v1893 = vpack.c.bf16 %v1693, %v1689
        %v1894 = vpack.c.bf16 %v1694, %v1690
        %v1895 = vpack.c.bf16 %v1699, %v1695
        %v1896 = vpack.c.bf16 %v1700, %v1696
        %v1897 = vpack.c.bf16 %v1701, %v1697
        %v1898 = vpack.c.bf16 %v1702, %v1698
        %v1899 = vpack.c.bf16 %v1707, %v1703
        %v1900 = vpack.c.bf16 %v1708, %v1704
        %v1901 = vpack.c.bf16 %v1709, %v1705
        %v1902 = vpack.c.bf16 %v1710, %v1706
        %v1903 = vpack.c.bf16 %v1715, %v1711
        %v1904 = vpack.c.bf16 %v1716, %v1712
        %v1905 = vpack.c.bf16 %v1717, %v1713
        %v1906 = vpack.c.bf16 %v1718, %v1714
        %v1907 = vpack.c.bf16 %v1723, %v1719
        %v1908 = vpack.c.bf16 %v1724, %v1720
        %v1909 = vpack.c.bf16 %v1725, %v1721
        %v1910 = vpack.c.bf16 %v1726, %v1722
        %v1911 = vpack.c.bf16 %v1731, %v1727
        %v1912 = vpack.c.bf16 %v1732, %v1728
        %v1913 = vpack.c.bf16 %v1733, %v1729
        %v1914 = vpack.c.bf16 %v1734, %v1730
        %v1915 = vpack.c.bf16 %v1739, %v1735
        %v1916 = vpack.c.bf16 %v1740, %v1736
        %v1917 = vpack.c.bf16 %v1741, %v1737
        %v1918 = vpack.c.bf16 %v1742, %v1738
        %v1919 = vpack.c.bf16 %v1747, %v1743
        %v1920 = vpack.c.bf16 %v1748, %v1744
        %v1921 = vpack.c.bf16 %v1749, %v1745
        %v1922 = vpack.c.bf16 %v1750, %v1746
        %v1923 = vpack.c.bf16 %v1755, %v1751
        %v1924 = vpack.c.bf16 %v1756, %v1752
        %v1925 = vpack.c.bf16 %v1757, %v1753
        %v1926 = vpack.c.bf16 %v1758, %v1754
        %v1927 = vpack.c.bf16 %v1763, %v1759
        %v1928 = vpack.c.bf16 %v1764, %v1760
        %v1929 = vpack.c.bf16 %v1765, %v1761
        %v1930 = vpack.c.bf16 %v1766, %v1762
        %v1931 = vpack.c.bf16 %v1771, %v1767
        %v1932 = vpack.c.bf16 %v1772, %v1768
        %v1933 = vpack.c.bf16 %v1773, %v1769
        %v1934 = vpack.c.bf16 %v1774, %v1770
        %v1935 = vpack.c.bf16 %v1779, %v1775
        %v1936 = vpack.c.bf16 %v1780, %v1776
        %v1937 = vpack.c.bf16 %v1781, %v1777
        %v1938 = vpack.c.bf16 %v1782, %v1778
        %v1939 = vpack.c.bf16 %v1787, %v1783
        %v1940 = vpack.c.bf16 %v1788, %v1784
        %v1941 = vpack.c.bf16 %v1789, %v1785
        %v1942 = vpack.c.bf16 %v1790, %v1786
        %v1943 = vpack.c.bf16 %v1795, %v1791
        %v1944 = vpack.c.bf16 %v1796, %v1792
        %v1945 = vpack.c.bf16 %v1797, %v1793
        %v1946 = vpack.c.bf16 %v1798, %v1794
        %v1947 = vpack.c.bf16 %v1803, %v1799
        %v1948 = vpack.c.bf16 %v1804, %v1800
        %v1949 = vpack.c.bf16 %v1805, %v1801
        %v1950 = vpack.c.bf16 %v1806, %v1802
        %v1951 = vpack.c.bf16 %v1811, %v1807
        %v1952 = vpack.c.bf16 %v1812, %v1808
        %v1953 = vpack.c.bf16 %v1813, %v1809
        %v1954 = vpack.c.bf16 %v1814, %v1810
        %v1955 = vpack.c.bf16 %v1819, %v1815
        %v1956 = vpack.c.bf16 %v1820, %v1816
        %v1957 = vpack.c.bf16 %v1821, %v1817
        %v1958 = vpack.c.bf16 %v1822, %v1818
        %v1959 = vpack.c.bf16 %v1827, %v1823
        %v1960 = vpack.c.bf16 %v1828, %v1824
        %v1961 = vpack.c.bf16 %v1829, %v1825
        %v1962 = vpack.c.bf16 %v1830, %v1826
        %v1963 = vpack.c.bf16 %v1835, %v1831
        %v1964 = vpack.c.bf16 %v1836, %v1832
        %v1965 = vpack.c.bf16 %v1837, %v1833
        %v1966 = vpack.c.bf16 %v1838, %v1834
        %v1967 = vld [vmem:[%s3] sm:$0xff]
        %v1968 = vld [vmem:[%s3 + $0x8] sm:$0xff]
        %v1969 = vld [vmem:[%s3 + $0x10] sm:$0xff]
        %v1970 = vld [vmem:[%s3 + $0x18] sm:$0xff]
        %v1971 = vld [vmem:[%s3 + $0x20] sm:$0xff]
        %v1972 = vld [vmem:[%s3 + $0x28] sm:$0xff]
        %v1973 = vld [vmem:[%s3 + $0x30] sm:$0xff]
        %v1974 = vld [vmem:[%s3 + $0x38] sm:$0xff]
        %v1975 = vld [vmem:[%s3 + $0x40] sm:$0xff]
        %v1976 = vld [vmem:[%s3 + $0x48] sm:$0xff]
        %v1977 = vld [vmem:[%s3 + $0x50] sm:$0xff]
        %v1978 = vld [vmem:[%s3 + $0x58] sm:$0xff]
        %v1979 = vld [vmem:[%s3 + $0x60] sm:$0xff]
        %v1980 = vld [vmem:[%s3 + $0x68] sm:$0xff]
        %v1981 = vld [vmem:[%s3 + $0x70] sm:$0xff]
        %v1982 = vld [vmem:[%s3 + $0x78] sm:$0xff]
        %v1983 = vld [vmem:[%s3 + $0x80] sm:$0xff]
        %v1984 = vld [vmem:[%s3 + $0x88] sm:$0xff]
        %v1985 = vld [vmem:[%s3 + $0x90] sm:$0xff]
        %v1986 = vld [vmem:[%s3 + $0x98] sm:$0xff]
        %v1987 = vld [vmem:[%s3 + $0xa0] sm:$0xff]
        %v1988 = vld [vmem:[%s3 + $0xa8] sm:$0xff]
        %v1989 = vld [vmem:[%s3 + $0xb0] sm:$0xff]
        %v1990 = vld [vmem:[%s3 + $0xb8] sm:$0xff]
        %v1991 = vld [vmem:[%s3 + $0xc0] sm:$0xff]
        %v1992 = vld [vmem:[%s3 + $0xc8] sm:$0xff]
        %v1993 = vld [vmem:[%s3 + $0xd0] sm:$0xff]
        %v1994 = vld [vmem:[%s3 + $0xd8] sm:$0xff]
        %v1995 = vld [vmem:[%s3 + $0xe0] sm:$0xff]
        %v1996 = vld [vmem:[%s3 + $0xe8] sm:$0xff]
        %v1997 = vld [vmem:[%s3 + $0xf0] sm:$0xff]
        %v1998 = vld [vmem:[%s3 + $0xf8] sm:$0xff]
        %v1999 = vld [vmem:[%s3 + $0x100] sm:$0xff]
        %v2000 = vld [vmem:[%s3 + $0x108] sm:$0xff]
        %v2001 = vld [vmem:[%s3 + $0x110] sm:$0xff]
        %v2002 = vld [vmem:[%s3 + $0x118] sm:$0xff]
        %v2003 = vld [vmem:[%s3 + $0x120] sm:$0xff]
        %v2004 = vld [vmem:[%s3 + $0x128] sm:$0xff]
        %v2005 = vld [vmem:[%s3 + $0x130] sm:$0xff]
        %v2006 = vld [vmem:[%s3 + $0x138] sm:$0xff]
        %v2007 = vld [vmem:[%s3 + $0x140] sm:$0xff]
        %v2008 = vld [vmem:[%s3 + $0x148] sm:$0xff]
        %v2009 = vld [vmem:[%s3 + $0x150] sm:$0xff]
        %v2010 = vld [vmem:[%s3 + $0x158] sm:$0xff]
        %v2011 = vld [vmem:[%s3 + $0x160] sm:$0xff]
        %v2012 = vld [vmem:[%s3 + $0x168] sm:$0xff]
        %v2013 = vld [vmem:[%s3 + $0x170] sm:$0xff]
        %v2014 = vld [vmem:[%s3 + $0x178] sm:$0xff]
        %v2015 = vld [vmem:[%s3 + $0x180] sm:$0xff]
        %v2016 = vld [vmem:[%s3 + $0x188] sm:$0xff]
        %v2017 = vld [vmem:[%s3 + $0x190] sm:$0xff]
        %v2018 = vld [vmem:[%s3 + $0x198] sm:$0xff]
        %v2019 = vld [vmem:[%s3 + $0x1a0] sm:$0xff]
        %v2020 = vld [vmem:[%s3 + $0x1a8] sm:$0xff]
        %v2021 = vld [vmem:[%s3 + $0x1b0] sm:$0xff]
        %v2022 = vld [vmem:[%s3 + $0x1b8] sm:$0xff]
        %v2023 = vld [vmem:[%s3 + $0x1c0] sm:$0xff]
        %v2024 = vld [vmem:[%s3 + $0x1c8] sm:$0xff]
        %v2025 = vld [vmem:[%s3 + $0x1d0] sm:$0xff]
        %v2026 = vld [vmem:[%s3 + $0x1d8] sm:$0xff]
        %v2027 = vld [vmem:[%s3 + $0x1e0] sm:$0xff]
        %v2028 = vld [vmem:[%s3 + $0x1e8] sm:$0xff]
        %v2029 = vld [vmem:[%s3 + $0x1f0] sm:$0xff]
        %v2030 = vld [vmem:[%s3 + $0x1f8] sm:$0xff]
        %v2031 = vld [vmem:[%s3 + $0x200] sm:$0xff]
        %v2032 = vld [vmem:[%s3 + $0x208] sm:$0xff]
        %v2033 = vld [vmem:[%s3 + $0x210] sm:$0xff]
        %v2034 = vld [vmem:[%s3 + $0x218] sm:$0xff]
        %v2035 = vld [vmem:[%s3 + $0x220] sm:$0xff]
        %v2036 = vld [vmem:[%s3 + $0x228] sm:$0xff]
        %v2037 = vld [vmem:[%s3 + $0x230] sm:$0xff]
        %v2038 = vld [vmem:[%s3 + $0x238] sm:$0xff]
        %v2039 = vld [vmem:[%s3 + $0x240] sm:$0xff]
        %v2040 = vld [vmem:[%s3 + $0x248] sm:$0xff]
        %v2041 = vld [vmem:[%s3 + $0x250] sm:$0xff]
        %v2042 = vld [vmem:[%s3 + $0x258] sm:$0xff]
        %v2043 = vld [vmem:[%s3 + $0x260] sm:$0xff]
        %v2044 = vld [vmem:[%s3 + $0x268] sm:$0xff]
        %v2045 = vld [vmem:[%s3 + $0x270] sm:$0xff]
        %v2046 = vld [vmem:[%s3 + $0x278] sm:$0xff]
        %v2047 = vld [vmem:[%s3 + $0x280] sm:$0xff]
        %v2048 = vld [vmem:[%s3 + $0x288] sm:$0xff]
        %v2049 = vld [vmem:[%s3 + $0x290] sm:$0xff]
        %v2050 = vld [vmem:[%s3 + $0x298] sm:$0xff]
        %v2051 = vld [vmem:[%s3 + $0x2a0] sm:$0xff]
        %v2052 = vld [vmem:[%s3 + $0x2a8] sm:$0xff]
        %v2053 = vld [vmem:[%s3 + $0x2b0] sm:$0xff]
        %v2054 = vld [vmem:[%s3 + $0x2b8] sm:$0xff]
        %v2055 = vld [vmem:[%s3 + $0x2c0] sm:$0xff]
        %v2056 = vld [vmem:[%s3 + $0x2c8] sm:$0xff]
        %v2057 = vld [vmem:[%s3 + $0x2d0] sm:$0xff]
        %v2058 = vld [vmem:[%s3 + $0x2d8] sm:$0xff]
        %v2059 = vld [vmem:[%s3 + $0x2e0] sm:$0xff]
        %v2060 = vld [vmem:[%s3 + $0x2e8] sm:$0xff]
        %v2061 = vld [vmem:[%s3 + $0x2f0] sm:$0xff]
        %v2062 = vld [vmem:[%s3 + $0x2f8] sm:$0xff]
        %v2063 = vld [vmem:[%s3 + $0x300] sm:$0xff]
        %v2064 = vld [vmem:[%s3 + $0x308] sm:$0xff]
        %v2065 = vld [vmem:[%s3 + $0x310] sm:$0xff]
        %v2066 = vld [vmem:[%s3 + $0x318] sm:$0xff]
        %v2067 = vld [vmem:[%s3 + $0x320] sm:$0xff]
        %v2068 = vld [vmem:[%s3 + $0x328] sm:$0xff]
        %v2069 = vld [vmem:[%s3 + $0x330] sm:$0xff]
        %v2070 = vld [vmem:[%s3 + $0x338] sm:$0xff]
        %v2071 = vld [vmem:[%s3 + $0x340] sm:$0xff]
        %v2072 = vld [vmem:[%s3 + $0x348] sm:$0xff]
        %v2073 = vld [vmem:[%s3 + $0x350] sm:$0xff]
        %v2074 = vld [vmem:[%s3 + $0x358] sm:$0xff]
        %v2075 = vld [vmem:[%s3 + $0x360] sm:$0xff]
        %v2076 = vld [vmem:[%s3 + $0x368] sm:$0xff]
        %v2077 = vld [vmem:[%s3 + $0x370] sm:$0xff]
        %v2078 = vld [vmem:[%s3 + $0x378] sm:$0xff]
        %v2079 = vld [vmem:[%s3 + $0x380] sm:$0xff]
        %v2080 = vld [vmem:[%s3 + $0x388] sm:$0xff]
        %v2081 = vld [vmem:[%s3 + $0x390] sm:$0xff]
        %v2082 = vld [vmem:[%s3 + $0x398] sm:$0xff]
        %v2083 = vld [vmem:[%s3 + $0x3a0] sm:$0xff]
        %v2084 = vld [vmem:[%s3 + $0x3a8] sm:$0xff]
        %v2085 = vld [vmem:[%s3 + $0x3b0] sm:$0xff]
        %v2086 = vld [vmem:[%s3 + $0x3b8] sm:$0xff]
        %v2087 = vld [vmem:[%s3 + $0x3c0] sm:$0xff]
        %v2088 = vld [vmem:[%s3 + $0x3c8] sm:$0xff]
        %v2089 = vld [vmem:[%s3 + $0x3d0] sm:$0xff]
        %v2090 = vld [vmem:[%s3 + $0x3d8] sm:$0xff]
        %v2091 = vld [vmem:[%s3 + $0x3e0] sm:$0xff]
        %v2092 = vld [vmem:[%s3 + $0x3e8] sm:$0xff]
        %v2093 = vld [vmem:[%s3 + $0x3f0] sm:$0xff]
        %v2094 = vld [vmem:[%s3 + $0x3f8] sm:$0xff]
        %v2095 = vld [vmem:[%s4] sm:$0xf]
        %v2097 = vlaneseq
        %v2098 = vshrl.u32 %v2097, 7
        %v2099 = vsub.s32 0, %v2098
        %v2100 = vrot.slane %v2095, %v2099
        %v2101 = vlaneseq
        %v2102 = vshrl.u32 %v2101, 7
        %v2103 = vsub.s32 1, %v2102
        %v2104 = vrot.slane %v2095, %v2103
        %v2105 = vlaneseq
        %v2106 = vshrl.u32 %v2105, 7
        %v2107 = vsub.s32 2, %v2106
        %v2108 = vrot.slane %v2095, %v2107
        %v2109 = vlaneseq
        %v2110 = vshrl.u32 %v2109, 7
        %v2111 = vsub.s32 3, %v2110
        %v2112 = vrot.slane %v2095, %v2111
        %v2245 = vunpack.c.l.b16 %v1967
        %v2246 = vunpack.c.h.b16 %v1967
        %v2247 = vunpack.c.l.b16 %v1968
        %v2248 = vunpack.c.h.b16 %v1968
        %v2249 = vunpack.c.l.b16 %v1969
        %v2250 = vunpack.c.h.b16 %v1969
        %v2251 = vunpack.c.l.b16 %v1970
        %v2252 = vunpack.c.h.b16 %v1970
        %v2253 = vunpack.c.l.b16 %v1971
        %v2254 = vunpack.c.h.b16 %v1971
        %v2255 = vunpack.c.l.b16 %v1972
        %v2256 = vunpack.c.h.b16 %v1972
        %v2257 = vunpack.c.l.b16 %v1973
        %v2258 = vunpack.c.h.b16 %v1973
        %v2259 = vunpack.c.l.b16 %v1974
        %v2260 = vunpack.c.h.b16 %v1974
        %v2261 = vunpack.c.l.b16 %v1975
        %v2262 = vunpack.c.h.b16 %v1975
        %v2263 = vunpack.c.l.b16 %v1976
        %v2264 = vunpack.c.h.b16 %v1976
        %v2265 = vunpack.c.l.b16 %v1977
        %v2266 = vunpack.c.h.b16 %v1977
        %v2267 = vunpack.c.l.b16 %v1978
        %v2268 = vunpack.c.h.b16 %v1978
        %v2269 = vunpack.c.l.b16 %v1979
        %v2270 = vunpack.c.h.b16 %v1979
        %v2271 = vunpack.c.l.b16 %v1980
        %v2272 = vunpack.c.h.b16 %v1980
        %v2273 = vunpack.c.l.b16 %v1981
        %v2274 = vunpack.c.h.b16 %v1981
        %v2275 = vunpack.c.l.b16 %v1982
        %v2276 = vunpack.c.h.b16 %v1982
        %v2277 = vunpack.c.l.b16 %v1983
        %v2278 = vunpack.c.h.b16 %v1983
        %v2279 = vunpack.c.l.b16 %v1984
        %v2280 = vunpack.c.h.b16 %v1984
        %v2281 = vunpack.c.l.b16 %v1985
        %v2282 = vunpack.c.h.b16 %v1985
        %v2283 = vunpack.c.l.b16 %v1986
        %v2284 = vunpack.c.h.b16 %v1986
        %v2285 = vunpack.c.l.b16 %v1987
        %v2286 = vunpack.c.h.b16 %v1987
        %v2287 = vunpack.c.l.b16 %v1988
        %v2288 = vunpack.c.h.b16 %v1988
        %v2289 = vunpack.c.l.b16 %v1989
        %v2290 = vunpack.c.h.b16 %v1989
        %v2291 = vunpack.c.l.b16 %v1990
        %v2292 = vunpack.c.h.b16 %v1990
        %v2293 = vunpack.c.l.b16 %v1991
        %v2294 = vunpack.c.h.b16 %v1991
        %v2295 = vunpack.c.l.b16 %v1992
        %v2296 = vunpack.c.h.b16 %v1992
        %v2297 = vunpack.c.l.b16 %v1993
        %v2298 = vunpack.c.h.b16 %v1993
        %v2299 = vunpack.c.l.b16 %v1994
        %v2300 = vunpack.c.h.b16 %v1994
        %v2301 = vunpack.c.l.b16 %v1995
        %v2302 = vunpack.c.h.b16 %v1995
        %v2303 = vunpack.c.l.b16 %v1996
        %v2304 = vunpack.c.h.b16 %v1996
        %v2305 = vunpack.c.l.b16 %v1997
        %v2306 = vunpack.c.h.b16 %v1997
        %v2307 = vunpack.c.l.b16 %v1998
        %v2308 = vunpack.c.h.b16 %v1998
        %v2309 = vunpack.c.l.b16 %v1999
        %v2310 = vunpack.c.h.b16 %v1999
        %v2311 = vunpack.c.l.b16 %v2000
        %v2312 = vunpack.c.h.b16 %v2000
        %v2313 = vunpack.c.l.b16 %v2001
        %v2314 = vunpack.c.h.b16 %v2001
        %v2315 = vunpack.c.l.b16 %v2002
        %v2316 = vunpack.c.h.b16 %v2002
        %v2317 = vunpack.c.l.b16 %v2003
        %v2318 = vunpack.c.h.b16 %v2003
        %v2319 = vunpack.c.l.b16 %v2004
        %v2320 = vunpack.c.h.b16 %v2004
        %v2321 = vunpack.c.l.b16 %v2005
        %v2322 = vunpack.c.h.b16 %v2005
        %v2323 = vunpack.c.l.b16 %v2006
        %v2324 = vunpack.c.h.b16 %v2006
        %v2325 = vunpack.c.l.b16 %v2007
        %v2326 = vunpack.c.h.b16 %v2007
        %v2327 = vunpack.c.l.b16 %v2008
        %v2328 = vunpack.c.h.b16 %v2008
        %v2329 = vunpack.c.l.b16 %v2009
        %v2330 = vunpack.c.h.b16 %v2009
        %v2331 = vunpack.c.l.b16 %v2010
        %v2332 = vunpack.c.h.b16 %v2010
        %v2333 = vunpack.c.l.b16 %v2011
        %v2334 = vunpack.c.h.b16 %v2011
        %v2335 = vunpack.c.l.b16 %v2012
        %v2336 = vunpack.c.h.b16 %v2012
        %v2337 = vunpack.c.l.b16 %v2013
        %v2338 = vunpack.c.h.b16 %v2013
        %v2339 = vunpack.c.l.b16 %v2014
        %v2340 = vunpack.c.h.b16 %v2014
        %v2341 = vunpack.c.l.b16 %v2015
        %v2342 = vunpack.c.h.b16 %v2015
        %v2343 = vunpack.c.l.b16 %v2016
        %v2344 = vunpack.c.h.b16 %v2016
        %v2345 = vunpack.c.l.b16 %v2017
        %v2346 = vunpack.c.h.b16 %v2017
        %v2347 = vunpack.c.l.b16 %v2018
        %v2348 = vunpack.c.h.b16 %v2018
        %v2349 = vunpack.c.l.b16 %v2019
        %v2350 = vunpack.c.h.b16 %v2019
        %v2351 = vunpack.c.l.b16 %v2020
        %v2352 = vunpack.c.h.b16 %v2020
        %v2353 = vunpack.c.l.b16 %v2021
        %v2354 = vunpack.c.h.b16 %v2021
        %v2355 = vunpack.c.l.b16 %v2022
        %v2356 = vunpack.c.h.b16 %v2022
        %v2357 = vunpack.c.l.b16 %v2023
        %v2358 = vunpack.c.h.b16 %v2023
        %v2359 = vunpack.c.l.b16 %v2024
        %v2360 = vunpack.c.h.b16 %v2024
        %v2361 = vunpack.c.l.b16 %v2025
        %v2362 = vunpack.c.h.b16 %v2025
        %v2363 = vunpack.c.l.b16 %v2026
        %v2364 = vunpack.c.h.b16 %v2026
        %v2365 = vunpack.c.l.b16 %v2027
        %v2366 = vunpack.c.h.b16 %v2027
        %v2367 = vunpack.c.l.b16 %v2028
        %v2368 = vunpack.c.h.b16 %v2028
        %v2369 = vunpack.c.l.b16 %v2029
        %v2370 = vunpack.c.h.b16 %v2029
        %v2371 = vunpack.c.l.b16 %v2030
        %v2372 = vunpack.c.h.b16 %v2030
        %v2373 = vunpack.c.l.b16 %v2031
        %v2374 = vunpack.c.h.b16 %v2031
        %v2375 = vunpack.c.l.b16 %v2032
        %v2376 = vunpack.c.h.b16 %v2032
        %v2377 = vunpack.c.l.b16 %v2033
        %v2378 = vunpack.c.h.b16 %v2033
        %v2379 = vunpack.c.l.b16 %v2034
        %v2380 = vunpack.c.h.b16 %v2034
        %v2381 = vunpack.c.l.b16 %v2035
        %v2382 = vunpack.c.h.b16 %v2035
        %v2383 = vunpack.c.l.b16 %v2036
        %v2384 = vunpack.c.h.b16 %v2036
        %v2385 = vunpack.c.l.b16 %v2037
        %v2386 = vunpack.c.h.b16 %v2037
        %v2387 = vunpack.c.l.b16 %v2038
        %v2388 = vunpack.c.h.b16 %v2038
        %v2389 = vunpack.c.l.b16 %v2039
        %v2390 = vunpack.c.h.b16 %v2039
        %v2391 = vunpack.c.l.b16 %v2040
        %v2392 = vunpack.c.h.b16 %v2040
        %v2393 = vunpack.c.l.b16 %v2041
        %v2394 = vunpack.c.h.b16 %v2041
        %v2395 = vunpack.c.l.b16 %v2042
        %v2396 = vunpack.c.h.b16 %v2042
        %v2397 = vunpack.c.l.b16 %v2043
        %v2398 = vunpack.c.h.b16 %v2043
        %v2399 = vunpack.c.l.b16 %v2044
        %v2400 = vunpack.c.h.b16 %v2044
        %v2401 = vunpack.c.l.b16 %v2045
        %v2402 = vunpack.c.h.b16 %v2045
        %v2403 = vunpack.c.l.b16 %v2046
        %v2404 = vunpack.c.h.b16 %v2046
        %v2405 = vunpack.c.l.b16 %v2047
        %v2406 = vunpack.c.h.b16 %v2047
        %v2407 = vunpack.c.l.b16 %v2048
        %v2408 = vunpack.c.h.b16 %v2048
        %v2409 = vunpack.c.l.b16 %v2049
        %v2410 = vunpack.c.h.b16 %v2049
        %v2411 = vunpack.c.l.b16 %v2050
        %v2412 = vunpack.c.h.b16 %v2050
        %v2413 = vunpack.c.l.b16 %v2051
        %v2414 = vunpack.c.h.b16 %v2051
        %v2415 = vunpack.c.l.b16 %v2052
        %v2416 = vunpack.c.h.b16 %v2052
        %v2417 = vunpack.c.l.b16 %v2053
        %v2418 = vunpack.c.h.b16 %v2053
        %v2419 = vunpack.c.l.b16 %v2054
        %v2420 = vunpack.c.h.b16 %v2054
        %v2421 = vunpack.c.l.b16 %v2055
        %v2422 = vunpack.c.h.b16 %v2055
        %v2423 = vunpack.c.l.b16 %v2056
        %v2424 = vunpack.c.h.b16 %v2056
        %v2425 = vunpack.c.l.b16 %v2057
        %v2426 = vunpack.c.h.b16 %v2057
        %v2427 = vunpack.c.l.b16 %v2058
        %v2428 = vunpack.c.h.b16 %v2058
        %v2429 = vunpack.c.l.b16 %v2059
        %v2430 = vunpack.c.h.b16 %v2059
        %v2431 = vunpack.c.l.b16 %v2060
        %v2432 = vunpack.c.h.b16 %v2060
        %v2433 = vunpack.c.l.b16 %v2061
        %v2434 = vunpack.c.h.b16 %v2061
        %v2435 = vunpack.c.l.b16 %v2062
        %v2436 = vunpack.c.h.b16 %v2062
        %v2437 = vunpack.c.l.b16 %v2063
        %v2438 = vunpack.c.h.b16 %v2063
        %v2439 = vunpack.c.l.b16 %v2064
        %v2440 = vunpack.c.h.b16 %v2064
        %v2441 = vunpack.c.l.b16 %v2065
        %v2442 = vunpack.c.h.b16 %v2065
        %v2443 = vunpack.c.l.b16 %v2066
        %v2444 = vunpack.c.h.b16 %v2066
        %v2445 = vunpack.c.l.b16 %v2067
        %v2446 = vunpack.c.h.b16 %v2067
        %v2447 = vunpack.c.l.b16 %v2068
        %v2448 = vunpack.c.h.b16 %v2068
        %v2449 = vunpack.c.l.b16 %v2069
        %v2450 = vunpack.c.h.b16 %v2069
        %v2451 = vunpack.c.l.b16 %v2070
        %v2452 = vunpack.c.h.b16 %v2070
        %v2453 = vunpack.c.l.b16 %v2071
        %v2454 = vunpack.c.h.b16 %v2071
        %v2455 = vunpack.c.l.b16 %v2072
        %v2456 = vunpack.c.h.b16 %v2072
        %v2457 = vunpack.c.l.b16 %v2073
        %v2458 = vunpack.c.h.b16 %v2073
        %v2459 = vunpack.c.l.b16 %v2074
        %v2460 = vunpack.c.h.b16 %v2074
        %v2461 = vunpack.c.l.b16 %v2075
        %v2462 = vunpack.c.h.b16 %v2075
        %v2463 = vunpack.c.l.b16 %v2076
        %v2464 = vunpack.c.h.b16 %v2076
        %v2465 = vunpack.c.l.b16 %v2077
        %v2466 = vunpack.c.h.b16 %v2077
        %v2467 = vunpack.c.l.b16 %v2078
        %v2468 = vunpack.c.h.b16 %v2078
        %v2469 = vunpack.c.l.b16 %v2079
        %v2470 = vunpack.c.h.b16 %v2079
        %v2471 = vunpack.c.l.b16 %v2080
        %v2472 = vunpack.c.h.b16 %v2080
        %v2473 = vunpack.c.l.b16 %v2081
        %v2474 = vunpack.c.h.b16 %v2081
        %v2475 = vunpack.c.l.b16 %v2082
        %v2476 = vunpack.c.h.b16 %v2082
        %v2477 = vunpack.c.l.b16 %v2083
        %v2478 = vunpack.c.h.b16 %v2083
        %v2479 = vunpack.c.l.b16 %v2084
        %v2480 = vunpack.c.h.b16 %v2084
        %v2481 = vunpack.c.l.b16 %v2085
        %v2482 = vunpack.c.h.b16 %v2085
        %v2483 = vunpack.c.l.b16 %v2086
        %v2484 = vunpack.c.h.b16 %v2086
        %v2485 = vunpack.c.l.b16 %v2087
        %v2486 = vunpack.c.h.b16 %v2087
        %v2487 = vunpack.c.l.b16 %v2088
        %v2488 = vunpack.c.h.b16 %v2088
        %v2489 = vunpack.c.l.b16 %v2089
        %v2490 = vunpack.c.h.b16 %v2089
        %v2491 = vunpack.c.l.b16 %v2090
        %v2492 = vunpack.c.h.b16 %v2090
        %v2493 = vunpack.c.l.b16 %v2091
        %v2494 = vunpack.c.h.b16 %v2091
        %v2495 = vunpack.c.l.b16 %v2092
        %v2496 = vunpack.c.h.b16 %v2092
        %v2497 = vunpack.c.l.b16 %v2093
        %v2498 = vunpack.c.h.b16 %v2093
        %v2499 = vunpack.c.l.b16 %v2094
        %v2500 = vunpack.c.h.b16 %v2094
        %v2501 = vpack.c.b16 %v2249, %v2245
        %v2502 = vpack.c.b16 %v2250, %v2246
        %v2503 = vpack.c.b16 %v2251, %v2247
        %v2504 = vpack.c.b16 %v2252, %v2248
        %v2505 = vpack.c.b16 %v2257, %v2253
        %v2506 = vpack.c.b16 %v2258, %v2254
        %v2507 = vpack.c.b16 %v2259, %v2255
        %v2508 = vpack.c.b16 %v2260, %v2256
        %v2509 = vpack.c.b16 %v2265, %v2261
        %v2510 = vpack.c.b16 %v2266, %v2262
        %v2511 = vpack.c.b16 %v2267, %v2263
        %v2512 = vpack.c.b16 %v2268, %v2264
        %v2513 = vpack.c.b16 %v2273, %v2269
        %v2514 = vpack.c.b16 %v2274, %v2270
        %v2515 = vpack.c.b16 %v2275, %v2271
        %v2516 = vpack.c.b16 %v2276, %v2272
        %v2517 = vpack.c.b16 %v2281, %v2277
        %v2518 = vpack.c.b16 %v2282, %v2278
        %v2519 = vpack.c.b16 %v2283, %v2279
        %v2520 = vpack.c.b16 %v2284, %v2280
        %v2521 = vpack.c.b16 %v2289, %v2285
        %v2522 = vpack.c.b16 %v2290, %v2286
        %v2523 = vpack.c.b16 %v2291, %v2287
        %v2524 = vpack.c.b16 %v2292, %v2288
        %v2525 = vpack.c.b16 %v2297, %v2293
        %v2526 = vpack.c.b16 %v2298, %v2294
        %v2527 = vpack.c.b16 %v2299, %v2295
        %v2528 = vpack.c.b16 %v2300, %v2296
        %v2529 = vpack.c.b16 %v2305, %v2301
        %v2530 = vpack.c.b16 %v2306, %v2302
        %v2531 = vpack.c.b16 %v2307, %v2303
        %v2532 = vpack.c.b16 %v2308, %v2304
        %v2533 = vpack.c.b16 %v2313, %v2309
        %v2534 = vpack.c.b16 %v2314, %v2310
        %v2535 = vpack.c.b16 %v2315, %v2311
        %v2536 = vpack.c.b16 %v2316, %v2312
        %v2537 = vpack.c.b16 %v2321, %v2317
        %v2538 = vpack.c.b16 %v2322, %v2318
        %v2539 = vpack.c.b16 %v2323, %v2319
        %v2540 = vpack.c.b16 %v2324, %v2320
        %v2541 = vpack.c.b16 %v2329, %v2325
        %v2542 = vpack.c.b16 %v2330, %v2326
        %v2543 = vpack.c.b16 %v2331, %v2327
        %v2544 = vpack.c.b16 %v2332, %v2328
        %v2545 = vpack.c.b16 %v2337, %v2333
        %v2546 = vpack.c.b16 %v2338, %v2334
        %v2547 = vpack.c.b16 %v2339, %v2335
        %v2548 = vpack.c.b16 %v2340, %v2336
        %v2549 = vpack.c.b16 %v2345, %v2341
        %v2550 = vpack.c.b16 %v2346, %v2342
        %v2551 = vpack.c.b16 %v2347, %v2343
        %v2552 = vpack.c.b16 %v2348, %v2344
        %v2553 = vpack.c.b16 %v2353, %v2349
        %v2554 = vpack.c.b16 %v2354, %v2350
        %v2555 = vpack.c.b16 %v2355, %v2351
        %v2556 = vpack.c.b16 %v2356, %v2352
        %v2557 = vpack.c.b16 %v2361, %v2357
        %v2558 = vpack.c.b16 %v2362, %v2358
        %v2559 = vpack.c.b16 %v2363, %v2359
        %v2560 = vpack.c.b16 %v2364, %v2360
        %v2561 = vpack.c.b16 %v2369, %v2365
        %v2562 = vpack.c.b16 %v2370, %v2366
        %v2563 = vpack.c.b16 %v2371, %v2367
        %v2564 = vpack.c.b16 %v2372, %v2368
        %v2565 = vpack.c.b16 %v2377, %v2373
        %v2566 = vpack.c.b16 %v2378, %v2374
        %v2567 = vpack.c.b16 %v2379, %v2375
        %v2568 = vpack.c.b16 %v2380, %v2376
        %v2569 = vpack.c.b16 %v2385, %v2381
        %v2570 = vpack.c.b16 %v2386, %v2382
        %v2571 = vpack.c.b16 %v2387, %v2383
        %v2572 = vpack.c.b16 %v2388, %v2384
        %v2573 = vpack.c.b16 %v2393, %v2389
        %v2574 = vpack.c.b16 %v2394, %v2390
        %v2575 = vpack.c.b16 %v2395, %v2391
        %v2576 = vpack.c.b16 %v2396, %v2392
        %v2577 = vpack.c.b16 %v2401, %v2397
        %v2578 = vpack.c.b16 %v2402, %v2398
        %v2579 = vpack.c.b16 %v2403, %v2399
        %v2580 = vpack.c.b16 %v2404, %v2400
        %v2581 = vpack.c.b16 %v2409, %v2405
        %v2582 = vpack.c.b16 %v2410, %v2406
        %v2583 = vpack.c.b16 %v2411, %v2407
        %v2584 = vpack.c.b16 %v2412, %v2408
        %v2585 = vpack.c.b16 %v2417, %v2413
        %v2586 = vpack.c.b16 %v2418, %v2414
        %v2587 = vpack.c.b16 %v2419, %v2415
        %v2588 = vpack.c.b16 %v2420, %v2416
        %v2589 = vpack.c.b16 %v2425, %v2421
        %v2590 = vpack.c.b16 %v2426, %v2422
        %v2591 = vpack.c.b16 %v2427, %v2423
        %v2592 = vpack.c.b16 %v2428, %v2424
        %v2593 = vpack.c.b16 %v2433, %v2429
        %v2594 = vpack.c.b16 %v2434, %v2430
        %v2595 = vpack.c.b16 %v2435, %v2431
        %v2596 = vpack.c.b16 %v2436, %v2432
        %v2597 = vpack.c.b16 %v2441, %v2437
        %v2598 = vpack.c.b16 %v2442, %v2438
        %v2599 = vpack.c.b16 %v2443, %v2439
        %v2600 = vpack.c.b16 %v2444, %v2440
        %v2601 = vpack.c.b16 %v2449, %v2445
        %v2602 = vpack.c.b16 %v2450, %v2446
        %v2603 = vpack.c.b16 %v2451, %v2447
        %v2604 = vpack.c.b16 %v2452, %v2448
        %v2605 = vpack.c.b16 %v2457, %v2453
        %v2606 = vpack.c.b16 %v2458, %v2454
        %v2607 = vpack.c.b16 %v2459, %v2455
        %v2608 = vpack.c.b16 %v2460, %v2456
        %v2609 = vpack.c.b16 %v2465, %v2461
        %v2610 = vpack.c.b16 %v2466, %v2462
        %v2611 = vpack.c.b16 %v2467, %v2463
        %v2612 = vpack.c.b16 %v2468, %v2464
        %v2613 = vpack.c.b16 %v2473, %v2469
        %v2614 = vpack.c.b16 %v2474, %v2470
        %v2615 = vpack.c.b16 %v2475, %v2471
        %v2616 = vpack.c.b16 %v2476, %v2472
        %v2617 = vpack.c.b16 %v2481, %v2477
        %v2618 = vpack.c.b16 %v2482, %v2478
        %v2619 = vpack.c.b16 %v2483, %v2479
        %v2620 = vpack.c.b16 %v2484, %v2480
        %v2621 = vpack.c.b16 %v2489, %v2485
        %v2622 = vpack.c.b16 %v2490, %v2486
        %v2623 = vpack.c.b16 %v2491, %v2487
        %v2624 = vpack.c.b16 %v2492, %v2488
        %v2625 = vpack.c.b16 %v2497, %v2493
        %v2626 = vpack.c.b16 %v2498, %v2494
        %v2627 = vpack.c.b16 %v2499, %v2495
        %v2628 = vpack.c.b16 %v2500, %v2496
        %2757 = vmatprep.subr.bf16.mxu0 %v2502
        %2758 = vmatpush1.bf16.msra.mxu0 %v2501
        %2759 = vmatprep.subr.bf16.mxu0 %v2506
        %2760 = vmatpush1.bf16.msra.mxu0 %v2505
        %2761 = vmatprep.subr.bf16.mxu0 %v2510
        %2762 = vmatpush1.bf16.msra.mxu0 %v2509
        %2763 = vmatprep.subr.bf16.mxu0 %v2514
        %2764 = vmatpush1.bf16.msra.mxu0 %v2513
        %2765 = vmatprep.subr.bf16.mxu0 %v2518
        %2766 = vmatpush1.bf16.msra.mxu0 %v2517
        %2767 = vmatprep.subr.bf16.mxu0 %v2522
        %2768 = vmatpush1.bf16.msra.mxu0 %v2521
        %2769 = vmatprep.subr.bf16.mxu0 %v2526
        %2770 = vmatpush1.bf16.msra.mxu0 %v2525
        %2771 = vmatprep.subr.bf16.mxu0 %v2530
        %2772 = vmatpush1.bf16.msra.mxu0 %v2529
        %2773 = vmatprep.subr.bf16.mxu0 %v2534
        %2774 = vmatpush1.bf16.msra.mxu0 %v2533
        %2775 = vmatprep.subr.bf16.mxu0 %v2538
        %2776 = vmatpush1.bf16.msra.mxu0 %v2537
        %2777 = vmatprep.subr.bf16.mxu0 %v2542
        %2778 = vmatpush1.bf16.msra.mxu0 %v2541
        %2779 = vmatprep.subr.bf16.mxu0 %v2546
        %2780 = vmatpush1.bf16.msra.mxu0 %v2545
        %2781 = vmatprep.subr.bf16.mxu0 %v2550
        %2782 = vmatpush1.bf16.msra.mxu0 %v2549
        %2783 = vmatprep.subr.bf16.mxu0 %v2554
        %2784 = vmatpush1.bf16.msra.mxu0 %v2553
        %2785 = vmatprep.subr.bf16.mxu0 %v2558
        %2786 = vmatpush1.bf16.msra.mxu0 %v2557
        %2787 = vmatprep.subr.bf16.mxu0 %v2562
        %2788 = vmatpush1.bf16.msra.mxu0 %v2561
        %2789 = vmatprep.mubr.bf16.mxu0 %v1840
        %2790 = vmatmul.mubr.bf16.gmra.mrb[0].mxu0 %v1839
        %v2791 = vpop.f32.mrb[0].mxu0
        %v2792 = vadd.f32 %v2100, %v2791
        %v2793 = vpop.f32.mrb[0].mxu0
        %v2794 = vadd.f32 %v2104, %v2793
        %v2795 = vpop.f32.mrb[0].mxu0
        %v2796 = vadd.f32 %v2100, %v2795
        %v2797 = vpop.f32.mrb[0].mxu0
        %v2798 = vadd.f32 %v2104, %v2797
        %2799 = vmatprep.mubr.bf16.mxu0 %v1844
        %2800 = vmatmul.mubr.bf16.gmra.mrb[0].mxu0 %v1843
        %v2801 = vpop.f32.mrb[0].mxu0
        %v2802 = vadd.f32 %v2100, %v2801
        %v2803 = vpop.f32.mrb[0].mxu0
        %v2804 = vadd.f32 %v2104, %v2803
        %v2805 = vpop.f32.mrb[0].mxu0
        %v2806 = vadd.f32 %v2100, %v2805
        %v2807 = vpop.f32.mrb[0].mxu0
        %v2808 = vadd.f32 %v2104, %v2807
        %2809 = vmatprep.mubr.bf16.mxu0 %v1848
        %2810 = vmatmul.mubr.bf16.gmra.mrb[0].mxu0 %v1847
        %v2811 = vpop.f32.mrb[0].mxu0
        %v2812 = vadd.f32 %v2100, %v2811
        %v2813 = vpop.f32.mrb[0].mxu0
        %v2814 = vadd.f32 %v2104, %v2813
        %v2815 = vpop.f32.mrb[0].mxu0
        %v2816 = vadd.f32 %v2100, %v2815
        %v2817 = vpop.f32.mrb[0].mxu0
        %v2818 = vadd.f32 %v2104, %v2817
        %2819 = vmatprep.mubr.bf16.mxu0 %v1852
        %2820 = vmatmul.mubr.bf16.gmra.mrb[0].mxu0 %v1851
        %v2821 = vpop.f32.mrb[0].mxu0
        %v2822 = vadd.f32 %v2100, %v2821
        %v2823 = vpop.f32.mrb[0].mxu0
        %v2824 = vadd.f32 %v2104, %v2823
        %v2825 = vpop.f32.mrb[0].mxu0
        %v2826 = vadd.f32 %v2100, %v2825
        %v2827 = vpop.f32.mrb[0].mxu0
        %v2828 = vadd.f32 %v2104, %v2827
        %2829 = vmatprep.mubr.bf16.mxu0 %v1856
        %2830 = vmatmul.mubr.bf16.gmra.mrb[0].mxu0 %v1855
        %v2831 = vpop.f32.mrb[0].mxu0
        %v2832 = vadd.f32 %v2100, %v2831
        %v2833 = vpop.f32.mrb[0].mxu0
        %v2834 = vadd.f32 %v2104, %v2833
        %v2835 = vpop.f32.mrb[0].mxu0
        %v2836 = vadd.f32 %v2100, %v2835
        %v2837 = vpop.f32.mrb[0].mxu0
        %v2838 = vadd.f32 %v2104, %v2837
        %2839 = vmatprep.mubr.bf16.mxu0 %v1860
        %2840 = vmatmul.mubr.bf16.gmra.mrb[0].mxu0 %v1859
        %v2841 = vpop.f32.mrb[0].mxu0
        %v2842 = vadd.f32 %v2100, %v2841
        %v2843 = vpop.f32.mrb[0].mxu0
        %v2844 = vadd.f32 %v2104, %v2843
        %v2845 = vpop.f32.mrb[0].mxu0
        %v2846 = vadd.f32 %v2100, %v2845
        %v2847 = vpop.f32.mrb[0].mxu0
        %v2848 = vadd.f32 %v2104, %v2847
        %2849 = vmatprep.mubr.bf16.mxu0 %v1864
        %2850 = vmatmul.mubr.bf16.gmra.mrb[0].mxu0 %v1863
        %v2851 = vpop.f32.mrb[0].mxu0
        %v2852 = vadd.f32 %v2100, %v2851
        %v2853 = vpop.f32.mrb[0].mxu0
        %v2854 = vadd.f32 %v2104, %v2853
        %v2855 = vpop.f32.mrb[0].mxu0
        %v2856 = vadd.f32 %v2100, %v2855
        %v2857 = vpop.f32.mrb[0].mxu0
        %v2858 = vadd.f32 %v2104, %v2857
        %2859 = vmatprep.mubr.bf16.mxu0 %v1868
        %2860 = vmatmul.mubr.bf16.gmra.mrb[0].mxu0 %v1867
        %v2861 = vpop.f32.mrb[0].mxu0
        %v2862 = vadd.f32 %v2100, %v2861
        %v2863 = vpop.f32.mrb[0].mxu0
        %v2864 = vadd.f32 %v2104, %v2863
        %v2865 = vpop.f32.mrb[0].mxu0
        %v2866 = vadd.f32 %v2100, %v2865
        %v2867 = vpop.f32.mrb[0].mxu0
        %v2868 = vadd.f32 %v2104, %v2867
        %2869 = vmatprep.mubr.bf16.mxu0 %v1872
        %2870 = vmatmul.mubr.bf16.gmra.mrb[0].mxu0 %v1871
        %v2871 = vpop.f32.mrb[0].mxu0
        %v2872 = vadd.f32 %v2100, %v2871
        %v2873 = vpop.f32.mrb[0].mxu0
        %v2874 = vadd.f32 %v2104, %v2873
        %v2875 = vpop.f32.mrb[0].mxu0
        %v2876 = vadd.f32 %v2100, %v2875
        %v2877 = vpop.f32.mrb[0].mxu0
        %v2878 = vadd.f32 %v2104, %v2877
        %2879 = vmatprep.mubr.bf16.mxu0 %v1876
        %2880 = vmatmul.mubr.bf16.gmra.mrb[0].mxu0 %v1875
        %v2881 = vpop.f32.mrb[0].mxu0
        %v2882 = vadd.f32 %v2100, %v2881
        %v2883 = vpop.f32.mrb[0].mxu0
        %v2884 = vadd.f32 %v2104, %v2883
        %v2885 = vpop.f32.mrb[0].mxu0
        %v2886 = vadd.f32 %v2100, %v2885
        %v2887 = vpop.f32.mrb[0].mxu0
        %v2888 = vadd.f32 %v2104, %v2887
        %2889 = vmatprep.mubr.bf16.mxu0 %v1880
        %2890 = vmatmul.mubr.bf16.gmra.mrb[0].mxu0 %v1879
        %v2891 = vpop.f32.mrb[0].mxu0
        %v2892 = vadd.f32 %v2100, %v2891
        %v2893 = vpop.f32.mrb[0].mxu0
        %v2894 = vadd.f32 %v2104, %v2893
        %v2895 = vpop.f32.mrb[0].mxu0
        %v2896 = vadd.f32 %v2100, %v2895
        %v2897 = vpop.f32.mrb[0].mxu0
        %v2898 = vadd.f32 %v2104, %v2897
        %2899 = vmatprep.mubr.bf16.mxu0 %v1884
        %2900 = vmatmul.mubr.bf16.gmra.mrb[0].mxu0 %v1883
        %v2901 = vpop.f32.mrb[0].mxu0
        %v2902 = vadd.f32 %v2100, %v2901
        %v2903 = vpop.f32.mrb[0].mxu0
        %v2904 = vadd.f32 %v2104, %v2903
        %v2905 = vpop.f32.mrb[0].mxu0
        %v2906 = vadd.f32 %v2100, %v2905
        %v2907 = vpop.f32.mrb[0].mxu0
        %v2908 = vadd.f32 %v2104, %v2907
        %2909 = vmatprep.mubr.bf16.mxu0 %v1888
        %2910 = vmatmul.mubr.bf16.gmra.mrb[0].mxu0 %v1887
        %v2911 = vpop.f32.mrb[0].mxu0
        %v2912 = vadd.f32 %v2100, %v2911
        %v2913 = vpop.f32.mrb[0].mxu0
        %v2914 = vadd.f32 %v2104, %v2913
        %v2915 = vpop.f32.mrb[0].mxu0
        %v2916 = vadd.f32 %v2100, %v2915
        %v2917 = vpop.f32.mrb[0].mxu0
        %v2918 = vadd.f32 %v2104, %v2917
        %2919 = vmatprep.mubr.bf16.mxu0 %v1892
        %2920 = vmatmul.mubr.bf16.gmra.mrb[0].mxu0 %v1891
        %v2921 = vpop.f32.mrb[0].mxu0
        %v2922 = vadd.f32 %v2100, %v2921
        %v2923 = vpop.f32.mrb[0].mxu0
        %v2924 = vadd.f32 %v2104, %v2923
        %v2925 = vpop.f32.mrb[0].mxu0
        %v2926 = vadd.f32 %v2100, %v2925
        %v2927 = vpop.f32.mrb[0].mxu0
        %v2928 = vadd.f32 %v2104, %v2927
        %2929 = vmatprep.mubr.bf16.mxu0 %v1896
        %2930 = vmatmul.mubr.bf16.gmra.mrb[0].mxu0 %v1895
        %v2931 = vpop.f32.mrb[0].mxu0
        %v2932 = vadd.f32 %v2100, %v2931
        %v2933 = vpop.f32.mrb[0].mxu0
        %v2934 = vadd.f32 %v2104, %v2933
        %v2935 = vpop.f32.mrb[0].mxu0
        %v2936 = vadd.f32 %v2100, %v2935
        %v2937 = vpop.f32.mrb[0].mxu0
        %v2938 = vadd.f32 %v2104, %v2937
        %2939 = vmatprep.mubr.bf16.mxu0 %v1900
        %2940 = vmatmul.mubr.bf16.gmra.mrb[0].mxu0 %v1899
        %v2941 = vpop.f32.mrb[0].mxu0
        %v2942 = vadd.f32 %v2100, %v2941
        %v2943 = vpop.f32.mrb[0].mxu0
        %v2944 = vadd.f32 %v2104, %v2943
        %v2945 = vpop.f32.mrb[0].mxu0
        %v2946 = vadd.f32 %v2100, %v2945
        %v2947 = vpop.f32.mrb[0].mxu0
        %v2948 = vadd.f32 %v2104, %v2947
        %2949 = vmatprep.mubr.bf16.mxu0 %v1904
        %2950 = vmatmul.mubr.bf16.gmra.mrb[0].mxu0 %v1903
        %v2951 = vpop.f32.mrb[0].mxu0
        %v2952 = vadd.f32 %v2100, %v2951
        %v2953 = vpop.f32.mrb[0].mxu0
        %v2954 = vadd.f32 %v2104, %v2953
        %v2955 = vpop.f32.mrb[0].mxu0
        %v2956 = vadd.f32 %v2100, %v2955
        %v2957 = vpop.f32.mrb[0].mxu0
        %v2958 = vadd.f32 %v2104, %v2957
        %2959 = vmatprep.mubr.bf16.mxu0 %v1908
        %2960 = vmatmul.mubr.bf16.gmra.mrb[0].mxu0 %v1907
        %v2961 = vpop.f32.mrb[0].mxu0
        %v2962 = vadd.f32 %v2100, %v2961
        %v2963 = vpop.f32.mrb[0].mxu0
        %v2964 = vadd.f32 %v2104, %v2963
        %v2965 = vpop.f32.mrb[0].mxu0
        %v2966 = vadd.f32 %v2100, %v2965
        %v2967 = vpop.f32.mrb[0].mxu0
        %v2968 = vadd.f32 %v2104, %v2967
        %2969 = vmatprep.mubr.bf16.mxu0 %v1912
        %2970 = vmatmul.mubr.bf16.gmra.mrb[0].mxu0 %v1911
        %v2971 = vpop.f32.mrb[0].mxu0
        %v2972 = vadd.f32 %v2100, %v2971
        %v2973 = vpop.f32.mrb[0].mxu0
        %v2974 = vadd.f32 %v2104, %v2973
        %v2975 = vpop.f32.mrb[0].mxu0
        %v2976 = vadd.f32 %v2100, %v2975
        %v2977 = vpop.f32.mrb[0].mxu0
        %v2978 = vadd.f32 %v2104, %v2977
        %2979 = vmatprep.mubr.bf16.mxu0 %v1916
        %2980 = vmatmul.mubr.bf16.gmra.mrb[0].mxu0 %v1915
        %v2981 = vpop.f32.mrb[0].mxu0
        %v2982 = vadd.f32 %v2100, %v2981
        %v2983 = vpop.f32.mrb[0].mxu0
        %v2984 = vadd.f32 %v2104, %v2983
        %v2985 = vpop.f32.mrb[0].mxu0
        %v2986 = vadd.f32 %v2100, %v2985
        %v2987 = vpop.f32.mrb[0].mxu0
        %v2988 = vadd.f32 %v2104, %v2987
        %2989 = vmatprep.mubr.bf16.mxu0 %v1920
        %2990 = vmatmul.mubr.bf16.gmra.mrb[0].mxu0 %v1919
        %v2991 = vpop.f32.mrb[0].mxu0
        %v2992 = vadd.f32 %v2100, %v2991
        %v2993 = vpop.f32.mrb[0].mxu0
        %v2994 = vadd.f32 %v2104, %v2993
        %v2995 = vpop.f32.mrb[0].mxu0
        %v2996 = vadd.f32 %v2100, %v2995
        %v2997 = vpop.f32.mrb[0].mxu0
        %v2998 = vadd.f32 %v2104, %v2997
        %2999 = vmatprep.mubr.bf16.mxu0 %v1924
        %3000 = vmatmul.mubr.bf16.gmra.mrb[0].mxu0 %v1923
        %v3001 = vpop.f32.mrb[0].mxu0
        %v3002 = vadd.f32 %v2100, %v3001
        %v3003 = vpop.f32.mrb[0].mxu0
        %v3004 = vadd.f32 %v2104, %v3003
        %v3005 = vpop.f32.mrb[0].mxu0
        %v3006 = vadd.f32 %v2100, %v3005
        %v3007 = vpop.f32.mrb[0].mxu0
        %v3008 = vadd.f32 %v2104, %v3007
        %3009 = vmatprep.mubr.bf16.mxu0 %v1928
        %3010 = vmatmul.mubr.bf16.gmra.mrb[0].mxu0 %v1927
        %v3011 = vpop.f32.mrb[0].mxu0
        %v3012 = vadd.f32 %v2100, %v3011
        %v3013 = vpop.f32.mrb[0].mxu0
        %v3014 = vadd.f32 %v2104, %v3013
        %v3015 = vpop.f32.mrb[0].mxu0
        %v3016 = vadd.f32 %v2100, %v3015
        %v3017 = vpop.f32.mrb[0].mxu0
        %v3018 = vadd.f32 %v2104, %v3017
        %3019 = vmatprep.mubr.bf16.mxu0 %v1932
        %3020 = vmatmul.mubr.bf16.gmra.mrb[0].mxu0 %v1931
        %v3021 = vpop.f32.mrb[0].mxu0
        %v3022 = vadd.f32 %v2100, %v3021
        %v3023 = vpop.f32.mrb[0].mxu0
        %v3024 = vadd.f32 %v2104, %v3023
        %v3025 = vpop.f32.mrb[0].mxu0
        %v3026 = vadd.f32 %v2100, %v3025
        %v3027 = vpop.f32.mrb[0].mxu0
        %v3028 = vadd.f32 %v2104, %v3027
        %3029 = vmatprep.mubr.bf16.mxu0 %v1936
        %3030 = vmatmul.mubr.bf16.gmra.mrb[0].mxu0 %v1935
        %v3031 = vpop.f32.mrb[0].mxu0
        %v3032 = vadd.f32 %v2100, %v3031
        %v3033 = vpop.f32.mrb[0].mxu0
        %v3034 = vadd.f32 %v2104, %v3033
        %v3035 = vpop.f32.mrb[0].mxu0
        %v3036 = vadd.f32 %v2100, %v3035
        %v3037 = vpop.f32.mrb[0].mxu0
        %v3038 = vadd.f32 %v2104, %v3037
        %3039 = vmatprep.mubr.bf16.mxu0 %v1940
        %3040 = vmatmul.mubr.bf16.gmra.mrb[0].mxu0 %v1939
        %v3041 = vpop.f32.mrb[0].mxu0
        %v3042 = vadd.f32 %v2100, %v3041
        %v3043 = vpop.f32.mrb[0].mxu0
        %v3044 = vadd.f32 %v2104, %v3043
        %v3045 = vpop.f32.mrb[0].mxu0
        %v3046 = vadd.f32 %v2100, %v3045
        %v3047 = vpop.f32.mrb[0].mxu0
        %v3048 = vadd.f32 %v2104, %v3047
        %3049 = vmatprep.mubr.bf16.mxu0 %v1944
        %3050 = vmatmul.mubr.bf16.gmra.mrb[0].mxu0 %v1943
        %v3051 = vpop.f32.mrb[0].mxu0
        %v3052 = vadd.f32 %v2100, %v3051
        %v3053 = vpop.f32.mrb[0].mxu0
        %v3054 = vadd.f32 %v2104, %v3053
        %v3055 = vpop.f32.mrb[0].mxu0
        %v3056 = vadd.f32 %v2100, %v3055
        %v3057 = vpop.f32.mrb[0].mxu0
        %v3058 = vadd.f32 %v2104, %v3057
        %3059 = vmatprep.mubr.bf16.mxu0 %v1948
        %3060 = vmatmul.mubr.bf16.gmra.mrb[0].mxu0 %v1947
        %v3061 = vpop.f32.mrb[0].mxu0
        %v3062 = vadd.f32 %v2100, %v3061
        %v3063 = vpop.f32.mrb[0].mxu0
        %v3064 = vadd.f32 %v2104, %v3063
        %v3065 = vpop.f32.mrb[0].mxu0
        %v3066 = vadd.f32 %v2100, %v3065
        %v3067 = vpop.f32.mrb[0].mxu0
        %v3068 = vadd.f32 %v2104, %v3067
        %3069 = vmatprep.mubr.bf16.mxu0 %v1952
        %3070 = vmatmul.mubr.bf16.gmra.mrb[0].mxu0 %v1951
        %v3071 = vpop.f32.mrb[0].mxu0
        %v3072 = vadd.f32 %v2100, %v3071
        %v3073 = vpop.f32.mrb[0].mxu0
        %v3074 = vadd.f32 %v2104, %v3073
        %v3075 = vpop.f32.mrb[0].mxu0
        %v3076 = vadd.f32 %v2100, %v3075
        %v3077 = vpop.f32.mrb[0].mxu0
        %v3078 = vadd.f32 %v2104, %v3077
        %3079 = vmatprep.mubr.bf16.mxu0 %v1956
        %3080 = vmatmul.mubr.bf16.gmra.mrb[0].mxu0 %v1955
        %v3081 = vpop.f32.mrb[0].mxu0
        %v3082 = vadd.f32 %v2100, %v3081
        %v3083 = vpop.f32.mrb[0].mxu0
        %v3084 = vadd.f32 %v2104, %v3083
        %v3085 = vpop.f32.mrb[0].mxu0
        %v3086 = vadd.f32 %v2100, %v3085
        %v3087 = vpop.f32.mrb[0].mxu0
        %v3088 = vadd.f32 %v2104, %v3087
        %3089 = vmatprep.mubr.bf16.mxu0 %v1960
        %3090 = vmatmul.mubr.bf16.gmra.mrb[0].mxu0 %v1959
        %v3091 = vpop.f32.mrb[0].mxu0
        %v3092 = vadd.f32 %v2100, %v3091
        %v3093 = vpop.f32.mrb[0].mxu0
        %v3094 = vadd.f32 %v2104, %v3093
        %v3095 = vpop.f32.mrb[0].mxu0
        %v3096 = vadd.f32 %v2100, %v3095
        %v3097 = vpop.f32.mrb[0].mxu0
        %v3098 = vadd.f32 %v2104, %v3097
        %3099 = vmatprep.mubr.bf16.mxu0 %v1964
        %3100 = vmatmul.mubr.bf16.gmra.mrb[0].mxu0 %v1963
        %v3101 = vpop.f32.mrb[0].mxu0
        %v3102 = vadd.f32 %v2100, %v3101
        %v3103 = vpop.f32.mrb[0].mxu0
        %v3104 = vadd.f32 %v2104, %v3103
        %v3105 = vpop.f32.mrb[0].mxu0
        %v3106 = vadd.f32 %v2100, %v3105
        %v3107 = vpop.f32.mrb[0].mxu0
        %v3108 = vadd.f32 %v2104, %v3107
        %3109 = vdwg.mxu0
        %3110 = vmatprep.subr.bf16.mxu0 %v2566
        %3111 = vmatpush1.bf16.msra.mxu0 %v2565
        %3112 = vmatprep.subr.bf16.mxu0 %v2570
        %3113 = vmatpush1.bf16.msra.mxu0 %v2569
        %3114 = vmatprep.subr.bf16.mxu0 %v2574
        %3115 = vmatpush1.bf16.msra.mxu0 %v2573
        %3116 = vmatprep.subr.bf16.mxu0 %v2578
        %3117 = vmatpush1.bf16.msra.mxu0 %v2577
        %3118 = vmatprep.subr.bf16.mxu0 %v2582
        %3119 = vmatpush1.bf16.msra.mxu0 %v2581
        %3120 = vmatprep.subr.bf16.mxu0 %v2586
        %3121 = vmatpush1.bf16.msra.mxu0 %v2585
        %3122 = vmatprep.subr.bf16.mxu0 %v2590
        %3123 = vmatpush1.bf16.msra.mxu0 %v2589
        %3124 = vmatprep.subr.bf16.mxu0 %v2594
        %3125 = vmatpush1.bf16.msra.mxu0 %v2593
        %3126 = vmatprep.subr.bf16.mxu0 %v2598
        %3127 = vmatpush1.bf16.msra.mxu0 %v2597
        %3128 = vmatprep.subr.bf16.mxu0 %v2602
        %3129 = vmatpush1.bf16.msra.mxu0 %v2601
        %3130 = vmatprep.subr.bf16.mxu0 %v2606
        %3131 = vmatpush1.bf16.msra.mxu0 %v2605
        %3132 = vmatprep.subr.bf16.mxu0 %v2610
        %3133 = vmatpush1.bf16.msra.mxu0 %v2609
        %3134 = vmatprep.subr.bf16.mxu0 %v2614
        %3135 = vmatpush1.bf16.msra.mxu0 %v2613
        %3136 = vmatprep.subr.bf16.mxu0 %v2618
        %3137 = vmatpush1.bf16.msra.mxu0 %v2617
        %3138 = vmatprep.subr.bf16.mxu0 %v2622
        %3139 = vmatpush1.bf16.msra.mxu0 %v2621
        %3140 = vmatprep.subr.bf16.mxu0 %v2626
        %3141 = vmatpush1.bf16.msra.mxu0 %v2625
        %3142 = vmatprep.mubr.bf16.mxu0 %v1842
        %3143 = vmatmul.mubr.bf16.gmra.mrb[0].mxu0 %v1841
        %v3144 = vpop.f32.mrb[0].mxu0
        %v3145 = vadd.f32 %v2792, %v3144
        %v3146 = vpop.f32.mrb[0].mxu0
        %v3147 = vadd.f32 %v2794, %v3146
        %v3148 = vpop.f32.mrb[0].mxu0
        %v3149 = vadd.f32 %v2796, %v3148
        %v3150 = vpop.f32.mrb[0].mxu0
        %v3151 = vadd.f32 %v2798, %v3150
        %3152 = vmatprep.mubr.bf16.mxu0 %v1846
        %3153 = vmatmul.mubr.bf16.gmra.mrb[0].mxu0 %v1845
        %v3154 = vpop.f32.mrb[0].mxu0
        %v3155 = vadd.f32 %v2802, %v3154
        %v3156 = vpop.f32.mrb[0].mxu0
        %v3157 = vadd.f32 %v2804, %v3156
        %v3158 = vpop.f32.mrb[0].mxu0
        %v3159 = vadd.f32 %v2806, %v3158
        %v3160 = vpop.f32.mrb[0].mxu0
        %v3161 = vadd.f32 %v2808, %v3160
        %3162 = vmatprep.mubr.bf16.mxu0 %v1850
        %3163 = vmatmul.mubr.bf16.gmra.mrb[0].mxu0 %v1849
        %v3164 = vpop.f32.mrb[0].mxu0
        %v3165 = vadd.f32 %v2812, %v3164
        %v3166 = vpop.f32.mrb[0].mxu0
        %v3167 = vadd.f32 %v2814, %v3166
        %v3168 = vpop.f32.mrb[0].mxu0
        %v3169 = vadd.f32 %v2816, %v3168
        %v3170 = vpop.f32.mrb[0].mxu0
        %v3171 = vadd.f32 %v2818, %v3170
        %3172 = vmatprep.mubr.bf16.mxu0 %v1854
        %3173 = vmatmul.mubr.bf16.gmra.mrb[0].mxu0 %v1853
        %v3174 = vpop.f32.mrb[0].mxu0
        %v3175 = vadd.f32 %v2822, %v3174
        %v3176 = vpop.f32.mrb[0].mxu0
        %v3177 = vadd.f32 %v2824, %v3176
        %v3178 = vpop.f32.mrb[0].mxu0
        %v3179 = vadd.f32 %v2826, %v3178
        %v3180 = vpop.f32.mrb[0].mxu0
        %v3181 = vadd.f32 %v2828, %v3180
        %3182 = vmatprep.mubr.bf16.mxu0 %v1858
        %3183 = vmatmul.mubr.bf16.gmra.mrb[0].mxu0 %v1857
        %v3184 = vpop.f32.mrb[0].mxu0
        %v3185 = vadd.f32 %v2832, %v3184
        %v3186 = vpop.f32.mrb[0].mxu0
        %v3187 = vadd.f32 %v2834, %v3186
        %v3188 = vpop.f32.mrb[0].mxu0
        %v3189 = vadd.f32 %v2836, %v3188
        %v3190 = vpop.f32.mrb[0].mxu0
        %v3191 = vadd.f32 %v2838, %v3190
        %3192 = vmatprep.mubr.bf16.mxu0 %v1862
        %3193 = vmatmul.mubr.bf16.gmra.mrb[0].mxu0 %v1861
        %v3194 = vpop.f32.mrb[0].mxu0
        %v3195 = vadd.f32 %v2842, %v3194
        %v3196 = vpop.f32.mrb[0].mxu0
        %v3197 = vadd.f32 %v2844, %v3196
        %v3198 = vpop.f32.mrb[0].mxu0
        %v3199 = vadd.f32 %v2846, %v3198
        %v3200 = vpop.f32.mrb[0].mxu0
        %v3201 = vadd.f32 %v2848, %v3200
        %3202 = vmatprep.mubr.bf16.mxu0 %v1866
        %3203 = vmatmul.mubr.bf16.gmra.mrb[0].mxu0 %v1865
        %v3204 = vpop.f32.mrb[0].mxu0
        %v3205 = vadd.f32 %v2852, %v3204
        %v3206 = vpop.f32.mrb[0].mxu0
        %v3207 = vadd.f32 %v2854, %v3206
        %v3208 = vpop.f32.mrb[0].mxu0
        %v3209 = vadd.f32 %v2856, %v3208
        %v3210 = vpop.f32.mrb[0].mxu0
        %v3211 = vadd.f32 %v2858, %v3210
        %3212 = vmatprep.mubr.bf16.mxu0 %v1870
        %3213 = vmatmul.mubr.bf16.gmra.mrb[0].mxu0 %v1869
        %v3214 = vpop.f32.mrb[0].mxu0
        %v3215 = vadd.f32 %v2862, %v3214
        %v3216 = vpop.f32.mrb[0].mxu0
        %v3217 = vadd.f32 %v2864, %v3216
        %v3218 = vpop.f32.mrb[0].mxu0
        %v3219 = vadd.f32 %v2866, %v3218
        %v3220 = vpop.f32.mrb[0].mxu0
        %v3221 = vadd.f32 %v2868, %v3220
        %3222 = vmatprep.mubr.bf16.mxu0 %v1874
        %3223 = vmatmul.mubr.bf16.gmra.mrb[0].mxu0 %v1873
        %v3224 = vpop.f32.mrb[0].mxu0
        %v3225 = vadd.f32 %v2872, %v3224
        %v3226 = vpop.f32.mrb[0].mxu0
        %v3227 = vadd.f32 %v2874, %v3226
        %v3228 = vpop.f32.mrb[0].mxu0
        %v3229 = vadd.f32 %v2876, %v3228
        %v3230 = vpop.f32.mrb[0].mxu0
        %v3231 = vadd.f32 %v2878, %v3230
        %3232 = vmatprep.mubr.bf16.mxu0 %v1878
        %3233 = vmatmul.mubr.bf16.gmra.mrb[0].mxu0 %v1877
        %v3234 = vpop.f32.mrb[0].mxu0
        %v3235 = vadd.f32 %v2882, %v3234
        %v3236 = vpop.f32.mrb[0].mxu0
        %v3237 = vadd.f32 %v2884, %v3236
        %v3238 = vpop.f32.mrb[0].mxu0
        %v3239 = vadd.f32 %v2886, %v3238
        %v3240 = vpop.f32.mrb[0].mxu0
        %v3241 = vadd.f32 %v2888, %v3240
        %3242 = vmatprep.mubr.bf16.mxu0 %v1882
        %3243 = vmatmul.mubr.bf16.gmra.mrb[0].mxu0 %v1881
        %v3244 = vpop.f32.mrb[0].mxu0
        %v3245 = vadd.f32 %v2892, %v3244
        %v3246 = vpop.f32.mrb[0].mxu0
        %v3247 = vadd.f32 %v2894, %v3246
        %v3248 = vpop.f32.mrb[0].mxu0
        %v3249 = vadd.f32 %v2896, %v3248
        %v3250 = vpop.f32.mrb[0].mxu0
        %v3251 = vadd.f32 %v2898, %v3250
        %3252 = vmatprep.mubr.bf16.mxu0 %v1886
        %3253 = vmatmul.mubr.bf16.gmra.mrb[0].mxu0 %v1885
        %v3254 = vpop.f32.mrb[0].mxu0
        %v3255 = vadd.f32 %v2902, %v3254
        %v3256 = vpop.f32.mrb[0].mxu0
        %v3257 = vadd.f32 %v2904, %v3256
        %v3258 = vpop.f32.mrb[0].mxu0
        %v3259 = vadd.f32 %v2906, %v3258
        %v3260 = vpop.f32.mrb[0].mxu0
        %v3261 = vadd.f32 %v2908, %v3260
        %3262 = vmatprep.mubr.bf16.mxu0 %v1890
        %3263 = vmatmul.mubr.bf16.gmra.mrb[0].mxu0 %v1889
        %v3264 = vpop.f32.mrb[0].mxu0
        %v3265 = vadd.f32 %v2912, %v3264
        %v3266 = vpop.f32.mrb[0].mxu0
        %v3267 = vadd.f32 %v2914, %v3266
        %v3268 = vpop.f32.mrb[0].mxu0
        %v3269 = vadd.f32 %v2916, %v3268
        %v3270 = vpop.f32.mrb[0].mxu0
        %v3271 = vadd.f32 %v2918, %v3270
        %3272 = vmatprep.mubr.bf16.mxu0 %v1894
        %3273 = vmatmul.mubr.bf16.gmra.mrb[0].mxu0 %v1893
        %v3274 = vpop.f32.mrb[0].mxu0
        %v3275 = vadd.f32 %v2922, %v3274
        %v3276 = vpop.f32.mrb[0].mxu0
        %v3277 = vadd.f32 %v2924, %v3276
        %v3278 = vpop.f32.mrb[0].mxu0
        %v3279 = vadd.f32 %v2926, %v3278
        %v3280 = vpop.f32.mrb[0].mxu0
        %v3281 = vadd.f32 %v2928, %v3280
        %3282 = vmatprep.mubr.bf16.mxu0 %v1898
        %3283 = vmatmul.mubr.bf16.gmra.mrb[0].mxu0 %v1897
        %v3284 = vpop.f32.mrb[0].mxu0
        %v3285 = vadd.f32 %v2932, %v3284
        %v3286 = vpop.f32.mrb[0].mxu0
        %v3287 = vadd.f32 %v2934, %v3286
        %v3288 = vpop.f32.mrb[0].mxu0
        %v3289 = vadd.f32 %v2936, %v3288
        %v3290 = vpop.f32.mrb[0].mxu0
        %v3291 = vadd.f32 %v2938, %v3290
        %3292 = vmatprep.mubr.bf16.mxu0 %v1902
        %3293 = vmatmul.mubr.bf16.gmra.mrb[0].mxu0 %v1901
        %v3294 = vpop.f32.mrb[0].mxu0
        %v3295 = vadd.f32 %v2942, %v3294
        %v3296 = vpop.f32.mrb[0].mxu0
        %v3297 = vadd.f32 %v2944, %v3296
        %v3298 = vpop.f32.mrb[0].mxu0
        %v3299 = vadd.f32 %v2946, %v3298
        %v3300 = vpop.f32.mrb[0].mxu0
        %v3301 = vadd.f32 %v2948, %v3300
        %3302 = vmatprep.mubr.bf16.mxu0 %v1906
        %3303 = vmatmul.mubr.bf16.gmra.mrb[0].mxu0 %v1905
        %v3304 = vpop.f32.mrb[0].mxu0
        %v3305 = vadd.f32 %v2952, %v3304
        %v3306 = vpop.f32.mrb[0].mxu0
        %v3307 = vadd.f32 %v2954, %v3306
        %v3308 = vpop.f32.mrb[0].mxu0
        %v3309 = vadd.f32 %v2956, %v3308
        %v3310 = vpop.f32.mrb[0].mxu0
        %v3311 = vadd.f32 %v2958, %v3310
        %3312 = vmatprep.mubr.bf16.mxu0 %v1910
        %3313 = vmatmul.mubr.bf16.gmra.mrb[0].mxu0 %v1909
        %v3314 = vpop.f32.mrb[0].mxu0
        %v3315 = vadd.f32 %v2962, %v3314
        %v3316 = vpop.f32.mrb[0].mxu0
        %v3317 = vadd.f32 %v2964, %v3316
        %v3318 = vpop.f32.mrb[0].mxu0
        %v3319 = vadd.f32 %v2966, %v3318
        %v3320 = vpop.f32.mrb[0].mxu0
        %v3321 = vadd.f32 %v2968, %v3320
        %3322 = vmatprep.mubr.bf16.mxu0 %v1914
        %3323 = vmatmul.mubr.bf16.gmra.mrb[0].mxu0 %v1913
        %v3324 = vpop.f32.mrb[0].mxu0
        %v3325 = vadd.f32 %v2972, %v3324
        %v3326 = vpop.f32.mrb[0].mxu0
        %v3327 = vadd.f32 %v2974, %v3326
        %v3328 = vpop.f32.mrb[0].mxu0
        %v3329 = vadd.f32 %v2976, %v3328
        %v3330 = vpop.f32.mrb[0].mxu0
        %v3331 = vadd.f32 %v2978, %v3330
        %3332 = vmatprep.mubr.bf16.mxu0 %v1918
        %3333 = vmatmul.mubr.bf16.gmra.mrb[0].mxu0 %v1917
        %v3334 = vpop.f32.mrb[0].mxu0
        %v3335 = vadd.f32 %v2982, %v3334
        %v3336 = vpop.f32.mrb[0].mxu0
        %v3337 = vadd.f32 %v2984, %v3336
        %v3338 = vpop.f32.mrb[0].mxu0
        %v3339 = vadd.f32 %v2986, %v3338
        %v3340 = vpop.f32.mrb[0].mxu0
        %v3341 = vadd.f32 %v2988, %v3340
        %3342 = vmatprep.mubr.bf16.mxu0 %v1922
        %3343 = vmatmul.mubr.bf16.gmra.mrb[0].mxu0 %v1921
        %v3344 = vpop.f32.mrb[0].mxu0
        %v3345 = vadd.f32 %v2992, %v3344
        %v3346 = vpop.f32.mrb[0].mxu0
        %v3347 = vadd.f32 %v2994, %v3346
        %v3348 = vpop.f32.mrb[0].mxu0
        %v3349 = vadd.f32 %v2996, %v3348
        %v3350 = vpop.f32.mrb[0].mxu0
        %v3351 = vadd.f32 %v2998, %v3350
        %3352 = vmatprep.mubr.bf16.mxu0 %v1926
        %3353 = vmatmul.mubr.bf16.gmra.mrb[0].mxu0 %v1925
        %v3354 = vpop.f32.mrb[0].mxu0
        %v3355 = vadd.f32 %v3002, %v3354
        %v3356 = vpop.f32.mrb[0].mxu0
        %v3357 = vadd.f32 %v3004, %v3356
        %v3358 = vpop.f32.mrb[0].mxu0
        %v3359 = vadd.f32 %v3006, %v3358
        %v3360 = vpop.f32.mrb[0].mxu0
        %v3361 = vadd.f32 %v3008, %v3360
        %3362 = vmatprep.mubr.bf16.mxu0 %v1930
        %3363 = vmatmul.mubr.bf16.gmra.mrb[0].mxu0 %v1929
        %v3364 = vpop.f32.mrb[0].mxu0
        %v3365 = vadd.f32 %v3012, %v3364
        %v3366 = vpop.f32.mrb[0].mxu0
        %v3367 = vadd.f32 %v3014, %v3366
        %v3368 = vpop.f32.mrb[0].mxu0
        %v3369 = vadd.f32 %v3016, %v3368
        %v3370 = vpop.f32.mrb[0].mxu0
        %v3371 = vadd.f32 %v3018, %v3370
        %3372 = vmatprep.mubr.bf16.mxu0 %v1934
        %3373 = vmatmul.mubr.bf16.gmra.mrb[0].mxu0 %v1933
        %v3374 = vpop.f32.mrb[0].mxu0
        %v3375 = vadd.f32 %v3022, %v3374
        %v3376 = vpop.f32.mrb[0].mxu0
        %v3377 = vadd.f32 %v3024, %v3376
        %v3378 = vpop.f32.mrb[0].mxu0
        %v3379 = vadd.f32 %v3026, %v3378
        %v3380 = vpop.f32.mrb[0].mxu0
        %v3381 = vadd.f32 %v3028, %v3380
        %3382 = vmatprep.mubr.bf16.mxu0 %v1938
        %3383 = vmatmul.mubr.bf16.gmra.mrb[0].mxu0 %v1937
        %v3384 = vpop.f32.mrb[0].mxu0
        %v3385 = vadd.f32 %v3032, %v3384
        %v3386 = vpop.f32.mrb[0].mxu0
        %v3387 = vadd.f32 %v3034, %v3386
        %v3388 = vpop.f32.mrb[0].mxu0
        %v3389 = vadd.f32 %v3036, %v3388
        %v3390 = vpop.f32.mrb[0].mxu0
        %v3391 = vadd.f32 %v3038, %v3390
        %3392 = vmatprep.mubr.bf16.mxu0 %v1942
        %3393 = vmatmul.mubr.bf16.gmra.mrb[0].mxu0 %v1941
        %v3394 = vpop.f32.mrb[0].mxu0
        %v3395 = vadd.f32 %v3042, %v3394
        %v3396 = vpop.f32.mrb[0].mxu0
        %v3397 = vadd.f32 %v3044, %v3396
        %v3398 = vpop.f32.mrb[0].mxu0
        %v3399 = vadd.f32 %v3046, %v3398
        %v3400 = vpop.f32.mrb[0].mxu0
        %v3401 = vadd.f32 %v3048, %v3400
        %3402 = vmatprep.mubr.bf16.mxu0 %v1946
        %3403 = vmatmul.mubr.bf16.gmra.mrb[0].mxu0 %v1945
        %v3404 = vpop.f32.mrb[0].mxu0
        %v3405 = vadd.f32 %v3052, %v3404
        %v3406 = vpop.f32.mrb[0].mxu0
        %v3407 = vadd.f32 %v3054, %v3406
        %v3408 = vpop.f32.mrb[0].mxu0
        %v3409 = vadd.f32 %v3056, %v3408
        %v3410 = vpop.f32.mrb[0].mxu0
        %v3411 = vadd.f32 %v3058, %v3410
        %3412 = vmatprep.mubr.bf16.mxu0 %v1950
        %3413 = vmatmul.mubr.bf16.gmra.mrb[0].mxu0 %v1949
        %v3414 = vpop.f32.mrb[0].mxu0
        %v3415 = vadd.f32 %v3062, %v3414
        %v3416 = vpop.f32.mrb[0].mxu0
        %v3417 = vadd.f32 %v3064, %v3416
        %v3418 = vpop.f32.mrb[0].mxu0
        %v3419 = vadd.f32 %v3066, %v3418
        %v3420 = vpop.f32.mrb[0].mxu0
        %v3421 = vadd.f32 %v3068, %v3420
        %3422 = vmatprep.mubr.bf16.mxu0 %v1954
        %3423 = vmatmul.mubr.bf16.gmra.mrb[0].mxu0 %v1953
        %v3424 = vpop.f32.mrb[0].mxu0
        %v3425 = vadd.f32 %v3072, %v3424
        %v3426 = vpop.f32.mrb[0].mxu0
        %v3427 = vadd.f32 %v3074, %v3426
        %v3428 = vpop.f32.mrb[0].mxu0
        %v3429 = vadd.f32 %v3076, %v3428
        %v3430 = vpop.f32.mrb[0].mxu0
        %v3431 = vadd.f32 %v3078, %v3430
        %3432 = vmatprep.mubr.bf16.mxu0 %v1958
        %3433 = vmatmul.mubr.bf16.gmra.mrb[0].mxu0 %v1957
        %v3434 = vpop.f32.mrb[0].mxu0
        %v3435 = vadd.f32 %v3082, %v3434
        %v3436 = vpop.f32.mrb[0].mxu0
        %v3437 = vadd.f32 %v3084, %v3436
        %v3438 = vpop.f32.mrb[0].mxu0
        %v3439 = vadd.f32 %v3086, %v3438
        %v3440 = vpop.f32.mrb[0].mxu0
        %v3441 = vadd.f32 %v3088, %v3440
        %3442 = vmatprep.mubr.bf16.mxu0 %v1962
        %3443 = vmatmul.mubr.bf16.gmra.mrb[0].mxu0 %v1961
        %v3444 = vpop.f32.mrb[0].mxu0
        %v3445 = vadd.f32 %v3092, %v3444
        %v3446 = vpop.f32.mrb[0].mxu0
        %v3447 = vadd.f32 %v3094, %v3446
        %v3448 = vpop.f32.mrb[0].mxu0
        %v3449 = vadd.f32 %v3096, %v3448
        %v3450 = vpop.f32.mrb[0].mxu0
        %v3451 = vadd.f32 %v3098, %v3450
        %3452 = vmatprep.mubr.bf16.mxu0 %v1966
        %3453 = vmatmul.mubr.bf16.gmra.mrb[0].mxu0 %v1965
        %v3454 = vpop.f32.mrb[0].mxu0
        %v3455 = vadd.f32 %v3102, %v3454
        %v3456 = vpop.f32.mrb[0].mxu0
        %v3457 = vadd.f32 %v3104, %v3456
        %v3458 = vpop.f32.mrb[0].mxu0
        %v3459 = vadd.f32 %v3106, %v3458
        %v3460 = vpop.f32.mrb[0].mxu0
        %v3461 = vadd.f32 %v3108, %v3460
        %3462 = vdwg.mxu0
        %3463 = vmatprep.subr.bf16.mxu0 %v2504
        %3464 = vmatpush1.bf16.msra.mxu0 %v2503
        %3465 = vmatprep.subr.bf16.mxu0 %v2508
        %3466 = vmatpush1.bf16.msra.mxu0 %v2507
        %3467 = vmatprep.subr.bf16.mxu0 %v2512
        %3468 = vmatpush1.bf16.msra.mxu0 %v2511
        %3469 = vmatprep.subr.bf16.mxu0 %v2516
        %3470 = vmatpush1.bf16.msra.mxu0 %v2515
        %3471 = vmatprep.subr.bf16.mxu0 %v2520
        %3472 = vmatpush1.bf16.msra.mxu0 %v2519
        %3473 = vmatprep.subr.bf16.mxu0 %v2524
        %3474 = vmatpush1.bf16.msra.mxu0 %v2523
        %3475 = vmatprep.subr.bf16.mxu0 %v2528
        %3476 = vmatpush1.bf16.msra.mxu0 %v2527
        %3477 = vmatprep.subr.bf16.mxu0 %v2532
        %3478 = vmatpush1.bf16.msra.mxu0 %v2531
        %3479 = vmatprep.subr.bf16.mxu0 %v2536
        %3480 = vmatpush1.bf16.msra.mxu0 %v2535
        %3481 = vmatprep.subr.bf16.mxu0 %v2540
        %3482 = vmatpush1.bf16.msra.mxu0 %v2539
        %3483 = vmatprep.subr.bf16.mxu0 %v2544
        %3484 = vmatpush1.bf16.msra.mxu0 %v2543
        %3485 = vmatprep.subr.bf16.mxu0 %v2548
        %3486 = vmatpush1.bf16.msra.mxu0 %v2547
        %3487 = vmatprep.subr.bf16.mxu0 %v2552
        %3488 = vmatpush1.bf16.msra.mxu0 %v2551
        %3489 = vmatprep.subr.bf16.mxu0 %v2556
        %3490 = vmatpush1.bf16.msra.mxu0 %v2555
        %3491 = vmatprep.subr.bf16.mxu0 %v2560
        %3492 = vmatpush1.bf16.msra.mxu0 %v2559
        %3493 = vmatprep.subr.bf16.mxu0 %v2564
        %3494 = vmatpush1.bf16.msra.mxu0 %v2563
        %3495 = vmatprep.mubr.bf16.mxu0 %v1840
        %3496 = vmatmul.mubr.bf16.gmra.mrb[0].mxu0 %v1839
        %v3497 = vpop.f32.mrb[0].mxu0
        %v3498 = vadd.f32 %v2108, %v3497
        %v3499 = vpop.f32.mrb[0].mxu0
        %v3500 = vadd.f32 %v2112, %v3499
        %v3501 = vpop.f32.mrb[0].mxu0
        %v3502 = vadd.f32 %v2108, %v3501
        %v3503 = vpop.f32.mrb[0].mxu0
        %v3504 = vadd.f32 %v2112, %v3503
        %3505 = vmatprep.mubr.bf16.mxu0 %v1844
        %3506 = vmatmul.mubr.bf16.gmra.mrb[0].mxu0 %v1843
        %v3507 = vpop.f32.mrb[0].mxu0
        %v3508 = vadd.f32 %v2108, %v3507
        %v3509 = vpop.f32.mrb[0].mxu0
        %v3510 = vadd.f32 %v2112, %v3509
        %v3511 = vpop.f32.mrb[0].mxu0
        %v3512 = vadd.f32 %v2108, %v3511
        %v3513 = vpop.f32.mrb[0].mxu0
        %v3514 = vadd.f32 %v2112, %v3513
        %3515 = vmatprep.mubr.bf16.mxu0 %v1848
        %3516 = vmatmul.mubr.bf16.gmra.mrb[0].mxu0 %v1847
        %v3517 = vpop.f32.mrb[0].mxu0
        %v3518 = vadd.f32 %v2108, %v3517
        %v3519 = vpop.f32.mrb[0].mxu0
        %v3520 = vadd.f32 %v2112, %v3519
        %v3521 = vpop.f32.mrb[0].mxu0
        %v3522 = vadd.f32 %v2108, %v3521
        %v3523 = vpop.f32.mrb[0].mxu0
        %v3524 = vadd.f32 %v2112, %v3523
        %3525 = vmatprep.mubr.bf16.mxu0 %v1852
        %3526 = vmatmul.mubr.bf16.gmra.mrb[0].mxu0 %v1851
        %v3527 = vpop.f32.mrb[0].mxu0
        %v3528 = vadd.f32 %v2108, %v3527
        %v3529 = vpop.f32.mrb[0].mxu0
        %v3530 = vadd.f32 %v2112, %v3529
        %v3531 = vpop.f32.mrb[0].mxu0
        %v3532 = vadd.f32 %v2108, %v3531
        %v3533 = vpop.f32.mrb[0].mxu0
        %v3534 = vadd.f32 %v2112, %v3533
        %3535 = vmatprep.mubr.bf16.mxu0 %v1856
        %3536 = vmatmul.mubr.bf16.gmra.mrb[0].mxu0 %v1855
        %v3537 = vpop.f32.mrb[0].mxu0
        %v3538 = vadd.f32 %v2108, %v3537
        %v3539 = vpop.f32.mrb[0].mxu0
        %v3540 = vadd.f32 %v2112, %v3539
        %v3541 = vpop.f32.mrb[0].mxu0
        %v3542 = vadd.f32 %v2108, %v3541
        %v3543 = vpop.f32.mrb[0].mxu0
        %v3544 = vadd.f32 %v2112, %v3543
        %3545 = vmatprep.mubr.bf16.mxu0 %v1860
        %3546 = vmatmul.mubr.bf16.gmra.mrb[0].mxu0 %v1859
        %v3547 = vpop.f32.mrb[0].mxu0
        %v3548 = vadd.f32 %v2108, %v3547
        %v3549 = vpop.f32.mrb[0].mxu0
        %v3550 = vadd.f32 %v2112, %v3549
        %v3551 = vpop.f32.mrb[0].mxu0
        %v3552 = vadd.f32 %v2108, %v3551
        %v3553 = vpop.f32.mrb[0].mxu0
        %v3554 = vadd.f32 %v2112, %v3553
        %3555 = vmatprep.mubr.bf16.mxu0 %v1864
        %3556 = vmatmul.mubr.bf16.gmra.mrb[0].mxu0 %v1863
        %v3557 = vpop.f32.mrb[0].mxu0
        %v3558 = vadd.f32 %v2108, %v3557
        %v3559 = vpop.f32.mrb[0].mxu0
        %v3560 = vadd.f32 %v2112, %v3559
        %v3561 = vpop.f32.mrb[0].mxu0
        %v3562 = vadd.f32 %v2108, %v3561
        %v3563 = vpop.f32.mrb[0].mxu0
        %v3564 = vadd.f32 %v2112, %v3563
        %3565 = vmatprep.mubr.bf16.mxu0 %v1868
        %3566 = vmatmul.mubr.bf16.gmra.mrb[0].mxu0 %v1867
        %v3567 = vpop.f32.mrb[0].mxu0
        %v3568 = vadd.f32 %v2108, %v3567
        %v3569 = vpop.f32.mrb[0].mxu0
        %v3570 = vadd.f32 %v2112, %v3569
        %v3571 = vpop.f32.mrb[0].mxu0
        %v3572 = vadd.f32 %v2108, %v3571
        %v3573 = vpop.f32.mrb[0].mxu0
        %v3574 = vadd.f32 %v2112, %v3573
        %3575 = vmatprep.mubr.bf16.mxu0 %v1872
        %3576 = vmatmul.mubr.bf16.gmra.mrb[0].mxu0 %v1871
        %v3577 = vpop.f32.mrb[0].mxu0
        %v3578 = vadd.f32 %v2108, %v3577
        %v3579 = vpop.f32.mrb[0].mxu0
        %v3580 = vadd.f32 %v2112, %v3579
        %v3581 = vpop.f32.mrb[0].mxu0
        %v3582 = vadd.f32 %v2108, %v3581
        %v3583 = vpop.f32.mrb[0].mxu0
        %v3584 = vadd.f32 %v2112, %v3583
        %3585 = vmatprep.mubr.bf16.mxu0 %v1876
        %3586 = vmatmul.mubr.bf16.gmra.mrb[0].mxu0 %v1875
        %v3587 = vpop.f32.mrb[0].mxu0
        %v3588 = vadd.f32 %v2108, %v3587
        %v3589 = vpop.f32.mrb[0].mxu0
        %v3590 = vadd.f32 %v2112, %v3589
        %v3591 = vpop.f32.mrb[0].mxu0
        %v3592 = vadd.f32 %v2108, %v3591
        %v3593 = vpop.f32.mrb[0].mxu0
        %v3594 = vadd.f32 %v2112, %v3593
        %3595 = vmatprep.mubr.bf16.mxu0 %v1880
        %3596 = vmatmul.mubr.bf16.gmra.mrb[0].mxu0 %v1879
        %v3597 = vpop.f32.mrb[0].mxu0
        %v3598 = vadd.f32 %v2108, %v3597
        %v3599 = vpop.f32.mrb[0].mxu0
        %v3600 = vadd.f32 %v2112, %v3599
        %v3601 = vpop.f32.mrb[0].mxu0
        %v3602 = vadd.f32 %v2108, %v3601
        %v3603 = vpop.f32.mrb[0].mxu0
        %v3604 = vadd.f32 %v2112, %v3603
        %3605 = vmatprep.mubr.bf16.mxu0 %v1884
        %3606 = vmatmul.mubr.bf16.gmra.mrb[0].mxu0 %v1883
        %v3607 = vpop.f32.mrb[0].mxu0
        %v3608 = vadd.f32 %v2108, %v3607
        %v3609 = vpop.f32.mrb[0].mxu0
        %v3610 = vadd.f32 %v2112, %v3609
        %v3611 = vpop.f32.mrb[0].mxu0
        %v3612 = vadd.f32 %v2108, %v3611
        %v3613 = vpop.f32.mrb[0].mxu0
        %v3614 = vadd.f32 %v2112, %v3613
        %3615 = vmatprep.mubr.bf16.mxu0 %v1888
        %3616 = vmatmul.mubr.bf16.gmra.mrb[0].mxu0 %v1887
        %v3617 = vpop.f32.mrb[0].mxu0
        %v3618 = vadd.f32 %v2108, %v3617
        %v3619 = vpop.f32.mrb[0].mxu0
        %v3620 = vadd.f32 %v2112, %v3619
        %v3621 = vpop.f32.mrb[0].mxu0
        %v3622 = vadd.f32 %v2108, %v3621
        %v3623 = vpop.f32.mrb[0].mxu0
        %v3624 = vadd.f32 %v2112, %v3623
        %3625 = vmatprep.mubr.bf16.mxu0 %v1892
        %3626 = vmatmul.mubr.bf16.gmra.mrb[0].mxu0 %v1891
        %v3627 = vpop.f32.mrb[0].mxu0
        %v3628 = vadd.f32 %v2108, %v3627
        %v3629 = vpop.f32.mrb[0].mxu0
        %v3630 = vadd.f32 %v2112, %v3629
        %v3631 = vpop.f32.mrb[0].mxu0
        %v3632 = vadd.f32 %v2108, %v3631
        %v3633 = vpop.f32.mrb[0].mxu0
        %v3634 = vadd.f32 %v2112, %v3633
        %3635 = vmatprep.mubr.bf16.mxu0 %v1896
        %3636 = vmatmul.mubr.bf16.gmra.mrb[0].mxu0 %v1895
        %v3637 = vpop.f32.mrb[0].mxu0
        %v3638 = vadd.f32 %v2108, %v3637
        %v3639 = vpop.f32.mrb[0].mxu0
        %v3640 = vadd.f32 %v2112, %v3639
        %v3641 = vpop.f32.mrb[0].mxu0
        %v3642 = vadd.f32 %v2108, %v3641
        %v3643 = vpop.f32.mrb[0].mxu0
        %v3644 = vadd.f32 %v2112, %v3643
        %3645 = vmatprep.mubr.bf16.mxu0 %v1900
        %3646 = vmatmul.mubr.bf16.gmra.mrb[0].mxu0 %v1899
        %v3647 = vpop.f32.mrb[0].mxu0
        %v3648 = vadd.f32 %v2108, %v3647
        %v3649 = vpop.f32.mrb[0].mxu0
        %v3650 = vadd.f32 %v2112, %v3649
        %v3651 = vpop.f32.mrb[0].mxu0
        %v3652 = vadd.f32 %v2108, %v3651
        %v3653 = vpop.f32.mrb[0].mxu0
        %v3654 = vadd.f32 %v2112, %v3653
        %3655 = vmatprep.mubr.bf16.mxu0 %v1904
        %3656 = vmatmul.mubr.bf16.gmra.mrb[0].mxu0 %v1903
        %v3657 = vpop.f32.mrb[0].mxu0
        %v3658 = vadd.f32 %v2108, %v3657
        %v3659 = vpop.f32.mrb[0].mxu0
        %v3660 = vadd.f32 %v2112, %v3659
        %v3661 = vpop.f32.mrb[0].mxu0
        %v3662 = vadd.f32 %v2108, %v3661
        %v3663 = vpop.f32.mrb[0].mxu0
        %v3664 = vadd.f32 %v2112, %v3663
        %3665 = vmatprep.mubr.bf16.mxu0 %v1908
        %3666 = vmatmul.mubr.bf16.gmra.mrb[0].mxu0 %v1907
        %v3667 = vpop.f32.mrb[0].mxu0
        %v3668 = vadd.f32 %v2108, %v3667
        %v3669 = vpop.f32.mrb[0].mxu0
        %v3670 = vadd.f32 %v2112, %v3669
        %v3671 = vpop.f32.mrb[0].mxu0
        %v3672 = vadd.f32 %v2108, %v3671
        %v3673 = vpop.f32.mrb[0].mxu0
        %v3674 = vadd.f32 %v2112, %v3673
        %3675 = vmatprep.mubr.bf16.mxu0 %v1912
        %3676 = vmatmul.mubr.bf16.gmra.mrb[0].mxu0 %v1911
        %v3677 = vpop.f32.mrb[0].mxu0
        %v3678 = vadd.f32 %v2108, %v3677
        %v3679 = vpop.f32.mrb[0].mxu0
        %v3680 = vadd.f32 %v2112, %v3679
        %v3681 = vpop.f32.mrb[0].mxu0
        %v3682 = vadd.f32 %v2108, %v3681
        %v3683 = vpop.f32.mrb[0].mxu0
        %v3684 = vadd.f32 %v2112, %v3683
        %3685 = vmatprep.mubr.bf16.mxu0 %v1916
        %3686 = vmatmul.mubr.bf16.gmra.mrb[0].mxu0 %v1915
        %v3687 = vpop.f32.mrb[0].mxu0
        %v3688 = vadd.f32 %v2108, %v3687
        %v3689 = vpop.f32.mrb[0].mxu0
        %v3690 = vadd.f32 %v2112, %v3689
        %v3691 = vpop.f32.mrb[0].mxu0
        %v3692 = vadd.f32 %v2108, %v3691
        %v3693 = vpop.f32.mrb[0].mxu0
        %v3694 = vadd.f32 %v2112, %v3693
        %3695 = vmatprep.mubr.bf16.mxu0 %v1920
        %3696 = vmatmul.mubr.bf16.gmra.mrb[0].mxu0 %v1919
        %v3697 = vpop.f32.mrb[0].mxu0
        %v3698 = vadd.f32 %v2108, %v3697
        %v3699 = vpop.f32.mrb[0].mxu0
        %v3700 = vadd.f32 %v2112, %v3699
        %v3701 = vpop.f32.mrb[0].mxu0
        %v3702 = vadd.f32 %v2108, %v3701
        %v3703 = vpop.f32.mrb[0].mxu0
        %v3704 = vadd.f32 %v2112, %v3703
        %3705 = vmatprep.mubr.bf16.mxu0 %v1924
        %3706 = vmatmul.mubr.bf16.gmra.mrb[0].mxu0 %v1923
        %v3707 = vpop.f32.mrb[0].mxu0
        %v3708 = vadd.f32 %v2108, %v3707
        %v3709 = vpop.f32.mrb[0].mxu0
        %v3710 = vadd.f32 %v2112, %v3709
        %v3711 = vpop.f32.mrb[0].mxu0
        %v3712 = vadd.f32 %v2108, %v3711
        %v3713 = vpop.f32.mrb[0].mxu0
        %v3714 = vadd.f32 %v2112, %v3713
        %3715 = vmatprep.mubr.bf16.mxu0 %v1928
        %3716 = vmatmul.mubr.bf16.gmra.mrb[0].mxu0 %v1927
        %v3717 = vpop.f32.mrb[0].mxu0
        %v3718 = vadd.f32 %v2108, %v3717
        %v3719 = vpop.f32.mrb[0].mxu0
        %v3720 = vadd.f32 %v2112, %v3719
        %v3721 = vpop.f32.mrb[0].mxu0
        %v3722 = vadd.f32 %v2108, %v3721
        %v3723 = vpop.f32.mrb[0].mxu0
        %v3724 = vadd.f32 %v2112, %v3723
        %3725 = vmatprep.mubr.bf16.mxu0 %v1932
        %3726 = vmatmul.mubr.bf16.gmra.mrb[0].mxu0 %v1931
        %v3727 = vpop.f32.mrb[0].mxu0
        %v3728 = vadd.f32 %v2108, %v3727
        %v3729 = vpop.f32.mrb[0].mxu0
        %v3730 = vadd.f32 %v2112, %v3729
        %v3731 = vpop.f32.mrb[0].mxu0
        %v3732 = vadd.f32 %v2108, %v3731
        %v3733 = vpop.f32.mrb[0].mxu0
        %v3734 = vadd.f32 %v2112, %v3733
        %3735 = vmatprep.mubr.bf16.mxu0 %v1936
        %3736 = vmatmul.mubr.bf16.gmra.mrb[0].mxu0 %v1935
        %v3737 = vpop.f32.mrb[0].mxu0
        %v3738 = vadd.f32 %v2108, %v3737
        %v3739 = vpop.f32.mrb[0].mxu0
        %v3740 = vadd.f32 %v2112, %v3739
        %v3741 = vpop.f32.mrb[0].mxu0
        %v3742 = vadd.f32 %v2108, %v3741
        %v3743 = vpop.f32.mrb[0].mxu0
        %v3744 = vadd.f32 %v2112, %v3743
        %3745 = vmatprep.mubr.bf16.mxu0 %v1940
        %3746 = vmatmul.mubr.bf16.gmra.mrb[0].mxu0 %v1939
        %v3747 = vpop.f32.mrb[0].mxu0
        %v3748 = vadd.f32 %v2108, %v3747
        %v3749 = vpop.f32.mrb[0].mxu0
        %v3750 = vadd.f32 %v2112, %v3749
        %v3751 = vpop.f32.mrb[0].mxu0
        %v3752 = vadd.f32 %v2108, %v3751
        %v3753 = vpop.f32.mrb[0].mxu0
        %v3754 = vadd.f32 %v2112, %v3753
        %3755 = vmatprep.mubr.bf16.mxu0 %v1944
        %3756 = vmatmul.mubr.bf16.gmra.mrb[0].mxu0 %v1943
        %v3757 = vpop.f32.mrb[0].mxu0
        %v3758 = vadd.f32 %v2108, %v3757
        %v3759 = vpop.f32.mrb[0].mxu0
        %v3760 = vadd.f32 %v2112, %v3759
        %v3761 = vpop.f32.mrb[0].mxu0
        %v3762 = vadd.f32 %v2108, %v3761
        %v3763 = vpop.f32.mrb[0].mxu0
        %v3764 = vadd.f32 %v2112, %v3763
        %3765 = vmatprep.mubr.bf16.mxu0 %v1948
        %3766 = vmatmul.mubr.bf16.gmra.mrb[0].mxu0 %v1947
        %v3767 = vpop.f32.mrb[0].mxu0
        %v3768 = vadd.f32 %v2108, %v3767
        %v3769 = vpop.f32.mrb[0].mxu0
        %v3770 = vadd.f32 %v2112, %v3769
        %v3771 = vpop.f32.mrb[0].mxu0
        %v3772 = vadd.f32 %v2108, %v3771
        %v3773 = vpop.f32.mrb[0].mxu0
        %v3774 = vadd.f32 %v2112, %v3773
        %3775 = vmatprep.mubr.bf16.mxu0 %v1952
        %3776 = vmatmul.mubr.bf16.gmra.mrb[0].mxu0 %v1951
        %v3777 = vpop.f32.mrb[0].mxu0
        %v3778 = vadd.f32 %v2108, %v3777
        %v3779 = vpop.f32.mrb[0].mxu0
        %v3780 = vadd.f32 %v2112, %v3779
        %v3781 = vpop.f32.mrb[0].mxu0
        %v3782 = vadd.f32 %v2108, %v3781
        %v3783 = vpop.f32.mrb[0].mxu0
        %v3784 = vadd.f32 %v2112, %v3783
        %3785 = vmatprep.mubr.bf16.mxu0 %v1956
        %3786 = vmatmul.mubr.bf16.gmra.mrb[0].mxu0 %v1955
        %v3787 = vpop.f32.mrb[0].mxu0
        %v3788 = vadd.f32 %v2108, %v3787
        %v3789 = vpop.f32.mrb[0].mxu0
        %v3790 = vadd.f32 %v2112, %v3789
        %v3791 = vpop.f32.mrb[0].mxu0
        %v3792 = vadd.f32 %v2108, %v3791
        %v3793 = vpop.f32.mrb[0].mxu0
        %v3794 = vadd.f32 %v2112, %v3793
        %3795 = vmatprep.mubr.bf16.mxu0 %v1960
        %3796 = vmatmul.mubr.bf16.gmra.mrb[0].mxu0 %v1959
        %v3797 = vpop.f32.mrb[0].mxu0
        %v3798 = vadd.f32 %v2108, %v3797
        %v3799 = vpop.f32.mrb[0].mxu0
        %v3800 = vadd.f32 %v2112, %v3799
        %v3801 = vpop.f32.mrb[0].mxu0
        %v3802 = vadd.f32 %v2108, %v3801
        %v3803 = vpop.f32.mrb[0].mxu0
        %v3804 = vadd.f32 %v2112, %v3803
        %3805 = vmatprep.mubr.bf16.mxu0 %v1964
        %3806 = vmatmul.mubr.bf16.gmra.mrb[0].mxu0 %v1963
        %v3807 = vpop.f32.mrb[0].mxu0
        %v3808 = vadd.f32 %v2108, %v3807
        %v3809 = vpop.f32.mrb[0].mxu0
        %v3810 = vadd.f32 %v2112, %v3809
        %v3811 = vpop.f32.mrb[0].mxu0
        %v3812 = vadd.f32 %v2108, %v3811
        %v3813 = vpop.f32.mrb[0].mxu0
        %v3814 = vadd.f32 %v2112, %v3813
        %3815 = vdwg.mxu0
        %3816 = vmatprep.subr.bf16.mxu0 %v2568
        %3817 = vmatpush1.bf16.msra.mxu0 %v2567
        %3818 = vmatprep.subr.bf16.mxu0 %v2572
        %3819 = vmatpush1.bf16.msra.mxu0 %v2571
        %3820 = vmatprep.subr.bf16.mxu0 %v2576
        %3821 = vmatpush1.bf16.msra.mxu0 %v2575
        %3822 = vmatprep.subr.bf16.mxu0 %v2580
        %3823 = vmatpush1.bf16.msra.mxu0 %v2579
        %3824 = vmatprep.subr.bf16.mxu0 %v2584
        %3825 = vmatpush1.bf16.msra.mxu0 %v2583
        %3826 = vmatprep.subr.bf16.mxu0 %v2588
        %3827 = vmatpush1.bf16.msra.mxu0 %v2587
        %3828 = vmatprep.subr.bf16.mxu0 %v2592
        %3829 = vmatpush1.bf16.msra.mxu0 %v2591
        %3830 = vmatprep.subr.bf16.mxu0 %v2596
        %3831 = vmatpush1.bf16.msra.mxu0 %v2595
        %3832 = vmatprep.subr.bf16.mxu0 %v2600
        %3833 = vmatpush1.bf16.msra.mxu0 %v2599
        %3834 = vmatprep.subr.bf16.mxu0 %v2604
        %3835 = vmatpush1.bf16.msra.mxu0 %v2603
        %3836 = vmatprep.subr.bf16.mxu0 %v2608
        %3837 = vmatpush1.bf16.msra.mxu0 %v2607
        %3838 = vmatprep.subr.bf16.mxu0 %v2612
        %3839 = vmatpush1.bf16.msra.mxu0 %v2611
        %3840 = vmatprep.subr.bf16.mxu0 %v2616
        %3841 = vmatpush1.bf16.msra.mxu0 %v2615
        %3842 = vmatprep.subr.bf16.mxu0 %v2620
        %3843 = vmatpush1.bf16.msra.mxu0 %v2619
        %3844 = vmatprep.subr.bf16.mxu0 %v2624
        %3845 = vmatpush1.bf16.msra.mxu0 %v2623
        %3846 = vmatprep.subr.bf16.mxu0 %v2628
        %3847 = vmatpush1.bf16.msra.mxu0 %v2627
        %3848 = vmatprep.mubr.bf16.mxu0 %v1842
        %3849 = vmatmul.mubr.bf16.gmra.mrb[0].mxu0 %v1841
        %v3850 = vpop.f32.mrb[0].mxu0
        %v3851 = vadd.f32 %v3498, %v3850
        %v3852 = vpop.f32.mrb[0].mxu0
        %v3853 = vadd.f32 %v3500, %v3852
        %v3854 = vpop.f32.mrb[0].mxu0
        %v3855 = vadd.f32 %v3502, %v3854
        %v3856 = vpop.f32.mrb[0].mxu0
        %v3857 = vadd.f32 %v3504, %v3856
        %3858 = vmatprep.mubr.bf16.mxu0 %v1846
        %3859 = vmatmul.mubr.bf16.gmra.mrb[0].mxu0 %v1845
        %v3860 = vpop.f32.mrb[0].mxu0
        %v3861 = vadd.f32 %v3508, %v3860
        %v3862 = vpop.f32.mrb[0].mxu0
        %v3863 = vadd.f32 %v3510, %v3862
        %v3864 = vpop.f32.mrb[0].mxu0
        %v3865 = vadd.f32 %v3512, %v3864
        %v3866 = vpop.f32.mrb[0].mxu0
        %v3867 = vadd.f32 %v3514, %v3866
        %3868 = vmatprep.mubr.bf16.mxu0 %v1850
        %3869 = vmatmul.mubr.bf16.gmra.mrb[0].mxu0 %v1849
        %v3870 = vpop.f32.mrb[0].mxu0
        %v3871 = vadd.f32 %v3518, %v3870
        %v3872 = vpop.f32.mrb[0].mxu0
        %v3873 = vadd.f32 %v3520, %v3872
        %v3874 = vpop.f32.mrb[0].mxu0
        %v3875 = vadd.f32 %v3522, %v3874
        %v3876 = vpop.f32.mrb[0].mxu0
        %v3877 = vadd.f32 %v3524, %v3876
        %3878 = vmatprep.mubr.bf16.mxu0 %v1854
        %3879 = vmatmul.mubr.bf16.gmra.mrb[0].mxu0 %v1853
        %v3880 = vpop.f32.mrb[0].mxu0
        %v3881 = vadd.f32 %v3528, %v3880
        %v3882 = vpop.f32.mrb[0].mxu0
        %v3883 = vadd.f32 %v3530, %v3882
        %v3884 = vpop.f32.mrb[0].mxu0
        %v3885 = vadd.f32 %v3532, %v3884
        %v3886 = vpop.f32.mrb[0].mxu0
        %v3887 = vadd.f32 %v3534, %v3886
        %3888 = vmatprep.mubr.bf16.mxu0 %v1858
        %3889 = vmatmul.mubr.bf16.gmra.mrb[0].mxu0 %v1857
        %v3890 = vpop.f32.mrb[0].mxu0
        %v3891 = vadd.f32 %v3538, %v3890
        %v3892 = vpop.f32.mrb[0].mxu0
        %v3893 = vadd.f32 %v3540, %v3892
        %v3894 = vpop.f32.mrb[0].mxu0
        %v3895 = vadd.f32 %v3542, %v3894
        %v3896 = vpop.f32.mrb[0].mxu0
        %v3897 = vadd.f32 %v3544, %v3896
        %3898 = vmatprep.mubr.bf16.mxu0 %v1862
        %3899 = vmatmul.mubr.bf16.gmra.mrb[0].mxu0 %v1861
        %v3900 = vpop.f32.mrb[0].mxu0
        %v3901 = vadd.f32 %v3548, %v3900
        %v3902 = vpop.f32.mrb[0].mxu0
        %v3903 = vadd.f32 %v3550, %v3902
        %v3904 = vpop.f32.mrb[0].mxu0
        %v3905 = vadd.f32 %v3552, %v3904
        %v3906 = vpop.f32.mrb[0].mxu0
        %v3907 = vadd.f32 %v3554, %v3906
        %3908 = vmatprep.mubr.bf16.mxu0 %v1866
        %3909 = vmatmul.mubr.bf16.gmra.mrb[0].mxu0 %v1865
        %v3910 = vpop.f32.mrb[0].mxu0
        %v3911 = vadd.f32 %v3558, %v3910
        %v3912 = vpop.f32.mrb[0].mxu0
        %v3913 = vadd.f32 %v3560, %v3912
        %v3914 = vpop.f32.mrb[0].mxu0
        %v3915 = vadd.f32 %v3562, %v3914
        %v3916 = vpop.f32.mrb[0].mxu0
        %v3917 = vadd.f32 %v3564, %v3916
        %3918 = vmatprep.mubr.bf16.mxu0 %v1870
        %3919 = vmatmul.mubr.bf16.gmra.mrb[0].mxu0 %v1869
        %v3920 = vpop.f32.mrb[0].mxu0
        %v3921 = vadd.f32 %v3568, %v3920
        %v3922 = vpop.f32.mrb[0].mxu0
        %v3923 = vadd.f32 %v3570, %v3922
        %v3924 = vpop.f32.mrb[0].mxu0
        %v3925 = vadd.f32 %v3572, %v3924
        %v3926 = vpop.f32.mrb[0].mxu0
        %v3927 = vadd.f32 %v3574, %v3926
        %3928 = vmatprep.mubr.bf16.mxu0 %v1874
        %3929 = vmatmul.mubr.bf16.gmra.mrb[0].mxu0 %v1873
        %v3930 = vpop.f32.mrb[0].mxu0
        %v3931 = vadd.f32 %v3578, %v3930
        %v3932 = vpop.f32.mrb[0].mxu0
        %v3933 = vadd.f32 %v3580, %v3932
        %v3934 = vpop.f32.mrb[0].mxu0
        %v3935 = vadd.f32 %v3582, %v3934
        %v3936 = vpop.f32.mrb[0].mxu0
        %v3937 = vadd.f32 %v3584, %v3936
        %3938 = vmatprep.mubr.bf16.mxu0 %v1878
        %3939 = vmatmul.mubr.bf16.gmra.mrb[0].mxu0 %v1877
        %v3940 = vpop.f32.mrb[0].mxu0
        %v3941 = vadd.f32 %v3588, %v3940
        %v3942 = vpop.f32.mrb[0].mxu0
        %v3943 = vadd.f32 %v3590, %v3942
        %v3944 = vpop.f32.mrb[0].mxu0
        %v3945 = vadd.f32 %v3592, %v3944
        %v3946 = vpop.f32.mrb[0].mxu0
        %v3947 = vadd.f32 %v3594, %v3946
        %3948 = vmatprep.mubr.bf16.mxu0 %v1882
        %3949 = vmatmul.mubr.bf16.gmra.mrb[0].mxu0 %v1881
        %v3950 = vpop.f32.mrb[0].mxu0
        %v3951 = vadd.f32 %v3598, %v3950
        %v3952 = vpop.f32.mrb[0].mxu0
        %v3953 = vadd.f32 %v3600, %v3952
        %v3954 = vpop.f32.mrb[0].mxu0
        %v3955 = vadd.f32 %v3602, %v3954
        %v3956 = vpop.f32.mrb[0].mxu0
        %v3957 = vadd.f32 %v3604, %v3956
        %3958 = vmatprep.mubr.bf16.mxu0 %v1886
        %3959 = vmatmul.mubr.bf16.gmra.mrb[0].mxu0 %v1885
        %v3960 = vpop.f32.mrb[0].mxu0
        %v3961 = vadd.f32 %v3608, %v3960
        %v3962 = vpop.f32.mrb[0].mxu0
        %v3963 = vadd.f32 %v3610, %v3962
        %v3964 = vpop.f32.mrb[0].mxu0
        %v3965 = vadd.f32 %v3612, %v3964
        %v3966 = vpop.f32.mrb[0].mxu0
        %v3967 = vadd.f32 %v3614, %v3966
        %3968 = vmatprep.mubr.bf16.mxu0 %v1890
        %3969 = vmatmul.mubr.bf16.gmra.mrb[0].mxu0 %v1889
        %v3970 = vpop.f32.mrb[0].mxu0
        %v3971 = vadd.f32 %v3618, %v3970
        %v3972 = vpop.f32.mrb[0].mxu0
        %v3973 = vadd.f32 %v3620, %v3972
        %v3974 = vpop.f32.mrb[0].mxu0
        %v3975 = vadd.f32 %v3622, %v3974
        %v3976 = vpop.f32.mrb[0].mxu0
        %v3977 = vadd.f32 %v3624, %v3976
        %3978 = vmatprep.mubr.bf16.mxu0 %v1894
        %3979 = vmatmul.mubr.bf16.gmra.mrb[0].mxu0 %v1893
        %v3980 = vpop.f32.mrb[0].mxu0
        %v3981 = vadd.f32 %v3628, %v3980
        %v3982 = vpop.f32.mrb[0].mxu0
        %v3983 = vadd.f32 %v3630, %v3982
        %v3984 = vpop.f32.mrb[0].mxu0
        %v3985 = vadd.f32 %v3632, %v3984
        %v3986 = vpop.f32.mrb[0].mxu0
        %v3987 = vadd.f32 %v3634, %v3986
        %3988 = vmatprep.mubr.bf16.mxu0 %v1898
        %3989 = vmatmul.mubr.bf16.gmra.mrb[0].mxu0 %v1897
        %v3990 = vpop.f32.mrb[0].mxu0
        %v3991 = vadd.f32 %v3638, %v3990
        %v3992 = vpop.f32.mrb[0].mxu0
        %v3993 = vadd.f32 %v3640, %v3992
        %v3994 = vpop.f32.mrb[0].mxu0
        %v3995 = vadd.f32 %v3642, %v3994
        %v3996 = vpop.f32.mrb[0].mxu0
        %v3997 = vadd.f32 %v3644, %v3996
        %3998 = vmatprep.mubr.bf16.mxu0 %v1902
        %3999 = vmatmul.mubr.bf16.gmra.mrb[0].mxu0 %v1901
        %v4000 = vpop.f32.mrb[0].mxu0
        %v4001 = vadd.f32 %v3648, %v4000
        %v4002 = vpop.f32.mrb[0].mxu0
        %v4003 = vadd.f32 %v3650, %v4002
        %v4004 = vpop.f32.mrb[0].mxu0
        %v4005 = vadd.f32 %v3652, %v4004
        %v4006 = vpop.f32.mrb[0].mxu0
        %v4007 = vadd.f32 %v3654, %v4006
        %4008 = vmatprep.mubr.bf16.mxu0 %v1906
        %4009 = vmatmul.mubr.bf16.gmra.mrb[0].mxu0 %v1905
        %v4010 = vpop.f32.mrb[0].mxu0
        %v4011 = vadd.f32 %v3658, %v4010
        %v4012 = vpop.f32.mrb[0].mxu0
        %v4013 = vadd.f32 %v3660, %v4012
        %v4014 = vpop.f32.mrb[0].mxu0
        %v4015 = vadd.f32 %v3662, %v4014
        %v4016 = vpop.f32.mrb[0].mxu0
        %v4017 = vadd.f32 %v3664, %v4016
        %4018 = vmatprep.mubr.bf16.mxu0 %v1910
        %4019 = vmatmul.mubr.bf16.gmra.mrb[0].mxu0 %v1909
        %v4020 = vpop.f32.mrb[0].mxu0
        %v4021 = vadd.f32 %v3668, %v4020
        %v4022 = vpop.f32.mrb[0].mxu0
        %v4023 = vadd.f32 %v3670, %v4022
        %v4024 = vpop.f32.mrb[0].mxu0
        %v4025 = vadd.f32 %v3672, %v4024
        %v4026 = vpop.f32.mrb[0].mxu0
        %v4027 = vadd.f32 %v3674, %v4026
        %4028 = vmatprep.mubr.bf16.mxu0 %v1914
        %4029 = vmatmul.mubr.bf16.gmra.mrb[0].mxu0 %v1913
        %v4030 = vpop.f32.mrb[0].mxu0
        %v4031 = vadd.f32 %v3678, %v4030
        %v4032 = vpop.f32.mrb[0].mxu0
        %v4033 = vadd.f32 %v3680, %v4032
        %v4034 = vpop.f32.mrb[0].mxu0
        %v4035 = vadd.f32 %v3682, %v4034
        %v4036 = vpop.f32.mrb[0].mxu0
        %v4037 = vadd.f32 %v3684, %v4036
        %4038 = vmatprep.mubr.bf16.mxu0 %v1918
        %4039 = vmatmul.mubr.bf16.gmra.mrb[0].mxu0 %v1917
        %v4040 = vpop.f32.mrb[0].mxu0
        %v4041 = vadd.f32 %v3688, %v4040
        %v4042 = vpop.f32.mrb[0].mxu0
        %v4043 = vadd.f32 %v3690, %v4042
        %v4044 = vpop.f32.mrb[0].mxu0
        %v4045 = vadd.f32 %v3692, %v4044
        %v4046 = vpop.f32.mrb[0].mxu0
        %v4047 = vadd.f32 %v3694, %v4046
        %4048 = vmatprep.mubr.bf16.mxu0 %v1922
        %4049 = vmatmul.mubr.bf16.gmra.mrb[0].mxu0 %v1921
        %v4050 = vpop.f32.mrb[0].mxu0
        %v4051 = vadd.f32 %v3698, %v4050
        %v4052 = vpop.f32.mrb[0].mxu0
        %v4053 = vadd.f32 %v3700, %v4052
        %v4054 = vpop.f32.mrb[0].mxu0
        %v4055 = vadd.f32 %v3702, %v4054
        %v4056 = vpop.f32.mrb[0].mxu0
        %v4057 = vadd.f32 %v3704, %v4056
        %4058 = vmatprep.mubr.bf16.mxu0 %v1926
        %4059 = vmatmul.mubr.bf16.gmra.mrb[0].mxu0 %v1925
        %v4060 = vpop.f32.mrb[0].mxu0
        %v4061 = vadd.f32 %v3708, %v4060
        %v4062 = vpop.f32.mrb[0].mxu0
        %v4063 = vadd.f32 %v3710, %v4062
        %v4064 = vpop.f32.mrb[0].mxu0
        %v4065 = vadd.f32 %v3712, %v4064
        %v4066 = vpop.f32.mrb[0].mxu0
        %v4067 = vadd.f32 %v3714, %v4066
        %4068 = vmatprep.mubr.bf16.mxu0 %v1930
        %4069 = vmatmul.mubr.bf16.gmra.mrb[0].mxu0 %v1929
        %v4070 = vpop.f32.mrb[0].mxu0
        %v4071 = vadd.f32 %v3718, %v4070
        %v4072 = vpop.f32.mrb[0].mxu0
        %v4073 = vadd.f32 %v3720, %v4072
        %v4074 = vpop.f32.mrb[0].mxu0
        %v4075 = vadd.f32 %v3722, %v4074
        %v4076 = vpop.f32.mrb[0].mxu0
        %v4077 = vadd.f32 %v3724, %v4076
        %4078 = vmatprep.mubr.bf16.mxu0 %v1934
        %4079 = vmatmul.mubr.bf16.gmra.mrb[0].mxu0 %v1933
        %v4080 = vpop.f32.mrb[0].mxu0
        %v4081 = vadd.f32 %v3728, %v4080
        %v4082 = vpop.f32.mrb[0].mxu0
        %v4083 = vadd.f32 %v3730, %v4082
        %v4084 = vpop.f32.mrb[0].mxu0
        %v4085 = vadd.f32 %v3732, %v4084
        %v4086 = vpop.f32.mrb[0].mxu0
        %v4087 = vadd.f32 %v3734, %v4086
        %4088 = vmatprep.mubr.bf16.mxu0 %v1938
        %4089 = vmatmul.mubr.bf16.gmra.mrb[0].mxu0 %v1937
        %v4090 = vpop.f32.mrb[0].mxu0
        %v4091 = vadd.f32 %v3738, %v4090
        %v4092 = vpop.f32.mrb[0].mxu0
        %v4093 = vadd.f32 %v3740, %v4092
        %v4094 = vpop.f32.mrb[0].mxu0
        %v4095 = vadd.f32 %v3742, %v4094
        %v4096 = vpop.f32.mrb[0].mxu0
        %v4097 = vadd.f32 %v3744, %v4096
        %4098 = vmatprep.mubr.bf16.mxu0 %v1942
        %4099 = vmatmul.mubr.bf16.gmra.mrb[0].mxu0 %v1941
        %v4100 = vpop.f32.mrb[0].mxu0
        %v4101 = vadd.f32 %v3748, %v4100
        %v4102 = vpop.f32.mrb[0].mxu0
        %v4103 = vadd.f32 %v3750, %v4102
        %v4104 = vpop.f32.mrb[0].mxu0
        %v4105 = vadd.f32 %v3752, %v4104
        %v4106 = vpop.f32.mrb[0].mxu0
        %v4107 = vadd.f32 %v3754, %v4106
        %4108 = vmatprep.mubr.bf16.mxu0 %v1946
        %4109 = vmatmul.mubr.bf16.gmra.mrb[0].mxu0 %v1945
        %v4110 = vpop.f32.mrb[0].mxu0
        %v4111 = vadd.f32 %v3758, %v4110
        %v4112 = vpop.f32.mrb[0].mxu0
        %v4113 = vadd.f32 %v3760, %v4112
        %v4114 = vpop.f32.mrb[0].mxu0
        %v4115 = vadd.f32 %v3762, %v4114
        %v4116 = vpop.f32.mrb[0].mxu0
        %v4117 = vadd.f32 %v3764, %v4116
        %4118 = vmatprep.mubr.bf16.mxu0 %v1950
        %4119 = vmatmul.mubr.bf16.gmra.mrb[0].mxu0 %v1949
        %v4120 = vpop.f32.mrb[0].mxu0
        %v4121 = vadd.f32 %v3768, %v4120
        %v4122 = vpop.f32.mrb[0].mxu0
        %v4123 = vadd.f32 %v3770, %v4122
        %v4124 = vpop.f32.mrb[0].mxu0
        %v4125 = vadd.f32 %v3772, %v4124
        %v4126 = vpop.f32.mrb[0].mxu0
        %v4127 = vadd.f32 %v3774, %v4126
        %4128 = vmatprep.mubr.bf16.mxu0 %v1954
        %4129 = vmatmul.mubr.bf16.gmra.mrb[0].mxu0 %v1953
        %v4130 = vpop.f32.mrb[0].mxu0
        %v4131 = vadd.f32 %v3778, %v4130
        %v4132 = vpop.f32.mrb[0].mxu0
        %v4133 = vadd.f32 %v3780, %v4132
        %v4134 = vpop.f32.mrb[0].mxu0
        %v4135 = vadd.f32 %v3782, %v4134
        %v4136 = vpop.f32.mrb[0].mxu0
        %v4137 = vadd.f32 %v3784, %v4136
        %4138 = vmatprep.mubr.bf16.mxu0 %v1958
        %4139 = vmatmul.mubr.bf16.gmra.mrb[0].mxu0 %v1957
        %v4140 = vpop.f32.mrb[0].mxu0
        %v4141 = vadd.f32 %v3788, %v4140
        %v4142 = vpop.f32.mrb[0].mxu0
        %v4143 = vadd.f32 %v3790, %v4142
        %v4144 = vpop.f32.mrb[0].mxu0
        %v4145 = vadd.f32 %v3792, %v4144
        %v4146 = vpop.f32.mrb[0].mxu0
        %v4147 = vadd.f32 %v3794, %v4146
        %4148 = vmatprep.mubr.bf16.mxu0 %v1962
        %4149 = vmatmul.mubr.bf16.gmra.mrb[0].mxu0 %v1961
        %v4150 = vpop.f32.mrb[0].mxu0
        %v4151 = vadd.f32 %v3798, %v4150
        %v4152 = vpop.f32.mrb[0].mxu0
        %v4153 = vadd.f32 %v3800, %v4152
        %v4154 = vpop.f32.mrb[0].mxu0
        %v4155 = vadd.f32 %v3802, %v4154
        %v4156 = vpop.f32.mrb[0].mxu0
        %v4157 = vadd.f32 %v3804, %v4156
        %4158 = vmatprep.mubr.bf16.mxu0 %v1966
        %4159 = vmatmul.mubr.bf16.gmra.mrb[0].mxu0 %v1965
        %v4160 = vpop.f32.mrb[0].mxu0
        %v4161 = vadd.f32 %v3808, %v4160
        %v4162 = vpop.f32.mrb[0].mxu0
        %v4163 = vadd.f32 %v3810, %v4162
        %v4164 = vpop.f32.mrb[0].mxu0
        %v4165 = vadd.f32 %v3812, %v4164
        %v4166 = vpop.f32.mrb[0].mxu0
        %v4167 = vadd.f32 %v3814, %v4166
        %4168 = vdwg.mxu0
        %v4169 = vmax.f32 %v3145, 0.0
        %v4170 = vmax.f32 %v3147, 0.0
        %v4171 = vmax.f32 %v3851, 0.0
        %v4172 = vmax.f32 %v3853, 0.0
        %v4173 = vmax.f32 %v3149, 0.0
        %v4174 = vmax.f32 %v3151, 0.0
        %v4175 = vmax.f32 %v3855, 0.0
        %v4176 = vmax.f32 %v3857, 0.0
        %v4177 = vmax.f32 %v3155, 0.0
        %v4178 = vmax.f32 %v3157, 0.0
        %v4179 = vmax.f32 %v3861, 0.0
        %v4180 = vmax.f32 %v3863, 0.0
        %v4181 = vmax.f32 %v3159, 0.0
        %v4182 = vmax.f32 %v3161, 0.0
        %v4183 = vmax.f32 %v3865, 0.0
        %v4184 = vmax.f32 %v3867, 0.0
        %v4185 = vmax.f32 %v3165, 0.0
        %v4186 = vmax.f32 %v3167, 0.0
        %v4187 = vmax.f32 %v3871, 0.0
        %v4188 = vmax.f32 %v3873, 0.0
        %v4189 = vmax.f32 %v3169, 0.0
        %v4190 = vmax.f32 %v3171, 0.0
        %v4191 = vmax.f32 %v3875, 0.0
        %v4192 = vmax.f32 %v3877, 0.0
        %v4193 = vmax.f32 %v3175, 0.0
        %v4194 = vmax.f32 %v3177, 0.0
        %v4195 = vmax.f32 %v3881, 0.0
        %v4196 = vmax.f32 %v3883, 0.0
        %v4197 = vmax.f32 %v3179, 0.0
        %v4198 = vmax.f32 %v3181, 0.0
        %v4199 = vmax.f32 %v3885, 0.0
        %v4200 = vmax.f32 %v3887, 0.0
        %v4201 = vmax.f32 %v3185, 0.0
        %v4202 = vmax.f32 %v3187, 0.0
        %v4203 = vmax.f32 %v3891, 0.0
        %v4204 = vmax.f32 %v3893, 0.0
        %v4205 = vmax.f32 %v3189, 0.0
        %v4206 = vmax.f32 %v3191, 0.0
        %v4207 = vmax.f32 %v3895, 0.0
        %v4208 = vmax.f32 %v3897, 0.0
        %v4209 = vmax.f32 %v3195, 0.0
        %v4210 = vmax.f32 %v3197, 0.0
        %v4211 = vmax.f32 %v3901, 0.0
        %v4212 = vmax.f32 %v3903, 0.0
        %v4213 = vmax.f32 %v3199, 0.0
        %v4214 = vmax.f32 %v3201, 0.0
        %v4215 = vmax.f32 %v3905, 0.0
        %v4216 = vmax.f32 %v3907, 0.0
        %v4217 = vmax.f32 %v3205, 0.0
        %v4218 = vmax.f32 %v3207, 0.0
        %v4219 = vmax.f32 %v3911, 0.0
        %v4220 = vmax.f32 %v3913, 0.0
        %v4221 = vmax.f32 %v3209, 0.0
        %v4222 = vmax.f32 %v3211, 0.0
        %v4223 = vmax.f32 %v3915, 0.0
        %v4224 = vmax.f32 %v3917, 0.0
        %v4225 = vmax.f32 %v3215, 0.0
        %v4226 = vmax.f32 %v3217, 0.0
        %v4227 = vmax.f32 %v3921, 0.0
        %v4228 = vmax.f32 %v3923, 0.0
        %v4229 = vmax.f32 %v3219, 0.0
        %v4230 = vmax.f32 %v3221, 0.0
        %v4231 = vmax.f32 %v3925, 0.0
        %v4232 = vmax.f32 %v3927, 0.0
        %v4233 = vmax.f32 %v3225, 0.0
        %v4234 = vmax.f32 %v3227, 0.0
        %v4235 = vmax.f32 %v3931, 0.0
        %v4236 = vmax.f32 %v3933, 0.0
        %v4237 = vmax.f32 %v3229, 0.0
        %v4238 = vmax.f32 %v3231, 0.0
        %v4239 = vmax.f32 %v3935, 0.0
        %v4240 = vmax.f32 %v3937, 0.0
        %v4241 = vmax.f32 %v3235, 0.0
        %v4242 = vmax.f32 %v3237, 0.0
        %v4243 = vmax.f32 %v3941, 0.0
        %v4244 = vmax.f32 %v3943, 0.0
        %v4245 = vmax.f32 %v3239, 0.0
        %v4246 = vmax.f32 %v3241, 0.0
        %v4247 = vmax.f32 %v3945, 0.0
        %v4248 = vmax.f32 %v3947, 0.0
        %v4249 = vmax.f32 %v3245, 0.0
        %v4250 = vmax.f32 %v3247, 0.0
        %v4251 = vmax.f32 %v3951, 0.0
        %v4252 = vmax.f32 %v3953, 0.0
        %v4253 = vmax.f32 %v3249, 0.0
        %v4254 = vmax.f32 %v3251, 0.0
        %v4255 = vmax.f32 %v3955, 0.0
        %v4256 = vmax.f32 %v3957, 0.0
        %v4257 = vmax.f32 %v3255, 0.0
        %v4258 = vmax.f32 %v3257, 0.0
        %v4259 = vmax.f32 %v3961, 0.0
        %v4260 = vmax.f32 %v3963, 0.0
        %v4261 = vmax.f32 %v3259, 0.0
        %v4262 = vmax.f32 %v3261, 0.0
        %v4263 = vmax.f32 %v3965, 0.0
        %v4264 = vmax.f32 %v3967, 0.0
        %v4265 = vmax.f32 %v3265, 0.0
        %v4266 = vmax.f32 %v3267, 0.0
        %v4267 = vmax.f32 %v3971, 0.0
        %v4268 = vmax.f32 %v3973, 0.0
        %v4269 = vmax.f32 %v3269, 0.0
        %v4270 = vmax.f32 %v3271, 0.0
        %v4271 = vmax.f32 %v3975, 0.0
        %v4272 = vmax.f32 %v3977, 0.0
        %v4273 = vmax.f32 %v3275, 0.0
        %v4274 = vmax.f32 %v3277, 0.0
        %v4275 = vmax.f32 %v3981, 0.0
        %v4276 = vmax.f32 %v3983, 0.0
        %v4277 = vmax.f32 %v3279, 0.0
        %v4278 = vmax.f32 %v3281, 0.0
        %v4279 = vmax.f32 %v3985, 0.0
        %v4280 = vmax.f32 %v3987, 0.0
        %v4281 = vmax.f32 %v3285, 0.0
        %v4282 = vmax.f32 %v3287, 0.0
        %v4283 = vmax.f32 %v3991, 0.0
        %v4284 = vmax.f32 %v3993, 0.0
        %v4285 = vmax.f32 %v3289, 0.0
        %v4286 = vmax.f32 %v3291, 0.0
        %v4287 = vmax.f32 %v3995, 0.0
        %v4288 = vmax.f32 %v3997, 0.0
        %v4289 = vmax.f32 %v3295, 0.0
        %v4290 = vmax.f32 %v3297, 0.0
        %v4291 = vmax.f32 %v4001, 0.0
        %v4292 = vmax.f32 %v4003, 0.0
        %v4293 = vmax.f32 %v3299, 0.0
        %v4294 = vmax.f32 %v3301, 0.0
        %v4295 = vmax.f32 %v4005, 0.0
        %v4296 = vmax.f32 %v4007, 0.0
        %v4297 = vmax.f32 %v3305, 0.0
        %v4298 = vmax.f32 %v3307, 0.0
        %v4299 = vmax.f32 %v4011, 0.0
        %v4300 = vmax.f32 %v4013, 0.0
        %v4301 = vmax.f32 %v3309, 0.0
        %v4302 = vmax.f32 %v3311, 0.0
        %v4303 = vmax.f32 %v4015, 0.0
        %v4304 = vmax.f32 %v4017, 0.0
        %v4305 = vmax.f32 %v3315, 0.0
        %v4306 = vmax.f32 %v3317, 0.0
        %v4307 = vmax.f32 %v4021, 0.0
        %v4308 = vmax.f32 %v4023, 0.0
        %v4309 = vmax.f32 %v3319, 0.0
        %v4310 = vmax.f32 %v3321, 0.0
        %v4311 = vmax.f32 %v4025, 0.0
        %v4312 = vmax.f32 %v4027, 0.0
        %v4313 = vmax.f32 %v3325, 0.0
        %v4314 = vmax.f32 %v3327, 0.0
        %v4315 = vmax.f32 %v4031, 0.0
        %v4316 = vmax.f32 %v4033, 0.0
        %v4317 = vmax.f32 %v3329, 0.0
        %v4318 = vmax.f32 %v3331, 0.0
        %v4319 = vmax.f32 %v4035, 0.0
        %v4320 = vmax.f32 %v4037, 0.0
        %v4321 = vmax.f32 %v3335, 0.0
        %v4322 = vmax.f32 %v3337, 0.0
        %v4323 = vmax.f32 %v4041, 0.0
        %v4324 = vmax.f32 %v4043, 0.0
        %v4325 = vmax.f32 %v3339, 0.0
        %v4326 = vmax.f32 %v3341, 0.0
        %v4327 = vmax.f32 %v4045, 0.0
        %v4328 = vmax.f32 %v4047, 0.0
        %v4329 = vmax.f32 %v3345, 0.0
        %v4330 = vmax.f32 %v3347, 0.0
        %v4331 = vmax.f32 %v4051, 0.0
        %v4332 = vmax.f32 %v4053, 0.0
        %v4333 = vmax.f32 %v3349, 0.0
        %v4334 = vmax.f32 %v3351, 0.0
        %v4335 = vmax.f32 %v4055, 0.0
        %v4336 = vmax.f32 %v4057, 0.0
        %v4337 = vmax.f32 %v3355, 0.0
        %v4338 = vmax.f32 %v3357, 0.0
        %v4339 = vmax.f32 %v4061, 0.0
        %v4340 = vmax.f32 %v4063, 0.0
        %v4341 = vmax.f32 %v3359, 0.0
        %v4342 = vmax.f32 %v3361, 0.0
        %v4343 = vmax.f32 %v4065, 0.0
        %v4344 = vmax.f32 %v4067, 0.0
        %v4345 = vmax.f32 %v3365, 0.0
        %v4346 = vmax.f32 %v3367, 0.0
        %v4347 = vmax.f32 %v4071, 0.0
        %v4348 = vmax.f32 %v4073, 0.0
        %v4349 = vmax.f32 %v3369, 0.0
        %v4350 = vmax.f32 %v3371, 0.0
        %v4351 = vmax.f32 %v4075, 0.0
        %v4352 = vmax.f32 %v4077, 0.0
        %v4353 = vmax.f32 %v3375, 0.0
        %v4354 = vmax.f32 %v3377, 0.0
        %v4355 = vmax.f32 %v4081, 0.0
        %v4356 = vmax.f32 %v4083, 0.0
        %v4357 = vmax.f32 %v3379, 0.0
        %v4358 = vmax.f32 %v3381, 0.0
        %v4359 = vmax.f32 %v4085, 0.0
        %v4360 = vmax.f32 %v4087, 0.0
        %v4361 = vmax.f32 %v3385, 0.0
        %v4362 = vmax.f32 %v3387, 0.0
        %v4363 = vmax.f32 %v4091, 0.0
        %v4364 = vmax.f32 %v4093, 0.0
        %v4365 = vmax.f32 %v3389, 0.0
        %v4366 = vmax.f32 %v3391, 0.0
        %v4367 = vmax.f32 %v4095, 0.0
        %v4368 = vmax.f32 %v4097, 0.0
        %v4369 = vmax.f32 %v3395, 0.0
        %v4370 = vmax.f32 %v3397, 0.0
        %v4371 = vmax.f32 %v4101, 0.0
        %v4372 = vmax.f32 %v4103, 0.0
        %v4373 = vmax.f32 %v3399, 0.0
        %v4374 = vmax.f32 %v3401, 0.0
        %v4375 = vmax.f32 %v4105, 0.0
        %v4376 = vmax.f32 %v4107, 0.0
        %v4377 = vmax.f32 %v3405, 0.0
        %v4378 = vmax.f32 %v3407, 0.0
        %v4379 = vmax.f32 %v4111, 0.0
        %v4380 = vmax.f32 %v4113, 0.0
        %v4381 = vmax.f32 %v3409, 0.0
        %v4382 = vmax.f32 %v3411, 0.0
        %v4383 = vmax.f32 %v4115, 0.0
        %v4384 = vmax.f32 %v4117, 0.0
        %v4385 = vmax.f32 %v3415, 0.0
        %v4386 = vmax.f32 %v3417, 0.0
        %v4387 = vmax.f32 %v4121, 0.0
        %v4388 = vmax.f32 %v4123, 0.0
        %v4389 = vmax.f32 %v3419, 0.0
        %v4390 = vmax.f32 %v3421, 0.0
        %v4391 = vmax.f32 %v4125, 0.0
        %v4392 = vmax.f32 %v4127, 0.0
        %v4393 = vmax.f32 %v3425, 0.0
        %v4394 = vmax.f32 %v3427, 0.0
        %v4395 = vmax.f32 %v4131, 0.0
        %v4396 = vmax.f32 %v4133, 0.0
        %v4397 = vmax.f32 %v3429, 0.0
        %v4398 = vmax.f32 %v3431, 0.0
        %v4399 = vmax.f32 %v4135, 0.0
        %v4400 = vmax.f32 %v4137, 0.0
        %v4401 = vmax.f32 %v3435, 0.0
        %v4402 = vmax.f32 %v3437, 0.0
        %v4403 = vmax.f32 %v4141, 0.0
        %v4404 = vmax.f32 %v4143, 0.0
        %v4405 = vmax.f32 %v3439, 0.0
        %v4406 = vmax.f32 %v3441, 0.0
        %v4407 = vmax.f32 %v4145, 0.0
        %v4408 = vmax.f32 %v4147, 0.0
        %v4409 = vmax.f32 %v3445, 0.0
        %v4410 = vmax.f32 %v3447, 0.0
        %v4411 = vmax.f32 %v4151, 0.0
        %v4412 = vmax.f32 %v4153, 0.0
        %v4413 = vmax.f32 %v3449, 0.0
        %v4414 = vmax.f32 %v3451, 0.0
        %v4415 = vmax.f32 %v4155, 0.0
        %v4416 = vmax.f32 %v4157, 0.0
        %v4417 = vmax.f32 %v3455, 0.0
        %v4418 = vmax.f32 %v3457, 0.0
        %v4419 = vmax.f32 %v4161, 0.0
        %v4420 = vmax.f32 %v4163, 0.0
        %v4421 = vmax.f32 %v3459, 0.0
        %v4422 = vmax.f32 %v3461, 0.0
        %v4423 = vmax.f32 %v4165, 0.0
        %v4424 = vmax.f32 %v4167, 0.0
        %v4425 = vpack.c.bf16 %v4173, %v4169
        %v4426 = vpack.c.bf16 %v4174, %v4170
        %v4427 = vpack.c.bf16 %v4175, %v4171
        %v4428 = vpack.c.bf16 %v4176, %v4172
        %v4429 = vpack.c.bf16 %v4181, %v4177
        %v4430 = vpack.c.bf16 %v4182, %v4178
        %v4431 = vpack.c.bf16 %v4183, %v4179
        %v4432 = vpack.c.bf16 %v4184, %v4180
        %v4433 = vpack.c.bf16 %v4189, %v4185
        %v4434 = vpack.c.bf16 %v4190, %v4186
        %v4435 = vpack.c.bf16 %v4191, %v4187
        %v4436 = vpack.c.bf16 %v4192, %v4188
        %v4437 = vpack.c.bf16 %v4197, %v4193
        %v4438 = vpack.c.bf16 %v4198, %v4194
        %v4439 = vpack.c.bf16 %v4199, %v4195
        %v4440 = vpack.c.bf16 %v4200, %v4196
        %v4441 = vpack.c.bf16 %v4205, %v4201
        %v4442 = vpack.c.bf16 %v4206, %v4202
        %v4443 = vpack.c.bf16 %v4207, %v4203
        %v4444 = vpack.c.bf16 %v4208, %v4204
        %v4445 = vpack.c.bf16 %v4213, %v4209
        %v4446 = vpack.c.bf16 %v4214, %v4210
        %v4447 = vpack.c.bf16 %v4215, %v4211
        %v4448 = vpack.c.bf16 %v4216, %v4212
        %v4449 = vpack.c.bf16 %v4221, %v4217
        %v4450 = vpack.c.bf16 %v4222, %v4218
        %v4451 = vpack.c.bf16 %v4223, %v4219
        %v4452 = vpack.c.bf16 %v4224, %v4220
        %v4453 = vpack.c.bf16 %v4229, %v4225
        %v4454 = vpack.c.bf16 %v4230, %v4226
        %v4455 = vpack.c.bf16 %v4231, %v4227
        %v4456 = vpack.c.bf16 %v4232, %v4228
        %v4457 = vpack.c.bf16 %v4237, %v4233
        %v4458 = vpack.c.bf16 %v4238, %v4234
        %v4459 = vpack.c.bf16 %v4239, %v4235
        %v4460 = vpack.c.bf16 %v4240, %v4236
        %v4461 = vpack.c.bf16 %v4245, %v4241
        %v4462 = vpack.c.bf16 %v4246, %v4242
        %v4463 = vpack.c.bf16 %v4247, %v4243
        %v4464 = vpack.c.bf16 %v4248, %v4244
        %v4465 = vpack.c.bf16 %v4253, %v4249
        %v4466 = vpack.c.bf16 %v4254, %v4250
        %v4467 = vpack.c.bf16 %v4255, %v4251
        %v4468 = vpack.c.bf16 %v4256, %v4252
        %v4469 = vpack.c.bf16 %v4261, %v4257
        %v4470 = vpack.c.bf16 %v4262, %v4258
        %v4471 = vpack.c.bf16 %v4263, %v4259
        %v4472 = vpack.c.bf16 %v4264, %v4260
        %v4473 = vpack.c.bf16 %v4269, %v4265
        %v4474 = vpack.c.bf16 %v4270, %v4266
        %v4475 = vpack.c.bf16 %v4271, %v4267
        %v4476 = vpack.c.bf16 %v4272, %v4268
        %v4477 = vpack.c.bf16 %v4277, %v4273
        %v4478 = vpack.c.bf16 %v4278, %v4274
        %v4479 = vpack.c.bf16 %v4279, %v4275
        %v4480 = vpack.c.bf16 %v4280, %v4276
        %v4481 = vpack.c.bf16 %v4285, %v4281
        %v4482 = vpack.c.bf16 %v4286, %v4282
        %v4483 = vpack.c.bf16 %v4287, %v4283
        %v4484 = vpack.c.bf16 %v4288, %v4284
        %v4485 = vpack.c.bf16 %v4293, %v4289
        %v4486 = vpack.c.bf16 %v4294, %v4290
        %v4487 = vpack.c.bf16 %v4295, %v4291
        %v4488 = vpack.c.bf16 %v4296, %v4292
        %v4489 = vpack.c.bf16 %v4301, %v4297
        %v4490 = vpack.c.bf16 %v4302, %v4298
        %v4491 = vpack.c.bf16 %v4303, %v4299
        %v4492 = vpack.c.bf16 %v4304, %v4300
        %v4493 = vpack.c.bf16 %v4309, %v4305
        %v4494 = vpack.c.bf16 %v4310, %v4306
        %v4495 = vpack.c.bf16 %v4311, %v4307
        %v4496 = vpack.c.bf16 %v4312, %v4308
        %v4497 = vpack.c.bf16 %v4317, %v4313
        %v4498 = vpack.c.bf16 %v4318, %v4314
        %v4499 = vpack.c.bf16 %v4319, %v4315
        %v4500 = vpack.c.bf16 %v4320, %v4316
        %v4501 = vpack.c.bf16 %v4325, %v4321
        %v4502 = vpack.c.bf16 %v4326, %v4322
        %v4503 = vpack.c.bf16 %v4327, %v4323
        %v4504 = vpack.c.bf16 %v4328, %v4324
        %v4505 = vpack.c.bf16 %v4333, %v4329
        %v4506 = vpack.c.bf16 %v4334, %v4330
        %v4507 = vpack.c.bf16 %v4335, %v4331
        %v4508 = vpack.c.bf16 %v4336, %v4332
        %v4509 = vpack.c.bf16 %v4341, %v4337
        %v4510 = vpack.c.bf16 %v4342, %v4338
        %v4511 = vpack.c.bf16 %v4343, %v4339
        %v4512 = vpack.c.bf16 %v4344, %v4340
        %v4513 = vpack.c.bf16 %v4349, %v4345
        %v4514 = vpack.c.bf16 %v4350, %v4346
        %v4515 = vpack.c.bf16 %v4351, %v4347
        %v4516 = vpack.c.bf16 %v4352, %v4348
        %v4517 = vpack.c.bf16 %v4357, %v4353
        %v4518 = vpack.c.bf16 %v4358, %v4354
        %v4519 = vpack.c.bf16 %v4359, %v4355
        %v4520 = vpack.c.bf16 %v4360, %v4356
        %v4521 = vpack.c.bf16 %v4365, %v4361
        %v4522 = vpack.c.bf16 %v4366, %v4362
        %v4523 = vpack.c.bf16 %v4367, %v4363
        %v4524 = vpack.c.bf16 %v4368, %v4364
        %v4525 = vpack.c.bf16 %v4373, %v4369
        %v4526 = vpack.c.bf16 %v4374, %v4370
        %v4527 = vpack.c.bf16 %v4375, %v4371
        %v4528 = vpack.c.bf16 %v4376, %v4372
        %v4529 = vpack.c.bf16 %v4381, %v4377
        %v4530 = vpack.c.bf16 %v4382, %v4378
        %v4531 = vpack.c.bf16 %v4383, %v4379
        %v4532 = vpack.c.bf16 %v4384, %v4380
        %v4533 = vpack.c.bf16 %v4389, %v4385
        %v4534 = vpack.c.bf16 %v4390, %v4386
        %v4535 = vpack.c.bf16 %v4391, %v4387
        %v4536 = vpack.c.bf16 %v4392, %v4388
        %v4537 = vpack.c.bf16 %v4397, %v4393
        %v4538 = vpack.c.bf16 %v4398, %v4394
        %v4539 = vpack.c.bf16 %v4399, %v4395
        %v4540 = vpack.c.bf16 %v4400, %v4396
        %v4541 = vpack.c.bf16 %v4405, %v4401
        %v4542 = vpack.c.bf16 %v4406, %v4402
        %v4543 = vpack.c.bf16 %v4407, %v4403
        %v4544 = vpack.c.bf16 %v4408, %v4404
        %v4545 = vpack.c.bf16 %v4413, %v4409
        %v4546 = vpack.c.bf16 %v4414, %v4410
        %v4547 = vpack.c.bf16 %v4415, %v4411
        %v4548 = vpack.c.bf16 %v4416, %v4412
        %v4549 = vpack.c.bf16 %v4421, %v4417
        %v4550 = vpack.c.bf16 %v4422, %v4418
        %v4551 = vpack.c.bf16 %v4423, %v4419
        %v4552 = vpack.c.bf16 %v4424, %v4420
        %v4553 = vld [vmem:[#allocation4] sm:$0xff]
        %v4554 = vld [vmem:[#allocation4 + $0x8] sm:$0xff]
        %v4555 = vld [vmem:[#allocation4 + $0x10] sm:$0xff]
        %v4556 = vld [vmem:[#allocation4 + $0x18] sm:$0xff]
        %v4557 = vld [vmem:[#allocation4 + $0x20] sm:$0xff]
        %v4558 = vld [vmem:[#allocation4 + $0x28] sm:$0xff]
        %v4559 = vld [vmem:[#allocation4 + $0x30] sm:$0xff]
        %v4560 = vld [vmem:[#allocation4 + $0x38] sm:$0xff]
        %v4561 = vld [vmem:[#allocation4 + $0x40] sm:$0xff]
        %v4562 = vld [vmem:[#allocation4 + $0x48] sm:$0xff]
        %v4563 = vld [vmem:[#allocation4 + $0x50] sm:$0xff]
        %v4564 = vld [vmem:[#allocation4 + $0x58] sm:$0xff]
        %v4565 = vld [vmem:[#allocation4 + $0x60] sm:$0xff]
        %v4566 = vld [vmem:[#allocation4 + $0x68] sm:$0xff]
        %v4567 = vld [vmem:[#allocation4 + $0x70] sm:$0xff]
        %v4568 = vld [vmem:[#allocation4 + $0x78] sm:$0xff]
        %v4569 = vld [vmem:[#allocation4 + $0x80] sm:$0xff]
        %v4570 = vld [vmem:[#allocation4 + $0x88] sm:$0xff]
        %v4571 = vld [vmem:[#allocation4 + $0x90] sm:$0xff]
        %v4572 = vld [vmem:[#allocation4 + $0x98] sm:$0xff]
        %v4573 = vld [vmem:[#allocation4 + $0xa0] sm:$0xff]
        %v4574 = vld [vmem:[#allocation4 + $0xa8] sm:$0xff]
        %v4575 = vld [vmem:[#allocation4 + $0xb0] sm:$0xff]
        %v4576 = vld [vmem:[#allocation4 + $0xb8] sm:$0xff]
        %v4577 = vld [vmem:[#allocation4 + $0xc0] sm:$0xff]
        %v4578 = vld [vmem:[#allocation4 + $0xc8] sm:$0xff]
        %v4579 = vld [vmem:[#allocation4 + $0xd0] sm:$0xff]
        %v4580 = vld [vmem:[#allocation4 + $0xd8] sm:$0xff]
        %v4581 = vld [vmem:[#allocation4 + $0xe0] sm:$0xff]
        %v4582 = vld [vmem:[#allocation4 + $0xe8] sm:$0xff]
        %v4583 = vld [vmem:[#allocation4 + $0xf0] sm:$0xff]
        %v4584 = vld [vmem:[#allocation4 + $0xf8] sm:$0xff]
        %v4585 = vld [vmem:[#allocation4 + $0x100] sm:$0xff]
        %v4586 = vld [vmem:[#allocation4 + $0x108] sm:$0xff]
        %v4587 = vld [vmem:[#allocation4 + $0x110] sm:$0xff]
        %v4588 = vld [vmem:[#allocation4 + $0x118] sm:$0xff]
        %v4589 = vld [vmem:[#allocation4 + $0x120] sm:$0xff]
        %v4590 = vld [vmem:[#allocation4 + $0x128] sm:$0xff]
        %v4591 = vld [vmem:[#allocation4 + $0x130] sm:$0xff]
        %v4592 = vld [vmem:[#allocation4 + $0x138] sm:$0xff]
        %v4593 = vld [vmem:[#allocation4 + $0x140] sm:$0xff]
        %v4594 = vld [vmem:[#allocation4 + $0x148] sm:$0xff]
        %v4595 = vld [vmem:[#allocation4 + $0x150] sm:$0xff]
        %v4596 = vld [vmem:[#allocation4 + $0x158] sm:$0xff]
        %v4597 = vld [vmem:[#allocation4 + $0x160] sm:$0xff]
        %v4598 = vld [vmem:[#allocation4 + $0x168] sm:$0xff]
        %v4599 = vld [vmem:[#allocation4 + $0x170] sm:$0xff]
        %v4600 = vld [vmem:[#allocation4 + $0x178] sm:$0xff]
        %v4601 = vld [vmem:[#allocation4 + $0x180] sm:$0xff]
        %v4602 = vld [vmem:[#allocation4 + $0x188] sm:$0xff]
        %v4603 = vld [vmem:[#allocation4 + $0x190] sm:$0xff]
        %v4604 = vld [vmem:[#allocation4 + $0x198] sm:$0xff]
        %v4605 = vld [vmem:[#allocation4 + $0x1a0] sm:$0xff]
        %v4606 = vld [vmem:[#allocation4 + $0x1a8] sm:$0xff]
        %v4607 = vld [vmem:[#allocation4 + $0x1b0] sm:$0xff]
        %v4608 = vld [vmem:[#allocation4 + $0x1b8] sm:$0xff]
        %v4609 = vld [vmem:[#allocation4 + $0x1c0] sm:$0xff]
        %v4610 = vld [vmem:[#allocation4 + $0x1c8] sm:$0xff]
        %v4611 = vld [vmem:[#allocation4 + $0x1d0] sm:$0xff]
        %v4612 = vld [vmem:[#allocation4 + $0x1d8] sm:$0xff]
        %v4613 = vld [vmem:[#allocation4 + $0x1e0] sm:$0xff]
        %v4614 = vld [vmem:[#allocation4 + $0x1e8] sm:$0xff]
        %v4615 = vld [vmem:[#allocation4 + $0x1f0] sm:$0xff]
        %v4616 = vld [vmem:[#allocation4 + $0x1f8] sm:$0xff]
        %v4617 = vld [vmem:[#allocation6] sm:$0x3]
        %v4619 = vlaneseq
        %v4620 = vshrl.u32 %v4619, 7
        %v4621 = vsub.s32 0, %v4620
        %v4622 = vrot.slane %v4617, %v4621
        %v4623 = vlaneseq
        %v4624 = vshrl.u32 %v4623, 7
        %v4625 = vsub.s32 1, %v4624
        %v4626 = vrot.slane %v4617, %v4625
        %v4693 = vunpack.c.l.b16 %v4553
        %v4694 = vunpack.c.h.b16 %v4553
        %v4695 = vunpack.c.l.b16 %v4554
        %v4696 = vunpack.c.h.b16 %v4554
        %v4697 = vunpack.c.l.b16 %v4555
        %v4698 = vunpack.c.h.b16 %v4555
        %v4699 = vunpack.c.l.b16 %v4556
        %v4700 = vunpack.c.h.b16 %v4556
        %v4701 = vunpack.c.l.b16 %v4557
        %v4702 = vunpack.c.h.b16 %v4557
        %v4703 = vunpack.c.l.b16 %v4558
        %v4704 = vunpack.c.h.b16 %v4558
        %v4705 = vunpack.c.l.b16 %v4559
        %v4706 = vunpack.c.h.b16 %v4559
        %v4707 = vunpack.c.l.b16 %v4560
        %v4708 = vunpack.c.h.b16 %v4560
        %v4709 = vunpack.c.l.b16 %v4561
        %v4710 = vunpack.c.h.b16 %v4561
        %v4711 = vunpack.c.l.b16 %v4562
        %v4712 = vunpack.c.h.b16 %v4562
        %v4713 = vunpack.c.l.b16 %v4563
        %v4714 = vunpack.c.h.b16 %v4563
        %v4715 = vunpack.c.l.b16 %v4564
        %v4716 = vunpack.c.h.b16 %v4564
        %v4717 = vunpack.c.l.b16 %v4565
        %v4718 = vunpack.c.h.b16 %v4565
        %v4719 = vunpack.c.l.b16 %v4566
        %v4720 = vunpack.c.h.b16 %v4566
        %v4721 = vunpack.c.l.b16 %v4567
        %v4722 = vunpack.c.h.b16 %v4567
        %v4723 = vunpack.c.l.b16 %v4568
        %v4724 = vunpack.c.h.b16 %v4568
        %v4725 = vunpack.c.l.b16 %v4569
        %v4726 = vunpack.c.h.b16 %v4569
        %v4727 = vunpack.c.l.b16 %v4570
        %v4728 = vunpack.c.h.b16 %v4570
        %v4729 = vunpack.c.l.b16 %v4571
        %v4730 = vunpack.c.h.b16 %v4571
        %v4731 = vunpack.c.l.b16 %v4572
        %v4732 = vunpack.c.h.b16 %v4572
        %v4733 = vunpack.c.l.b16 %v4573
        %v4734 = vunpack.c.h.b16 %v4573
        %v4735 = vunpack.c.l.b16 %v4574
        %v4736 = vunpack.c.h.b16 %v4574
        %v4737 = vunpack.c.l.b16 %v4575
        %v4738 = vunpack.c.h.b16 %v4575
        %v4739 = vunpack.c.l.b16 %v4576
        %v4740 = vunpack.c.h.b16 %v4576
        %v4741 = vunpack.c.l.b16 %v4577
        %v4742 = vunpack.c.h.b16 %v4577
        %v4743 = vunpack.c.l.b16 %v4578
        %v4744 = vunpack.c.h.b16 %v4578
        %v4745 = vunpack.c.l.b16 %v4579
        %v4746 = vunpack.c.h.b16 %v4579
        %v4747 = vunpack.c.l.b16 %v4580
        %v4748 = vunpack.c.h.b16 %v4580
        %v4749 = vunpack.c.l.b16 %v4581
        %v4750 = vunpack.c.h.b16 %v4581
        %v4751 = vunpack.c.l.b16 %v4582
        %v4752 = vunpack.c.h.b16 %v4582
        %v4753 = vunpack.c.l.b16 %v4583
        %v4754 = vunpack.c.h.b16 %v4583
        %v4755 = vunpack.c.l.b16 %v4584
        %v4756 = vunpack.c.h.b16 %v4584
        %v4757 = vunpack.c.l.b16 %v4585
        %v4758 = vunpack.c.h.b16 %v4585
        %v4759 = vunpack.c.l.b16 %v4586
        %v4760 = vunpack.c.h.b16 %v4586
        %v4761 = vunpack.c.l.b16 %v4587
        %v4762 = vunpack.c.h.b16 %v4587
        %v4763 = vunpack.c.l.b16 %v4588
        %v4764 = vunpack.c.h.b16 %v4588
        %v4765 = vunpack.c.l.b16 %v4589
        %v4766 = vunpack.c.h.b16 %v4589
        %v4767 = vunpack.c.l.b16 %v4590
        %v4768 = vunpack.c.h.b16 %v4590
        %v4769 = vunpack.c.l.b16 %v4591
        %v4770 = vunpack.c.h.b16 %v4591
        %v4771 = vunpack.c.l.b16 %v4592
        %v4772 = vunpack.c.h.b16 %v4592
        %v4773 = vunpack.c.l.b16 %v4593
        %v4774 = vunpack.c.h.b16 %v4593
        %v4775 = vunpack.c.l.b16 %v4594
        %v4776 = vunpack.c.h.b16 %v4594
        %v4777 = vunpack.c.l.b16 %v4595
        %v4778 = vunpack.c.h.b16 %v4595
        %v4779 = vunpack.c.l.b16 %v4596
        %v4780 = vunpack.c.h.b16 %v4596
        %v4781 = vunpack.c.l.b16 %v4597
        %v4782 = vunpack.c.h.b16 %v4597
        %v4783 = vunpack.c.l.b16 %v4598
        %v4784 = vunpack.c.h.b16 %v4598
        %v4785 = vunpack.c.l.b16 %v4599
        %v4786 = vunpack.c.h.b16 %v4599
        %v4787 = vunpack.c.l.b16 %v4600
        %v4788 = vunpack.c.h.b16 %v4600
        %v4789 = vunpack.c.l.b16 %v4601
        %v4790 = vunpack.c.h.b16 %v4601
        %v4791 = vunpack.c.l.b16 %v4602
        %v4792 = vunpack.c.h.b16 %v4602
        %v4793 = vunpack.c.l.b16 %v4603
        %v4794 = vunpack.c.h.b16 %v4603
        %v4795 = vunpack.c.l.b16 %v4604
        %v4796 = vunpack.c.h.b16 %v4604
        %v4797 = vunpack.c.l.b16 %v4605
        %v4798 = vunpack.c.h.b16 %v4605
        %v4799 = vunpack.c.l.b16 %v4606
        %v4800 = vunpack.c.h.b16 %v4606
        %v4801 = vunpack.c.l.b16 %v4607
        %v4802 = vunpack.c.h.b16 %v4607
        %v4803 = vunpack.c.l.b16 %v4608
        %v4804 = vunpack.c.h.b16 %v4608
        %v4805 = vunpack.c.l.b16 %v4609
        %v4806 = vunpack.c.h.b16 %v4609
        %v4807 = vunpack.c.l.b16 %v4610
        %v4808 = vunpack.c.h.b16 %v4610
        %v4809 = vunpack.c.l.b16 %v4611
        %v4810 = vunpack.c.h.b16 %v4611
        %v4811 = vunpack.c.l.b16 %v4612
        %v4812 = vunpack.c.h.b16 %v4612
        %v4813 = vunpack.c.l.b16 %v4613
        %v4814 = vunpack.c.h.b16 %v4613
        %v4815 = vunpack.c.l.b16 %v4614
        %v4816 = vunpack.c.h.b16 %v4614
        %v4817 = vunpack.c.l.b16 %v4615
        %v4818 = vunpack.c.h.b16 %v4615
        %v4819 = vunpack.c.l.b16 %v4616
        %v4820 = vunpack.c.h.b16 %v4616
        %v4821 = vpack.c.b16 %v4695, %v4693
        %v4822 = vpack.c.b16 %v4696, %v4694
        %v4823 = vpack.c.b16 %v4699, %v4697
        %v4824 = vpack.c.b16 %v4700, %v4698
        %v4825 = vpack.c.b16 %v4703, %v4701
        %v4826 = vpack.c.b16 %v4704, %v4702
        %v4827 = vpack.c.b16 %v4707, %v4705
        %v4828 = vpack.c.b16 %v4708, %v4706
        %v4829 = vpack.c.b16 %v4711, %v4709
        %v4830 = vpack.c.b16 %v4712, %v4710
        %v4831 = vpack.c.b16 %v4715, %v4713
        %v4832 = vpack.c.b16 %v4716, %v4714
        %v4833 = vpack.c.b16 %v4719, %v4717
        %v4834 = vpack.c.b16 %v4720, %v4718
        %v4835 = vpack.c.b16 %v4723, %v4721
        %v4836 = vpack.c.b16 %v4724, %v4722
        %v4837 = vpack.c.b16 %v4727, %v4725
        %v4838 = vpack.c.b16 %v4728, %v4726
        %v4839 = vpack.c.b16 %v4731, %v4729
        %v4840 = vpack.c.b16 %v4732, %v4730
        %v4841 = vpack.c.b16 %v4735, %v4733
        %v4842 = vpack.c.b16 %v4736, %v4734
        %v4843 = vpack.c.b16 %v4739, %v4737
        %v4844 = vpack.c.b16 %v4740, %v4738
        %v4845 = vpack.c.b16 %v4743, %v4741
        %v4846 = vpack.c.b16 %v4744, %v4742
        %v4847 = vpack.c.b16 %v4747, %v4745
        %v4848 = vpack.c.b16 %v4748, %v4746
        %v4849 = vpack.c.b16 %v4751, %v4749
        %v4850 = vpack.c.b16 %v4752, %v4750
        %v4851 = vpack.c.b16 %v4755, %v4753
        %v4852 = vpack.c.b16 %v4756, %v4754
        %v4853 = vpack.c.b16 %v4759, %v4757
        %v4854 = vpack.c.b16 %v4760, %v4758
        %v4855 = vpack.c.b16 %v4763, %v4761
        %v4856 = vpack.c.b16 %v4764, %v4762
        %v4857 = vpack.c.b16 %v4767, %v4765
        %v4858 = vpack.c.b16 %v4768, %v4766
        %v4859 = vpack.c.b16 %v4771, %v4769
        %v4860 = vpack.c.b16 %v4772, %v4770
        %v4861 = vpack.c.b16 %v4775, %v4773
        %v4862 = vpack.c.b16 %v4776, %v4774
        %v4863 = vpack.c.b16 %v4779, %v4777
        %v4864 = vpack.c.b16 %v4780, %v4778
        %v4865 = vpack.c.b16 %v4783, %v4781
        %v4866 = vpack.c.b16 %v4784, %v4782
        %v4867 = vpack.c.b16 %v4787, %v4785
        %v4868 = vpack.c.b16 %v4788, %v4786
        %v4869 = vpack.c.b16 %v4791, %v4789
        %v4870 = vpack.c.b16 %v4792, %v4790
        %v4871 = vpack.c.b16 %v4795, %v4793
        %v4872 = vpack.c.b16 %v4796, %v4794
        %v4873 = vpack.c.b16 %v4799, %v4797
        %v4874 = vpack.c.b16 %v4800, %v4798
        %v4875 = vpack.c.b16 %v4803, %v4801
        %v4876 = vpack.c.b16 %v4804, %v4802
        %v4877 = vpack.c.b16 %v4807, %v4805
        %v4878 = vpack.c.b16 %v4808, %v4806
        %v4879 = vpack.c.b16 %v4811, %v4809
        %v4880 = vpack.c.b16 %v4812, %v4810
        %v4881 = vpack.c.b16 %v4815, %v4813
        %v4882 = vpack.c.b16 %v4816, %v4814
        %v4883 = vpack.c.b16 %v4819, %v4817
        %v4884 = vpack.c.b16 %v4820, %v4818
        %4949 = vmatprep.subr.bf16.mxu0 %v4822
        %4950 = vmatpush1.bf16.msra.mxu0 %v4821
        %4951 = vmatprep.subr.bf16.mxu0 %v4824
        %4952 = vmatpush1.bf16.msra.mxu0 %v4823
        %4953 = vmatprep.subr.bf16.mxu0 %v4826
        %4954 = vmatpush1.bf16.msra.mxu0 %v4825
        %4955 = vmatprep.subr.bf16.mxu0 %v4828
        %4956 = vmatpush1.bf16.msra.mxu0 %v4827
        %4957 = vmatprep.subr.bf16.mxu0 %v4830
        %4958 = vmatpush1.bf16.msra.mxu0 %v4829
        %4959 = vmatprep.subr.bf16.mxu0 %v4832
        %4960 = vmatpush1.bf16.msra.mxu0 %v4831
        %4961 = vmatprep.subr.bf16.mxu0 %v4834
        %4962 = vmatpush1.bf16.msra.mxu0 %v4833
        %4963 = vmatprep.subr.bf16.mxu0 %v4836
        %4964 = vmatpush1.bf16.msra.mxu0 %v4835
        %4965 = vmatprep.subr.bf16.mxu0 %v4838
        %4966 = vmatpush1.bf16.msra.mxu0 %v4837
        %4967 = vmatprep.subr.bf16.mxu0 %v4840
        %4968 = vmatpush1.bf16.msra.mxu0 %v4839
        %4969 = vmatprep.subr.bf16.mxu0 %v4842
        %4970 = vmatpush1.bf16.msra.mxu0 %v4841
        %4971 = vmatprep.subr.bf16.mxu0 %v4844
        %4972 = vmatpush1.bf16.msra.mxu0 %v4843
        %4973 = vmatprep.subr.bf16.mxu0 %v4846
        %4974 = vmatpush1.bf16.msra.mxu0 %v4845
        %4975 = vmatprep.subr.bf16.mxu0 %v4848
        %4976 = vmatpush1.bf16.msra.mxu0 %v4847
        %4977 = vmatprep.subr.bf16.mxu0 %v4850
        %4978 = vmatpush1.bf16.msra.mxu0 %v4849
        %4979 = vmatprep.subr.bf16.mxu0 %v4852
        %4980 = vmatpush1.bf16.msra.mxu0 %v4851
        %4981 = vmatprep.mubr.bf16.mxu0 %v4426
        %4982 = vmatmul.mubr.bf16.gmra.mrb[0].mxu0 %v4425
        %v4983 = vpop.f32.mrb[0].mxu0
        %v4984 = vadd.f32 %v4622, %v4983
        %v4985 = vpop.f32.mrb[0].mxu0
        %v4986 = vadd.f32 %v4626, %v4985
        %v4987 = vpop.f32.mrb[0].mxu0
        %v4988 = vadd.f32 %v4622, %v4987
        %v4989 = vpop.f32.mrb[0].mxu0
        %v4990 = vadd.f32 %v4626, %v4989
        %4991 = vmatprep.mubr.bf16.mxu0 %v4430
        %4992 = vmatmul.mubr.bf16.gmra.mrb[0].mxu0 %v4429
        %v4993 = vpop.f32.mrb[0].mxu0
        %v4994 = vadd.f32 %v4622, %v4993
        %v4995 = vpop.f32.mrb[0].mxu0
        %v4996 = vadd.f32 %v4626, %v4995
        %v4997 = vpop.f32.mrb[0].mxu0
        %v4998 = vadd.f32 %v4622, %v4997
        %v4999 = vpop.f32.mrb[0].mxu0
        %v5000 = vadd.f32 %v4626, %v4999
        %5001 = vmatprep.mubr.bf16.mxu0 %v4434
        %5002 = vmatmul.mubr.bf16.gmra.mrb[0].mxu0 %v4433
        %v5003 = vpop.f32.mrb[0].mxu0
        %v5004 = vadd.f32 %v4622, %v5003
        %v5005 = vpop.f32.mrb[0].mxu0
        %v5006 = vadd.f32 %v4626, %v5005
        %v5007 = vpop.f32.mrb[0].mxu0
        %v5008 = vadd.f32 %v4622, %v5007
        %v5009 = vpop.f32.mrb[0].mxu0
        %v5010 = vadd.f32 %v4626, %v5009
        %5011 = vmatprep.mubr.bf16.mxu0 %v4438
        %5012 = vmatmul.mubr.bf16.gmra.mrb[0].mxu0 %v4437
        %v5013 = vpop.f32.mrb[0].mxu0
        %v5014 = vadd.f32 %v4622, %v5013
        %v5015 = vpop.f32.mrb[0].mxu0
        %v5016 = vadd.f32 %v4626, %v5015
        %v5017 = vpop.f32.mrb[0].mxu0
        %v5018 = vadd.f32 %v4622, %v5017
        %v5019 = vpop.f32.mrb[0].mxu0
        %v5020 = vadd.f32 %v4626, %v5019
        %5021 = vmatprep.mubr.bf16.mxu0 %v4442
        %5022 = vmatmul.mubr.bf16.gmra.mrb[0].mxu0 %v4441
        %v5023 = vpop.f32.mrb[0].mxu0
        %v5024 = vadd.f32 %v4622, %v5023
        %v5025 = vpop.f32.mrb[0].mxu0
        %v5026 = vadd.f32 %v4626, %v5025
        %v5027 = vpop.f32.mrb[0].mxu0
        %v5028 = vadd.f32 %v4622, %v5027
        %v5029 = vpop.f32.mrb[0].mxu0
        %v5030 = vadd.f32 %v4626, %v5029
        %5031 = vmatprep.mubr.bf16.mxu0 %v4446
        %5032 = vmatmul.mubr.bf16.gmra.mrb[0].mxu0 %v4445
        %v5033 = vpop.f32.mrb[0].mxu0
        %v5034 = vadd.f32 %v4622, %v5033
        %v5035 = vpop.f32.mrb[0].mxu0
        %v5036 = vadd.f32 %v4626, %v5035
        %v5037 = vpop.f32.mrb[0].mxu0
        %v5038 = vadd.f32 %v4622, %v5037
        %v5039 = vpop.f32.mrb[0].mxu0
        %v5040 = vadd.f32 %v4626, %v5039
        %5041 = vmatprep.mubr.bf16.mxu0 %v4450
        %5042 = vmatmul.mubr.bf16.gmra.mrb[0].mxu0 %v4449
        %v5043 = vpop.f32.mrb[0].mxu0
        %v5044 = vadd.f32 %v4622, %v5043
        %v5045 = vpop.f32.mrb[0].mxu0
        %v5046 = vadd.f32 %v4626, %v5045
        %v5047 = vpop.f32.mrb[0].mxu0
        %v5048 = vadd.f32 %v4622, %v5047
        %v5049 = vpop.f32.mrb[0].mxu0
        %v5050 = vadd.f32 %v4626, %v5049
        %5051 = vmatprep.mubr.bf16.mxu0 %v4454
        %5052 = vmatmul.mubr.bf16.gmra.mrb[0].mxu0 %v4453
        %v5053 = vpop.f32.mrb[0].mxu0
        %v5054 = vadd.f32 %v4622, %v5053
        %v5055 = vpop.f32.mrb[0].mxu0
        %v5056 = vadd.f32 %v4626, %v5055
        %v5057 = vpop.f32.mrb[0].mxu0
        %v5058 = vadd.f32 %v4622, %v5057
        %v5059 = vpop.f32.mrb[0].mxu0
        %v5060 = vadd.f32 %v4626, %v5059
        %5061 = vmatprep.mubr.bf16.mxu0 %v4458
        %5062 = vmatmul.mubr.bf16.gmra.mrb[0].mxu0 %v4457
        %v5063 = vpop.f32.mrb[0].mxu0
        %v5064 = vadd.f32 %v4622, %v5063
        %v5065 = vpop.f32.mrb[0].mxu0
        %v5066 = vadd.f32 %v4626, %v5065
        %v5067 = vpop.f32.mrb[0].mxu0
        %v5068 = vadd.f32 %v4622, %v5067
        %v5069 = vpop.f32.mrb[0].mxu0
        %v5070 = vadd.f32 %v4626, %v5069
        %5071 = vmatprep.mubr.bf16.mxu0 %v4462
        %5072 = vmatmul.mubr.bf16.gmra.mrb[0].mxu0 %v4461
        %v5073 = vpop.f32.mrb[0].mxu0
        %v5074 = vadd.f32 %v4622, %v5073
        %v5075 = vpop.f32.mrb[0].mxu0
        %v5076 = vadd.f32 %v4626, %v5075
        %v5077 = vpop.f32.mrb[0].mxu0
        %v5078 = vadd.f32 %v4622, %v5077
        %v5079 = vpop.f32.mrb[0].mxu0
        %v5080 = vadd.f32 %v4626, %v5079
        %5081 = vmatprep.mubr.bf16.mxu0 %v4466
        %5082 = vmatmul.mubr.bf16.gmra.mrb[0].mxu0 %v4465
        %v5083 = vpop.f32.mrb[0].mxu0
        %v5084 = vadd.f32 %v4622, %v5083
        %v5085 = vpop.f32.mrb[0].mxu0
        %v5086 = vadd.f32 %v4626, %v5085
        %v5087 = vpop.f32.mrb[0].mxu0
        %v5088 = vadd.f32 %v4622, %v5087
        %v5089 = vpop.f32.mrb[0].mxu0
        %v5090 = vadd.f32 %v4626, %v5089
        %5091 = vmatprep.mubr.bf16.mxu0 %v4470
        %5092 = vmatmul.mubr.bf16.gmra.mrb[0].mxu0 %v4469
        %v5093 = vpop.f32.mrb[0].mxu0
        %v5094 = vadd.f32 %v4622, %v5093
        %v5095 = vpop.f32.mrb[0].mxu0
        %v5096 = vadd.f32 %v4626, %v5095
        %v5097 = vpop.f32.mrb[0].mxu0
        %v5098 = vadd.f32 %v4622, %v5097
        %v5099 = vpop.f32.mrb[0].mxu0
        %v5100 = vadd.f32 %v4626, %v5099
        %5101 = vmatprep.mubr.bf16.mxu0 %v4474
        %5102 = vmatmul.mubr.bf16.gmra.mrb[0].mxu0 %v4473
        %v5103 = vpop.f32.mrb[0].mxu0
        %v5104 = vadd.f32 %v4622, %v5103
        %v5105 = vpop.f32.mrb[0].mxu0
        %v5106 = vadd.f32 %v4626, %v5105
        %v5107 = vpop.f32.mrb[0].mxu0
        %v5108 = vadd.f32 %v4622, %v5107
        %v5109 = vpop.f32.mrb[0].mxu0
        %v5110 = vadd.f32 %v4626, %v5109
        %5111 = vmatprep.mubr.bf16.mxu0 %v4478
        %5112 = vmatmul.mubr.bf16.gmra.mrb[0].mxu0 %v4477
        %v5113 = vpop.f32.mrb[0].mxu0
        %v5114 = vadd.f32 %v4622, %v5113
        %v5115 = vpop.f32.mrb[0].mxu0
        %v5116 = vadd.f32 %v4626, %v5115
        %v5117 = vpop.f32.mrb[0].mxu0
        %v5118 = vadd.f32 %v4622, %v5117
        %v5119 = vpop.f32.mrb[0].mxu0
        %v5120 = vadd.f32 %v4626, %v5119
        %5121 = vmatprep.mubr.bf16.mxu0 %v4482
        %5122 = vmatmul.mubr.bf16.gmra.mrb[0].mxu0 %v4481
        %v5123 = vpop.f32.mrb[0].mxu0
        %v5124 = vadd.f32 %v4622, %v5123
        %v5125 = vpop.f32.mrb[0].mxu0
        %v5126 = vadd.f32 %v4626, %v5125
        %v5127 = vpop.f32.mrb[0].mxu0
        %v5128 = vadd.f32 %v4622, %v5127
        %v5129 = vpop.f32.mrb[0].mxu0
        %v5130 = vadd.f32 %v4626, %v5129
        %5131 = vmatprep.mubr.bf16.mxu0 %v4486
        %5132 = vmatmul.mubr.bf16.gmra.mrb[0].mxu0 %v4485
        %v5133 = vpop.f32.mrb[0].mxu0
        %v5134 = vadd.f32 %v4622, %v5133
        %v5135 = vpop.f32.mrb[0].mxu0
        %v5136 = vadd.f32 %v4626, %v5135
        %v5137 = vpop.f32.mrb[0].mxu0
        %v5138 = vadd.f32 %v4622, %v5137
        %v5139 = vpop.f32.mrb[0].mxu0
        %v5140 = vadd.f32 %v4626, %v5139
        %5141 = vmatprep.mubr.bf16.mxu0 %v4490
        %5142 = vmatmul.mubr.bf16.gmra.mrb[0].mxu0 %v4489
        %v5143 = vpop.f32.mrb[0].mxu0
        %v5144 = vadd.f32 %v4622, %v5143
        %v5145 = vpop.f32.mrb[0].mxu0
        %v5146 = vadd.f32 %v4626, %v5145
        %v5147 = vpop.f32.mrb[0].mxu0
        %v5148 = vadd.f32 %v4622, %v5147
        %v5149 = vpop.f32.mrb[0].mxu0
        %v5150 = vadd.f32 %v4626, %v5149
        %5151 = vmatprep.mubr.bf16.mxu0 %v4494
        %5152 = vmatmul.mubr.bf16.gmra.mrb[0].mxu0 %v4493
        %v5153 = vpop.f32.mrb[0].mxu0
        %v5154 = vadd.f32 %v4622, %v5153
        %v5155 = vpop.f32.mrb[0].mxu0
        %v5156 = vadd.f32 %v4626, %v5155
        %v5157 = vpop.f32.mrb[0].mxu0
        %v5158 = vadd.f32 %v4622, %v5157
        %v5159 = vpop.f32.mrb[0].mxu0
        %v5160 = vadd.f32 %v4626, %v5159
        %5161 = vmatprep.mubr.bf16.mxu0 %v4498
        %5162 = vmatmul.mubr.bf16.gmra.mrb[0].mxu0 %v4497
        %v5163 = vpop.f32.mrb[0].mxu0
        %v5164 = vadd.f32 %v4622, %v5163
        %v5165 = vpop.f32.mrb[0].mxu0
        %v5166 = vadd.f32 %v4626, %v5165
        %v5167 = vpop.f32.mrb[0].mxu0
        %v5168 = vadd.f32 %v4622, %v5167
        %v5169 = vpop.f32.mrb[0].mxu0
        %v5170 = vadd.f32 %v4626, %v5169
        %5171 = vmatprep.mubr.bf16.mxu0 %v4502
        %5172 = vmatmul.mubr.bf16.gmra.mrb[0].mxu0 %v4501
        %v5173 = vpop.f32.mrb[0].mxu0
        %v5174 = vadd.f32 %v4622, %v5173
        %v5175 = vpop.f32.mrb[0].mxu0
        %v5176 = vadd.f32 %v4626, %v5175
        %v5177 = vpop.f32.mrb[0].mxu0
        %v5178 = vadd.f32 %v4622, %v5177
        %v5179 = vpop.f32.mrb[0].mxu0
        %v5180 = vadd.f32 %v4626, %v5179
        %5181 = vmatprep.mubr.bf16.mxu0 %v4506
        %5182 = vmatmul.mubr.bf16.gmra.mrb[0].mxu0 %v4505
        %v5183 = vpop.f32.mrb[0].mxu0
        %v5184 = vadd.f32 %v4622, %v5183
        %v5185 = vpop.f32.mrb[0].mxu0
        %v5186 = vadd.f32 %v4626, %v5185
        %v5187 = vpop.f32.mrb[0].mxu0
        %v5188 = vadd.f32 %v4622, %v5187
        %v5189 = vpop.f32.mrb[0].mxu0
        %v5190 = vadd.f32 %v4626, %v5189
        %5191 = vmatprep.mubr.bf16.mxu0 %v4510
        %5192 = vmatmul.mubr.bf16.gmra.mrb[0].mxu0 %v4509
        %v5193 = vpop.f32.mrb[0].mxu0
        %v5194 = vadd.f32 %v4622, %v5193
        %v5195 = vpop.f32.mrb[0].mxu0
        %v5196 = vadd.f32 %v4626, %v5195
        %v5197 = vpop.f32.mrb[0].mxu0
        %v5198 = vadd.f32 %v4622, %v5197
        %v5199 = vpop.f32.mrb[0].mxu0
        %v5200 = vadd.f32 %v4626, %v5199
        %5201 = vmatprep.mubr.bf16.mxu0 %v4514
        %5202 = vmatmul.mubr.bf16.gmra.mrb[0].mxu0 %v4513
        %v5203 = vpop.f32.mrb[0].mxu0
        %v5204 = vadd.f32 %v4622, %v5203
        %v5205 = vpop.f32.mrb[0].mxu0
        %v5206 = vadd.f32 %v4626, %v5205
        %v5207 = vpop.f32.mrb[0].mxu0
        %v5208 = vadd.f32 %v4622, %v5207
        %v5209 = vpop.f32.mrb[0].mxu0
        %v5210 = vadd.f32 %v4626, %v5209
        %5211 = vmatprep.mubr.bf16.mxu0 %v4518
        %5212 = vmatmul.mubr.bf16.gmra.mrb[0].mxu0 %v4517
        %v5213 = vpop.f32.mrb[0].mxu0
        %v5214 = vadd.f32 %v4622, %v5213
        %v5215 = vpop.f32.mrb[0].mxu0
        %v5216 = vadd.f32 %v4626, %v5215
        %v5217 = vpop.f32.mrb[0].mxu0
        %v5218 = vadd.f32 %v4622, %v5217
        %v5219 = vpop.f32.mrb[0].mxu0
        %v5220 = vadd.f32 %v4626, %v5219
        %5221 = vmatprep.mubr.bf16.mxu0 %v4522
        %5222 = vmatmul.mubr.bf16.gmra.mrb[0].mxu0 %v4521
        %v5223 = vpop.f32.mrb[0].mxu0
        %v5224 = vadd.f32 %v4622, %v5223
        %v5225 = vpop.f32.mrb[0].mxu0
        %v5226 = vadd.f32 %v4626, %v5225
        %v5227 = vpop.f32.mrb[0].mxu0
        %v5228 = vadd.f32 %v4622, %v5227
        %v5229 = vpop.f32.mrb[0].mxu0
        %v5230 = vadd.f32 %v4626, %v5229
        %5231 = vmatprep.mubr.bf16.mxu0 %v4526
        %5232 = vmatmul.mubr.bf16.gmra.mrb[0].mxu0 %v4525
        %v5233 = vpop.f32.mrb[0].mxu0
        %v5234 = vadd.f32 %v4622, %v5233
        %v5235 = vpop.f32.mrb[0].mxu0
        %v5236 = vadd.f32 %v4626, %v5235
        %v5237 = vpop.f32.mrb[0].mxu0
        %v5238 = vadd.f32 %v4622, %v5237
        %v5239 = vpop.f32.mrb[0].mxu0
        %v5240 = vadd.f32 %v4626, %v5239
        %5241 = vmatprep.mubr.bf16.mxu0 %v4530
        %5242 = vmatmul.mubr.bf16.gmra.mrb[0].mxu0 %v4529
        %v5243 = vpop.f32.mrb[0].mxu0
        %v5244 = vadd.f32 %v4622, %v5243
        %v5245 = vpop.f32.mrb[0].mxu0
        %v5246 = vadd.f32 %v4626, %v5245
        %v5247 = vpop.f32.mrb[0].mxu0
        %v5248 = vadd.f32 %v4622, %v5247
        %v5249 = vpop.f32.mrb[0].mxu0
        %v5250 = vadd.f32 %v4626, %v5249
        %5251 = vmatprep.mubr.bf16.mxu0 %v4534
        %5252 = vmatmul.mubr.bf16.gmra.mrb[0].mxu0 %v4533
        %v5253 = vpop.f32.mrb[0].mxu0
        %v5254 = vadd.f32 %v4622, %v5253
        %v5255 = vpop.f32.mrb[0].mxu0
        %v5256 = vadd.f32 %v4626, %v5255
        %v5257 = vpop.f32.mrb[0].mxu0
        %v5258 = vadd.f32 %v4622, %v5257
        %v5259 = vpop.f32.mrb[0].mxu0
        %v5260 = vadd.f32 %v4626, %v5259
        %5261 = vmatprep.mubr.bf16.mxu0 %v4538
        %5262 = vmatmul.mubr.bf16.gmra.mrb[0].mxu0 %v4537
        %v5263 = vpop.f32.mrb[0].mxu0
        %v5264 = vadd.f32 %v4622, %v5263
        %v5265 = vpop.f32.mrb[0].mxu0
        %v5266 = vadd.f32 %v4626, %v5265
        %v5267 = vpop.f32.mrb[0].mxu0
        %v5268 = vadd.f32 %v4622, %v5267
        %v5269 = vpop.f32.mrb[0].mxu0
        %v5270 = vadd.f32 %v4626, %v5269
        %5271 = vmatprep.mubr.bf16.mxu0 %v4542
        %5272 = vmatmul.mubr.bf16.gmra.mrb[0].mxu0 %v4541
        %v5273 = vpop.f32.mrb[0].mxu0
        %v5274 = vadd.f32 %v4622, %v5273
        %v5275 = vpop.f32.mrb[0].mxu0
        %v5276 = vadd.f32 %v4626, %v5275
        %v5277 = vpop.f32.mrb[0].mxu0
        %v5278 = vadd.f32 %v4622, %v5277
        %v5279 = vpop.f32.mrb[0].mxu0
        %v5280 = vadd.f32 %v4626, %v5279
        %5281 = vmatprep.mubr.bf16.mxu0 %v4546
        %5282 = vmatmul.mubr.bf16.gmra.mrb[0].mxu0 %v4545
        %v5283 = vpop.f32.mrb[0].mxu0
        %v5284 = vadd.f32 %v4622, %v5283
        %v5285 = vpop.f32.mrb[0].mxu0
        %v5286 = vadd.f32 %v4626, %v5285
        %v5287 = vpop.f32.mrb[0].mxu0
        %v5288 = vadd.f32 %v4622, %v5287
        %v5289 = vpop.f32.mrb[0].mxu0
        %v5290 = vadd.f32 %v4626, %v5289
        %5291 = vmatprep.mubr.bf16.mxu0 %v4550
        %5292 = vmatmul.mubr.bf16.gmra.mrb[0].mxu0 %v4549
        %v5293 = vpop.f32.mrb[0].mxu0
        %v5294 = vadd.f32 %v4622, %v5293
        %v5295 = vpop.f32.mrb[0].mxu0
        %v5296 = vadd.f32 %v4626, %v5295
        %v5297 = vpop.f32.mrb[0].mxu0
        %v5298 = vadd.f32 %v4622, %v5297
        %v5299 = vpop.f32.mrb[0].mxu0
        %v5300 = vadd.f32 %v4626, %v5299
        %5301 = vdwg.mxu0
        %5302 = vmatprep.subr.bf16.mxu0 %v4854
        %5303 = vmatpush1.bf16.msra.mxu0 %v4853
        %5304 = vmatprep.subr.bf16.mxu0 %v4856
        %5305 = vmatpush1.bf16.msra.mxu0 %v4855
        %5306 = vmatprep.subr.bf16.mxu0 %v4858
        %5307 = vmatpush1.bf16.msra.mxu0 %v4857
        %5308 = vmatprep.subr.bf16.mxu0 %v4860
        %5309 = vmatpush1.bf16.msra.mxu0 %v4859
        %5310 = vmatprep.subr.bf16.mxu0 %v4862
        %5311 = vmatpush1.bf16.msra.mxu0 %v4861
        %5312 = vmatprep.subr.bf16.mxu0 %v4864
        %5313 = vmatpush1.bf16.msra.mxu0 %v4863
        %5314 = vmatprep.subr.bf16.mxu0 %v4866
        %5315 = vmatpush1.bf16.msra.mxu0 %v4865
        %5316 = vmatprep.subr.bf16.mxu0 %v4868
        %5317 = vmatpush1.bf16.msra.mxu0 %v4867
        %5318 = vmatprep.subr.bf16.mxu0 %v4870
        %5319 = vmatpush1.bf16.msra.mxu0 %v4869
        %5320 = vmatprep.subr.bf16.mxu0 %v4872
        %5321 = vmatpush1.bf16.msra.mxu0 %v4871
        %5322 = vmatprep.subr.bf16.mxu0 %v4874
        %5323 = vmatpush1.bf16.msra.mxu0 %v4873
        %5324 = vmatprep.subr.bf16.mxu0 %v4876
        %5325 = vmatpush1.bf16.msra.mxu0 %v4875
        %5326 = vmatprep.subr.bf16.mxu0 %v4878
        %5327 = vmatpush1.bf16.msra.mxu0 %v4877
        %5328 = vmatprep.subr.bf16.mxu0 %v4880
        %5329 = vmatpush1.bf16.msra.mxu0 %v4879
        %5330 = vmatprep.subr.bf16.mxu0 %v4882
        %5331 = vmatpush1.bf16.msra.mxu0 %v4881
        %5332 = vmatprep.subr.bf16.mxu0 %v4884
        %5333 = vmatpush1.bf16.msra.mxu0 %v4883
        %5334 = vmatprep.mubr.bf16.mxu0 %v4428
        %5335 = vmatmul.mubr.bf16.gmra.mrb[0].mxu0 %v4427
        %v5336 = vpop.f32.mrb[0].mxu0
        %v5337 = vadd.f32 %v4984, %v5336
        %v5338 = vpop.f32.mrb[0].mxu0
        %v5339 = vadd.f32 %v4986, %v5338
        %v5340 = vpop.f32.mrb[0].mxu0
        %v5341 = vadd.f32 %v4988, %v5340
        %v5342 = vpop.f32.mrb[0].mxu0
        %v5343 = vadd.f32 %v4990, %v5342
        %5344 = vmatprep.mubr.bf16.mxu0 %v4432
        %5345 = vmatmul.mubr.bf16.gmra.mrb[0].mxu0 %v4431
        %v5346 = vpop.f32.mrb[0].mxu0
        %v5347 = vadd.f32 %v4994, %v5346
        %v5348 = vpop.f32.mrb[0].mxu0
        %v5349 = vadd.f32 %v4996, %v5348
        %v5350 = vpop.f32.mrb[0].mxu0
        %v5351 = vadd.f32 %v4998, %v5350
        %v5352 = vpop.f32.mrb[0].mxu0
        %v5353 = vadd.f32 %v5000, %v5352
        %5354 = vmatprep.mubr.bf16.mxu0 %v4436
        %5355 = vmatmul.mubr.bf16.gmra.mrb[0].mxu0 %v4435
        %v5356 = vpop.f32.mrb[0].mxu0
        %v5357 = vadd.f32 %v5004, %v5356
        %v5358 = vpop.f32.mrb[0].mxu0
        %v5359 = vadd.f32 %v5006, %v5358
        %v5360 = vpop.f32.mrb[0].mxu0
        %v5361 = vadd.f32 %v5008, %v5360
        %v5362 = vpop.f32.mrb[0].mxu0
        %v5363 = vadd.f32 %v5010, %v5362
        %5364 = vmatprep.mubr.bf16.mxu0 %v4440
        %5365 = vmatmul.mubr.bf16.gmra.mrb[0].mxu0 %v4439
        %v5366 = vpop.f32.mrb[0].mxu0
        %v5367 = vadd.f32 %v5014, %v5366
        %v5368 = vpop.f32.mrb[0].mxu0
        %v5369 = vadd.f32 %v5016, %v5368
        %v5370 = vpop.f32.mrb[0].mxu0
        %v5371 = vadd.f32 %v5018, %v5370
        %v5372 = vpop.f32.mrb[0].mxu0
        %v5373 = vadd.f32 %v5020, %v5372
        %5374 = vmatprep.mubr.bf16.mxu0 %v4444
        %5375 = vmatmul.mubr.bf16.gmra.mrb[0].mxu0 %v4443
        %v5376 = vpop.f32.mrb[0].mxu0
        %v5377 = vadd.f32 %v5024, %v5376
        %v5378 = vpop.f32.mrb[0].mxu0
        %v5379 = vadd.f32 %v5026, %v5378
        %v5380 = vpop.f32.mrb[0].mxu0
        %v5381 = vadd.f32 %v5028, %v5380
        %v5382 = vpop.f32.mrb[0].mxu0
        %v5383 = vadd.f32 %v5030, %v5382
        %5384 = vmatprep.mubr.bf16.mxu0 %v4448
        %5385 = vmatmul.mubr.bf16.gmra.mrb[0].mxu0 %v4447
        %v5386 = vpop.f32.mrb[0].mxu0
        %v5387 = vadd.f32 %v5034, %v5386
        %v5388 = vpop.f32.mrb[0].mxu0
        %v5389 = vadd.f32 %v5036, %v5388
        %v5390 = vpop.f32.mrb[0].mxu0
        %v5391 = vadd.f32 %v5038, %v5390
        %v5392 = vpop.f32.mrb[0].mxu0
        %v5393 = vadd.f32 %v5040, %v5392
        %5394 = vmatprep.mubr.bf16.mxu0 %v4452
        %5395 = vmatmul.mubr.bf16.gmra.mrb[0].mxu0 %v4451
        %v5396 = vpop.f32.mrb[0].mxu0
        %v5397 = vadd.f32 %v5044, %v5396
        %v5398 = vpop.f32.mrb[0].mxu0
        %v5399 = vadd.f32 %v5046, %v5398
        %v5400 = vpop.f32.mrb[0].mxu0
        %v5401 = vadd.f32 %v5048, %v5400
        %v5402 = vpop.f32.mrb[0].mxu0
        %v5403 = vadd.f32 %v5050, %v5402
        %5404 = vmatprep.mubr.bf16.mxu0 %v4456
        %5405 = vmatmul.mubr.bf16.gmra.mrb[0].mxu0 %v4455
        %v5406 = vpop.f32.mrb[0].mxu0
        %v5407 = vadd.f32 %v5054, %v5406
        %v5408 = vpop.f32.mrb[0].mxu0
        %v5409 = vadd.f32 %v5056, %v5408
        %v5410 = vpop.f32.mrb[0].mxu0
        %v5411 = vadd.f32 %v5058, %v5410
        %v5412 = vpop.f32.mrb[0].mxu0
        %v5413 = vadd.f32 %v5060, %v5412
        %5414 = vmatprep.mubr.bf16.mxu0 %v4460
        %5415 = vmatmul.mubr.bf16.gmra.mrb[0].mxu0 %v4459
        %v5416 = vpop.f32.mrb[0].mxu0
        %v5417 = vadd.f32 %v5064, %v5416
        %v5418 = vpop.f32.mrb[0].mxu0
        %v5419 = vadd.f32 %v5066, %v5418
        %v5420 = vpop.f32.mrb[0].mxu0
        %v5421 = vadd.f32 %v5068, %v5420
        %v5422 = vpop.f32.mrb[0].mxu0
        %v5423 = vadd.f32 %v5070, %v5422
        %5424 = vmatprep.mubr.bf16.mxu0 %v4464
        %5425 = vmatmul.mubr.bf16.gmra.mrb[0].mxu0 %v4463
        %v5426 = vpop.f32.mrb[0].mxu0
        %v5427 = vadd.f32 %v5074, %v5426
        %v5428 = vpop.f32.mrb[0].mxu0
        %v5429 = vadd.f32 %v5076, %v5428
        %v5430 = vpop.f32.mrb[0].mxu0
        %v5431 = vadd.f32 %v5078, %v5430
        %v5432 = vpop.f32.mrb[0].mxu0
        %v5433 = vadd.f32 %v5080, %v5432
        %5434 = vmatprep.mubr.bf16.mxu0 %v4468
        %5435 = vmatmul.mubr.bf16.gmra.mrb[0].mxu0 %v4467
        %v5436 = vpop.f32.mrb[0].mxu0
        %v5437 = vadd.f32 %v5084, %v5436
        %v5438 = vpop.f32.mrb[0].mxu0
        %v5439 = vadd.f32 %v5086, %v5438
        %v5440 = vpop.f32.mrb[0].mxu0
        %v5441 = vadd.f32 %v5088, %v5440
        %v5442 = vpop.f32.mrb[0].mxu0
        %v5443 = vadd.f32 %v5090, %v5442
        %5444 = vmatprep.mubr.bf16.mxu0 %v4472
        %5445 = vmatmul.mubr.bf16.gmra.mrb[0].mxu0 %v4471
        %v5446 = vpop.f32.mrb[0].mxu0
        %v5447 = vadd.f32 %v5094, %v5446
        %v5448 = vpop.f32.mrb[0].mxu0
        %v5449 = vadd.f32 %v5096, %v5448
        %v5450 = vpop.f32.mrb[0].mxu0
        %v5451 = vadd.f32 %v5098, %v5450
        %v5452 = vpop.f32.mrb[0].mxu0
        %v5453 = vadd.f32 %v5100, %v5452
        %5454 = vmatprep.mubr.bf16.mxu0 %v4476
        %5455 = vmatmul.mubr.bf16.gmra.mrb[0].mxu0 %v4475
        %v5456 = vpop.f32.mrb[0].mxu0
        %v5457 = vadd.f32 %v5104, %v5456
        %v5458 = vpop.f32.mrb[0].mxu0
        %v5459 = vadd.f32 %v5106, %v5458
        %v5460 = vpop.f32.mrb[0].mxu0
        %v5461 = vadd.f32 %v5108, %v5460
        %v5462 = vpop.f32.mrb[0].mxu0
        %v5463 = vadd.f32 %v5110, %v5462
        %5464 = vmatprep.mubr.bf16.mxu0 %v4480
        %5465 = vmatmul.mubr.bf16.gmra.mrb[0].mxu0 %v4479
        %v5466 = vpop.f32.mrb[0].mxu0
        %v5467 = vadd.f32 %v5114, %v5466
        %v5468 = vpop.f32.mrb[0].mxu0
        %v5469 = vadd.f32 %v5116, %v5468
        %v5470 = vpop.f32.mrb[0].mxu0
        %v5471 = vadd.f32 %v5118, %v5470
        %v5472 = vpop.f32.mrb[0].mxu0
        %v5473 = vadd.f32 %v5120, %v5472
        %5474 = vmatprep.mubr.bf16.mxu0 %v4484
        %5475 = vmatmul.mubr.bf16.gmra.mrb[0].mxu0 %v4483
        %v5476 = vpop.f32.mrb[0].mxu0
        %v5477 = vadd.f32 %v5124, %v5476
        %v5478 = vpop.f32.mrb[0].mxu0
        %v5479 = vadd.f32 %v5126, %v5478
        %v5480 = vpop.f32.mrb[0].mxu0
        %v5481 = vadd.f32 %v5128, %v5480
        %v5482 = vpop.f32.mrb[0].mxu0
        %v5483 = vadd.f32 %v5130, %v5482
        %5484 = vmatprep.mubr.bf16.mxu0 %v4488
        %5485 = vmatmul.mubr.bf16.gmra.mrb[0].mxu0 %v4487
        %v5486 = vpop.f32.mrb[0].mxu0
        %v5487 = vadd.f32 %v5134, %v5486
        %v5488 = vpop.f32.mrb[0].mxu0
        %v5489 = vadd.f32 %v5136, %v5488
        %v5490 = vpop.f32.mrb[0].mxu0
        %v5491 = vadd.f32 %v5138, %v5490
        %v5492 = vpop.f32.mrb[0].mxu0
        %v5493 = vadd.f32 %v5140, %v5492
        %5494 = vmatprep.mubr.bf16.mxu0 %v4492
        %5495 = vmatmul.mubr.bf16.gmra.mrb[0].mxu0 %v4491
        %v5496 = vpop.f32.mrb[0].mxu0
        %v5497 = vadd.f32 %v5144, %v5496
        %v5498 = vpop.f32.mrb[0].mxu0
        %v5499 = vadd.f32 %v5146, %v5498
        %v5500 = vpop.f32.mrb[0].mxu0
        %v5501 = vadd.f32 %v5148, %v5500
        %v5502 = vpop.f32.mrb[0].mxu0
        %v5503 = vadd.f32 %v5150, %v5502
        %5504 = vmatprep.mubr.bf16.mxu0 %v4496
        %5505 = vmatmul.mubr.bf16.gmra.mrb[0].mxu0 %v4495
        %v5506 = vpop.f32.mrb[0].mxu0
        %v5507 = vadd.f32 %v5154, %v5506
        %v5508 = vpop.f32.mrb[0].mxu0
        %v5509 = vadd.f32 %v5156, %v5508
        %v5510 = vpop.f32.mrb[0].mxu0
        %v5511 = vadd.f32 %v5158, %v5510
        %v5512 = vpop.f32.mrb[0].mxu0
        %v5513 = vadd.f32 %v5160, %v5512
        %5514 = vmatprep.mubr.bf16.mxu0 %v4500
        %5515 = vmatmul.mubr.bf16.gmra.mrb[0].mxu0 %v4499
        %v5516 = vpop.f32.mrb[0].mxu0
        %v5517 = vadd.f32 %v5164, %v5516
        %v5518 = vpop.f32.mrb[0].mxu0
        %v5519 = vadd.f32 %v5166, %v5518
        %v5520 = vpop.f32.mrb[0].mxu0
        %v5521 = vadd.f32 %v5168, %v5520
        %v5522 = vpop.f32.mrb[0].mxu0
        %v5523 = vadd.f32 %v5170, %v5522
        %5524 = vmatprep.mubr.bf16.mxu0 %v4504
        %5525 = vmatmul.mubr.bf16.gmra.mrb[0].mxu0 %v4503
        %v5526 = vpop.f32.mrb[0].mxu0
        %v5527 = vadd.f32 %v5174, %v5526
        %v5528 = vpop.f32.mrb[0].mxu0
        %v5529 = vadd.f32 %v5176, %v5528
        %v5530 = vpop.f32.mrb[0].mxu0
        %v5531 = vadd.f32 %v5178, %v5530
        %v5532 = vpop.f32.mrb[0].mxu0
        %v5533 = vadd.f32 %v5180, %v5532
        %5534 = vmatprep.mubr.bf16.mxu0 %v4508
        %5535 = vmatmul.mubr.bf16.gmra.mrb[0].mxu0 %v4507
        %v5536 = vpop.f32.mrb[0].mxu0
        %v5537 = vadd.f32 %v5184, %v5536
        %v5538 = vpop.f32.mrb[0].mxu0
        %v5539 = vadd.f32 %v5186, %v5538
        %v5540 = vpop.f32.mrb[0].mxu0
        %v5541 = vadd.f32 %v5188, %v5540
        %v5542 = vpop.f32.mrb[0].mxu0
        %v5543 = vadd.f32 %v5190, %v5542
        %5544 = vmatprep.mubr.bf16.mxu0 %v4512
        %5545 = vmatmul.mubr.bf16.gmra.mrb[0].mxu0 %v4511
        %v5546 = vpop.f32.mrb[0].mxu0
        %v5547 = vadd.f32 %v5194, %v5546
        %v5548 = vpop.f32.mrb[0].mxu0
        %v5549 = vadd.f32 %v5196, %v5548
        %v5550 = vpop.f32.mrb[0].mxu0
        %v5551 = vadd.f32 %v5198, %v5550
        %v5552 = vpop.f32.mrb[0].mxu0
        %v5553 = vadd.f32 %v5200, %v5552
        %5554 = vmatprep.mubr.bf16.mxu0 %v4516
        %5555 = vmatmul.mubr.bf16.gmra.mrb[0].mxu0 %v4515
        %v5556 = vpop.f32.mrb[0].mxu0
        %v5557 = vadd.f32 %v5204, %v5556
        %v5558 = vpop.f32.mrb[0].mxu0
        %v5559 = vadd.f32 %v5206, %v5558
        %v5560 = vpop.f32.mrb[0].mxu0
        %v5561 = vadd.f32 %v5208, %v5560
        %v5562 = vpop.f32.mrb[0].mxu0
        %v5563 = vadd.f32 %v5210, %v5562
        %5564 = vmatprep.mubr.bf16.mxu0 %v4520
        %5565 = vmatmul.mubr.bf16.gmra.mrb[0].mxu0 %v4519
        %v5566 = vpop.f32.mrb[0].mxu0
        %v5567 = vadd.f32 %v5214, %v5566
        %v5568 = vpop.f32.mrb[0].mxu0
        %v5569 = vadd.f32 %v5216, %v5568
        %v5570 = vpop.f32.mrb[0].mxu0
        %v5571 = vadd.f32 %v5218, %v5570
        %v5572 = vpop.f32.mrb[0].mxu0
        %v5573 = vadd.f32 %v5220, %v5572
        %5574 = vmatprep.mubr.bf16.mxu0 %v4524
        %5575 = vmatmul.mubr.bf16.gmra.mrb[0].mxu0 %v4523
        %v5576 = vpop.f32.mrb[0].mxu0
        %v5577 = vadd.f32 %v5224, %v5576
        %v5578 = vpop.f32.mrb[0].mxu0
        %v5579 = vadd.f32 %v5226, %v5578
        %v5580 = vpop.f32.mrb[0].mxu0
        %v5581 = vadd.f32 %v5228, %v5580
        %v5582 = vpop.f32.mrb[0].mxu0
        %v5583 = vadd.f32 %v5230, %v5582
        %5584 = vmatprep.mubr.bf16.mxu0 %v4528
        %5585 = vmatmul.mubr.bf16.gmra.mrb[0].mxu0 %v4527
        %v5586 = vpop.f32.mrb[0].mxu0
        %v5587 = vadd.f32 %v5234, %v5586
        %v5588 = vpop.f32.mrb[0].mxu0
        %v5589 = vadd.f32 %v5236, %v5588
        %v5590 = vpop.f32.mrb[0].mxu0
        %v5591 = vadd.f32 %v5238, %v5590
        %v5592 = vpop.f32.mrb[0].mxu0
        %v5593 = vadd.f32 %v5240, %v5592
        %5594 = vmatprep.mubr.bf16.mxu0 %v4532
        %5595 = vmatmul.mubr.bf16.gmra.mrb[0].mxu0 %v4531
        %v5596 = vpop.f32.mrb[0].mxu0
        %v5597 = vadd.f32 %v5244, %v5596
        %v5598 = vpop.f32.mrb[0].mxu0
        %v5599 = vadd.f32 %v5246, %v5598
        %v5600 = vpop.f32.mrb[0].mxu0
        %v5601 = vadd.f32 %v5248, %v5600
        %v5602 = vpop.f32.mrb[0].mxu0
        %v5603 = vadd.f32 %v5250, %v5602
        %5604 = vmatprep.mubr.bf16.mxu0 %v4536
        %5605 = vmatmul.mubr.bf16.gmra.mrb[0].mxu0 %v4535
        %v5606 = vpop.f32.mrb[0].mxu0
        %v5607 = vadd.f32 %v5254, %v5606
        %v5608 = vpop.f32.mrb[0].mxu0
        %v5609 = vadd.f32 %v5256, %v5608
        %v5610 = vpop.f32.mrb[0].mxu0
        %v5611 = vadd.f32 %v5258, %v5610
        %v5612 = vpop.f32.mrb[0].mxu0
        %v5613 = vadd.f32 %v5260, %v5612
        %5614 = vmatprep.mubr.bf16.mxu0 %v4540
        %5615 = vmatmul.mubr.bf16.gmra.mrb[0].mxu0 %v4539
        %v5616 = vpop.f32.mrb[0].mxu0
        %v5617 = vadd.f32 %v5264, %v5616
        %v5618 = vpop.f32.mrb[0].mxu0
        %v5619 = vadd.f32 %v5266, %v5618
        %v5620 = vpop.f32.mrb[0].mxu0
        %v5621 = vadd.f32 %v5268, %v5620
        %v5622 = vpop.f32.mrb[0].mxu0
        %v5623 = vadd.f32 %v5270, %v5622
        %5624 = vmatprep.mubr.bf16.mxu0 %v4544
        %5625 = vmatmul.mubr.bf16.gmra.mrb[0].mxu0 %v4543
        %v5626 = vpop.f32.mrb[0].mxu0
        %v5627 = vadd.f32 %v5274, %v5626
        %v5628 = vpop.f32.mrb[0].mxu0
        %v5629 = vadd.f32 %v5276, %v5628
        %v5630 = vpop.f32.mrb[0].mxu0
        %v5631 = vadd.f32 %v5278, %v5630
        %v5632 = vpop.f32.mrb[0].mxu0
        %v5633 = vadd.f32 %v5280, %v5632
        %5634 = vmatprep.mubr.bf16.mxu0 %v4548
        %5635 = vmatmul.mubr.bf16.gmra.mrb[0].mxu0 %v4547
        %v5636 = vpop.f32.mrb[0].mxu0
        %v5637 = vadd.f32 %v5284, %v5636
        %v5638 = vpop.f32.mrb[0].mxu0
        %v5639 = vadd.f32 %v5286, %v5638
        %v5640 = vpop.f32.mrb[0].mxu0
        %v5641 = vadd.f32 %v5288, %v5640
        %v5642 = vpop.f32.mrb[0].mxu0
        %v5643 = vadd.f32 %v5290, %v5642
        %5644 = vmatprep.mubr.bf16.mxu0 %v4552
        %5645 = vmatmul.mubr.bf16.gmra.mrb[0].mxu0 %v4551
        %v5646 = vpop.f32.mrb[0].mxu0
        %v5647 = vadd.f32 %v5294, %v5646
        %v5648 = vpop.f32.mrb[0].mxu0
        %v5649 = vadd.f32 %v5296, %v5648
        %v5650 = vpop.f32.mrb[0].mxu0
        %v5651 = vadd.f32 %v5298, %v5650
        %v5652 = vpop.f32.mrb[0].mxu0
        %v5653 = vadd.f32 %v5300, %v5652
        %5654 = vdwg.mxu0
        %v5655 = vmax.f32 %v5337, 0.0
        %v5656 = vmax.f32 %v5339, 0.0
        %v5657 = vmax.f32 %v5341, 0.0
        %v5658 = vmax.f32 %v5343, 0.0
        %v5659 = vmax.f32 %v5347, 0.0
        %v5660 = vmax.f32 %v5349, 0.0
        %v5661 = vmax.f32 %v5351, 0.0
        %v5662 = vmax.f32 %v5353, 0.0
        %v5663 = vmax.f32 %v5357, 0.0
        %v5664 = vmax.f32 %v5359, 0.0
        %v5665 = vmax.f32 %v5361, 0.0
        %v5666 = vmax.f32 %v5363, 0.0
        %v5667 = vmax.f32 %v5367, 0.0
        %v5668 = vmax.f32 %v5369, 0.0
        %v5669 = vmax.f32 %v5371, 0.0
        %v5670 = vmax.f32 %v5373, 0.0
        %v5671 = vmax.f32 %v5377, 0.0
        %v5672 = vmax.f32 %v5379, 0.0
        %v5673 = vmax.f32 %v5381, 0.0
        %v5674 = vmax.f32 %v5383, 0.0
        %v5675 = vmax.f32 %v5387, 0.0
        %v5676 = vmax.f32 %v5389, 0.0
        %v5677 = vmax.f32 %v5391, 0.0
        %v5678 = vmax.f32 %v5393, 0.0
        %v5679 = vmax.f32 %v5397, 0.0
        %v5680 = vmax.f32 %v5399, 0.0
        %v5681 = vmax.f32 %v5401, 0.0
        %v5682 = vmax.f32 %v5403, 0.0
        %v5683 = vmax.f32 %v5407, 0.0
        %v5684 = vmax.f32 %v5409, 0.0
        %v5685 = vmax.f32 %v5411, 0.0
        %v5686 = vmax.f32 %v5413, 0.0
        %v5687 = vmax.f32 %v5417, 0.0
        %v5688 = vmax.f32 %v5419, 0.0
        %v5689 = vmax.f32 %v5421, 0.0
        %v5690 = vmax.f32 %v5423, 0.0
        %v5691 = vmax.f32 %v5427, 0.0
        %v5692 = vmax.f32 %v5429, 0.0
        %v5693 = vmax.f32 %v5431, 0.0
        %v5694 = vmax.f32 %v5433, 0.0
        %v5695 = vmax.f32 %v5437, 0.0
        %v5696 = vmax.f32 %v5439, 0.0
        %v5697 = vmax.f32 %v5441, 0.0
        %v5698 = vmax.f32 %v5443, 0.0
        %v5699 = vmax.f32 %v5447, 0.0
        %v5700 = vmax.f32 %v5449, 0.0
        %v5701 = vmax.f32 %v5451, 0.0
        %v5702 = vmax.f32 %v5453, 0.0
        %v5703 = vmax.f32 %v5457, 0.0
        %v5704 = vmax.f32 %v5459, 0.0
        %v5705 = vmax.f32 %v5461, 0.0
        %v5706 = vmax.f32 %v5463, 0.0
        %v5707 = vmax.f32 %v5467, 0.0
        %v5708 = vmax.f32 %v5469, 0.0
        %v5709 = vmax.f32 %v5471, 0.0
        %v5710 = vmax.f32 %v5473, 0.0
        %v5711 = vmax.f32 %v5477, 0.0
        %v5712 = vmax.f32 %v5479, 0.0
        %v5713 = vmax.f32 %v5481, 0.0
        %v5714 = vmax.f32 %v5483, 0.0
        %v5715 = vmax.f32 %v5487, 0.0
        %v5716 = vmax.f32 %v5489, 0.0
        %v5717 = vmax.f32 %v5491, 0.0
        %v5718 = vmax.f32 %v5493, 0.0
        %v5719 = vmax.f32 %v5497, 0.0
        %v5720 = vmax.f32 %v5499, 0.0
        %v5721 = vmax.f32 %v5501, 0.0
        %v5722 = vmax.f32 %v5503, 0.0
        %v5723 = vmax.f32 %v5507, 0.0
        %v5724 = vmax.f32 %v5509, 0.0
        %v5725 = vmax.f32 %v5511, 0.0
        %v5726 = vmax.f32 %v5513, 0.0
        %v5727 = vmax.f32 %v5517, 0.0
        %v5728 = vmax.f32 %v5519, 0.0
        %v5729 = vmax.f32 %v5521, 0.0
        %v5730 = vmax.f32 %v5523, 0.0
        %v5731 = vmax.f32 %v5527, 0.0
        %v5732 = vmax.f32 %v5529, 0.0
        %v5733 = vmax.f32 %v5531, 0.0
        %v5734 = vmax.f32 %v5533, 0.0
        %v5735 = vmax.f32 %v5537, 0.0
        %v5736 = vmax.f32 %v5539, 0.0
        %v5737 = vmax.f32 %v5541, 0.0
        %v5738 = vmax.f32 %v5543, 0.0
        %v5739 = vmax.f32 %v5547, 0.0
        %v5740 = vmax.f32 %v5549, 0.0
        %v5741 = vmax.f32 %v5551, 0.0
        %v5742 = vmax.f32 %v5553, 0.0
        %v5743 = vmax.f32 %v5557, 0.0
        %v5744 = vmax.f32 %v5559, 0.0
        %v5745 = vmax.f32 %v5561, 0.0
        %v5746 = vmax.f32 %v5563, 0.0
        %v5747 = vmax.f32 %v5567, 0.0
        %v5748 = vmax.f32 %v5569, 0.0
        %v5749 = vmax.f32 %v5571, 0.0
        %v5750 = vmax.f32 %v5573, 0.0
        %v5751 = vmax.f32 %v5577, 0.0
        %v5752 = vmax.f32 %v5579, 0.0
        %v5753 = vmax.f32 %v5581, 0.0
        %v5754 = vmax.f32 %v5583, 0.0
        %v5755 = vmax.f32 %v5587, 0.0
        %v5756 = vmax.f32 %v5589, 0.0
        %v5757 = vmax.f32 %v5591, 0.0
        %v5758 = vmax.f32 %v5593, 0.0
        %v5759 = vmax.f32 %v5597, 0.0
        %v5760 = vmax.f32 %v5599, 0.0
        %v5761 = vmax.f32 %v5601, 0.0
        %v5762 = vmax.f32 %v5603, 0.0
        %v5763 = vmax.f32 %v5607, 0.0
        %v5764 = vmax.f32 %v5609, 0.0
        %v5765 = vmax.f32 %v5611, 0.0
        %v5766 = vmax.f32 %v5613, 0.0
        %v5767 = vmax.f32 %v5617, 0.0
        %v5768 = vmax.f32 %v5619, 0.0
        %v5769 = vmax.f32 %v5621, 0.0
        %v5770 = vmax.f32 %v5623, 0.0
        %v5771 = vmax.f32 %v5627, 0.0
        %v5772 = vmax.f32 %v5629, 0.0
        %v5773 = vmax.f32 %v5631, 0.0
        %v5774 = vmax.f32 %v5633, 0.0
        %v5775 = vmax.f32 %v5637, 0.0
        %v5776 = vmax.f32 %v5639, 0.0
        %v5777 = vmax.f32 %v5641, 0.0
        %v5778 = vmax.f32 %v5643, 0.0
        %v5779 = vmax.f32 %v5647, 0.0
        %v5780 = vmax.f32 %v5649, 0.0
        %v5781 = vmax.f32 %v5651, 0.0
        %v5782 = vmax.f32 %v5653, 0.0
        %v5783 = vpack.c.bf16 %v5657, %v5655
        %v5784 = vpack.c.bf16 %v5658, %v5656
        %v5785 = vpack.c.bf16 %v5661, %v5659
        %v5786 = vpack.c.bf16 %v5662, %v5660
        %v5787 = vpack.c.bf16 %v5665, %v5663
        %v5788 = vpack.c.bf16 %v5666, %v5664
        %v5789 = vpack.c.bf16 %v5669, %v5667
        %v5790 = vpack.c.bf16 %v5670, %v5668
        %v5791 = vpack.c.bf16 %v5673, %v5671
        %v5792 = vpack.c.bf16 %v5674, %v5672
        %v5793 = vpack.c.bf16 %v5677, %v5675
        %v5794 = vpack.c.bf16 %v5678, %v5676
        %v5795 = vpack.c.bf16 %v5681, %v5679
        %v5796 = vpack.c.bf16 %v5682, %v5680
        %v5797 = vpack.c.bf16 %v5685, %v5683
        %v5798 = vpack.c.bf16 %v5686, %v5684
        %v5799 = vpack.c.bf16 %v5689, %v5687
        %v5800 = vpack.c.bf16 %v5690, %v5688
        %v5801 = vpack.c.bf16 %v5693, %v5691
        %v5802 = vpack.c.bf16 %v5694, %v5692
        %v5803 = vpack.c.bf16 %v5697, %v5695
        %v5804 = vpack.c.bf16 %v5698, %v5696
        %v5805 = vpack.c.bf16 %v5701, %v5699
        %v5806 = vpack.c.bf16 %v5702, %v5700
        %v5807 = vpack.c.bf16 %v5705, %v5703
        %v5808 = vpack.c.bf16 %v5706, %v5704
        %v5809 = vpack.c.bf16 %v5709, %v5707
        %v5810 = vpack.c.bf16 %v5710, %v5708
        %v5811 = vpack.c.bf16 %v5713, %v5711
        %v5812 = vpack.c.bf16 %v5714, %v5712
        %v5813 = vpack.c.bf16 %v5717, %v5715
        %v5814 = vpack.c.bf16 %v5718, %v5716
        %v5815 = vpack.c.bf16 %v5721, %v5719
        %v5816 = vpack.c.bf16 %v5722, %v5720
        %v5817 = vpack.c.bf16 %v5725, %v5723
        %v5818 = vpack.c.bf16 %v5726, %v5724
        %v5819 = vpack.c.bf16 %v5729, %v5727
        %v5820 = vpack.c.bf16 %v5730, %v5728
        %v5821 = vpack.c.bf16 %v5733, %v5731
        %v5822 = vpack.c.bf16 %v5734, %v5732
        %v5823 = vpack.c.bf16 %v5737, %v5735
        %v5824 = vpack.c.bf16 %v5738, %v5736
        %v5825 = vpack.c.bf16 %v5741, %v5739
        %v5826 = vpack.c.bf16 %v5742, %v5740
        %v5827 = vpack.c.bf16 %v5745, %v5743
        %v5828 = vpack.c.bf16 %v5746, %v5744
        %v5829 = vpack.c.bf16 %v5749, %v5747
        %v5830 = vpack.c.bf16 %v5750, %v5748
        %v5831 = vpack.c.bf16 %v5753, %v5751
        %v5832 = vpack.c.bf16 %v5754, %v5752
        %v5833 = vpack.c.bf16 %v5757, %v5755
        %v5834 = vpack.c.bf16 %v5758, %v5756
        %v5835 = vpack.c.bf16 %v5761, %v5759
        %v5836 = vpack.c.bf16 %v5762, %v5760
        %v5837 = vpack.c.bf16 %v5765, %v5763
        %v5838 = vpack.c.bf16 %v5766, %v5764
        %v5839 = vpack.c.bf16 %v5769, %v5767
        %v5840 = vpack.c.bf16 %v5770, %v5768
        %v5841 = vpack.c.bf16 %v5773, %v5771
        %v5842 = vpack.c.bf16 %v5774, %v5772
        %v5843 = vpack.c.bf16 %v5777, %v5775
        %v5844 = vpack.c.bf16 %v5778, %v5776
        %v5845 = vpack.c.bf16 %v5781, %v5779
        %v5846 = vpack.c.bf16 %v5782, %v5780
        %v5847 = vld [vmem:[%s7] sm:$0xff]
        %v5848 = vld [vmem:[%s7 + $0x8] sm:$0xff]
        %v5849 = vld [vmem:[%s7 + $0x10] sm:$0xff]
        %v5850 = vld [vmem:[%s7 + $0x18] sm:$0xff]
        %v5851 = vld [vmem:[%s7 + $0x20] sm:$0xff]
        %v5852 = vld [vmem:[%s7 + $0x28] sm:$0xff]
        %v5853 = vld [vmem:[%s7 + $0x30] sm:$0xff]
        %v5854 = vld [vmem:[%s7 + $0x38] sm:$0xff]
        %v5855 = vld [vmem:[%s7 + $0x40] sm:$0xff]
        %v5856 = vld [vmem:[%s7 + $0x48] sm:$0xff]
        %v5857 = vld [vmem:[%s7 + $0x50] sm:$0xff]
        %v5858 = vld [vmem:[%s7 + $0x58] sm:$0xff]
        %v5859 = vld [vmem:[%s7 + $0x60] sm:$0xff]
        %v5860 = vld [vmem:[%s7 + $0x68] sm:$0xff]
        %v5861 = vld [vmem:[%s7 + $0x70] sm:$0xff]
        %v5862 = vld [vmem:[%s7 + $0x78] sm:$0xff]
        %v5863 = vld [vmem:[%s7 + $0x80] sm:$0xff]
        %v5864 = vld [vmem:[%s7 + $0x88] sm:$0xff]
        %v5865 = vld [vmem:[%s7 + $0x90] sm:$0xff]
        %v5866 = vld [vmem:[%s7 + $0x98] sm:$0xff]
        %v5867 = vld [vmem:[%s7 + $0xa0] sm:$0xff]
        %v5868 = vld [vmem:[%s7 + $0xa8] sm:$0xff]
        %v5869 = vld [vmem:[%s7 + $0xb0] sm:$0xff]
        %v5870 = vld [vmem:[%s7 + $0xb8] sm:$0xff]
        %v5871 = vld [vmem:[%s7 + $0xc0] sm:$0xff]
        %v5872 = vld [vmem:[%s7 + $0xc8] sm:$0xff]
        %v5873 = vld [vmem:[%s7 + $0xd0] sm:$0xff]
        %v5874 = vld [vmem:[%s7 + $0xd8] sm:$0xff]
        %v5875 = vld [vmem:[%s7 + $0xe0] sm:$0xff]
        %v5876 = vld [vmem:[%s7 + $0xe8] sm:$0xff]
        %v5877 = vld [vmem:[%s7 + $0xf0] sm:$0xff]
        %v5878 = vld [vmem:[%s7 + $0xf8] sm:$0xff]
        %v5879 = vld [vmem:[%s8] sm:$0x3]
        %v5881 = vlaneseq
        %v5882 = vshrl.u32 %v5881, 7
        %v5883 = vsub.s32 0, %v5882
        %v5884 = vrot.slane %v5879, %v5883
        %v5885 = vlaneseq
        %v5886 = vshrl.u32 %v5885, 7
        %v5887 = vsub.s32 1, %v5886
        %v5888 = vrot.slane %v5879, %v5887
        %v5923 = vunpack.c.l.b16 %v5847
        %v5924 = vunpack.c.h.b16 %v5847
        %v5925 = vunpack.c.l.b16 %v5848
        %v5926 = vunpack.c.h.b16 %v5848
        %v5927 = vunpack.c.l.b16 %v5849
        %v5928 = vunpack.c.h.b16 %v5849
        %v5929 = vunpack.c.l.b16 %v5850
        %v5930 = vunpack.c.h.b16 %v5850
        %v5931 = vunpack.c.l.b16 %v5851
        %v5932 = vunpack.c.h.b16 %v5851
        %v5933 = vunpack.c.l.b16 %v5852
        %v5934 = vunpack.c.h.b16 %v5852
        %v5935 = vunpack.c.l.b16 %v5853
        %v5936 = vunpack.c.h.b16 %v5853
        %v5937 = vunpack.c.l.b16 %v5854
        %v5938 = vunpack.c.h.b16 %v5854
        %v5939 = vunpack.c.l.b16 %v5855
        %v5940 = vunpack.c.h.b16 %v5855
        %v5941 = vunpack.c.l.b16 %v5856
        %v5942 = vunpack.c.h.b16 %v5856
        %v5943 = vunpack.c.l.b16 %v5857
        %v5944 = vunpack.c.h.b16 %v5857
        %v5945 = vunpack.c.l.b16 %v5858
        %v5946 = vunpack.c.h.b16 %v5858
        %v5947 = vunpack.c.l.b16 %v5859
        %v5948 = vunpack.c.h.b16 %v5859
        %v5949 = vunpack.c.l.b16 %v5860
        %v5950 = vunpack.c.h.b16 %v5860
        %v5951 = vunpack.c.l.b16 %v5861
        %v5952 = vunpack.c.h.b16 %v5861
        %v5953 = vunpack.c.l.b16 %v5862
        %v5954 = vunpack.c.h.b16 %v5862
        %v5955 = vunpack.c.l.b16 %v5863
        %v5956 = vunpack.c.h.b16 %v5863
        %v5957 = vunpack.c.l.b16 %v5864
        %v5958 = vunpack.c.h.b16 %v5864
        %v5959 = vunpack.c.l.b16 %v5865
        %v5960 = vunpack.c.h.b16 %v5865
        %v5961 = vunpack.c.l.b16 %v5866
        %v5962 = vunpack.c.h.b16 %v5866
        %v5963 = vunpack.c.l.b16 %v5867
        %v5964 = vunpack.c.h.b16 %v5867
        %v5965 = vunpack.c.l.b16 %v5868
        %v5966 = vunpack.c.h.b16 %v5868
        %v5967 = vunpack.c.l.b16 %v5869
        %v5968 = vunpack.c.h.b16 %v5869
        %v5969 = vunpack.c.l.b16 %v5870
        %v5970 = vunpack.c.h.b16 %v5870
        %v5971 = vunpack.c.l.b16 %v5871
        %v5972 = vunpack.c.h.b16 %v5871
        %v5973 = vunpack.c.l.b16 %v5872
        %v5974 = vunpack.c.h.b16 %v5872
        %v5975 = vunpack.c.l.b16 %v5873
        %v5976 = vunpack.c.h.b16 %v5873
        %v5977 = vunpack.c.l.b16 %v5874
        %v5978 = vunpack.c.h.b16 %v5874
        %v5979 = vunpack.c.l.b16 %v5875
        %v5980 = vunpack.c.h.b16 %v5875
        %v5981 = vunpack.c.l.b16 %v5876
        %v5982 = vunpack.c.h.b16 %v5876
        %v5983 = vunpack.c.l.b16 %v5877
        %v5984 = vunpack.c.h.b16 %v5877
        %v5985 = vunpack.c.l.b16 %v5878
        %v5986 = vunpack.c.h.b16 %v5878
        %v5987 = vpack.c.b16 %v5925, %v5923
        %v5988 = vpack.c.b16 %v5926, %v5924
        %v5989 = vpack.c.b16 %v5929, %v5927
        %v5990 = vpack.c.b16 %v5930, %v5928
        %v5991 = vpack.c.b16 %v5933, %v5931
        %v5992 = vpack.c.b16 %v5934, %v5932
        %v5993 = vpack.c.b16 %v5937, %v5935
        %v5994 = vpack.c.b16 %v5938, %v5936
        %v5995 = vpack.c.b16 %v5941, %v5939
        %v5996 = vpack.c.b16 %v5942, %v5940
        %v5997 = vpack.c.b16 %v5945, %v5943
        %v5998 = vpack.c.b16 %v5946, %v5944
        %v5999 = vpack.c.b16 %v5949, %v5947
        %v6000 = vpack.c.b16 %v5950, %v5948
        %v6001 = vpack.c.b16 %v5953, %v5951
        %v6002 = vpack.c.b16 %v5954, %v5952
        %v6003 = vpack.c.b16 %v5957, %v5955
        %v6004 = vpack.c.b16 %v5958, %v5956
        %v6005 = vpack.c.b16 %v5961, %v5959
        %v6006 = vpack.c.b16 %v5962, %v5960
        %v6007 = vpack.c.b16 %v5965, %v5963
        %v6008 = vpack.c.b16 %v5966, %v5964
        %v6009 = vpack.c.b16 %v5969, %v5967
        %v6010 = vpack.c.b16 %v5970, %v5968
        %v6011 = vpack.c.b16 %v5973, %v5971
        %v6012 = vpack.c.b16 %v5974, %v5972
        %v6013 = vpack.c.b16 %v5977, %v5975
        %v6014 = vpack.c.b16 %v5978, %v5976
        %v6015 = vpack.c.b16 %v5981, %v5979
        %v6016 = vpack.c.b16 %v5982, %v5980
        %v6017 = vpack.c.b16 %v5985, %v5983
        %v6018 = vpack.c.b16 %v5986, %v5984
        %6051 = vmatprep.subr.bf16.mxu0 %v5988
        %6052 = vmatpush1.bf16.msra.mxu0 %v5987
        %6053 = vmatprep.subr.bf16.mxu0 %v5990
        %6054 = vmatpush1.bf16.msra.mxu0 %v5989
        %6055 = vmatprep.subr.bf16.mxu0 %v5992
        %6056 = vmatpush1.bf16.msra.mxu0 %v5991
        %6057 = vmatprep.subr.bf16.mxu0 %v5994
        %6058 = vmatpush1.bf16.msra.mxu0 %v5993
        %6059 = vmatprep.subr.bf16.mxu0 %v5996
        %6060 = vmatpush1.bf16.msra.mxu0 %v5995
        %6061 = vmatprep.subr.bf16.mxu0 %v5998
        %6062 = vmatpush1.bf16.msra.mxu0 %v5997
        %6063 = vmatprep.subr.bf16.mxu0 %v6000
        %6064 = vmatpush1.bf16.msra.mxu0 %v5999
        %6065 = vmatprep.subr.bf16.mxu0 %v6002
        %6066 = vmatpush1.bf16.msra.mxu0 %v6001
        %6067 = vmatprep.subr.bf16.mxu0 %v6004
        %6068 = vmatpush1.bf16.msra.mxu0 %v6003
        %6069 = vmatprep.subr.bf16.mxu0 %v6006
        %6070 = vmatpush1.bf16.msra.mxu0 %v6005
        %6071 = vmatprep.subr.bf16.mxu0 %v6008
        %6072 = vmatpush1.bf16.msra.mxu0 %v6007
        %6073 = vmatprep.subr.bf16.mxu0 %v6010
        %6074 = vmatpush1.bf16.msra.mxu0 %v6009
        %6075 = vmatprep.subr.bf16.mxu0 %v6012
        %6076 = vmatpush1.bf16.msra.mxu0 %v6011
        %6077 = vmatprep.subr.bf16.mxu0 %v6014
        %6078 = vmatpush1.bf16.msra.mxu0 %v6013
        %6079 = vmatprep.subr.bf16.mxu0 %v6016
        %6080 = vmatpush1.bf16.msra.mxu0 %v6015
        %6081 = vmatprep.subr.bf16.mxu0 %v6018
        %6082 = vmatpush1.bf16.msra.mxu0 %v6017
        %6083 = vmatprep.mubr.bf16.mxu0 %v5784
        %6084 = vmatmul.mubr.bf16.gmra.mrb[0].mxu0 %v5783
        %v6085 = vpop.f32.mrb[0].mxu0
        %v6086 = vadd.f32 %v5884, %v6085
        %v6087 = vpop.f32.mrb[0].mxu0
        %v6088 = vadd.f32 %v5888, %v6087
        %v6089 = vpop.f32.mrb[0].mxu0
        %v6090 = vadd.f32 %v5884, %v6089
        %v6091 = vpop.f32.mrb[0].mxu0
        %v6092 = vadd.f32 %v5888, %v6091
        %6093 = vmatprep.mubr.bf16.mxu0 %v5786
        %6094 = vmatmul.mubr.bf16.gmra.mrb[0].mxu0 %v5785
        %v6095 = vpop.f32.mrb[0].mxu0
        %v6096 = vadd.f32 %v5884, %v6095
        %v6097 = vpop.f32.mrb[0].mxu0
        %v6098 = vadd.f32 %v5888, %v6097
        %v6099 = vpop.f32.mrb[0].mxu0
        %v6100 = vadd.f32 %v5884, %v6099
        %v6101 = vpop.f32.mrb[0].mxu0
        %v6102 = vadd.f32 %v5888, %v6101
        %6103 = vmatprep.mubr.bf16.mxu0 %v5788
        %6104 = vmatmul.mubr.bf16.gmra.mrb[0].mxu0 %v5787
        %v6105 = vpop.f32.mrb[0].mxu0
        %v6106 = vadd.f32 %v5884, %v6105
        %v6107 = vpop.f32.mrb[0].mxu0
        %v6108 = vadd.f32 %v5888, %v6107
        %v6109 = vpop.f32.mrb[0].mxu0
        %v6110 = vadd.f32 %v5884, %v6109
        %v6111 = vpop.f32.mrb[0].mxu0
        %v6112 = vadd.f32 %v5888, %v6111
        %6113 = vmatprep.mubr.bf16.mxu0 %v5790
        %6114 = vmatmul.mubr.bf16.gmra.mrb[0].mxu0 %v5789
        %v6115 = vpop.f32.mrb[0].mxu0
        %v6116 = vadd.f32 %v5884, %v6115
        %v6117 = vpop.f32.mrb[0].mxu0
        %v6118 = vadd.f32 %v5888, %v6117
        %v6119 = vpop.f32.mrb[0].mxu0
        %v6120 = vadd.f32 %v5884, %v6119
        %v6121 = vpop.f32.mrb[0].mxu0
        %v6122 = vadd.f32 %v5888, %v6121
        %6123 = vmatprep.mubr.bf16.mxu0 %v5792
        %6124 = vmatmul.mubr.bf16.gmra.mrb[0].mxu0 %v5791
        %v6125 = vpop.f32.mrb[0].mxu0
        %v6126 = vadd.f32 %v5884, %v6125
        %v6127 = vpop.f32.mrb[0].mxu0
        %v6128 = vadd.f32 %v5888, %v6127
        %v6129 = vpop.f32.mrb[0].mxu0
        %v6130 = vadd.f32 %v5884, %v6129
        %v6131 = vpop.f32.mrb[0].mxu0
        %v6132 = vadd.f32 %v5888, %v6131
        %6133 = vmatprep.mubr.bf16.mxu0 %v5794
        %6134 = vmatmul.mubr.bf16.gmra.mrb[0].mxu0 %v5793
        %v6135 = vpop.f32.mrb[0].mxu0
        %v6136 = vadd.f32 %v5884, %v6135
        %v6137 = vpop.f32.mrb[0].mxu0
        %v6138 = vadd.f32 %v5888, %v6137
        %v6139 = vpop.f32.mrb[0].mxu0
        %v6140 = vadd.f32 %v5884, %v6139
        %v6141 = vpop.f32.mrb[0].mxu0
        %v6142 = vadd.f32 %v5888, %v6141
        %6143 = vmatprep.mubr.bf16.mxu0 %v5796
        %6144 = vmatmul.mubr.bf16.gmra.mrb[0].mxu0 %v5795
        %v6145 = vpop.f32.mrb[0].mxu0
        %v6146 = vadd.f32 %v5884, %v6145
        %v6147 = vpop.f32.mrb[0].mxu0
        %v6148 = vadd.f32 %v5888, %v6147
        %v6149 = vpop.f32.mrb[0].mxu0
        %v6150 = vadd.f32 %v5884, %v6149
        %v6151 = vpop.f32.mrb[0].mxu0
        %v6152 = vadd.f32 %v5888, %v6151
        %6153 = vmatprep.mubr.bf16.mxu0 %v5798
        %6154 = vmatmul.mubr.bf16.gmra.mrb[0].mxu0 %v5797
        %v6155 = vpop.f32.mrb[0].mxu0
        %v6156 = vadd.f32 %v5884, %v6155
        %v6157 = vpop.f32.mrb[0].mxu0
        %v6158 = vadd.f32 %v5888, %v6157
        %v6159 = vpop.f32.mrb[0].mxu0
        %v6160 = vadd.f32 %v5884, %v6159
        %v6161 = vpop.f32.mrb[0].mxu0
        %v6162 = vadd.f32 %v5888, %v6161
        %6163 = vmatprep.mubr.bf16.mxu0 %v5800
        %6164 = vmatmul.mubr.bf16.gmra.mrb[0].mxu0 %v5799
        %v6165 = vpop.f32.mrb[0].mxu0
        %v6166 = vadd.f32 %v5884, %v6165
        %v6167 = vpop.f32.mrb[0].mxu0
        %v6168 = vadd.f32 %v5888, %v6167
        %v6169 = vpop.f32.mrb[0].mxu0
        %v6170 = vadd.f32 %v5884, %v6169
        %v6171 = vpop.f32.mrb[0].mxu0
        %v6172 = vadd.f32 %v5888, %v6171
        %6173 = vmatprep.mubr.bf16.mxu0 %v5802
        %6174 = vmatmul.mubr.bf16.gmra.mrb[0].mxu0 %v5801
        %v6175 = vpop.f32.mrb[0].mxu0
        %v6176 = vadd.f32 %v5884, %v6175
        %v6177 = vpop.f32.mrb[0].mxu0
        %v6178 = vadd.f32 %v5888, %v6177
        %v6179 = vpop.f32.mrb[0].mxu0
        %v6180 = vadd.f32 %v5884, %v6179
        %v6181 = vpop.f32.mrb[0].mxu0
        %v6182 = vadd.f32 %v5888, %v6181
        %6183 = vmatprep.mubr.bf16.mxu0 %v5804
        %6184 = vmatmul.mubr.bf16.gmra.mrb[0].mxu0 %v5803
        %v6185 = vpop.f32.mrb[0].mxu0
        %v6186 = vadd.f32 %v5884, %v6185
        %v6187 = vpop.f32.mrb[0].mxu0
        %v6188 = vadd.f32 %v5888, %v6187
        %v6189 = vpop.f32.mrb[0].mxu0
        %v6190 = vadd.f32 %v5884, %v6189
        %v6191 = vpop.f32.mrb[0].mxu0
        %v6192 = vadd.f32 %v5888, %v6191
        %6193 = vmatprep.mubr.bf16.mxu0 %v5806
        %6194 = vmatmul.mubr.bf16.gmra.mrb[0].mxu0 %v5805
        %v6195 = vpop.f32.mrb[0].mxu0
        %v6196 = vadd.f32 %v5884, %v6195
        %v6197 = vpop.f32.mrb[0].mxu0
        %v6198 = vadd.f32 %v5888, %v6197
        %v6199 = vpop.f32.mrb[0].mxu0
        %v6200 = vadd.f32 %v5884, %v6199
        %v6201 = vpop.f32.mrb[0].mxu0
        %v6202 = vadd.f32 %v5888, %v6201
        %6203 = vmatprep.mubr.bf16.mxu0 %v5808
        %6204 = vmatmul.mubr.bf16.gmra.mrb[0].mxu0 %v5807
        %v6205 = vpop.f32.mrb[0].mxu0
        %v6206 = vadd.f32 %v5884, %v6205
        %v6207 = vpop.f32.mrb[0].mxu0
        %v6208 = vadd.f32 %v5888, %v6207
        %v6209 = vpop.f32.mrb[0].mxu0
        %v6210 = vadd.f32 %v5884, %v6209
        %v6211 = vpop.f32.mrb[0].mxu0
        %v6212 = vadd.f32 %v5888, %v6211
        %6213 = vmatprep.mubr.bf16.mxu0 %v5810
        %6214 = vmatmul.mubr.bf16.gmra.mrb[0].mxu0 %v5809
        %v6215 = vpop.f32.mrb[0].mxu0
        %v6216 = vadd.f32 %v5884, %v6215
        %v6217 = vpop.f32.mrb[0].mxu0
        %v6218 = vadd.f32 %v5888, %v6217
        %v6219 = vpop.f32.mrb[0].mxu0
        %v6220 = vadd.f32 %v5884, %v6219
        %v6221 = vpop.f32.mrb[0].mxu0
        %v6222 = vadd.f32 %v5888, %v6221
        %6223 = vmatprep.mubr.bf16.mxu0 %v5812
        %6224 = vmatmul.mubr.bf16.gmra.mrb[0].mxu0 %v5811
        %v6225 = vpop.f32.mrb[0].mxu0
        %v6226 = vadd.f32 %v5884, %v6225
        %v6227 = vpop.f32.mrb[0].mxu0
        %v6228 = vadd.f32 %v5888, %v6227
        %v6229 = vpop.f32.mrb[0].mxu0
        %v6230 = vadd.f32 %v5884, %v6229
        %v6231 = vpop.f32.mrb[0].mxu0
        %v6232 = vadd.f32 %v5888, %v6231
        %6233 = vmatprep.mubr.bf16.mxu0 %v5814
        %6234 = vmatmul.mubr.bf16.gmra.mrb[0].mxu0 %v5813
        %v6235 = vpop.f32.mrb[0].mxu0
        %v6236 = vadd.f32 %v5884, %v6235
        %v6237 = vpop.f32.mrb[0].mxu0
        %v6238 = vadd.f32 %v5888, %v6237
        %v6239 = vpop.f32.mrb[0].mxu0
        %v6240 = vadd.f32 %v5884, %v6239
        %v6241 = vpop.f32.mrb[0].mxu0
        %v6242 = vadd.f32 %v5888, %v6241
        %6243 = vmatprep.mubr.bf16.mxu0 %v5816
        %6244 = vmatmul.mubr.bf16.gmra.mrb[0].mxu0 %v5815
        %v6245 = vpop.f32.mrb[0].mxu0
        %v6246 = vadd.f32 %v5884, %v6245
        %v6247 = vpop.f32.mrb[0].mxu0
        %v6248 = vadd.f32 %v5888, %v6247
        %v6249 = vpop.f32.mrb[0].mxu0
        %v6250 = vadd.f32 %v5884, %v6249
        %v6251 = vpop.f32.mrb[0].mxu0
        %v6252 = vadd.f32 %v5888, %v6251
        %6253 = vmatprep.mubr.bf16.mxu0 %v5818
        %6254 = vmatmul.mubr.bf16.gmra.mrb[0].mxu0 %v5817
        %v6255 = vpop.f32.mrb[0].mxu0
        %v6256 = vadd.f32 %v5884, %v6255
        %v6257 = vpop.f32.mrb[0].mxu0
        %v6258 = vadd.f32 %v5888, %v6257
        %v6259 = vpop.f32.mrb[0].mxu0
        %v6260 = vadd.f32 %v5884, %v6259
        %v6261 = vpop.f32.mrb[0].mxu0
        %v6262 = vadd.f32 %v5888, %v6261
        %6263 = vmatprep.mubr.bf16.mxu0 %v5820
        %6264 = vmatmul.mubr.bf16.gmra.mrb[0].mxu0 %v5819
        %v6265 = vpop.f32.mrb[0].mxu0
        %v6266 = vadd.f32 %v5884, %v6265
        %v6267 = vpop.f32.mrb[0].mxu0
        %v6268 = vadd.f32 %v5888, %v6267
        %v6269 = vpop.f32.mrb[0].mxu0
        %v6270 = vadd.f32 %v5884, %v6269
        %v6271 = vpop.f32.mrb[0].mxu0
        %v6272 = vadd.f32 %v5888, %v6271
        %6273 = vmatprep.mubr.bf16.mxu0 %v5822
        %6274 = vmatmul.mubr.bf16.gmra.mrb[0].mxu0 %v5821
        %v6275 = vpop.f32.mrb[0].mxu0
        %v6276 = vadd.f32 %v5884, %v6275
        %v6277 = vpop.f32.mrb[0].mxu0
        %v6278 = vadd.f32 %v5888, %v6277
        %v6279 = vpop.f32.mrb[0].mxu0
        %v6280 = vadd.f32 %v5884, %v6279
        %v6281 = vpop.f32.mrb[0].mxu0
        %v6282 = vadd.f32 %v5888, %v6281
        %6283 = vmatprep.mubr.bf16.mxu0 %v5824
        %6284 = vmatmul.mubr.bf16.gmra.mrb[0].mxu0 %v5823
        %v6285 = vpop.f32.mrb[0].mxu0
        %v6286 = vadd.f32 %v5884, %v6285
        %v6287 = vpop.f32.mrb[0].mxu0
        %v6288 = vadd.f32 %v5888, %v6287
        %v6289 = vpop.f32.mrb[0].mxu0
        %v6290 = vadd.f32 %v5884, %v6289
        %v6291 = vpop.f32.mrb[0].mxu0
        %v6292 = vadd.f32 %v5888, %v6291
        %6293 = vmatprep.mubr.bf16.mxu0 %v5826
        %6294 = vmatmul.mubr.bf16.gmra.mrb[0].mxu0 %v5825
        %v6295 = vpop.f32.mrb[0].mxu0
        %v6296 = vadd.f32 %v5884, %v6295
        %v6297 = vpop.f32.mrb[0].mxu0
        %v6298 = vadd.f32 %v5888, %v6297
        %v6299 = vpop.f32.mrb[0].mxu0
        %v6300 = vadd.f32 %v5884, %v6299
        %v6301 = vpop.f32.mrb[0].mxu0
        %v6302 = vadd.f32 %v5888, %v6301
        %6303 = vmatprep.mubr.bf16.mxu0 %v5828
        %6304 = vmatmul.mubr.bf16.gmra.mrb[0].mxu0 %v5827
        %v6305 = vpop.f32.mrb[0].mxu0
        %v6306 = vadd.f32 %v5884, %v6305
        %v6307 = vpop.f32.mrb[0].mxu0
        %v6308 = vadd.f32 %v5888, %v6307
        %v6309 = vpop.f32.mrb[0].mxu0
        %v6310 = vadd.f32 %v5884, %v6309
        %v6311 = vpop.f32.mrb[0].mxu0
        %v6312 = vadd.f32 %v5888, %v6311
        %6313 = vmatprep.mubr.bf16.mxu0 %v5830
        %6314 = vmatmul.mubr.bf16.gmra.mrb[0].mxu0 %v5829
        %v6315 = vpop.f32.mrb[0].mxu0
        %v6316 = vadd.f32 %v5884, %v6315
        %v6317 = vpop.f32.mrb[0].mxu0
        %v6318 = vadd.f32 %v5888, %v6317
        %v6319 = vpop.f32.mrb[0].mxu0
        %v6320 = vadd.f32 %v5884, %v6319
        %v6321 = vpop.f32.mrb[0].mxu0
        %v6322 = vadd.f32 %v5888, %v6321
        %6323 = vmatprep.mubr.bf16.mxu0 %v5832
        %6324 = vmatmul.mubr.bf16.gmra.mrb[0].mxu0 %v5831
        %v6325 = vpop.f32.mrb[0].mxu0
        %v6326 = vadd.f32 %v5884, %v6325
        %v6327 = vpop.f32.mrb[0].mxu0
        %v6328 = vadd.f32 %v5888, %v6327
        %v6329 = vpop.f32.mrb[0].mxu0
        %v6330 = vadd.f32 %v5884, %v6329
        %v6331 = vpop.f32.mrb[0].mxu0
        %v6332 = vadd.f32 %v5888, %v6331
        %6333 = vmatprep.mubr.bf16.mxu0 %v5834
        %6334 = vmatmul.mubr.bf16.gmra.mrb[0].mxu0 %v5833
        %v6335 = vpop.f32.mrb[0].mxu0
        %v6336 = vadd.f32 %v5884, %v6335
        %v6337 = vpop.f32.mrb[0].mxu0
        %v6338 = vadd.f32 %v5888, %v6337
        %v6339 = vpop.f32.mrb[0].mxu0
        %v6340 = vadd.f32 %v5884, %v6339
        %v6341 = vpop.f32.mrb[0].mxu0
        %v6342 = vadd.f32 %v5888, %v6341
        %6343 = vmatprep.mubr.bf16.mxu0 %v5836
        %6344 = vmatmul.mubr.bf16.gmra.mrb[0].mxu0 %v5835
        %v6345 = vpop.f32.mrb[0].mxu0
        %v6346 = vadd.f32 %v5884, %v6345
        %v6347 = vpop.f32.mrb[0].mxu0
        %v6348 = vadd.f32 %v5888, %v6347
        %v6349 = vpop.f32.mrb[0].mxu0
        %v6350 = vadd.f32 %v5884, %v6349
        %v6351 = vpop.f32.mrb[0].mxu0
        %v6352 = vadd.f32 %v5888, %v6351
        %6353 = vmatprep.mubr.bf16.mxu0 %v5838
        %6354 = vmatmul.mubr.bf16.gmra.mrb[0].mxu0 %v5837
        %v6355 = vpop.f32.mrb[0].mxu0
        %v6356 = vadd.f32 %v5884, %v6355
        %v6357 = vpop.f32.mrb[0].mxu0
        %v6358 = vadd.f32 %v5888, %v6357
        %v6359 = vpop.f32.mrb[0].mxu0
        %v6360 = vadd.f32 %v5884, %v6359
        %v6361 = vpop.f32.mrb[0].mxu0
        %v6362 = vadd.f32 %v5888, %v6361
        %6363 = vmatprep.mubr.bf16.mxu0 %v5840
        %6364 = vmatmul.mubr.bf16.gmra.mrb[0].mxu0 %v5839
        %v6365 = vpop.f32.mrb[0].mxu0
        %v6366 = vadd.f32 %v5884, %v6365
        %v6367 = vpop.f32.mrb[0].mxu0
        %v6368 = vadd.f32 %v5888, %v6367
        %v6369 = vpop.f32.mrb[0].mxu0
        %v6370 = vadd.f32 %v5884, %v6369
        %v6371 = vpop.f32.mrb[0].mxu0
        %v6372 = vadd.f32 %v5888, %v6371
        %6373 = vmatprep.mubr.bf16.mxu0 %v5842
        %6374 = vmatmul.mubr.bf16.gmra.mrb[0].mxu0 %v5841
        %v6375 = vpop.f32.mrb[0].mxu0
        %v6376 = vadd.f32 %v5884, %v6375
        %v6377 = vpop.f32.mrb[0].mxu0
        %v6378 = vadd.f32 %v5888, %v6377
        %v6379 = vpop.f32.mrb[0].mxu0
        %v6380 = vadd.f32 %v5884, %v6379
        %v6381 = vpop.f32.mrb[0].mxu0
        %v6382 = vadd.f32 %v5888, %v6381
        %6383 = vmatprep.mubr.bf16.mxu0 %v5844
        %6384 = vmatmul.mubr.bf16.gmra.mrb[0].mxu0 %v5843
        %v6385 = vpop.f32.mrb[0].mxu0
        %v6386 = vadd.f32 %v5884, %v6385
        %v6387 = vpop.f32.mrb[0].mxu0
        %v6388 = vadd.f32 %v5888, %v6387
        %v6389 = vpop.f32.mrb[0].mxu0
        %v6390 = vadd.f32 %v5884, %v6389
        %v6391 = vpop.f32.mrb[0].mxu0
        %v6392 = vadd.f32 %v5888, %v6391
        %6393 = vmatprep.mubr.bf16.mxu0 %v5846
        %6394 = vmatmul.mubr.bf16.gmra.mrb[0].mxu0 %v5845
        %v6395 = vpop.f32.mrb[0].mxu0
        %v6396 = vadd.f32 %v5884, %v6395
        %v6397 = vpop.f32.mrb[0].mxu0
        %v6398 = vadd.f32 %v5888, %v6397
        %v6399 = vpop.f32.mrb[0].mxu0
        %v6400 = vadd.f32 %v5884, %v6399
        %v6401 = vpop.f32.mrb[0].mxu0
        %v6402 = vadd.f32 %v5888, %v6401
        %6403 = vdwg.mxu0
        %v6404 = vmax.f32 %v6086, 0.0
        %v6405 = vmax.f32 %v6088, 0.0
        %v6406 = vmax.f32 %v6090, 0.0
        %v6407 = vmax.f32 %v6092, 0.0
        %v6408 = vmax.f32 %v6096, 0.0
        %v6409 = vmax.f32 %v6098, 0.0
        %v6410 = vmax.f32 %v6100, 0.0
        %v6411 = vmax.f32 %v6102, 0.0
        %v6412 = vmax.f32 %v6106, 0.0
        %v6413 = vmax.f32 %v6108, 0.0
        %v6414 = vmax.f32 %v6110, 0.0
        %v6415 = vmax.f32 %v6112, 0.0
        %v6416 = vmax.f32 %v6116, 0.0
        %v6417 = vmax.f32 %v6118, 0.0
        %v6418 = vmax.f32 %v6120, 0.0
        %v6419 = vmax.f32 %v6122, 0.0
        %v6420 = vmax.f32 %v6126, 0.0
        %v6421 = vmax.f32 %v6128, 0.0
        %v6422 = vmax.f32 %v6130, 0.0
        %v6423 = vmax.f32 %v6132, 0.0
        %v6424 = vmax.f32 %v6136, 0.0
        %v6425 = vmax.f32 %v6138, 0.0
        %v6426 = vmax.f32 %v6140, 0.0
        %v6427 = vmax.f32 %v6142, 0.0
        %v6428 = vmax.f32 %v6146, 0.0
        %v6429 = vmax.f32 %v6148, 0.0
        %v6430 = vmax.f32 %v6150, 0.0
        %v6431 = vmax.f32 %v6152, 0.0
        %v6432 = vmax.f32 %v6156, 0.0
        %v6433 = vmax.f32 %v6158, 0.0
        %v6434 = vmax.f32 %v6160, 0.0
        %v6435 = vmax.f32 %v6162, 0.0
        %v6436 = vmax.f32 %v6166, 0.0
        %v6437 = vmax.f32 %v6168, 0.0
        %v6438 = vmax.f32 %v6170, 0.0
        %v6439 = vmax.f32 %v6172, 0.0
        %v6440 = vmax.f32 %v6176, 0.0
        %v6441 = vmax.f32 %v6178, 0.0
        %v6442 = vmax.f32 %v6180, 0.0
        %v6443 = vmax.f32 %v6182, 0.0
        %v6444 = vmax.f32 %v6186, 0.0
        %v6445 = vmax.f32 %v6188, 0.0
        %v6446 = vmax.f32 %v6190, 0.0
        %v6447 = vmax.f32 %v6192, 0.0
        %v6448 = vmax.f32 %v6196, 0.0
        %v6449 = vmax.f32 %v6198, 0.0
        %v6450 = vmax.f32 %v6200, 0.0
        %v6451 = vmax.f32 %v6202, 0.0
        %v6452 = vmax.f32 %v6206, 0.0
        %v6453 = vmax.f32 %v6208, 0.0
        %v6454 = vmax.f32 %v6210, 0.0
        %v6455 = vmax.f32 %v6212, 0.0
        %v6456 = vmax.f32 %v6216, 0.0
        %v6457 = vmax.f32 %v6218, 0.0
        %v6458 = vmax.f32 %v6220, 0.0
        %v6459 = vmax.f32 %v6222, 0.0
        %v6460 = vmax.f32 %v6226, 0.0
        %v6461 = vmax.f32 %v6228, 0.0
        %v6462 = vmax.f32 %v6230, 0.0
        %v6463 = vmax.f32 %v6232, 0.0
        %v6464 = vmax.f32 %v6236, 0.0
        %v6465 = vmax.f32 %v6238, 0.0
        %v6466 = vmax.f32 %v6240, 0.0
        %v6467 = vmax.f32 %v6242, 0.0
        %v6468 = vmax.f32 %v6246, 0.0
        %v6469 = vmax.f32 %v6248, 0.0
        %v6470 = vmax.f32 %v6250, 0.0
        %v6471 = vmax.f32 %v6252, 0.0
        %v6472 = vmax.f32 %v6256, 0.0
        %v6473 = vmax.f32 %v6258, 0.0
        %v6474 = vmax.f32 %v6260, 0.0
        %v6475 = vmax.f32 %v6262, 0.0
        %v6476 = vmax.f32 %v6266, 0.0
        %v6477 = vmax.f32 %v6268, 0.0
        %v6478 = vmax.f32 %v6270, 0.0
        %v6479 = vmax.f32 %v6272, 0.0
        %v6480 = vmax.f32 %v6276, 0.0
        %v6481 = vmax.f32 %v6278, 0.0
        %v6482 = vmax.f32 %v6280, 0.0
        %v6483 = vmax.f32 %v6282, 0.0
        %v6484 = vmax.f32 %v6286, 0.0
        %v6485 = vmax.f32 %v6288, 0.0
        %v6486 = vmax.f32 %v6290, 0.0
        %v6487 = vmax.f32 %v6292, 0.0
        %v6488 = vmax.f32 %v6296, 0.0
        %v6489 = vmax.f32 %v6298, 0.0
        %v6490 = vmax.f32 %v6300, 0.0
        %v6491 = vmax.f32 %v6302, 0.0
        %v6492 = vmax.f32 %v6306, 0.0
        %v6493 = vmax.f32 %v6308, 0.0
        %v6494 = vmax.f32 %v6310, 0.0
        %v6495 = vmax.f32 %v6312, 0.0
        %v6496 = vmax.f32 %v6316, 0.0
        %v6497 = vmax.f32 %v6318, 0.0
        %v6498 = vmax.f32 %v6320, 0.0
        %v6499 = vmax.f32 %v6322, 0.0
        %v6500 = vmax.f32 %v6326, 0.0
        %v6501 = vmax.f32 %v6328, 0.0
        %v6502 = vmax.f32 %v6330, 0.0
        %v6503 = vmax.f32 %v6332, 0.0
        %v6504 = vmax.f32 %v6336, 0.0
        %v6505 = vmax.f32 %v6338, 0.0
        %v6506 = vmax.f32 %v6340, 0.0
        %v6507 = vmax.f32 %v6342, 0.0
        %v6508 = vmax.f32 %v6346, 0.0
        %v6509 = vmax.f32 %v6348, 0.0
        %v6510 = vmax.f32 %v6350, 0.0
        %v6511 = vmax.f32 %v6352, 0.0
        %v6512 = vmax.f32 %v6356, 0.0
        %v6513 = vmax.f32 %v6358, 0.0
        %v6514 = vmax.f32 %v6360, 0.0
        %v6515 = vmax.f32 %v6362, 0.0
        %v6516 = vmax.f32 %v6366, 0.0
        %v6517 = vmax.f32 %v6368, 0.0
        %v6518 = vmax.f32 %v6370, 0.0
        %v6519 = vmax.f32 %v6372, 0.0
        %v6520 = vmax.f32 %v6376, 0.0
        %v6521 = vmax.f32 %v6378, 0.0
        %v6522 = vmax.f32 %v6380, 0.0
        %v6523 = vmax.f32 %v6382, 0.0
        %v6524 = vmax.f32 %v6386, 0.0
        %v6525 = vmax.f32 %v6388, 0.0
        %v6526 = vmax.f32 %v6390, 0.0
        %v6527 = vmax.f32 %v6392, 0.0
        %v6528 = vmax.f32 %v6396, 0.0
        %v6529 = vmax.f32 %v6398, 0.0
        %v6530 = vmax.f32 %v6400, 0.0
        %v6531 = vmax.f32 %v6402, 0.0
        %v6532 = vpack.c.bf16 %v6406, %v6404
        %v6533 = vpack.c.bf16 %v6407, %v6405
        %v6534 = vpack.c.bf16 %v6410, %v6408
        %v6535 = vpack.c.bf16 %v6411, %v6409
        %v6536 = vpack.c.bf16 %v6414, %v6412
        %v6537 = vpack.c.bf16 %v6415, %v6413
        %v6538 = vpack.c.bf16 %v6418, %v6416
        %v6539 = vpack.c.bf16 %v6419, %v6417
        %v6540 = vpack.c.bf16 %v6422, %v6420
        %v6541 = vpack.c.bf16 %v6423, %v6421
        %v6542 = vpack.c.bf16 %v6426, %v6424
        %v6543 = vpack.c.bf16 %v6427, %v6425
        %v6544 = vpack.c.bf16 %v6430, %v6428
        %v6545 = vpack.c.bf16 %v6431, %v6429
        %v6546 = vpack.c.bf16 %v6434, %v6432
        %v6547 = vpack.c.bf16 %v6435, %v6433
        %v6548 = vpack.c.bf16 %v6438, %v6436
        %v6549 = vpack.c.bf16 %v6439, %v6437
        %v6550 = vpack.c.bf16 %v6442, %v6440
        %v6551 = vpack.c.bf16 %v6443, %v6441
        %v6552 = vpack.c.bf16 %v6446, %v6444
        %v6553 = vpack.c.bf16 %v6447, %v6445
        %v6554 = vpack.c.bf16 %v6450, %v6448
        %v6555 = vpack.c.bf16 %v6451, %v6449
        %v6556 = vpack.c.bf16 %v6454, %v6452
        %v6557 = vpack.c.bf16 %v6455, %v6453
        %v6558 = vpack.c.bf16 %v6458, %v6456
        %v6559 = vpack.c.bf16 %v6459, %v6457
        %v6560 = vpack.c.bf16 %v6462, %v6460
        %v6561 = vpack.c.bf16 %v6463, %v6461
        %v6562 = vpack.c.bf16 %v6466, %v6464
        %v6563 = vpack.c.bf16 %v6467, %v6465
        %v6564 = vpack.c.bf16 %v6470, %v6468
        %v6565 = vpack.c.bf16 %v6471, %v6469
        %v6566 = vpack.c.bf16 %v6474, %v6472
        %v6567 = vpack.c.bf16 %v6475, %v6473
        %v6568 = vpack.c.bf16 %v6478, %v6476
        %v6569 = vpack.c.bf16 %v6479, %v6477
        %v6570 = vpack.c.bf16 %v6482, %v6480
        %v6571 = vpack.c.bf16 %v6483, %v6481
        %v6572 = vpack.c.bf16 %v6486, %v6484
        %v6573 = vpack.c.bf16 %v6487, %v6485
        %v6574 = vpack.c.bf16 %v6490, %v6488
        %v6575 = vpack.c.bf16 %v6491, %v6489
        %v6576 = vpack.c.bf16 %v6494, %v6492
        %v6577 = vpack.c.bf16 %v6495, %v6493
        %v6578 = vpack.c.bf16 %v6498, %v6496
        %v6579 = vpack.c.bf16 %v6499, %v6497
        %v6580 = vpack.c.bf16 %v6502, %v6500
        %v6581 = vpack.c.bf16 %v6503, %v6501
        %v6582 = vpack.c.bf16 %v6506, %v6504
        %v6583 = vpack.c.bf16 %v6507, %v6505
        %v6584 = vpack.c.bf16 %v6510, %v6508
        %v6585 = vpack.c.bf16 %v6511, %v6509
        %v6586 = vpack.c.bf16 %v6514, %v6512
        %v6587 = vpack.c.bf16 %v6515, %v6513
        %v6588 = vpack.c.bf16 %v6518, %v6516
        %v6589 = vpack.c.bf16 %v6519, %v6517
        %v6590 = vpack.c.bf16 %v6522, %v6520
        %v6591 = vpack.c.bf16 %v6523, %v6521
        %v6592 = vpack.c.bf16 %v6526, %v6524
        %v6593 = vpack.c.bf16 %v6527, %v6525
        %v6594 = vpack.c.bf16 %v6530, %v6528
        %v6595 = vpack.c.bf16 %v6531, %v6529
        %v6596 = vld [vmem:[#allocation7] sm:$0xff]
        %v6597 = vld [vmem:[#allocation7 + $0x8] sm:$0xff]
        %v6598 = vld [vmem:[#allocation7 + $0x10] sm:$0xff]
        %v6599 = vld [vmem:[#allocation7 + $0x18] sm:$0xff]
        %v6600 = vld [vmem:[#allocation7 + $0x20] sm:$0xff]
        %v6601 = vld [vmem:[#allocation7 + $0x28] sm:$0xff]
        %v6602 = vld [vmem:[#allocation7 + $0x30] sm:$0xff]
        %v6603 = vld [vmem:[#allocation7 + $0x38] sm:$0xff]
        %v6604 = vld [vmem:[#allocation7 + $0x40] sm:$0xff]
        %v6605 = vld [vmem:[#allocation7 + $0x48] sm:$0xff]
        %v6606 = vld [vmem:[#allocation7 + $0x50] sm:$0xff]
        %v6607 = vld [vmem:[#allocation7 + $0x58] sm:$0xff]
        %v6608 = vld [vmem:[#allocation7 + $0x60] sm:$0xff]
        %v6609 = vld [vmem:[#allocation7 + $0x68] sm:$0xff]
        %v6610 = vld [vmem:[#allocation7 + $0x70] sm:$0xff]
        %v6611 = vld [vmem:[#allocation7 + $0x78] sm:$0xff]
        %v6612 = vld [vmem:[#allocation7 + $0x80] sm:$0xff]
        %v6613 = vld [vmem:[#allocation7 + $0x88] sm:$0xff]
        %v6614 = vld [vmem:[#allocation7 + $0x90] sm:$0xff]
        %v6615 = vld [vmem:[#allocation7 + $0x98] sm:$0xff]
        %v6616 = vld [vmem:[#allocation7 + $0xa0] sm:$0xff]
        %v6617 = vld [vmem:[#allocation7 + $0xa8] sm:$0xff]
        %v6618 = vld [vmem:[#allocation7 + $0xb0] sm:$0xff]
        %v6619 = vld [vmem:[#allocation7 + $0xb8] sm:$0xff]
        %v6620 = vld [vmem:[#allocation7 + $0xc0] sm:$0xff]
        %v6621 = vld [vmem:[#allocation7 + $0xc8] sm:$0xff]
        %v6622 = vld [vmem:[#allocation7 + $0xd0] sm:$0xff]
        %v6623 = vld [vmem:[#allocation7 + $0xd8] sm:$0xff]
        %v6624 = vld [vmem:[#allocation7 + $0xe0] sm:$0xff]
        %v6625 = vld [vmem:[#allocation7 + $0xe8] sm:$0xff]
        %v6626 = vld [vmem:[#allocation7 + $0xf0] sm:$0xff]
        %v6627 = vld [vmem:[#allocation7 + $0xf8] sm:$0xff]
        %v6628 = vld [vmem:[%s10] sm:$0x3]
        %v6630 = vlaneseq
        %v6631 = vshrl.u32 %v6630, 7
        %v6632 = vsub.s32 0, %v6631
        %v6633 = vrot.slane %v6628, %v6632
        %v6634 = vlaneseq
        %v6635 = vshrl.u32 %v6634, 7
        %v6636 = vsub.s32 1, %v6635
        %v6637 = vrot.slane %v6628, %v6636
        %v6672 = vunpack.c.l.b16 %v6596
        %v6673 = vunpack.c.h.b16 %v6596
        %v6674 = vunpack.c.l.b16 %v6597
        %v6675 = vunpack.c.h.b16 %v6597
        %v6676 = vunpack.c.l.b16 %v6598
        %v6677 = vunpack.c.h.b16 %v6598
        %v6678 = vunpack.c.l.b16 %v6599
        %v6679 = vunpack.c.h.b16 %v6599
        %v6680 = vunpack.c.l.b16 %v6600
        %v6681 = vunpack.c.h.b16 %v6600
        %v6682 = vunpack.c.l.b16 %v6601
        %v6683 = vunpack.c.h.b16 %v6601
        %v6684 = vunpack.c.l.b16 %v6602
        %v6685 = vunpack.c.h.b16 %v6602
        %v6686 = vunpack.c.l.b16 %v6603
        %v6687 = vunpack.c.h.b16 %v6603
        %v6688 = vunpack.c.l.b16 %v6604
        %v6689 = vunpack.c.h.b16 %v6604
        %v6690 = vunpack.c.l.b16 %v6605
        %v6691 = vunpack.c.h.b16 %v6605
        %v6692 = vunpack.c.l.b16 %v6606
        %v6693 = vunpack.c.h.b16 %v6606
        %v6694 = vunpack.c.l.b16 %v6607
        %v6695 = vunpack.c.h.b16 %v6607
        %v6696 = vunpack.c.l.b16 %v6608
        %v6697 = vunpack.c.h.b16 %v6608
        %v6698 = vunpack.c.l.b16 %v6609
        %v6699 = vunpack.c.h.b16 %v6609
        %v6700 = vunpack.c.l.b16 %v6610
        %v6701 = vunpack.c.h.b16 %v6610
        %v6702 = vunpack.c.l.b16 %v6611
        %v6703 = vunpack.c.h.b16 %v6611
        %v6704 = vunpack.c.l.b16 %v6612
        %v6705 = vunpack.c.h.b16 %v6612
        %v6706 = vunpack.c.l.b16 %v6613
        %v6707 = vunpack.c.h.b16 %v6613
        %v6708 = vunpack.c.l.b16 %v6614
        %v6709 = vunpack.c.h.b16 %v6614
        %v6710 = vunpack.c.l.b16 %v6615
        %v6711 = vunpack.c.h.b16 %v6615
        %v6712 = vunpack.c.l.b16 %v6616
        %v6713 = vunpack.c.h.b16 %v6616
        %v6714 = vunpack.c.l.b16 %v6617
        %v6715 = vunpack.c.h.b16 %v6617
        %v6716 = vunpack.c.l.b16 %v6618
        %v6717 = vunpack.c.h.b16 %v6618
        %v6718 = vunpack.c.l.b16 %v6619
        %v6719 = vunpack.c.h.b16 %v6619
        %v6720 = vunpack.c.l.b16 %v6620
        %v6721 = vunpack.c.h.b16 %v6620
        %v6722 = vunpack.c.l.b16 %v6621
        %v6723 = vunpack.c.h.b16 %v6621
        %v6724 = vunpack.c.l.b16 %v6622
        %v6725 = vunpack.c.h.b16 %v6622
        %v6726 = vunpack.c.l.b16 %v6623
        %v6727 = vunpack.c.h.b16 %v6623
        %v6728 = vunpack.c.l.b16 %v6624
        %v6729 = vunpack.c.h.b16 %v6624
        %v6730 = vunpack.c.l.b16 %v6625
        %v6731 = vunpack.c.h.b16 %v6625
        %v6732 = vunpack.c.l.b16 %v6626
        %v6733 = vunpack.c.h.b16 %v6626
        %v6734 = vunpack.c.l.b16 %v6627
        %v6735 = vunpack.c.h.b16 %v6627
        %v6736 = vpack.c.b16 %v6674, %v6672
        %v6737 = vpack.c.b16 %v6675, %v6673
        %v6738 = vpack.c.b16 %v6678, %v6676
        %v6739 = vpack.c.b16 %v6679, %v6677
        %v6740 = vpack.c.b16 %v6682, %v6680
        %v6741 = vpack.c.b16 %v6683, %v6681
        %v6742 = vpack.c.b16 %v6686, %v6684
        %v6743 = vpack.c.b16 %v6687, %v6685
        %v6744 = vpack.c.b16 %v6690, %v6688
        %v6745 = vpack.c.b16 %v6691, %v6689
        %v6746 = vpack.c.b16 %v6694, %v6692
        %v6747 = vpack.c.b16 %v6695, %v6693
        %v6748 = vpack.c.b16 %v6698, %v6696
        %v6749 = vpack.c.b16 %v6699, %v6697
        %v6750 = vpack.c.b16 %v6702, %v6700
        %v6751 = vpack.c.b16 %v6703, %v6701
        %v6752 = vpack.c.b16 %v6706, %v6704
        %v6753 = vpack.c.b16 %v6707, %v6705
        %v6754 = vpack.c.b16 %v6710, %v6708
        %v6755 = vpack.c.b16 %v6711, %v6709
        %v6756 = vpack.c.b16 %v6714, %v6712
        %v6757 = vpack.c.b16 %v6715, %v6713
        %v6758 = vpack.c.b16 %v6718, %v6716
        %v6759 = vpack.c.b16 %v6719, %v6717
        %v6760 = vpack.c.b16 %v6722, %v6720
        %v6761 = vpack.c.b16 %v6723, %v6721
        %v6762 = vpack.c.b16 %v6726, %v6724
        %v6763 = vpack.c.b16 %v6727, %v6725
        %v6764 = vpack.c.b16 %v6730, %v6728
        %v6765 = vpack.c.b16 %v6731, %v6729
        %v6766 = vpack.c.b16 %v6734, %v6732
        %v6767 = vpack.c.b16 %v6735, %v6733
        %6800 = vmatprep.subr.bf16.mxu0 %v6737
        %6801 = vmatpush1.bf16.msra.mxu0 %v6736
        %6802 = vmatprep.subr.bf16.mxu0 %v6739
        %6803 = vmatpush1.bf16.msra.mxu0 %v6738
        %6804 = vmatprep.subr.bf16.mxu0 %v6741
        %6805 = vmatpush1.bf16.msra.mxu0 %v6740
        %6806 = vmatprep.subr.bf16.mxu0 %v6743
        %6807 = vmatpush1.bf16.msra.mxu0 %v6742
        %6808 = vmatprep.subr.bf16.mxu0 %v6745
        %6809 = vmatpush1.bf16.msra.mxu0 %v6744
        %6810 = vmatprep.subr.bf16.mxu0 %v6747
        %6811 = vmatpush1.bf16.msra.mxu0 %v6746
        %6812 = vmatprep.subr.bf16.mxu0 %v6749
        %6813 = vmatpush1.bf16.msra.mxu0 %v6748
        %6814 = vmatprep.subr.bf16.mxu0 %v6751
        %6815 = vmatpush1.bf16.msra.mxu0 %v6750
        %6816 = vmatprep.subr.bf16.mxu0 %v6753
        %6817 = vmatpush1.bf16.msra.mxu0 %v6752
        %6818 = vmatprep.subr.bf16.mxu0 %v6755
        %6819 = vmatpush1.bf16.msra.mxu0 %v6754
        %6820 = vmatprep.subr.bf16.mxu0 %v6757
        %6821 = vmatpush1.bf16.msra.mxu0 %v6756
        %6822 = vmatprep.subr.bf16.mxu0 %v6759
        %6823 = vmatpush1.bf16.msra.mxu0 %v6758
        %6824 = vmatprep.subr.bf16.mxu0 %v6761
        %6825 = vmatpush1.bf16.msra.mxu0 %v6760
        %6826 = vmatprep.subr.bf16.mxu0 %v6763
        %6827 = vmatpush1.bf16.msra.mxu0 %v6762
        %6828 = vmatprep.subr.bf16.mxu0 %v6765
        %6829 = vmatpush1.bf16.msra.mxu0 %v6764
        %6830 = vmatprep.subr.bf16.mxu0 %v6767
        %6831 = vmatpush1.bf16.msra.mxu0 %v6766
        %6832 = vmatprep.mubr.bf16.mxu0 %v6533
        %6833 = vmatmul.mubr.bf16.gmra.mrb[0].mxu0 %v6532
        %v6834 = vpop.f32.mrb[0].mxu0
        %v6835 = vadd.f32 %v6633, %v6834
        %v6836 = vpop.f32.mrb[0].mxu0
        %v6837 = vadd.f32 %v6637, %v6836
        %v6838 = vpop.f32.mrb[0].mxu0
        %v6839 = vadd.f32 %v6633, %v6838
        %v6840 = vpop.f32.mrb[0].mxu0
        %v6841 = vadd.f32 %v6637, %v6840
        %6842 = vmatprep.mubr.bf16.mxu0 %v6535
        %6843 = vmatmul.mubr.bf16.gmra.mrb[0].mxu0 %v6534
        %v6844 = vpop.f32.mrb[0].mxu0
        %v6845 = vadd.f32 %v6633, %v6844
        %v6846 = vpop.f32.mrb[0].mxu0
        %v6847 = vadd.f32 %v6637, %v6846
        %v6848 = vpop.f32.mrb[0].mxu0
        %v6849 = vadd.f32 %v6633, %v6848
        %v6850 = vpop.f32.mrb[0].mxu0
        %v6851 = vadd.f32 %v6637, %v6850
        %6852 = vmatprep.mubr.bf16.mxu0 %v6537
        %6853 = vmatmul.mubr.bf16.gmra.mrb[0].mxu0 %v6536
        %v6854 = vpop.f32.mrb[0].mxu0
        %v6855 = vadd.f32 %v6633, %v6854
        %v6856 = vpop.f32.mrb[0].mxu0
        %v6857 = vadd.f32 %v6637, %v6856
        %v6858 = vpop.f32.mrb[0].mxu0
        %v6859 = vadd.f32 %v6633, %v6858
        %v6860 = vpop.f32.mrb[0].mxu0
        %v6861 = vadd.f32 %v6637, %v6860
        %6862 = vmatprep.mubr.bf16.mxu0 %v6539
        %6863 = vmatmul.mubr.bf16.gmra.mrb[0].mxu0 %v6538
        %v6864 = vpop.f32.mrb[0].mxu0
        %v6865 = vadd.f32 %v6633, %v6864
        %v6866 = vpop.f32.mrb[0].mxu0
        %v6867 = vadd.f32 %v6637, %v6866
        %v6868 = vpop.f32.mrb[0].mxu0
        %v6869 = vadd.f32 %v6633, %v6868
        %v6870 = vpop.f32.mrb[0].mxu0
        %v6871 = vadd.f32 %v6637, %v6870
        %6872 = vmatprep.mubr.bf16.mxu0 %v6541
        %6873 = vmatmul.mubr.bf16.gmra.mrb[0].mxu0 %v6540
        %v6874 = vpop.f32.mrb[0].mxu0
        %v6875 = vadd.f32 %v6633, %v6874
        %v6876 = vpop.f32.mrb[0].mxu0
        %v6877 = vadd.f32 %v6637, %v6876
        %v6878 = vpop.f32.mrb[0].mxu0
        %v6879 = vadd.f32 %v6633, %v6878
        %v6880 = vpop.f32.mrb[0].mxu0
        %v6881 = vadd.f32 %v6637, %v6880
        %6882 = vmatprep.mubr.bf16.mxu0 %v6543
        %6883 = vmatmul.mubr.bf16.gmra.mrb[0].mxu0 %v6542
        %v6884 = vpop.f32.mrb[0].mxu0
        %v6885 = vadd.f32 %v6633, %v6884
        %v6886 = vpop.f32.mrb[0].mxu0
        %v6887 = vadd.f32 %v6637, %v6886
        %v6888 = vpop.f32.mrb[0].mxu0
        %v6889 = vadd.f32 %v6633, %v6888
        %v6890 = vpop.f32.mrb[0].mxu0
        %v6891 = vadd.f32 %v6637, %v6890
        %6892 = vmatprep.mubr.bf16.mxu0 %v6545
        %6893 = vmatmul.mubr.bf16.gmra.mrb[0].mxu0 %v6544
        %v6894 = vpop.f32.mrb[0].mxu0
        %v6895 = vadd.f32 %v6633, %v6894
        %v6896 = vpop.f32.mrb[0].mxu0
        %v6897 = vadd.f32 %v6637, %v6896
        %v6898 = vpop.f32.mrb[0].mxu0
        %v6899 = vadd.f32 %v6633, %v6898
        %v6900 = vpop.f32.mrb[0].mxu0
        %v6901 = vadd.f32 %v6637, %v6900
        %6902 = vmatprep.mubr.bf16.mxu0 %v6547
        %6903 = vmatmul.mubr.bf16.gmra.mrb[0].mxu0 %v6546
        %v6904 = vpop.f32.mrb[0].mxu0
        %v6905 = vadd.f32 %v6633, %v6904
        %v6906 = vpop.f32.mrb[0].mxu0
        %v6907 = vadd.f32 %v6637, %v6906
        %v6908 = vpop.f32.mrb[0].mxu0
        %v6909 = vadd.f32 %v6633, %v6908
        %v6910 = vpop.f32.mrb[0].mxu0
        %v6911 = vadd.f32 %v6637, %v6910
        %6912 = vmatprep.mubr.bf16.mxu0 %v6549
        %6913 = vmatmul.mubr.bf16.gmra.mrb[0].mxu0 %v6548
        %v6914 = vpop.f32.mrb[0].mxu0
        %v6915 = vadd.f32 %v6633, %v6914
        %v6916 = vpop.f32.mrb[0].mxu0
        %v6917 = vadd.f32 %v6637, %v6916
        %v6918 = vpop.f32.mrb[0].mxu0
        %v6919 = vadd.f32 %v6633, %v6918
        %v6920 = vpop.f32.mrb[0].mxu0
        %v6921 = vadd.f32 %v6637, %v6920
        %6922 = vmatprep.mubr.bf16.mxu0 %v6551
        %6923 = vmatmul.mubr.bf16.gmra.mrb[0].mxu0 %v6550
        %v6924 = vpop.f32.mrb[0].mxu0
        %v6925 = vadd.f32 %v6633, %v6924
        %v6926 = vpop.f32.mrb[0].mxu0
        %v6927 = vadd.f32 %v6637, %v6926
        %v6928 = vpop.f32.mrb[0].mxu0
        %v6929 = vadd.f32 %v6633, %v6928
        %v6930 = vpop.f32.mrb[0].mxu0
        %v6931 = vadd.f32 %v6637, %v6930
        %6932 = vmatprep.mubr.bf16.mxu0 %v6553
        %6933 = vmatmul.mubr.bf16.gmra.mrb[0].mxu0 %v6552
        %v6934 = vpop.f32.mrb[0].mxu0
        %v6935 = vadd.f32 %v6633, %v6934
        %v6936 = vpop.f32.mrb[0].mxu0
        %v6937 = vadd.f32 %v6637, %v6936
        %v6938 = vpop.f32.mrb[0].mxu0
        %v6939 = vadd.f32 %v6633, %v6938
        %v6940 = vpop.f32.mrb[0].mxu0
        %v6941 = vadd.f32 %v6637, %v6940
        %6942 = vmatprep.mubr.bf16.mxu0 %v6555
        %6943 = vmatmul.mubr.bf16.gmra.mrb[0].mxu0 %v6554
        %v6944 = vpop.f32.mrb[0].mxu0
        %v6945 = vadd.f32 %v6633, %v6944
        %v6946 = vpop.f32.mrb[0].mxu0
        %v6947 = vadd.f32 %v6637, %v6946
        %v6948 = vpop.f32.mrb[0].mxu0
        %v6949 = vadd.f32 %v6633, %v6948
        %v6950 = vpop.f32.mrb[0].mxu0
        %v6951 = vadd.f32 %v6637, %v6950
        %6952 = vmatprep.mubr.bf16.mxu0 %v6557
        %6953 = vmatmul.mubr.bf16.gmra.mrb[0].mxu0 %v6556
        %v6954 = vpop.f32.mrb[0].mxu0
        %v6955 = vadd.f32 %v6633, %v6954
        %v6956 = vpop.f32.mrb[0].mxu0
        %v6957 = vadd.f32 %v6637, %v6956
        %v6958 = vpop.f32.mrb[0].mxu0
        %v6959 = vadd.f32 %v6633, %v6958
        %v6960 = vpop.f32.mrb[0].mxu0
        %v6961 = vadd.f32 %v6637, %v6960
        %6962 = vmatprep.mubr.bf16.mxu0 %v6559
        %6963 = vmatmul.mubr.bf16.gmra.mrb[0].mxu0 %v6558
        %v6964 = vpop.f32.mrb[0].mxu0
        %v6965 = vadd.f32 %v6633, %v6964
        %v6966 = vpop.f32.mrb[0].mxu0
        %v6967 = vadd.f32 %v6637, %v6966
        %v6968 = vpop.f32.mrb[0].mxu0
        %v6969 = vadd.f32 %v6633, %v6968
        %v6970 = vpop.f32.mrb[0].mxu0
        %v6971 = vadd.f32 %v6637, %v6970
        %6972 = vmatprep.mubr.bf16.mxu0 %v6561
        %6973 = vmatmul.mubr.bf16.gmra.mrb[0].mxu0 %v6560
        %v6974 = vpop.f32.mrb[0].mxu0
        %v6975 = vadd.f32 %v6633, %v6974
        %v6976 = vpop.f32.mrb[0].mxu0
        %v6977 = vadd.f32 %v6637, %v6976
        %v6978 = vpop.f32.mrb[0].mxu0
        %v6979 = vadd.f32 %v6633, %v6978
        %v6980 = vpop.f32.mrb[0].mxu0
        %v6981 = vadd.f32 %v6637, %v6980
        %6982 = vmatprep.mubr.bf16.mxu0 %v6563
        %6983 = vmatmul.mubr.bf16.gmra.mrb[0].mxu0 %v6562
        %v6984 = vpop.f32.mrb[0].mxu0
        %v6985 = vadd.f32 %v6633, %v6984
        %v6986 = vpop.f32.mrb[0].mxu0
        %v6987 = vadd.f32 %v6637, %v6986
        %v6988 = vpop.f32.mrb[0].mxu0
        %v6989 = vadd.f32 %v6633, %v6988
        %v6990 = vpop.f32.mrb[0].mxu0
        %v6991 = vadd.f32 %v6637, %v6990
        %6992 = vmatprep.mubr.bf16.mxu0 %v6565
        %6993 = vmatmul.mubr.bf16.gmra.mrb[0].mxu0 %v6564
        %v6994 = vpop.f32.mrb[0].mxu0
        %v6995 = vadd.f32 %v6633, %v6994
        %v6996 = vpop.f32.mrb[0].mxu0
        %v6997 = vadd.f32 %v6637, %v6996
        %v6998 = vpop.f32.mrb[0].mxu0
        %v6999 = vadd.f32 %v6633, %v6998
        %v7000 = vpop.f32.mrb[0].mxu0
        %v7001 = vadd.f32 %v6637, %v7000
        %7002 = vmatprep.mubr.bf16.mxu0 %v6567
        %7003 = vmatmul.mubr.bf16.gmra.mrb[0].mxu0 %v6566
        %v7004 = vpop.f32.mrb[0].mxu0
        %v7005 = vadd.f32 %v6633, %v7004
        %v7006 = vpop.f32.mrb[0].mxu0
        %v7007 = vadd.f32 %v6637, %v7006
        %v7008 = vpop.f32.mrb[0].mxu0
        %v7009 = vadd.f32 %v6633, %v7008
        %v7010 = vpop.f32.mrb[0].mxu0
        %v7011 = vadd.f32 %v6637, %v7010
        %7012 = vmatprep.mubr.bf16.mxu0 %v6569
        %7013 = vmatmul.mubr.bf16.gmra.mrb[0].mxu0 %v6568
        %v7014 = vpop.f32.mrb[0].mxu0
        %v7015 = vadd.f32 %v6633, %v7014
        %v7016 = vpop.f32.mrb[0].mxu0
        %v7017 = vadd.f32 %v6637, %v7016
        %v7018 = vpop.f32.mrb[0].mxu0
        %v7019 = vadd.f32 %v6633, %v7018
        %v7020 = vpop.f32.mrb[0].mxu0
        %v7021 = vadd.f32 %v6637, %v7020
        %7022 = vmatprep.mubr.bf16.mxu0 %v6571
        %7023 = vmatmul.mubr.bf16.gmra.mrb[0].mxu0 %v6570
        %v7024 = vpop.f32.mrb[0].mxu0
        %v7025 = vadd.f32 %v6633, %v7024
        %v7026 = vpop.f32.mrb[0].mxu0
        %v7027 = vadd.f32 %v6637, %v7026
        %v7028 = vpop.f32.mrb[0].mxu0
        %v7029 = vadd.f32 %v6633, %v7028
        %v7030 = vpop.f32.mrb[0].mxu0
        %v7031 = vadd.f32 %v6637, %v7030
        %7032 = vmatprep.mubr.bf16.mxu0 %v6573
        %7033 = vmatmul.mubr.bf16.gmra.mrb[0].mxu0 %v6572
        %v7034 = vpop.f32.mrb[0].mxu0
        %v7035 = vadd.f32 %v6633, %v7034
        %v7036 = vpop.f32.mrb[0].mxu0
        %v7037 = vadd.f32 %v6637, %v7036
        %v7038 = vpop.f32.mrb[0].mxu0
        %v7039 = vadd.f32 %v6633, %v7038
        %v7040 = vpop.f32.mrb[0].mxu0
        %v7041 = vadd.f32 %v6637, %v7040
        %7042 = vmatprep.mubr.bf16.mxu0 %v6575
        %7043 = vmatmul.mubr.bf16.gmra.mrb[0].mxu0 %v6574
        %v7044 = vpop.f32.mrb[0].mxu0
        %v7045 = vadd.f32 %v6633, %v7044
        %v7046 = vpop.f32.mrb[0].mxu0
        %v7047 = vadd.f32 %v6637, %v7046
        %v7048 = vpop.f32.mrb[0].mxu0
        %v7049 = vadd.f32 %v6633, %v7048
        %v7050 = vpop.f32.mrb[0].mxu0
        %v7051 = vadd.f32 %v6637, %v7050
        %7052 = vmatprep.mubr.bf16.mxu0 %v6577
        %7053 = vmatmul.mubr.bf16.gmra.mrb[0].mxu0 %v6576
        %v7054 = vpop.f32.mrb[0].mxu0
        %v7055 = vadd.f32 %v6633, %v7054
        %v7056 = vpop.f32.mrb[0].mxu0
        %v7057 = vadd.f32 %v6637, %v7056
        %v7058 = vpop.f32.mrb[0].mxu0
        %v7059 = vadd.f32 %v6633, %v7058
        %v7060 = vpop.f32.mrb[0].mxu0
        %v7061 = vadd.f32 %v6637, %v7060
        %7062 = vmatprep.mubr.bf16.mxu0 %v6579
        %7063 = vmatmul.mubr.bf16.gmra.mrb[0].mxu0 %v6578
        %v7064 = vpop.f32.mrb[0].mxu0
        %v7065 = vadd.f32 %v6633, %v7064
        %v7066 = vpop.f32.mrb[0].mxu0
        %v7067 = vadd.f32 %v6637, %v7066
        %v7068 = vpop.f32.mrb[0].mxu0
        %v7069 = vadd.f32 %v6633, %v7068
        %v7070 = vpop.f32.mrb[0].mxu0
        %v7071 = vadd.f32 %v6637, %v7070
        %7072 = vmatprep.mubr.bf16.mxu0 %v6581
        %7073 = vmatmul.mubr.bf16.gmra.mrb[0].mxu0 %v6580
        %v7074 = vpop.f32.mrb[0].mxu0
        %v7075 = vadd.f32 %v6633, %v7074
        %v7076 = vpop.f32.mrb[0].mxu0
        %v7077 = vadd.f32 %v6637, %v7076
        %v7078 = vpop.f32.mrb[0].mxu0
        %v7079 = vadd.f32 %v6633, %v7078
        %v7080 = vpop.f32.mrb[0].mxu0
        %v7081 = vadd.f32 %v6637, %v7080
        %7082 = vmatprep.mubr.bf16.mxu0 %v6583
        %7083 = vmatmul.mubr.bf16.gmra.mrb[0].mxu0 %v6582
        %v7084 = vpop.f32.mrb[0].mxu0
        %v7085 = vadd.f32 %v6633, %v7084
        %v7086 = vpop.f32.mrb[0].mxu0
        %v7087 = vadd.f32 %v6637, %v7086
        %v7088 = vpop.f32.mrb[0].mxu0
        %v7089 = vadd.f32 %v6633, %v7088
        %v7090 = vpop.f32.mrb[0].mxu0
        %v7091 = vadd.f32 %v6637, %v7090
        %7092 = vmatprep.mubr.bf16.mxu0 %v6585
        %7093 = vmatmul.mubr.bf16.gmra.mrb[0].mxu0 %v6584
        %v7094 = vpop.f32.mrb[0].mxu0
        %v7095 = vadd.f32 %v6633, %v7094
        %v7096 = vpop.f32.mrb[0].mxu0
        %v7097 = vadd.f32 %v6637, %v7096
        %v7098 = vpop.f32.mrb[0].mxu0
        %v7099 = vadd.f32 %v6633, %v7098
        %v7100 = vpop.f32.mrb[0].mxu0
        %v7101 = vadd.f32 %v6637, %v7100
        %7102 = vmatprep.mubr.bf16.mxu0 %v6587
        %7103 = vmatmul.mubr.bf16.gmra.mrb[0].mxu0 %v6586
        %v7104 = vpop.f32.mrb[0].mxu0
        %v7105 = vadd.f32 %v6633, %v7104
        %v7106 = vpop.f32.mrb[0].mxu0
        %v7107 = vadd.f32 %v6637, %v7106
        %v7108 = vpop.f32.mrb[0].mxu0
        %v7109 = vadd.f32 %v6633, %v7108
        %v7110 = vpop.f32.mrb[0].mxu0
        %v7111 = vadd.f32 %v6637, %v7110
        %7112 = vmatprep.mubr.bf16.mxu0 %v6589
        %7113 = vmatmul.mubr.bf16.gmra.mrb[0].mxu0 %v6588
        %v7114 = vpop.f32.mrb[0].mxu0
        %v7115 = vadd.f32 %v6633, %v7114
        %v7116 = vpop.f32.mrb[0].mxu0
        %v7117 = vadd.f32 %v6637, %v7116
        %v7118 = vpop.f32.mrb[0].mxu0
        %v7119 = vadd.f32 %v6633, %v7118
        %v7120 = vpop.f32.mrb[0].mxu0
        %v7121 = vadd.f32 %v6637, %v7120
        %7122 = vmatprep.mubr.bf16.mxu0 %v6591
        %7123 = vmatmul.mubr.bf16.gmra.mrb[0].mxu0 %v6590
        %v7124 = vpop.f32.mrb[0].mxu0
        %v7125 = vadd.f32 %v6633, %v7124
        %v7126 = vpop.f32.mrb[0].mxu0
        %v7127 = vadd.f32 %v6637, %v7126
        %v7128 = vpop.f32.mrb[0].mxu0
        %v7129 = vadd.f32 %v6633, %v7128
        %v7130 = vpop.f32.mrb[0].mxu0
        %v7131 = vadd.f32 %v6637, %v7130
        %7132 = vmatprep.mubr.bf16.mxu0 %v6593
        %7133 = vmatmul.mubr.bf16.gmra.mrb[0].mxu0 %v6592
        %v7134 = vpop.f32.mrb[0].mxu0
        %v7135 = vadd.f32 %v6633, %v7134
        %v7136 = vpop.f32.mrb[0].mxu0
        %v7137 = vadd.f32 %v6637, %v7136
        %v7138 = vpop.f32.mrb[0].mxu0
        %v7139 = vadd.f32 %v6633, %v7138
        %v7140 = vpop.f32.mrb[0].mxu0
        %v7141 = vadd.f32 %v6637, %v7140
        %7142 = vmatprep.mubr.bf16.mxu0 %v6595
        %7143 = vmatmul.mubr.bf16.gmra.mrb[0].mxu0 %v6594
        %v7144 = vpop.f32.mrb[0].mxu0
        %v7145 = vadd.f32 %v6633, %v7144
        %v7146 = vpop.f32.mrb[0].mxu0
        %v7147 = vadd.f32 %v6637, %v7146
        %v7148 = vpop.f32.mrb[0].mxu0
        %v7149 = vadd.f32 %v6633, %v7148
        %v7150 = vpop.f32.mrb[0].mxu0
        %v7151 = vadd.f32 %v6637, %v7150
        %7152 = vdwg.mxu0
        %v7153 = vmax.f32 %v6835, 0.0
        %v7154 = vmax.f32 %v6837, 0.0
        %v7155 = vmax.f32 %v6839, 0.0
        %v7156 = vmax.f32 %v6841, 0.0
        %v7157 = vmax.f32 %v6845, 0.0
        %v7158 = vmax.f32 %v6847, 0.0
        %v7159 = vmax.f32 %v6849, 0.0
        %v7160 = vmax.f32 %v6851, 0.0
        %v7161 = vmax.f32 %v6855, 0.0
        %v7162 = vmax.f32 %v6857, 0.0
        %v7163 = vmax.f32 %v6859, 0.0
        %v7164 = vmax.f32 %v6861, 0.0
        %v7165 = vmax.f32 %v6865, 0.0
        %v7166 = vmax.f32 %v6867, 0.0
        %v7167 = vmax.f32 %v6869, 0.0
        %v7168 = vmax.f32 %v6871, 0.0
        %v7169 = vmax.f32 %v6875, 0.0
        %v7170 = vmax.f32 %v6877, 0.0
        %v7171 = vmax.f32 %v6879, 0.0
        %v7172 = vmax.f32 %v6881, 0.0
        %v7173 = vmax.f32 %v6885, 0.0
        %v7174 = vmax.f32 %v6887, 0.0
        %v7175 = vmax.f32 %v6889, 0.0
        %v7176 = vmax.f32 %v6891, 0.0
        %v7177 = vmax.f32 %v6895, 0.0
        %v7178 = vmax.f32 %v6897, 0.0
        %v7179 = vmax.f32 %v6899, 0.0
        %v7180 = vmax.f32 %v6901, 0.0
        %v7181 = vmax.f32 %v6905, 0.0
        %v7182 = vmax.f32 %v6907, 0.0
        %v7183 = vmax.f32 %v6909, 0.0
        %v7184 = vmax.f32 %v6911, 0.0
        %v7185 = vmax.f32 %v6915, 0.0
        %v7186 = vmax.f32 %v6917, 0.0
        %v7187 = vmax.f32 %v6919, 0.0
        %v7188 = vmax.f32 %v6921, 0.0
        %v7189 = vmax.f32 %v6925, 0.0
        %v7190 = vmax.f32 %v6927, 0.0
        %v7191 = vmax.f32 %v6929, 0.0
        %v7192 = vmax.f32 %v6931, 0.0
        %v7193 = vmax.f32 %v6935, 0.0
        %v7194 = vmax.f32 %v6937, 0.0
        %v7195 = vmax.f32 %v6939, 0.0
        %v7196 = vmax.f32 %v6941, 0.0
        %v7197 = vmax.f32 %v6945, 0.0
        %v7198 = vmax.f32 %v6947, 0.0
        %v7199 = vmax.f32 %v6949, 0.0
        %v7200 = vmax.f32 %v6951, 0.0
        %v7201 = vmax.f32 %v6955, 0.0
        %v7202 = vmax.f32 %v6957, 0.0
        %v7203 = vmax.f32 %v6959, 0.0
        %v7204 = vmax.f32 %v6961, 0.0
        %v7205 = vmax.f32 %v6965, 0.0
        %v7206 = vmax.f32 %v6967, 0.0
        %v7207 = vmax.f32 %v6969, 0.0
        %v7208 = vmax.f32 %v6971, 0.0
        %v7209 = vmax.f32 %v6975, 0.0
        %v7210 = vmax.f32 %v6977, 0.0
        %v7211 = vmax.f32 %v6979, 0.0
        %v7212 = vmax.f32 %v6981, 0.0
        %v7213 = vmax.f32 %v6985, 0.0
        %v7214 = vmax.f32 %v6987, 0.0
        %v7215 = vmax.f32 %v6989, 0.0
        %v7216 = vmax.f32 %v6991, 0.0
        %v7217 = vmax.f32 %v6995, 0.0
        %v7218 = vmax.f32 %v6997, 0.0
        %v7219 = vmax.f32 %v6999, 0.0
        %v7220 = vmax.f32 %v7001, 0.0
        %v7221 = vmax.f32 %v7005, 0.0
        %v7222 = vmax.f32 %v7007, 0.0
        %v7223 = vmax.f32 %v7009, 0.0
        %v7224 = vmax.f32 %v7011, 0.0
        %v7225 = vmax.f32 %v7015, 0.0
        %v7226 = vmax.f32 %v7017, 0.0
        %v7227 = vmax.f32 %v7019, 0.0
        %v7228 = vmax.f32 %v7021, 0.0
        %v7229 = vmax.f32 %v7025, 0.0
        %v7230 = vmax.f32 %v7027, 0.0
        %v7231 = vmax.f32 %v7029, 0.0
        %v7232 = vmax.f32 %v7031, 0.0
        %v7233 = vmax.f32 %v7035, 0.0
        %v7234 = vmax.f32 %v7037, 0.0
        %v7235 = vmax.f32 %v7039, 0.0
        %v7236 = vmax.f32 %v7041, 0.0
        %v7237 = vmax.f32 %v7045, 0.0
        %v7238 = vmax.f32 %v7047, 0.0
        %v7239 = vmax.f32 %v7049, 0.0
        %v7240 = vmax.f32 %v7051, 0.0
        %v7241 = vmax.f32 %v7055, 0.0
        %v7242 = vmax.f32 %v7057, 0.0
        %v7243 = vmax.f32 %v7059, 0.0
        %v7244 = vmax.f32 %v7061, 0.0
        %v7245 = vmax.f32 %v7065, 0.0
        %v7246 = vmax.f32 %v7067, 0.0
        %v7247 = vmax.f32 %v7069, 0.0
        %v7248 = vmax.f32 %v7071, 0.0
        %v7249 = vmax.f32 %v7075, 0.0
        %v7250 = vmax.f32 %v7077, 0.0
        %v7251 = vmax.f32 %v7079, 0.0
        %v7252 = vmax.f32 %v7081, 0.0
        %v7253 = vmax.f32 %v7085, 0.0
        %v7254 = vmax.f32 %v7087, 0.0
        %v7255 = vmax.f32 %v7089, 0.0
        %v7256 = vmax.f32 %v7091, 0.0
        %v7257 = vmax.f32 %v7095, 0.0
        %v7258 = vmax.f32 %v7097, 0.0
        %v7259 = vmax.f32 %v7099, 0.0
        %v7260 = vmax.f32 %v7101, 0.0
        %v7261 = vmax.f32 %v7105, 0.0
        %v7262 = vmax.f32 %v7107, 0.0
        %v7263 = vmax.f32 %v7109, 0.0
        %v7264 = vmax.f32 %v7111, 0.0
        %v7265 = vmax.f32 %v7115, 0.0
        %v7266 = vmax.f32 %v7117, 0.0
        %v7267 = vmax.f32 %v7119, 0.0
        %v7268 = vmax.f32 %v7121, 0.0
        %v7269 = vmax.f32 %v7125, 0.0
        %v7270 = vmax.f32 %v7127, 0.0
        %v7271 = vmax.f32 %v7129, 0.0
        %v7272 = vmax.f32 %v7131, 0.0
        %v7273 = vmax.f32 %v7135, 0.0
        %v7274 = vmax.f32 %v7137, 0.0
        %v7275 = vmax.f32 %v7139, 0.0
        %v7276 = vmax.f32 %v7141, 0.0
        %v7277 = vmax.f32 %v7145, 0.0
        %v7278 = vmax.f32 %v7147, 0.0
        %v7279 = vmax.f32 %v7149, 0.0
        %v7280 = vmax.f32 %v7151, 0.0
        %v7281 = vpack.c.bf16 %v7155, %v7153
        %v7282 = vpack.c.bf16 %v7156, %v7154
        %v7283 = vpack.c.bf16 %v7159, %v7157
        %v7284 = vpack.c.bf16 %v7160, %v7158
        %v7285 = vpack.c.bf16 %v7163, %v7161
        %v7286 = vpack.c.bf16 %v7164, %v7162
        %v7287 = vpack.c.bf16 %v7167, %v7165
        %v7288 = vpack.c.bf16 %v7168, %v7166
        %v7289 = vpack.c.bf16 %v7171, %v7169
        %v7290 = vpack.c.bf16 %v7172, %v7170
        %v7291 = vpack.c.bf16 %v7175, %v7173
        %v7292 = vpack.c.bf16 %v7176, %v7174
        %v7293 = vpack.c.bf16 %v7179, %v7177
        %v7294 = vpack.c.bf16 %v7180, %v7178
        %v7295 = vpack.c.bf16 %v7183, %v7181
        %v7296 = vpack.c.bf16 %v7184, %v7182
        %v7297 = vpack.c.bf16 %v7187, %v7185
        %v7298 = vpack.c.bf16 %v7188, %v7186
        %v7299 = vpack.c.bf16 %v7191, %v7189
        %v7300 = vpack.c.bf16 %v7192, %v7190
        %v7301 = vpack.c.bf16 %v7195, %v7193
        %v7302 = vpack.c.bf16 %v7196, %v7194
        %v7303 = vpack.c.bf16 %v7199, %v7197
        %v7304 = vpack.c.bf16 %v7200, %v7198
        %v7305 = vpack.c.bf16 %v7203, %v7201
        %v7306 = vpack.c.bf16 %v7204, %v7202
        %v7307 = vpack.c.bf16 %v7207, %v7205
        %v7308 = vpack.c.bf16 %v7208, %v7206
        %v7309 = vpack.c.bf16 %v7211, %v7209
        %v7310 = vpack.c.bf16 %v7212, %v7210
        %v7311 = vpack.c.bf16 %v7215, %v7213
        %v7312 = vpack.c.bf16 %v7216, %v7214
        %v7313 = vpack.c.bf16 %v7219, %v7217
        %v7314 = vpack.c.bf16 %v7220, %v7218
        %v7315 = vpack.c.bf16 %v7223, %v7221
        %v7316 = vpack.c.bf16 %v7224, %v7222
        %v7317 = vpack.c.bf16 %v7227, %v7225
        %v7318 = vpack.c.bf16 %v7228, %v7226
        %v7319 = vpack.c.bf16 %v7231, %v7229
        %v7320 = vpack.c.bf16 %v7232, %v7230
        %v7321 = vpack.c.bf16 %v7235, %v7233
        %v7322 = vpack.c.bf16 %v7236, %v7234
        %v7323 = vpack.c.bf16 %v7239, %v7237
        %v7324 = vpack.c.bf16 %v7240, %v7238
        %v7325 = vpack.c.bf16 %v7243, %v7241
        %v7326 = vpack.c.bf16 %v7244, %v7242
        %v7327 = vpack.c.bf16 %v7247, %v7245
        %v7328 = vpack.c.bf16 %v7248, %v7246
        %v7329 = vpack.c.bf16 %v7251, %v7249
        %v7330 = vpack.c.bf16 %v7252, %v7250
        %v7331 = vpack.c.bf16 %v7255, %v7253
        %v7332 = vpack.c.bf16 %v7256, %v7254
        %v7333 = vpack.c.bf16 %v7259, %v7257
        %v7334 = vpack.c.bf16 %v7260, %v7258
        %v7335 = vpack.c.bf16 %v7263, %v7261
        %v7336 = vpack.c.bf16 %v7264, %v7262
        %v7337 = vpack.c.bf16 %v7267, %v7265
        %v7338 = vpack.c.bf16 %v7268, %v7266
        %v7339 = vpack.c.bf16 %v7271, %v7269
        %v7340 = vpack.c.bf16 %v7272, %v7270
        %v7341 = vpack.c.bf16 %v7275, %v7273
        %v7342 = vpack.c.bf16 %v7276, %v7274
        %v7343 = vpack.c.bf16 %v7279, %v7277
        %v7344 = vpack.c.bf16 %v7280, %v7278
        %v7345 = vld [vmem:[#allocation9] sm:$0xff]
        %v7346 = vld [vmem:[#allocation9 + $0x8] sm:$0xf]
        %v7347 = vld [vmem:[#allocation9 + $0xc] sm:$0xff]
        %v7348 = vld [vmem:[#allocation9 + $0x14] sm:$0xf]
        %v7349 = vld [vmem:[#allocation9 + $0x18] sm:$0xff]
        %v7350 = vld [vmem:[#allocation9 + $0x20] sm:$0xf]
        %v7351 = vld [vmem:[#allocation9 + $0x24] sm:$0xff]
        %v7352 = vld [vmem:[#allocation9 + $0x2c] sm:$0xf]
        %v7353 = vld [vmem:[#allocation9 + $0x30] sm:$0xff]
        %v7354 = vld [vmem:[#allocation9 + $0x38] sm:$0xf]
        %v7355 = vld [vmem:[#allocation9 + $0x3c] sm:$0xff]
        %v7356 = vld [vmem:[#allocation9 + $0x44] sm:$0xf]
        %v7357 = vld [vmem:[#allocation9 + $0x48] sm:$0xff]
        %v7358 = vld [vmem:[#allocation9 + $0x50] sm:$0xf]
        %v7359 = vld [vmem:[#allocation9 + $0x54] sm:$0xff]
        %v7360 = vld [vmem:[#allocation9 + $0x5c] sm:$0xf]
        %v7361 = vld [vmem:[#allocation9 + $0x60] sm:$0xff]
        %v7362 = vld [vmem:[#allocation9 + $0x68] sm:$0xf]
        %v7363 = vld [vmem:[#allocation9 + $0x6c] sm:$0xff]
        %v7364 = vld [vmem:[#allocation9 + $0x74] sm:$0xf]
        %v7365 = vld [vmem:[#allocation9 + $0x78] sm:$0xff]
        %v7366 = vld [vmem:[#allocation9 + $0x80] sm:$0xf]
        %v7367 = vld [vmem:[#allocation9 + $0x84] sm:$0xff]
        %v7368 = vld [vmem:[#allocation9 + $0x8c] sm:$0xf]
        %v7369 = vld [vmem:[#allocation9 + $0x90] sm:$0xff]
        %v7370 = vld [vmem:[#allocation9 + $0x98] sm:$0xf]
        %v7371 = vld [vmem:[#allocation9 + $0x9c] sm:$0xff]
        %v7372 = vld [vmem:[#allocation9 + $0xa4] sm:$0xf]
        %v7373 = vld [vmem:[#allocation9 + $0xa8] sm:$0xff]
        %v7374 = vld [vmem:[#allocation9 + $0xb0] sm:$0xf]
        %v7375 = vld [vmem:[#allocation9 + $0xb4] sm:$0xff]
        %v7376 = vld [vmem:[#allocation9 + $0xbc] sm:$0xf]
        %v7377 = vld [vmem:[#allocation9 + $0xc0] sm:$0xff]
        %v7378 = vld [vmem:[#allocation9 + $0xc8] sm:$0xf]
        %v7379 = vld [vmem:[#allocation9 + $0xcc] sm:$0xff]
        %v7380 = vld [vmem:[#allocation9 + $0xd4] sm:$0xf]
        %v7381 = vld [vmem:[#allocation9 + $0xd8] sm:$0xff]
        %v7382 = vld [vmem:[#allocation9 + $0xe0] sm:$0xf]
        %v7383 = vld [vmem:[#allocation9 + $0xe4] sm:$0xff]
        %v7384 = vld [vmem:[#allocation9 + $0xec] sm:$0xf]
        %v7385 = vld [vmem:[#allocation9 + $0xf0] sm:$0xff]
        %v7386 = vld [vmem:[#allocation9 + $0xf8] sm:$0xf]
        %v7387 = vld [vmem:[#allocation9 + $0xfc] sm:$0xff]
        %v7388 = vld [vmem:[#allocation9 + $0x104] sm:$0xf]
        %v7389 = vld [vmem:[#allocation9 + $0x108] sm:$0xff]
        %v7390 = vld [vmem:[#allocation9 + $0x110] sm:$0xf]
        %v7391 = vld [vmem:[#allocation9 + $0x114] sm:$0xff]
        %v7392 = vld [vmem:[#allocation9 + $0x11c] sm:$0xf]
        %v7393 = vld [vmem:[#allocation9 + $0x120] sm:$0xff]
        %v7394 = vld [vmem:[#allocation9 + $0x128] sm:$0xf]
        %v7395 = vld [vmem:[#allocation9 + $0x12c] sm:$0xff]
        %v7396 = vld [vmem:[#allocation9 + $0x134] sm:$0xf]
        %v7397 = vld [vmem:[#allocation9 + $0x138] sm:$0xff]
        %v7398 = vld [vmem:[#allocation9 + $0x140] sm:$0xf]
        %v7399 = vld [vmem:[#allocation9 + $0x144] sm:$0xff]
        %v7400 = vld [vmem:[#allocation9 + $0x14c] sm:$0xf]
        %v7401 = vld [vmem:[#allocation9 + $0x150] sm:$0xff]
        %v7402 = vld [vmem:[#allocation9 + $0x158] sm:$0xf]
        %v7403 = vld [vmem:[#allocation9 + $0x15c] sm:$0xff]
        %v7404 = vld [vmem:[#allocation9 + $0x164] sm:$0xf]
        %v7405 = vld [vmem:[#allocation9 + $0x168] sm:$0xff]
        %v7406 = vld [vmem:[#allocation9 + $0x170] sm:$0xf]
        %v7407 = vld [vmem:[#allocation9 + $0x174] sm:$0xff]
        %v7408 = vld [vmem:[#allocation9 + $0x17c] sm:$0xf]
        %v7409 = vld [vmem:[%s12] sm:$0x7]
        %v7411 = vlaneseq
        %v7412 = vshrl.u32 %v7411, 7
        %v7413 = vsub.s32 0, %v7412
        %v7414 = vrot.slane %v7409, %v7413
        %v7415 = vlaneseq
        %v7416 = vshrl.u32 %v7415, 7
        %v7417 = vsub.s32 1, %v7416
        %v7418 = vrot.slane %v7409, %v7417
        %v7419 = vlaneseq
        %v7420 = vshrl.u32 %v7419, 7
        %v7421 = vsub.s32 2, %v7420
        %v7422 = vrot.slane %v7409, %v7421
        %v7490 = vunpack.c.l.b16 %v7345
        %v7491 = vunpack.c.h.b16 %v7345
        %v7492 = vunpack.c.l.b16 %v7346
        %v7493 = vunpack.c.l.b16 %v7347
        %v7494 = vunpack.c.h.b16 %v7347
        %v7495 = vunpack.c.l.b16 %v7348
        %v7496 = vunpack.c.l.b16 %v7349
        %v7497 = vunpack.c.h.b16 %v7349
        %v7498 = vunpack.c.l.b16 %v7350
        %v7499 = vunpack.c.l.b16 %v7351
        %v7500 = vunpack.c.h.b16 %v7351
        %v7501 = vunpack.c.l.b16 %v7352
        %v7502 = vunpack.c.l.b16 %v7353
        %v7503 = vunpack.c.h.b16 %v7353
        %v7504 = vunpack.c.l.b16 %v7354
        %v7505 = vunpack.c.l.b16 %v7355
        %v7506 = vunpack.c.h.b16 %v7355
        %v7507 = vunpack.c.l.b16 %v7356
        %v7508 = vunpack.c.l.b16 %v7357
        %v7509 = vunpack.c.h.b16 %v7357
        %v7510 = vunpack.c.l.b16 %v7358
        %v7511 = vunpack.c.l.b16 %v7359
        %v7512 = vunpack.c.h.b16 %v7359
        %v7513 = vunpack.c.l.b16 %v7360
        %v7514 = vunpack.c.l.b16 %v7361
        %v7515 = vunpack.c.h.b16 %v7361
        %v7516 = vunpack.c.l.b16 %v7362
        %v7517 = vunpack.c.l.b16 %v7363
        %v7518 = vunpack.c.h.b16 %v7363
        %v7519 = vunpack.c.l.b16 %v7364
        %v7520 = vunpack.c.l.b16 %v7365
        %v7521 = vunpack.c.h.b16 %v7365
        %v7522 = vunpack.c.l.b16 %v7366
        %v7523 = vunpack.c.l.b16 %v7367
        %v7524 = vunpack.c.h.b16 %v7367
        %v7525 = vunpack.c.l.b16 %v7368
        %v7526 = vunpack.c.l.b16 %v7369
        %v7527 = vunpack.c.h.b16 %v7369
        %v7528 = vunpack.c.l.b16 %v7370
        %v7529 = vunpack.c.l.b16 %v7371
        %v7530 = vunpack.c.h.b16 %v7371
        %v7531 = vunpack.c.l.b16 %v7372
        %v7532 = vunpack.c.l.b16 %v7373
        %v7533 = vunpack.c.h.b16 %v7373
        %v7534 = vunpack.c.l.b16 %v7374
        %v7535 = vunpack.c.l.b16 %v7375
        %v7536 = vunpack.c.h.b16 %v7375
        %v7537 = vunpack.c.l.b16 %v7376
        %v7538 = vunpack.c.l.b16 %v7377
        %v7539 = vunpack.c.h.b16 %v7377
        %v7540 = vunpack.c.l.b16 %v7378
        %v7541 = vunpack.c.l.b16 %v7379
        %v7542 = vunpack.c.h.b16 %v7379
        %v7543 = vunpack.c.l.b16 %v7380
        %v7544 = vunpack.c.l.b16 %v7381
        %v7545 = vunpack.c.h.b16 %v7381
        %v7546 = vunpack.c.l.b16 %v7382
        %v7547 = vunpack.c.l.b16 %v7383
        %v7548 = vunpack.c.h.b16 %v7383
        %v7549 = vunpack.c.l.b16 %v7384
        %v7550 = vunpack.c.l.b16 %v7385
        %v7551 = vunpack.c.h.b16 %v7385
        %v7552 = vunpack.c.l.b16 %v7386
        %v7553 = vunpack.c.l.b16 %v7387
        %v7554 = vunpack.c.h.b16 %v7387
        %v7555 = vunpack.c.l.b16 %v7388
        %v7556 = vunpack.c.l.b16 %v7389
        %v7557 = vunpack.c.h.b16 %v7389
        %v7558 = vunpack.c.l.b16 %v7390
        %v7559 = vunpack.c.l.b16 %v7391
        %v7560 = vunpack.c.h.b16 %v7391
        %v7561 = vunpack.c.l.b16 %v7392
        %v7562 = vunpack.c.l.b16 %v7393
        %v7563 = vunpack.c.h.b16 %v7393
        %v7564 = vunpack.c.l.b16 %v7394
        %v7565 = vunpack.c.l.b16 %v7395
        %v7566 = vunpack.c.h.b16 %v7395
        %v7567 = vunpack.c.l.b16 %v7396
        %v7568 = vunpack.c.l.b16 %v7397
        %v7569 = vunpack.c.h.b16 %v7397
        %v7570 = vunpack.c.l.b16 %v7398
        %v7571 = vunpack.c.l.b16 %v7399
        %v7572 = vunpack.c.h.b16 %v7399
        %v7573 = vunpack.c.l.b16 %v7400
        %v7574 = vunpack.c.l.b16 %v7401
        %v7575 = vunpack.c.h.b16 %v7401
        %v7576 = vunpack.c.l.b16 %v7402
        %v7577 = vunpack.c.l.b16 %v7403
        %v7578 = vunpack.c.h.b16 %v7403
        %v7579 = vunpack.c.l.b16 %v7404
        %v7580 = vunpack.c.l.b16 %v7405
        %v7581 = vunpack.c.h.b16 %v7405
        %v7582 = vunpack.c.l.b16 %v7406
        %v7583 = vunpack.c.l.b16 %v7407
        %v7584 = vunpack.c.h.b16 %v7407
        %v7585 = vunpack.c.l.b16 %v7408
        %v7586 = vpack.c.b16 %v7493, %v7490
        %v7587 = vpack.c.b16 %v7494, %v7491
        %v7588 = vpack.c.b16 %v7495, %v7492
        %v7589 = vpack.c.b16 %v7499, %v7496
        %v7590 = vpack.c.b16 %v7500, %v7497
        %v7591 = vpack.c.b16 %v7501, %v7498
        %v7592 = vpack.c.b16 %v7505, %v7502
        %v7593 = vpack.c.b16 %v7506, %v7503
        %v7594 = vpack.c.b16 %v7507, %v7504
        %v7595 = vpack.c.b16 %v7511, %v7508
        %v7596 = vpack.c.b16 %v7512, %v7509
        %v7597 = vpack.c.b16 %v7513, %v7510
        %v7598 = vpack.c.b16 %v7517, %v7514
        %v7599 = vpack.c.b16 %v7518, %v7515
        %v7600 = vpack.c.b16 %v7519, %v7516
        %v7601 = vpack.c.b16 %v7523, %v7520
        %v7602 = vpack.c.b16 %v7524, %v7521
        %v7603 = vpack.c.b16 %v7525, %v7522
        %v7604 = vpack.c.b16 %v7529, %v7526
        %v7605 = vpack.c.b16 %v7530, %v7527
        %v7606 = vpack.c.b16 %v7531, %v7528
        %v7607 = vpack.c.b16 %v7535, %v7532
        %v7608 = vpack.c.b16 %v7536, %v7533
        %v7609 = vpack.c.b16 %v7537, %v7534
        %v7610 = vpack.c.b16 %v7541, %v7538
        %v7611 = vpack.c.b16 %v7542, %v7539
        %v7612 = vpack.c.b16 %v7543, %v7540
        %v7613 = vpack.c.b16 %v7547, %v7544
        %v7614 = vpack.c.b16 %v7548, %v7545
        %v7615 = vpack.c.b16 %v7549, %v7546
        %v7616 = vpack.c.b16 %v7553, %v7550
        %v7617 = vpack.c.b16 %v7554, %v7551
        %v7618 = vpack.c.b16 %v7555, %v7552
        %v7619 = vpack.c.b16 %v7559, %v7556
        %v7620 = vpack.c.b16 %v7560, %v7557
        %v7621 = vpack.c.b16 %v7561, %v7558
        %v7622 = vpack.c.b16 %v7565, %v7562
        %v7623 = vpack.c.b16 %v7566, %v7563
        %v7624 = vpack.c.b16 %v7567, %v7564
        %v7625 = vpack.c.b16 %v7571, %v7568
        %v7626 = vpack.c.b16 %v7572, %v7569
        %v7627 = vpack.c.b16 %v7573, %v7570
        %v7628 = vpack.c.b16 %v7577, %v7574
        %v7629 = vpack.c.b16 %v7578, %v7575
        %v7630 = vpack.c.b16 %v7579, %v7576
        %v7631 = vpack.c.b16 %v7583, %v7580
        %v7632 = vpack.c.b16 %v7584, %v7581
        %v7633 = vpack.c.b16 %v7585, %v7582
        %7682 = vmatprep.subr.bf16.mxu0 %v7587
        %7683 = vmatpush1.bf16.msra.mxu0 %v7586
        %7684 = vmatprep.subr.bf16.mxu0 %v7590
        %7685 = vmatpush1.bf16.msra.mxu0 %v7589
        %7686 = vmatprep.subr.bf16.mxu0 %v7593
        %7687 = vmatpush1.bf16.msra.mxu0 %v7592
        %7688 = vmatprep.subr.bf16.mxu0 %v7596
        %7689 = vmatpush1.bf16.msra.mxu0 %v7595
        %7690 = vmatprep.subr.bf16.mxu0 %v7599
        %7691 = vmatpush1.bf16.msra.mxu0 %v7598
        %7692 = vmatprep.subr.bf16.mxu0 %v7602
        %7693 = vmatpush1.bf16.msra.mxu0 %v7601
        %7694 = vmatprep.subr.bf16.mxu0 %v7605
        %7695 = vmatpush1.bf16.msra.mxu0 %v7604
        %7696 = vmatprep.subr.bf16.mxu0 %v7608
        %7697 = vmatpush1.bf16.msra.mxu0 %v7607
        %7698 = vmatprep.subr.bf16.mxu0 %v7611
        %7699 = vmatpush1.bf16.msra.mxu0 %v7610
        %7700 = vmatprep.subr.bf16.mxu0 %v7614
        %7701 = vmatpush1.bf16.msra.mxu0 %v7613
        %7702 = vmatprep.subr.bf16.mxu0 %v7617
        %7703 = vmatpush1.bf16.msra.mxu0 %v7616
        %7704 = vmatprep.subr.bf16.mxu0 %v7620
        %7705 = vmatpush1.bf16.msra.mxu0 %v7619
        %7706 = vmatprep.subr.bf16.mxu0 %v7623
        %7707 = vmatpush1.bf16.msra.mxu0 %v7622
        %7708 = vmatprep.subr.bf16.mxu0 %v7626
        %7709 = vmatpush1.bf16.msra.mxu0 %v7625
        %7710 = vmatprep.subr.bf16.mxu0 %v7629
        %7711 = vmatpush1.bf16.msra.mxu0 %v7628
        %7712 = vmatprep.subr.bf16.mxu0 %v7632
        %7713 = vmatpush1.bf16.msra.mxu0 %v7631
        %7714 = vmatprep.mubr.bf16.mxu0 %v7282
        %7715 = vmatmul.mubr.bf16.gmra.mrb[0].mxu0 %v7281
        %v7716 = vpop.f32.mrb[0].mxu0
        %v7717 = vadd.f32 %v7414, %v7716
        %v7718 = vpop.f32.mrb[0].mxu0
        %v7719 = vadd.f32 %v7418, %v7718
        %v7720 = vpop.f32.mrb[0].mxu0
        %v7721 = vadd.f32 %v7414, %v7720
        %v7722 = vpop.f32.mrb[0].mxu0
        %v7723 = vadd.f32 %v7418, %v7722
        %7724 = vmatprep.mubr.bf16.mxu0 %v7284
        %7725 = vmatmul.mubr.bf16.gmra.mrb[0].mxu0 %v7283
        %v7726 = vpop.f32.mrb[0].mxu0
        %v7727 = vadd.f32 %v7414, %v7726
        %v7728 = vpop.f32.mrb[0].mxu0
        %v7729 = vadd.f32 %v7418, %v7728
        %v7730 = vpop.f32.mrb[0].mxu0
        %v7731 = vadd.f32 %v7414, %v7730
        %v7732 = vpop.f32.mrb[0].mxu0
        %v7733 = vadd.f32 %v7418, %v7732
        %7734 = vmatprep.mubr.bf16.mxu0 %v7286
        %7735 = vmatmul.mubr.bf16.gmra.mrb[0].mxu0 %v7285
        %v7736 = vpop.f32.mrb[0].mxu0
        %v7737 = vadd.f32 %v7414, %v7736
        %v7738 = vpop.f32.mrb[0].mxu0
        %v7739 = vadd.f32 %v7418, %v7738
        %v7740 = vpop.f32.mrb[0].mxu0
        %v7741 = vadd.f32 %v7414, %v7740
        %v7742 = vpop.f32.mrb[0].mxu0
        %v7743 = vadd.f32 %v7418, %v7742
        %7744 = vmatprep.mubr.bf16.mxu0 %v7288
        %7745 = vmatmul.mubr.bf16.gmra.mrb[0].mxu0 %v7287
        %v7746 = vpop.f32.mrb[0].mxu0
        %v7747 = vadd.f32 %v7414, %v7746
        %v7748 = vpop.f32.mrb[0].mxu0
        %v7749 = vadd.f32 %v7418, %v7748
        %v7750 = vpop.f32.mrb[0].mxu0
        %v7751 = vadd.f32 %v7414, %v7750
        %v7752 = vpop.f32.mrb[0].mxu0
        %v7753 = vadd.f32 %v7418, %v7752
        %7754 = vmatprep.mubr.bf16.mxu0 %v7290
        %7755 = vmatmul.mubr.bf16.gmra.mrb[0].mxu0 %v7289
        %v7756 = vpop.f32.mrb[0].mxu0
        %v7757 = vadd.f32 %v7414, %v7756
        %v7758 = vpop.f32.mrb[0].mxu0
        %v7759 = vadd.f32 %v7418, %v7758
        %v7760 = vpop.f32.mrb[0].mxu0
        %v7761 = vadd.f32 %v7414, %v7760
        %v7762 = vpop.f32.mrb[0].mxu0
        %v7763 = vadd.f32 %v7418, %v7762
        %7764 = vmatprep.mubr.bf16.mxu0 %v7292
        %7765 = vmatmul.mubr.bf16.gmra.mrb[0].mxu0 %v7291
        %v7766 = vpop.f32.mrb[0].mxu0
        %v7767 = vadd.f32 %v7414, %v7766
        %v7768 = vpop.f32.mrb[0].mxu0
        %v7769 = vadd.f32 %v7418, %v7768
        %v7770 = vpop.f32.mrb[0].mxu0
        %v7771 = vadd.f32 %v7414, %v7770
        %v7772 = vpop.f32.mrb[0].mxu0
        %v7773 = vadd.f32 %v7418, %v7772
        %7774 = vmatprep.mubr.bf16.mxu0 %v7294
        %7775 = vmatmul.mubr.bf16.gmra.mrb[0].mxu0 %v7293
        %v7776 = vpop.f32.mrb[0].mxu0
        %v7777 = vadd.f32 %v7414, %v7776
        %v7778 = vpop.f32.mrb[0].mxu0
        %v7779 = vadd.f32 %v7418, %v7778
        %v7780 = vpop.f32.mrb[0].mxu0
        %v7781 = vadd.f32 %v7414, %v7780
        %v7782 = vpop.f32.mrb[0].mxu0
        %v7783 = vadd.f32 %v7418, %v7782
        %7784 = vmatprep.mubr.bf16.mxu0 %v7296
        %7785 = vmatmul.mubr.bf16.gmra.mrb[0].mxu0 %v7295
        %v7786 = vpop.f32.mrb[0].mxu0
        %v7787 = vadd.f32 %v7414, %v7786
        %v7788 = vpop.f32.mrb[0].mxu0
        %v7789 = vadd.f32 %v7418, %v7788
        %v7790 = vpop.f32.mrb[0].mxu0
        %v7791 = vadd.f32 %v7414, %v7790
        %v7792 = vpop.f32.mrb[0].mxu0
        %v7793 = vadd.f32 %v7418, %v7792
        %7794 = vmatprep.mubr.bf16.mxu0 %v7298
        %7795 = vmatmul.mubr.bf16.gmra.mrb[0].mxu0 %v7297
        %v7796 = vpop.f32.mrb[0].mxu0
        %v7797 = vadd.f32 %v7414, %v7796
        %v7798 = vpop.f32.mrb[0].mxu0
        %v7799 = vadd.f32 %v7418, %v7798
        %v7800 = vpop.f32.mrb[0].mxu0
        %v7801 = vadd.f32 %v7414, %v7800
        %v7802 = vpop.f32.mrb[0].mxu0
        %v7803 = vadd.f32 %v7418, %v7802
        %7804 = vmatprep.mubr.bf16.mxu0 %v7300
        %7805 = vmatmul.mubr.bf16.gmra.mrb[0].mxu0 %v7299
        %v7806 = vpop.f32.mrb[0].mxu0
        %v7807 = vadd.f32 %v7414, %v7806
        %v7808 = vpop.f32.mrb[0].mxu0
        %v7809 = vadd.f32 %v7418, %v7808
        %v7810 = vpop.f32.mrb[0].mxu0
        %v7811 = vadd.f32 %v7414, %v7810
        %v7812 = vpop.f32.mrb[0].mxu0
        %v7813 = vadd.f32 %v7418, %v7812
        %7814 = vmatprep.mubr.bf16.mxu0 %v7302
        %7815 = vmatmul.mubr.bf16.gmra.mrb[0].mxu0 %v7301
        %v7816 = vpop.f32.mrb[0].mxu0
        %v7817 = vadd.f32 %v7414, %v7816
        %v7818 = vpop.f32.mrb[0].mxu0
        %v7819 = vadd.f32 %v7418, %v7818
        %v7820 = vpop.f32.mrb[0].mxu0
        %v7821 = vadd.f32 %v7414, %v7820
        %v7822 = vpop.f32.mrb[0].mxu0
        %v7823 = vadd.f32 %v7418, %v7822
        %7824 = vmatprep.mubr.bf16.mxu0 %v7304
        %7825 = vmatmul.mubr.bf16.gmra.mrb[0].mxu0 %v7303
        %v7826 = vpop.f32.mrb[0].mxu0
        %v7827 = vadd.f32 %v7414, %v7826
        %v7828 = vpop.f32.mrb[0].mxu0
        %v7829 = vadd.f32 %v7418, %v7828
        %v7830 = vpop.f32.mrb[0].mxu0
        %v7831 = vadd.f32 %v7414, %v7830
        %v7832 = vpop.f32.mrb[0].mxu0
        %v7833 = vadd.f32 %v7418, %v7832
        %7834 = vmatprep.mubr.bf16.mxu0 %v7306
        %7835 = vmatmul.mubr.bf16.gmra.mrb[0].mxu0 %v7305
        %v7836 = vpop.f32.mrb[0].mxu0
        %v7837 = vadd.f32 %v7414, %v7836
        %v7838 = vpop.f32.mrb[0].mxu0
        %v7839 = vadd.f32 %v7418, %v7838
        %v7840 = vpop.f32.mrb[0].mxu0
        %v7841 = vadd.f32 %v7414, %v7840
        %v7842 = vpop.f32.mrb[0].mxu0
        %v7843 = vadd.f32 %v7418, %v7842
        %7844 = vmatprep.mubr.bf16.mxu0 %v7308
        %7845 = vmatmul.mubr.bf16.gmra.mrb[0].mxu0 %v7307
        %v7846 = vpop.f32.mrb[0].mxu0
        %v7847 = vadd.f32 %v7414, %v7846
        %v7848 = vpop.f32.mrb[0].mxu0
        %v7849 = vadd.f32 %v7418, %v7848
        %v7850 = vpop.f32.mrb[0].mxu0
        %v7851 = vadd.f32 %v7414, %v7850
        %v7852 = vpop.f32.mrb[0].mxu0
        %v7853 = vadd.f32 %v7418, %v7852
        %7854 = vmatprep.mubr.bf16.mxu0 %v7310
        %7855 = vmatmul.mubr.bf16.gmra.mrb[0].mxu0 %v7309
        %v7856 = vpop.f32.mrb[0].mxu0
        %v7857 = vadd.f32 %v7414, %v7856
        %v7858 = vpop.f32.mrb[0].mxu0
        %v7859 = vadd.f32 %v7418, %v7858
        %v7860 = vpop.f32.mrb[0].mxu0
        %v7861 = vadd.f32 %v7414, %v7860
        %v7862 = vpop.f32.mrb[0].mxu0
        %v7863 = vadd.f32 %v7418, %v7862
        %7864 = vmatprep.mubr.bf16.mxu0 %v7312
        %7865 = vmatmul.mubr.bf16.gmra.mrb[0].mxu0 %v7311
        %v7866 = vpop.f32.mrb[0].mxu0
        %v7867 = vadd.f32 %v7414, %v7866
        %v7868 = vpop.f32.mrb[0].mxu0
        %v7869 = vadd.f32 %v7418, %v7868
        %v7870 = vpop.f32.mrb[0].mxu0
        %v7871 = vadd.f32 %v7414, %v7870
        %v7872 = vpop.f32.mrb[0].mxu0
        %v7873 = vadd.f32 %v7418, %v7872
        %7874 = vmatprep.mubr.bf16.mxu0 %v7314
        %7875 = vmatmul.mubr.bf16.gmra.mrb[0].mxu0 %v7313
        %v7876 = vpop.f32.mrb[0].mxu0
        %v7877 = vadd.f32 %v7414, %v7876
        %v7878 = vpop.f32.mrb[0].mxu0
        %v7879 = vadd.f32 %v7418, %v7878
        %v7880 = vpop.f32.mrb[0].mxu0
        %v7881 = vadd.f32 %v7414, %v7880
        %v7882 = vpop.f32.mrb[0].mxu0
        %v7883 = vadd.f32 %v7418, %v7882
        %7884 = vmatprep.mubr.bf16.mxu0 %v7316
        %7885 = vmatmul.mubr.bf16.gmra.mrb[0].mxu0 %v7315
        %v7886 = vpop.f32.mrb[0].mxu0
        %v7887 = vadd.f32 %v7414, %v7886
        %v7888 = vpop.f32.mrb[0].mxu0
        %v7889 = vadd.f32 %v7418, %v7888
        %v7890 = vpop.f32.mrb[0].mxu0
        %v7891 = vadd.f32 %v7414, %v7890
        %v7892 = vpop.f32.mrb[0].mxu0
        %v7893 = vadd.f32 %v7418, %v7892
        %7894 = vmatprep.mubr.bf16.mxu0 %v7318
        %7895 = vmatmul.mubr.bf16.gmra.mrb[0].mxu0 %v7317
        %v7896 = vpop.f32.mrb[0].mxu0
        %v7897 = vadd.f32 %v7414, %v7896
        %v7898 = vpop.f32.mrb[0].mxu0
        %v7899 = vadd.f32 %v7418, %v7898
        %v7900 = vpop.f32.mrb[0].mxu0
        %v7901 = vadd.f32 %v7414, %v7900
        %v7902 = vpop.f32.mrb[0].mxu0
        %v7903 = vadd.f32 %v7418, %v7902
        %7904 = vmatprep.mubr.bf16.mxu0 %v7320
        %7905 = vmatmul.mubr.bf16.gmra.mrb[0].mxu0 %v7319
        %v7906 = vpop.f32.mrb[0].mxu0
        %v7907 = vadd.f32 %v7414, %v7906
        %v7908 = vpop.f32.mrb[0].mxu0
        %v7909 = vadd.f32 %v7418, %v7908
        %v7910 = vpop.f32.mrb[0].mxu0
        %v7911 = vadd.f32 %v7414, %v7910
        %v7912 = vpop.f32.mrb[0].mxu0
        %v7913 = vadd.f32 %v7418, %v7912
        %7914 = vmatprep.mubr.bf16.mxu0 %v7322
        %7915 = vmatmul.mubr.bf16.gmra.mrb[0].mxu0 %v7321
        %v7916 = vpop.f32.mrb[0].mxu0
        %v7917 = vadd.f32 %v7414, %v7916
        %v7918 = vpop.f32.mrb[0].mxu0
        %v7919 = vadd.f32 %v7418, %v7918
        %v7920 = vpop.f32.mrb[0].mxu0
        %v7921 = vadd.f32 %v7414, %v7920
        %v7922 = vpop.f32.mrb[0].mxu0
        %v7923 = vadd.f32 %v7418, %v7922
        %7924 = vmatprep.mubr.bf16.mxu0 %v7324
        %7925 = vmatmul.mubr.bf16.gmra.mrb[0].mxu0 %v7323
        %v7926 = vpop.f32.mrb[0].mxu0
        %v7927 = vadd.f32 %v7414, %v7926
        %v7928 = vpop.f32.mrb[0].mxu0
        %v7929 = vadd.f32 %v7418, %v7928
        %v7930 = vpop.f32.mrb[0].mxu0
        %v7931 = vadd.f32 %v7414, %v7930
        %v7932 = vpop.f32.mrb[0].mxu0
        %v7933 = vadd.f32 %v7418, %v7932
        %7934 = vmatprep.mubr.bf16.mxu0 %v7326
        %7935 = vmatmul.mubr.bf16.gmra.mrb[0].mxu0 %v7325
        %v7936 = vpop.f32.mrb[0].mxu0
        %v7937 = vadd.f32 %v7414, %v7936
        %v7938 = vpop.f32.mrb[0].mxu0
        %v7939 = vadd.f32 %v7418, %v7938
        %v7940 = vpop.f32.mrb[0].mxu0
        %v7941 = vadd.f32 %v7414, %v7940
        %v7942 = vpop.f32.mrb[0].mxu0
        %v7943 = vadd.f32 %v7418, %v7942
        %7944 = vmatprep.mubr.bf16.mxu0 %v7328
        %7945 = vmatmul.mubr.bf16.gmra.mrb[0].mxu0 %v7327
        %v7946 = vpop.f32.mrb[0].mxu0
        %v7947 = vadd.f32 %v7414, %v7946
        %v7948 = vpop.f32.mrb[0].mxu0
        %v7949 = vadd.f32 %v7418, %v7948
        %v7950 = vpop.f32.mrb[0].mxu0
        %v7951 = vadd.f32 %v7414, %v7950
        %v7952 = vpop.f32.mrb[0].mxu0
        %v7953 = vadd.f32 %v7418, %v7952
        %7954 = vmatprep.mubr.bf16.mxu0 %v7330
        %7955 = vmatmul.mubr.bf16.gmra.mrb[0].mxu0 %v7329
        %v7956 = vpop.f32.mrb[0].mxu0
        %v7957 = vadd.f32 %v7414, %v7956
        %v7958 = vpop.f32.mrb[0].mxu0
        %v7959 = vadd.f32 %v7418, %v7958
        %v7960 = vpop.f32.mrb[0].mxu0
        %v7961 = vadd.f32 %v7414, %v7960
        %v7962 = vpop.f32.mrb[0].mxu0
        %v7963 = vadd.f32 %v7418, %v7962
        %7964 = vmatprep.mubr.bf16.mxu0 %v7332
        %7965 = vmatmul.mubr.bf16.gmra.mrb[0].mxu0 %v7331
        %v7966 = vpop.f32.mrb[0].mxu0
        %v7967 = vadd.f32 %v7414, %v7966
        %v7968 = vpop.f32.mrb[0].mxu0
        %v7969 = vadd.f32 %v7418, %v7968
        %v7970 = vpop.f32.mrb[0].mxu0
        %v7971 = vadd.f32 %v7414, %v7970
        %v7972 = vpop.f32.mrb[0].mxu0
        %v7973 = vadd.f32 %v7418, %v7972
        %7974 = vmatprep.mubr.bf16.mxu0 %v7334
        %7975 = vmatmul.mubr.bf16.gmra.mrb[0].mxu0 %v7333
        %v7976 = vpop.f32.mrb[0].mxu0
        %v7977 = vadd.f32 %v7414, %v7976
        %v7978 = vpop.f32.mrb[0].mxu0
        %v7979 = vadd.f32 %v7418, %v7978
        %v7980 = vpop.f32.mrb[0].mxu0
        %v7981 = vadd.f32 %v7414, %v7980
        %v7982 = vpop.f32.mrb[0].mxu0
        %v7983 = vadd.f32 %v7418, %v7982
        %7984 = vmatprep.mubr.bf16.mxu0 %v7336
        %7985 = vmatmul.mubr.bf16.gmra.mrb[0].mxu0 %v7335
        %v7986 = vpop.f32.mrb[0].mxu0
        %v7987 = vadd.f32 %v7414, %v7986
        %v7988 = vpop.f32.mrb[0].mxu0
        %v7989 = vadd.f32 %v7418, %v7988
        %v7990 = vpop.f32.mrb[0].mxu0
        %v7991 = vadd.f32 %v7414, %v7990
        %v7992 = vpop.f32.mrb[0].mxu0
        %v7993 = vadd.f32 %v7418, %v7992
        %7994 = vmatprep.mubr.bf16.mxu0 %v7338
        %7995 = vmatmul.mubr.bf16.gmra.mrb[0].mxu0 %v7337
        %v7996 = vpop.f32.mrb[0].mxu0
        %v7997 = vadd.f32 %v7414, %v7996
        %v7998 = vpop.f32.mrb[0].mxu0
        %v7999 = vadd.f32 %v7418, %v7998
        %v8000 = vpop.f32.mrb[0].mxu0
        %v8001 = vadd.f32 %v7414, %v8000
        %v8002 = vpop.f32.mrb[0].mxu0
        %v8003 = vadd.f32 %v7418, %v8002
        %8004 = vmatprep.mubr.bf16.mxu0 %v7340
        %8005 = vmatmul.mubr.bf16.gmra.mrb[0].mxu0 %v7339
        %v8006 = vpop.f32.mrb[0].mxu0
        %v8007 = vadd.f32 %v7414, %v8006
        %v8008 = vpop.f32.mrb[0].mxu0
        %v8009 = vadd.f32 %v7418, %v8008
        %v8010 = vpop.f32.mrb[0].mxu0
        %v8011 = vadd.f32 %v7414, %v8010
        %v8012 = vpop.f32.mrb[0].mxu0
        %v8013 = vadd.f32 %v7418, %v8012
        %8014 = vmatprep.mubr.bf16.mxu0 %v7342
        %8015 = vmatmul.mubr.bf16.gmra.mrb[0].mxu0 %v7341
        %v8016 = vpop.f32.mrb[0].mxu0
        %v8017 = vadd.f32 %v7414, %v8016
        %v8018 = vpop.f32.mrb[0].mxu0
        %v8019 = vadd.f32 %v7418, %v8018
        %v8020 = vpop.f32.mrb[0].mxu0
        %v8021 = vadd.f32 %v7414, %v8020
        %v8022 = vpop.f32.mrb[0].mxu0
        %v8023 = vadd.f32 %v7418, %v8022
        %8024 = vmatprep.mubr.bf16.mxu0 %v7344
        %8025 = vmatmul.mubr.bf16.gmra.mrb[0].mxu0 %v7343
        %v8026 = vpop.f32.mrb[0].mxu0
        %v8027 = vadd.f32 %v7414, %v8026
        %v8028 = vpop.f32.mrb[0].mxu0
        %v8029 = vadd.f32 %v7418, %v8028
        %v8030 = vpop.f32.mrb[0].mxu0
        %v8031 = vadd.f32 %v7414, %v8030
        %v8032 = vpop.f32.mrb[0].mxu0
        %v8033 = vadd.f32 %v7418, %v8032
        %8034 = vdwg.mxu0
        %8035 = vmatprep.subr.bf16.mxu0 0
        %8036 = vmatpush1.bf16.msra.mxu0 %v7588
        %8037 = vmatprep.subr.bf16.mxu0 0
        %8038 = vmatpush1.bf16.msra.mxu0 %v7591
        %8039 = vmatprep.subr.bf16.mxu0 0
        %8040 = vmatpush1.bf16.msra.mxu0 %v7594
        %8041 = vmatprep.subr.bf16.mxu0 0
        %8042 = vmatpush1.bf16.msra.mxu0 %v7597
        %8043 = vmatprep.subr.bf16.mxu0 0
        %8044 = vmatpush1.bf16.msra.mxu0 %v7600
        %8045 = vmatprep.subr.bf16.mxu0 0
        %8046 = vmatpush1.bf16.msra.mxu0 %v7603
        %8047 = vmatprep.subr.bf16.mxu0 0
        %8048 = vmatpush1.bf16.msra.mxu0 %v7606
        %8049 = vmatprep.subr.bf16.mxu0 0
        %8050 = vmatpush1.bf16.msra.mxu0 %v7609
        %8051 = vmatprep.subr.bf16.mxu0 0
        %8052 = vmatpush1.bf16.msra.mxu0 %v7612
        %8053 = vmatprep.subr.bf16.mxu0 0
        %8054 = vmatpush1.bf16.msra.mxu0 %v7615
        %8055 = vmatprep.subr.bf16.mxu0 0
        %8056 = vmatpush1.bf16.msra.mxu0 %v7618
        %8057 = vmatprep.subr.bf16.mxu0 0
        %8058 = vmatpush1.bf16.msra.mxu0 %v7621
        %8059 = vmatprep.subr.bf16.mxu0 0
        %8060 = vmatpush1.bf16.msra.mxu0 %v7624
        %8061 = vmatprep.subr.bf16.mxu0 0
        %8062 = vmatpush1.bf16.msra.mxu0 %v7627
        %8063 = vmatprep.subr.bf16.mxu0 0
        %8064 = vmatpush1.bf16.msra.mxu0 %v7630
        %8065 = vmatprep.subr.bf16.mxu0 0
        %8066 = vmatpush1.bf16.msra.mxu0 %v7633
        %8067 = vmatprep.mubr.bf16.mxu0 %v7282
        %8068 = vmatmul.mubr.bf16.gmra.mrb[0].mxu0 %v7281
        %v8069 = vpop.f32.mrb[0].mxu0
        %v8070 = vadd.f32 %v7422, %v8069
        %v8071 = vpop.f32.mrb[0].mxu0
        %v8072 = vpop.f32.mrb[0].mxu0
        %v8073 = vadd.f32 %v7422, %v8072
        %v8074 = vpop.f32.mrb[0].mxu0
        %8075 = vmatprep.mubr.bf16.mxu0 %v7284
        %8076 = vmatmul.mubr.bf16.gmra.mrb[0].mxu0 %v7283
        %v8077 = vpop.f32.mrb[0].mxu0
        %v8078 = vadd.f32 %v7422, %v8077
        %v8079 = vpop.f32.mrb[0].mxu0
        %v8080 = vpop.f32.mrb[0].mxu0
        %v8081 = vadd.f32 %v7422, %v8080
        %v8082 = vpop.f32.mrb[0].mxu0
        %8083 = vmatprep.mubr.bf16.mxu0 %v7286
        %8084 = vmatmul.mubr.bf16.gmra.mrb[0].mxu0 %v7285
        %v8085 = vpop.f32.mrb[0].mxu0
        %v8086 = vadd.f32 %v7422, %v8085
        %v8087 = vpop.f32.mrb[0].mxu0
        %v8088 = vpop.f32.mrb[0].mxu0
        %v8089 = vadd.f32 %v7422, %v8088
        %v8090 = vpop.f32.mrb[0].mxu0
        %8091 = vmatprep.mubr.bf16.mxu0 %v7288
        %8092 = vmatmul.mubr.bf16.gmra.mrb[0].mxu0 %v7287
        %v8093 = vpop.f32.mrb[0].mxu0
        %v8094 = vadd.f32 %v7422, %v8093
        %v8095 = vpop.f32.mrb[0].mxu0
        %v8096 = vpop.f32.mrb[0].mxu0
        %v8097 = vadd.f32 %v7422, %v8096
        %v8098 = vpop.f32.mrb[0].mxu0
        %8099 = vmatprep.mubr.bf16.mxu0 %v7290
        %8100 = vmatmul.mubr.bf16.gmra.mrb[0].mxu0 %v7289
        %v8101 = vpop.f32.mrb[0].mxu0
        %v8102 = vadd.f32 %v7422, %v8101
        %v8103 = vpop.f32.mrb[0].mxu0
        %v8104 = vpop.f32.mrb[0].mxu0
        %v8105 = vadd.f32 %v7422, %v8104
        %v8106 = vpop.f32.mrb[0].mxu0
        %8107 = vmatprep.mubr.bf16.mxu0 %v7292
        %8108 = vmatmul.mubr.bf16.gmra.mrb[0].mxu0 %v7291
        %v8109 = vpop.f32.mrb[0].mxu0
        %v8110 = vadd.f32 %v7422, %v8109
        %v8111 = vpop.f32.mrb[0].mxu0
        %v8112 = vpop.f32.mrb[0].mxu0
        %v8113 = vadd.f32 %v7422, %v8112
        %v8114 = vpop.f32.mrb[0].mxu0
        %8115 = vmatprep.mubr.bf16.mxu0 %v7294
        %8116 = vmatmul.mubr.bf16.gmra.mrb[0].mxu0 %v7293
        %v8117 = vpop.f32.mrb[0].mxu0
        %v8118 = vadd.f32 %v7422, %v8117
        %v8119 = vpop.f32.mrb[0].mxu0
        %v8120 = vpop.f32.mrb[0].mxu0
        %v8121 = vadd.f32 %v7422, %v8120
        %v8122 = vpop.f32.mrb[0].mxu0
        %8123 = vmatprep.mubr.bf16.mxu0 %v7296
        %8124 = vmatmul.mubr.bf16.gmra.mrb[0].mxu0 %v7295
        %v8125 = vpop.f32.mrb[0].mxu0
        %v8126 = vadd.f32 %v7422, %v8125
        %v8127 = vpop.f32.mrb[0].mxu0
        %v8128 = vpop.f32.mrb[0].mxu0
        %v8129 = vadd.f32 %v7422, %v8128
        %v8130 = vpop.f32.mrb[0].mxu0
        %8131 = vmatprep.mubr.bf16.mxu0 %v7298
        %8132 = vmatmul.mubr.bf16.gmra.mrb[0].mxu0 %v7297
        %v8133 = vpop.f32.mrb[0].mxu0
        %v8134 = vadd.f32 %v7422, %v8133
        %v8135 = vpop.f32.mrb[0].mxu0
        %v8136 = vpop.f32.mrb[0].mxu0
        %v8137 = vadd.f32 %v7422, %v8136
        %v8138 = vpop.f32.mrb[0].mxu0
        %8139 = vmatprep.mubr.bf16.mxu0 %v7300
        %8140 = vmatmul.mubr.bf16.gmra.mrb[0].mxu0 %v7299
        %v8141 = vpop.f32.mrb[0].mxu0
        %v8142 = vadd.f32 %v7422, %v8141
        %v8143 = vpop.f32.mrb[0].mxu0
        %v8144 = vpop.f32.mrb[0].mxu0
        %v8145 = vadd.f32 %v7422, %v8144
        %v8146 = vpop.f32.mrb[0].mxu0
        %8147 = vmatprep.mubr.bf16.mxu0 %v7302
        %8148 = vmatmul.mubr.bf16.gmra.mrb[0].mxu0 %v7301
        %v8149 = vpop.f32.mrb[0].mxu0
        %v8150 = vadd.f32 %v7422, %v8149
        %v8151 = vpop.f32.mrb[0].mxu0
        %v8152 = vpop.f32.mrb[0].mxu0
        %v8153 = vadd.f32 %v7422, %v8152
        %v8154 = vpop.f32.mrb[0].mxu0
        %8155 = vmatprep.mubr.bf16.mxu0 %v7304
        %8156 = vmatmul.mubr.bf16.gmra.mrb[0].mxu0 %v7303
        %v8157 = vpop.f32.mrb[0].mxu0
        %v8158 = vadd.f32 %v7422, %v8157
        %v8159 = vpop.f32.mrb[0].mxu0
        %v8160 = vpop.f32.mrb[0].mxu0
        %v8161 = vadd.f32 %v7422, %v8160
        %v8162 = vpop.f32.mrb[0].mxu0
        %8163 = vmatprep.mubr.bf16.mxu0 %v7306
        %8164 = vmatmul.mubr.bf16.gmra.mrb[0].mxu0 %v7305
        %v8165 = vpop.f32.mrb[0].mxu0
        %v8166 = vadd.f32 %v7422, %v8165
        %v8167 = vpop.f32.mrb[0].mxu0
        %v8168 = vpop.f32.mrb[0].mxu0
        %v8169 = vadd.f32 %v7422, %v8168
        %v8170 = vpop.f32.mrb[0].mxu0
        %8171 = vmatprep.mubr.bf16.mxu0 %v7308
        %8172 = vmatmul.mubr.bf16.gmra.mrb[0].mxu0 %v7307
        %v8173 = vpop.f32.mrb[0].mxu0
        %v8174 = vadd.f32 %v7422, %v8173
        %v8175 = vpop.f32.mrb[0].mxu0
        %v8176 = vpop.f32.mrb[0].mxu0
        %v8177 = vadd.f32 %v7422, %v8176
        %v8178 = vpop.f32.mrb[0].mxu0
        %8179 = vmatprep.mubr.bf16.mxu0 %v7310
        %8180 = vmatmul.mubr.bf16.gmra.mrb[0].mxu0 %v7309
        %v8181 = vpop.f32.mrb[0].mxu0
        %v8182 = vadd.f32 %v7422, %v8181
        %v8183 = vpop.f32.mrb[0].mxu0
        %v8184 = vpop.f32.mrb[0].mxu0
        %v8185 = vadd.f32 %v7422, %v8184
        %v8186 = vpop.f32.mrb[0].mxu0
        %8187 = vmatprep.mubr.bf16.mxu0 %v7312
        %8188 = vmatmul.mubr.bf16.gmra.mrb[0].mxu0 %v7311
        %v8189 = vpop.f32.mrb[0].mxu0
        %v8190 = vadd.f32 %v7422, %v8189
        %v8191 = vpop.f32.mrb[0].mxu0
        %v8192 = vpop.f32.mrb[0].mxu0
        %v8193 = vadd.f32 %v7422, %v8192
        %v8194 = vpop.f32.mrb[0].mxu0
        %8195 = vmatprep.mubr.bf16.mxu0 %v7314
        %8196 = vmatmul.mubr.bf16.gmra.mrb[0].mxu0 %v7313
        %v8197 = vpop.f32.mrb[0].mxu0
        %v8198 = vadd.f32 %v7422, %v8197
        %v8199 = vpop.f32.mrb[0].mxu0
        %v8200 = vpop.f32.mrb[0].mxu0
        %v8201 = vadd.f32 %v7422, %v8200
        %v8202 = vpop.f32.mrb[0].mxu0
        %8203 = vmatprep.mubr.bf16.mxu0 %v7316
        %8204 = vmatmul.mubr.bf16.gmra.mrb[0].mxu0 %v7315
        %v8205 = vpop.f32.mrb[0].mxu0
        %v8206 = vadd.f32 %v7422, %v8205
        %v8207 = vpop.f32.mrb[0].mxu0
        %v8208 = vpop.f32.mrb[0].mxu0
        %v8209 = vadd.f32 %v7422, %v8208
        %v8210 = vpop.f32.mrb[0].mxu0
        %8211 = vmatprep.mubr.bf16.mxu0 %v7318
        %8212 = vmatmul.mubr.bf16.gmra.mrb[0].mxu0 %v7317
        %v8213 = vpop.f32.mrb[0].mxu0
        %v8214 = vadd.f32 %v7422, %v8213
        %v8215 = vpop.f32.mrb[0].mxu0
        %v8216 = vpop.f32.mrb[0].mxu0
        %v8217 = vadd.f32 %v7422, %v8216
        %v8218 = vpop.f32.mrb[0].mxu0
        %8219 = vmatprep.mubr.bf16.mxu0 %v7320
        %8220 = vmatmul.mubr.bf16.gmra.mrb[0].mxu0 %v7319
        %v8221 = vpop.f32.mrb[0].mxu0
        %v8222 = vadd.f32 %v7422, %v8221
        %v8223 = vpop.f32.mrb[0].mxu0
        %v8224 = vpop.f32.mrb[0].mxu0
        %v8225 = vadd.f32 %v7422, %v8224
        %v8226 = vpop.f32.mrb[0].mxu0
        %8227 = vmatprep.mubr.bf16.mxu0 %v7322
        %8228 = vmatmul.mubr.bf16.gmra.mrb[0].mxu0 %v7321
        %v8229 = vpop.f32.mrb[0].mxu0
        %v8230 = vadd.f32 %v7422, %v8229
        %v8231 = vpop.f32.mrb[0].mxu0
        %v8232 = vpop.f32.mrb[0].mxu0
        %v8233 = vadd.f32 %v7422, %v8232
        %v8234 = vpop.f32.mrb[0].mxu0
        %8235 = vmatprep.mubr.bf16.mxu0 %v7324
        %8236 = vmatmul.mubr.bf16.gmra.mrb[0].mxu0 %v7323
        %v8237 = vpop.f32.mrb[0].mxu0
        %v8238 = vadd.f32 %v7422, %v8237
        %v8239 = vpop.f32.mrb[0].mxu0
        %v8240 = vpop.f32.mrb[0].mxu0
        %v8241 = vadd.f32 %v7422, %v8240
        %v8242 = vpop.f32.mrb[0].mxu0
        %8243 = vmatprep.mubr.bf16.mxu0 %v7326
        %8244 = vmatmul.mubr.bf16.gmra.mrb[0].mxu0 %v7325
        %v8245 = vpop.f32.mrb[0].mxu0
        %v8246 = vadd.f32 %v7422, %v8245
        %v8247 = vpop.f32.mrb[0].mxu0
        %v8248 = vpop.f32.mrb[0].mxu0
        %v8249 = vadd.f32 %v7422, %v8248
        %v8250 = vpop.f32.mrb[0].mxu0
        %8251 = vmatprep.mubr.bf16.mxu0 %v7328
        %8252 = vmatmul.mubr.bf16.gmra.mrb[0].mxu0 %v7327
        %v8253 = vpop.f32.mrb[0].mxu0
        %v8254 = vadd.f32 %v7422, %v8253
        %v8255 = vpop.f32.mrb[0].mxu0
        %v8256 = vpop.f32.mrb[0].mxu0
        %v8257 = vadd.f32 %v7422, %v8256
        %v8258 = vpop.f32.mrb[0].mxu0
        %8259 = vmatprep.mubr.bf16.mxu0 %v7330
        %8260 = vmatmul.mubr.bf16.gmra.mrb[0].mxu0 %v7329
        %v8261 = vpop.f32.mrb[0].mxu0
        %v8262 = vadd.f32 %v7422, %v8261
        %v8263 = vpop.f32.mrb[0].mxu0
        %v8264 = vpop.f32.mrb[0].mxu0
        %v8265 = vadd.f32 %v7422, %v8264
        %v8266 = vpop.f32.mrb[0].mxu0
        %8267 = vmatprep.mubr.bf16.mxu0 %v7332
        %8268 = vmatmul.mubr.bf16.gmra.mrb[0].mxu0 %v7331
        %v8269 = vpop.f32.mrb[0].mxu0
        %v8270 = vadd.f32 %v7422, %v8269
        %v8271 = vpop.f32.mrb[0].mxu0
        %v8272 = vpop.f32.mrb[0].mxu0
        %v8273 = vadd.f32 %v7422, %v8272
        %v8274 = vpop.f32.mrb[0].mxu0
        %8275 = vmatprep.mubr.bf16.mxu0 %v7334
        %8276 = vmatmul.mubr.bf16.gmra.mrb[0].mxu0 %v7333
        %v8277 = vpop.f32.mrb[0].mxu0
        %v8278 = vadd.f32 %v7422, %v8277
        %v8279 = vpop.f32.mrb[0].mxu0
        %v8280 = vpop.f32.mrb[0].mxu0
        %v8281 = vadd.f32 %v7422, %v8280
        %v8282 = vpop.f32.mrb[0].mxu0
        %8283 = vmatprep.mubr.bf16.mxu0 %v7336
        %8284 = vmatmul.mubr.bf16.gmra.mrb[0].mxu0 %v7335
        %v8285 = vpop.f32.mrb[0].mxu0
        %v8286 = vadd.f32 %v7422, %v8285
        %v8287 = vpop.f32.mrb[0].mxu0
        %v8288 = vpop.f32.mrb[0].mxu0
        %v8289 = vadd.f32 %v7422, %v8288
        %v8290 = vpop.f32.mrb[0].mxu0
        %8291 = vmatprep.mubr.bf16.mxu0 %v7338
        %8292 = vmatmul.mubr.bf16.gmra.mrb[0].mxu0 %v7337
        %v8293 = vpop.f32.mrb[0].mxu0
        %v8294 = vadd.f32 %v7422, %v8293
        %v8295 = vpop.f32.mrb[0].mxu0
        %v8296 = vpop.f32.mrb[0].mxu0
        %v8297 = vadd.f32 %v7422, %v8296
        %v8298 = vpop.f32.mrb[0].mxu0
        %8299 = vmatprep.mubr.bf16.mxu0 %v7340
        %8300 = vmatmul.mubr.bf16.gmra.mrb[0].mxu0 %v7339
        %v8301 = vpop.f32.mrb[0].mxu0
        %v8302 = vadd.f32 %v7422, %v8301
        %v8303 = vpop.f32.mrb[0].mxu0
        %v8304 = vpop.f32.mrb[0].mxu0
        %v8305 = vadd.f32 %v7422, %v8304
        %v8306 = vpop.f32.mrb[0].mxu0
        %8307 = vmatprep.mubr.bf16.mxu0 %v7342
        %8308 = vmatmul.mubr.bf16.gmra.mrb[0].mxu0 %v7341
        %v8309 = vpop.f32.mrb[0].mxu0
        %v8310 = vadd.f32 %v7422, %v8309
        %v8311 = vpop.f32.mrb[0].mxu0
        %v8312 = vpop.f32.mrb[0].mxu0
        %v8313 = vadd.f32 %v7422, %v8312
        %v8314 = vpop.f32.mrb[0].mxu0
        %8315 = vmatprep.mubr.bf16.mxu0 %v7344
        %8316 = vmatmul.mubr.bf16.gmra.mrb[0].mxu0 %v7343
        %v8317 = vpop.f32.mrb[0].mxu0
        %v8318 = vadd.f32 %v7422, %v8317
        %v8319 = vpop.f32.mrb[0].mxu0
        %v8320 = vpop.f32.mrb[0].mxu0
        %v8321 = vadd.f32 %v7422, %v8320
        %v8322 = vpop.f32.mrb[0].mxu0
        %8323 = vdwg.mxu0
        %v8324 = vmax.f32 %v7717, 0.0
        %v8325 = vmax.f32 %v7719, 0.0
        %v8326 = vmax.f32 %v8070, 0.0
        %v8327 = vmax.f32 %v7721, 0.0
        %v8328 = vmax.f32 %v7723, 0.0
        %v8329 = vmax.f32 %v8073, 0.0
        %v8330 = vmax.f32 %v7727, 0.0
        %v8331 = vmax.f32 %v7729, 0.0
        %v8332 = vmax.f32 %v8078, 0.0
        %v8333 = vmax.f32 %v7731, 0.0
        %v8334 = vmax.f32 %v7733, 0.0
        %v8335 = vmax.f32 %v8081, 0.0
        %v8336 = vmax.f32 %v7737, 0.0
        %v8337 = vmax.f32 %v7739, 0.0
        %v8338 = vmax.f32 %v8086, 0.0
        %v8339 = vmax.f32 %v7741, 0.0
        %v8340 = vmax.f32 %v7743, 0.0
        %v8341 = vmax.f32 %v8089, 0.0
        %v8342 = vmax.f32 %v7747, 0.0
        %v8343 = vmax.f32 %v7749, 0.0
        %v8344 = vmax.f32 %v8094, 0.0
        %v8345 = vmax.f32 %v7751, 0.0
        %v8346 = vmax.f32 %v7753, 0.0
        %v8347 = vmax.f32 %v8097, 0.0
        %v8348 = vmax.f32 %v7757, 0.0
        %v8349 = vmax.f32 %v7759, 0.0
        %v8350 = vmax.f32 %v8102, 0.0
        %v8351 = vmax.f32 %v7761, 0.0
        %v8352 = vmax.f32 %v7763, 0.0
        %v8353 = vmax.f32 %v8105, 0.0
        %v8354 = vmax.f32 %v7767, 0.0
        %v8355 = vmax.f32 %v7769, 0.0
        %v8356 = vmax.f32 %v8110, 0.0
        %v8357 = vmax.f32 %v7771, 0.0
        %v8358 = vmax.f32 %v7773, 0.0
        %v8359 = vmax.f32 %v8113, 0.0
        %v8360 = vmax.f32 %v7777, 0.0
        %v8361 = vmax.f32 %v7779, 0.0
        %v8362 = vmax.f32 %v8118, 0.0
        %v8363 = vmax.f32 %v7781, 0.0
        %v8364 = vmax.f32 %v7783, 0.0
        %v8365 = vmax.f32 %v8121, 0.0
        %v8366 = vmax.f32 %v7787, 0.0
        %v8367 = vmax.f32 %v7789, 0.0
        %v8368 = vmax.f32 %v8126, 0.0
        %v8369 = vmax.f32 %v7791, 0.0
        %v8370 = vmax.f32 %v7793, 0.0
        %v8371 = vmax.f32 %v8129, 0.0
        %v8372 = vmax.f32 %v7797, 0.0
        %v8373 = vmax.f32 %v7799, 0.0
        %v8374 = vmax.f32 %v8134, 0.0
        %v8375 = vmax.f32 %v7801, 0.0
        %v8376 = vmax.f32 %v7803, 0.0
        %v8377 = vmax.f32 %v8137, 0.0
        %v8378 = vmax.f32 %v7807, 0.0
        %v8379 = vmax.f32 %v7809, 0.0
        %v8380 = vmax.f32 %v8142, 0.0
        %v8381 = vmax.f32 %v7811, 0.0
        %v8382 = vmax.f32 %v7813, 0.0
        %v8383 = vmax.f32 %v8145, 0.0
        %v8384 = vmax.f32 %v7817, 0.0
        %v8385 = vmax.f32 %v7819, 0.0
        %v8386 = vmax.f32 %v8150, 0.0
        %v8387 = vmax.f32 %v7821, 0.0
        %v8388 = vmax.f32 %v7823, 0.0
        %v8389 = vmax.f32 %v8153, 0.0
        %v8390 = vmax.f32 %v7827, 0.0
        %v8391 = vmax.f32 %v7829, 0.0
        %v8392 = vmax.f32 %v8158, 0.0
        %v8393 = vmax.f32 %v7831, 0.0
        %v8394 = vmax.f32 %v7833, 0.0
        %v8395 = vmax.f32 %v8161, 0.0
        %v8396 = vmax.f32 %v7837, 0.0
        %v8397 = vmax.f32 %v7839, 0.0
        %v8398 = vmax.f32 %v8166, 0.0
        %v8399 = vmax.f32 %v7841, 0.0
        %v8400 = vmax.f32 %v7843, 0.0
        %v8401 = vmax.f32 %v8169, 0.0
        %v8402 = vmax.f32 %v7847, 0.0
        %v8403 = vmax.f32 %v7849, 0.0
        %v8404 = vmax.f32 %v8174, 0.0
        %v8405 = vmax.f32 %v7851, 0.0
        %v8406 = vmax.f32 %v7853, 0.0
        %v8407 = vmax.f32 %v8177, 0.0
        %v8408 = vmax.f32 %v7857, 0.0
        %v8409 = vmax.f32 %v7859, 0.0
        %v8410 = vmax.f32 %v8182, 0.0
        %v8411 = vmax.f32 %v7861, 0.0
        %v8412 = vmax.f32 %v7863, 0.0
        %v8413 = vmax.f32 %v8185, 0.0
        %v8414 = vmax.f32 %v7867, 0.0
        %v8415 = vmax.f32 %v7869, 0.0
        %v8416 = vmax.f32 %v8190, 0.0
        %v8417 = vmax.f32 %v7871, 0.0
        %v8418 = vmax.f32 %v7873, 0.0
        %v8419 = vmax.f32 %v8193, 0.0
        %v8420 = vmax.f32 %v7877, 0.0
        %v8421 = vmax.f32 %v7879, 0.0
        %v8422 = vmax.f32 %v8198, 0.0
        %v8423 = vmax.f32 %v7881, 0.0
        %v8424 = vmax.f32 %v7883, 0.0
        %v8425 = vmax.f32 %v8201, 0.0
        %v8426 = vmax.f32 %v7887, 0.0
        %v8427 = vmax.f32 %v7889, 0.0
        %v8428 = vmax.f32 %v8206, 0.0
        %v8429 = vmax.f32 %v7891, 0.0
        %v8430 = vmax.f32 %v7893, 0.0
        %v8431 = vmax.f32 %v8209, 0.0
        %v8432 = vmax.f32 %v7897, 0.0
        %v8433 = vmax.f32 %v7899, 0.0
        %v8434 = vmax.f32 %v8214, 0.0
        %v8435 = vmax.f32 %v7901, 0.0
        %v8436 = vmax.f32 %v7903, 0.0
        %v8437 = vmax.f32 %v8217, 0.0
        %v8438 = vmax.f32 %v7907, 0.0
        %v8439 = vmax.f32 %v7909, 0.0
        %v8440 = vmax.f32 %v8222, 0.0
        %v8441 = vmax.f32 %v7911, 0.0
        %v8442 = vmax.f32 %v7913, 0.0
        %v8443 = vmax.f32 %v8225, 0.0
        %v8444 = vmax.f32 %v7917, 0.0
        %v8445 = vmax.f32 %v7919, 0.0
        %v8446 = vmax.f32 %v8230, 0.0
        %v8447 = vmax.f32 %v7921, 0.0
        %v8448 = vmax.f32 %v7923, 0.0
        %v8449 = vmax.f32 %v8233, 0.0
        %v8450 = vmax.f32 %v7927, 0.0
        %v8451 = vmax.f32 %v7929, 0.0
        %v8452 = vmax.f32 %v8238, 0.0
        %v8453 = vmax.f32 %v7931, 0.0
        %v8454 = vmax.f32 %v7933, 0.0
        %v8455 = vmax.f32 %v8241, 0.0
        %v8456 = vmax.f32 %v7937, 0.0
        %v8457 = vmax.f32 %v7939, 0.0
        %v8458 = vmax.f32 %v8246, 0.0
        %v8459 = vmax.f32 %v7941, 0.0
        %v8460 = vmax.f32 %v7943, 0.0
        %v8461 = vmax.f32 %v8249, 0.0
        %v8462 = vmax.f32 %v7947, 0.0
        %v8463 = vmax.f32 %v7949, 0.0
        %v8464 = vmax.f32 %v8254, 0.0
        %v8465 = vmax.f32 %v7951, 0.0
        %v8466 = vmax.f32 %v7953, 0.0
        %v8467 = vmax.f32 %v8257, 0.0
        %v8468 = vmax.f32 %v7957, 0.0
        %v8469 = vmax.f32 %v7959, 0.0
        %v8470 = vmax.f32 %v8262, 0.0
        %v8471 = vmax.f32 %v7961, 0.0
        %v8472 = vmax.f32 %v7963, 0.0
        %v8473 = vmax.f32 %v8265, 0.0
        %v8474 = vmax.f32 %v7967, 0.0
        %v8475 = vmax.f32 %v7969, 0.0
        %v8476 = vmax.f32 %v8270, 0.0
        %v8477 = vmax.f32 %v7971, 0.0
        %v8478 = vmax.f32 %v7973, 0.0
        %v8479 = vmax.f32 %v8273, 0.0
        %v8480 = vmax.f32 %v7977, 0.0
        %v8481 = vmax.f32 %v7979, 0.0
        %v8482 = vmax.f32 %v8278, 0.0
        %v8483 = vmax.f32 %v7981, 0.0
        %v8484 = vmax.f32 %v7983, 0.0
        %v8485 = vmax.f32 %v8281, 0.0
        %v8486 = vmax.f32 %v7987, 0.0
        %v8487 = vmax.f32 %v7989, 0.0
        %v8488 = vmax.f32 %v8286, 0.0
        %v8489 = vmax.f32 %v7991, 0.0
        %v8490 = vmax.f32 %v7993, 0.0
        %v8491 = vmax.f32 %v8289, 0.0
        %v8492 = vmax.f32 %v7997, 0.0
        %v8493 = vmax.f32 %v7999, 0.0
        %v8494 = vmax.f32 %v8294, 0.0
        %v8495 = vmax.f32 %v8001, 0.0
        %v8496 = vmax.f32 %v8003, 0.0
        %v8497 = vmax.f32 %v8297, 0.0
        %v8498 = vmax.f32 %v8007, 0.0
        %v8499 = vmax.f32 %v8009, 0.0
        %v8500 = vmax.f32 %v8302, 0.0
        %v8501 = vmax.f32 %v8011, 0.0
        %v8502 = vmax.f32 %v8013, 0.0
        %v8503 = vmax.f32 %v8305, 0.0
        %v8504 = vmax.f32 %v8017, 0.0
        %v8505 = vmax.f32 %v8019, 0.0
        %v8506 = vmax.f32 %v8310, 0.0
        %v8507 = vmax.f32 %v8021, 0.0
        %v8508 = vmax.f32 %v8023, 0.0
        %v8509 = vmax.f32 %v8313, 0.0
        %v8510 = vmax.f32 %v8027, 0.0
        %v8511 = vmax.f32 %v8029, 0.0
        %v8512 = vmax.f32 %v8318, 0.0
        %v8513 = vmax.f32 %v8031, 0.0
        %v8514 = vmax.f32 %v8033, 0.0
        %v8515 = vmax.f32 %v8321, 0.0
        %v8516 = vpack.c.bf16 %v8327, %v8324
        %v8517 = vpack.c.bf16 %v8328, %v8325
        %v8518 = vpack.c.bf16 %v8329, %v8326
        %v8519 = vpack.c.bf16 %v8333, %v8330
        %v8520 = vpack.c.bf16 %v8334, %v8331
        %v8521 = vpack.c.bf16 %v8335, %v8332
        %v8522 = vpack.c.bf16 %v8339, %v8336
        %v8523 = vpack.c.bf16 %v8340, %v8337
        %v8524 = vpack.c.bf16 %v8341, %v8338
        %v8525 = vpack.c.bf16 %v8345, %v8342
        %v8526 = vpack.c.bf16 %v8346, %v8343
        %v8527 = vpack.c.bf16 %v8347, %v8344
        %v8528 = vpack.c.bf16 %v8351, %v8348
        %v8529 = vpack.c.bf16 %v8352, %v8349
        %v8530 = vpack.c.bf16 %v8353, %v8350
        %v8531 = vpack.c.bf16 %v8357, %v8354
        %v8532 = vpack.c.bf16 %v8358, %v8355
        %v8533 = vpack.c.bf16 %v8359, %v8356
        %v8534 = vpack.c.bf16 %v8363, %v8360
        %v8535 = vpack.c.bf16 %v8364, %v8361
        %v8536 = vpack.c.bf16 %v8365, %v8362
        %v8537 = vpack.c.bf16 %v8369, %v8366
        %v8538 = vpack.c.bf16 %v8370, %v8367
        %v8539 = vpack.c.bf16 %v8371, %v8368
        %v8540 = vpack.c.bf16 %v8375, %v8372
        %v8541 = vpack.c.bf16 %v8376, %v8373
        %v8542 = vpack.c.bf16 %v8377, %v8374
        %v8543 = vpack.c.bf16 %v8381, %v8378
        %v8544 = vpack.c.bf16 %v8382, %v8379
        %v8545 = vpack.c.bf16 %v8383, %v8380
        %v8546 = vpack.c.bf16 %v8387, %v8384
        %v8547 = vpack.c.bf16 %v8388, %v8385
        %v8548 = vpack.c.bf16 %v8389, %v8386
        %v8549 = vpack.c.bf16 %v8393, %v8390
        %v8550 = vpack.c.bf16 %v8394, %v8391
        %v8551 = vpack.c.bf16 %v8395, %v8392
        %v8552 = vpack.c.bf16 %v8399, %v8396
        %v8553 = vpack.c.bf16 %v8400, %v8397
        %v8554 = vpack.c.bf16 %v8401, %v8398
        %v8555 = vpack.c.bf16 %v8405, %v8402
        %v8556 = vpack.c.bf16 %v8406, %v8403
        %v8557 = vpack.c.bf16 %v8407, %v8404
        %v8558 = vpack.c.bf16 %v8411, %v8408
        %v8559 = vpack.c.bf16 %v8412, %v8409
        %v8560 = vpack.c.bf16 %v8413, %v8410
        %v8561 = vpack.c.bf16 %v8417, %v8414
        %v8562 = vpack.c.bf16 %v8418, %v8415
        %v8563 = vpack.c.bf16 %v8419, %v8416
        %v8564 = vpack.c.bf16 %v8423, %v8420
        %v8565 = vpack.c.bf16 %v8424, %v8421
        %v8566 = vpack.c.bf16 %v8425, %v8422
        %v8567 = vpack.c.bf16 %v8429, %v8426
        %v8568 = vpack.c.bf16 %v8430, %v8427
        %v8569 = vpack.c.bf16 %v8431, %v8428
        %v8570 = vpack.c.bf16 %v8435, %v8432
        %v8571 = vpack.c.bf16 %v8436, %v8433
        %v8572 = vpack.c.bf16 %v8437, %v8434
        %v8573 = vpack.c.bf16 %v8441, %v8438
        %v8574 = vpack.c.bf16 %v8442, %v8439
        %v8575 = vpack.c.bf16 %v8443, %v8440
        %v8576 = vpack.c.bf16 %v8447, %v8444
        %v8577 = vpack.c.bf16 %v8448, %v8445
        %v8578 = vpack.c.bf16 %v8449, %v8446
        %v8579 = vpack.c.bf16 %v8453, %v8450
        %v8580 = vpack.c.bf16 %v8454, %v8451
        %v8581 = vpack.c.bf16 %v8455, %v8452
        %v8582 = vpack.c.bf16 %v8459, %v8456
        %v8583 = vpack.c.bf16 %v8460, %v8457
        %v8584 = vpack.c.bf16 %v8461, %v8458
        %v8585 = vpack.c.bf16 %v8465, %v8462
        %v8586 = vpack.c.bf16 %v8466, %v8463
        %v8587 = vpack.c.bf16 %v8467, %v8464
        %v8588 = vpack.c.bf16 %v8471, %v8468
        %v8589 = vpack.c.bf16 %v8472, %v8469
        %v8590 = vpack.c.bf16 %v8473, %v8470
        %v8591 = vpack.c.bf16 %v8477, %v8474
        %v8592 = vpack.c.bf16 %v8478, %v8475
        %v8593 = vpack.c.bf16 %v8479, %v8476
        %v8594 = vpack.c.bf16 %v8483, %v8480
        %v8595 = vpack.c.bf16 %v8484, %v8481
        %v8596 = vpack.c.bf16 %v8485, %v8482
        %v8597 = vpack.c.bf16 %v8489, %v8486
        %v8598 = vpack.c.bf16 %v8490, %v8487
        %v8599 = vpack.c.bf16 %v8491, %v8488
        %v8600 = vpack.c.bf16 %v8495, %v8492
        %v8601 = vpack.c.bf16 %v8496, %v8493
        %v8602 = vpack.c.bf16 %v8497, %v8494
        %v8603 = vpack.c.bf16 %v8501, %v8498
        %v8604 = vpack.c.bf16 %v8502, %v8499
        %v8605 = vpack.c.bf16 %v8503, %v8500
        %v8606 = vpack.c.bf16 %v8507, %v8504
        %v8607 = vpack.c.bf16 %v8508, %v8505
        %v8608 = vpack.c.bf16 %v8509, %v8506
        %v8609 = vpack.c.bf16 %v8513, %v8510
        %v8610 = vpack.c.bf16 %v8514, %v8511
        %v8611 = vpack.c.bf16 %v8515, %v8512
        %v8612 = vld [vmem:[#allocation10] sm:$0xff]
        %v8613 = vld [vmem:[#allocation10 + $0x8] sm:$0xf]
        %v8614 = vld [vmem:[#allocation10 + $0xc] sm:$0xff]
        %v8615 = vld [vmem:[#allocation10 + $0x14] sm:$0xf]
        %v8616 = vld [vmem:[#allocation10 + $0x18] sm:$0xff]
        %v8617 = vld [vmem:[#allocation10 + $0x20] sm:$0xf]
        %v8618 = vld [vmem:[#allocation10 + $0x24] sm:$0xff]
        %v8619 = vld [vmem:[#allocation10 + $0x2c] sm:$0xf]
        %v8620 = vld [vmem:[#allocation10 + $0x30] sm:$0xff]
        %v8621 = vld [vmem:[#allocation10 + $0x38] sm:$0xf]
        %v8622 = vld [vmem:[#allocation10 + $0x3c] sm:$0xff]
        %v8623 = vld [vmem:[#allocation10 + $0x44] sm:$0xf]
        %v8624 = vld [vmem:[#allocation10 + $0x48] sm:$0xff]
        %v8625 = vld [vmem:[#allocation10 + $0x50] sm:$0xf]
        %v8626 = vld [vmem:[#allocation10 + $0x54] sm:$0xff]
        %v8627 = vld [vmem:[#allocation10 + $0x5c] sm:$0xf]
        %v8628 = vld [vmem:[#allocation10 + $0x60] sm:$0xff]
        %v8629 = vld [vmem:[#allocation10 + $0x68] sm:$0xf]
        %v8630 = vld [vmem:[#allocation10 + $0x6c] sm:$0xff]
        %v8631 = vld [vmem:[#allocation10 + $0x74] sm:$0xf]
        %v8632 = vld [vmem:[#allocation10 + $0x78] sm:$0xff]
        %v8633 = vld [vmem:[#allocation10 + $0x80] sm:$0xf]
        %v8634 = vld [vmem:[#allocation10 + $0x84] sm:$0xff]
        %v8635 = vld [vmem:[#allocation10 + $0x8c] sm:$0xf]
        %v8636 = vld [vmem:[#allocation10 + $0x90] sm:$0xff]
        %v8637 = vld [vmem:[#allocation10 + $0x98] sm:$0xf]
        %v8638 = vld [vmem:[#allocation10 + $0x9c] sm:$0xff]
        %v8639 = vld [vmem:[#allocation10 + $0xa4] sm:$0xf]
        %v8640 = vld [vmem:[#allocation10 + $0xa8] sm:$0xff]
        %v8641 = vld [vmem:[#allocation10 + $0xb0] sm:$0xf]
        %v8642 = vld [vmem:[#allocation10 + $0xb4] sm:$0xff]
        %v8643 = vld [vmem:[#allocation10 + $0xbc] sm:$0xf]
        %v8644 = vld [vmem:[#allocation10 + $0xc0] sm:$0xff]
        %v8645 = vld [vmem:[#allocation10 + $0xc8] sm:$0xf]
        %v8646 = vld [vmem:[#allocation10 + $0xcc] sm:$0xff]
        %v8647 = vld [vmem:[#allocation10 + $0xd4] sm:$0xf]
        %v8648 = vld [vmem:[#allocation10 + $0xd8] sm:$0xff]
        %v8649 = vld [vmem:[#allocation10 + $0xe0] sm:$0xf]
        %v8650 = vld [vmem:[#allocation10 + $0xe4] sm:$0xff]
        %v8651 = vld [vmem:[#allocation10 + $0xec] sm:$0xf]
        %v8652 = vld [vmem:[#allocation10 + $0xf0] sm:$0xff]
        %v8653 = vld [vmem:[#allocation10 + $0xf8] sm:$0xf]
        %v8654 = vld [vmem:[#allocation10 + $0xfc] sm:$0xff]
        %v8655 = vld [vmem:[#allocation10 + $0x104] sm:$0xf]
        %v8656 = vld [vmem:[#allocation10 + $0x108] sm:$0xff]
        %v8657 = vld [vmem:[#allocation10 + $0x110] sm:$0xf]
        %v8658 = vld [vmem:[#allocation10 + $0x114] sm:$0xff]
        %v8659 = vld [vmem:[#allocation10 + $0x11c] sm:$0xf]
        %v8660 = vld [vmem:[#allocation10 + $0x120] sm:$0xff]
        %v8661 = vld [vmem:[#allocation10 + $0x128] sm:$0xf]
        %v8662 = vld [vmem:[#allocation10 + $0x12c] sm:$0xff]
        %v8663 = vld [vmem:[#allocation10 + $0x134] sm:$0xf]
        %v8664 = vld [vmem:[#allocation10 + $0x138] sm:$0xff]
        %v8665 = vld [vmem:[#allocation10 + $0x140] sm:$0xf]
        %v8666 = vld [vmem:[#allocation10 + $0x144] sm:$0xff]
        %v8667 = vld [vmem:[#allocation10 + $0x14c] sm:$0xf]
        %v8668 = vld [vmem:[#allocation10 + $0x150] sm:$0xff]
        %v8669 = vld [vmem:[#allocation10 + $0x158] sm:$0xf]
        %v8670 = vld [vmem:[#allocation10 + $0x15c] sm:$0xff]
        %v8671 = vld [vmem:[#allocation10 + $0x164] sm:$0xf]
        %v8672 = vld [vmem:[#allocation10 + $0x168] sm:$0xff]
        %v8673 = vld [vmem:[#allocation10 + $0x170] sm:$0xf]
        %v8674 = vld [vmem:[#allocation10 + $0x174] sm:$0xff]
        %v8675 = vld [vmem:[#allocation10 + $0x17c] sm:$0xf]
        %v8676 = vld [vmem:[#allocation10 + $0x180] sm:$0xff]
        %v8677 = vld [vmem:[#allocation10 + $0x188] sm:$0xf]
        %v8678 = vld [vmem:[#allocation10 + $0x18c] sm:$0xff]
        %v8679 = vld [vmem:[#allocation10 + $0x194] sm:$0xf]
        %v8680 = vld [vmem:[#allocation10 + $0x198] sm:$0xff]
        %v8681 = vld [vmem:[#allocation10 + $0x1a0] sm:$0xf]
        %v8682 = vld [vmem:[#allocation10 + $0x1a4] sm:$0xff]
        %v8683 = vld [vmem:[#allocation10 + $0x1ac] sm:$0xf]
        %v8684 = vld [vmem:[#allocation10 + $0x1b0] sm:$0xff]
        %v8685 = vld [vmem:[#allocation10 + $0x1b8] sm:$0xf]
        %v8686 = vld [vmem:[#allocation10 + $0x1bc] sm:$0xff]
        %v8687 = vld [vmem:[#allocation10 + $0x1c4] sm:$0xf]
        %v8688 = vld [vmem:[#allocation10 + $0x1c8] sm:$0xff]
        %v8689 = vld [vmem:[#allocation10 + $0x1d0] sm:$0xf]
        %v8690 = vld [vmem:[#allocation10 + $0x1d4] sm:$0xff]
        %v8691 = vld [vmem:[#allocation10 + $0x1dc] sm:$0xf]
        %v8692 = vld [vmem:[#allocation10 + $0x1e0] sm:$0xff]
        %v8693 = vld [vmem:[#allocation10 + $0x1e8] sm:$0xf]
        %v8694 = vld [vmem:[#allocation10 + $0x1ec] sm:$0xff]
        %v8695 = vld [vmem:[#allocation10 + $0x1f4] sm:$0xf]
        %v8696 = vld [vmem:[#allocation10 + $0x1f8] sm:$0xff]
        %v8697 = vld [vmem:[#allocation10 + $0x200] sm:$0xf]
        %v8698 = vld [vmem:[#allocation10 + $0x204] sm:$0xff]
        %v8699 = vld [vmem:[#allocation10 + $0x20c] sm:$0xf]
        %v8700 = vld [vmem:[#allocation10 + $0x210] sm:$0xff]
        %v8701 = vld [vmem:[#allocation10 + $0x218] sm:$0xf]
        %v8702 = vld [vmem:[#allocation10 + $0x21c] sm:$0xff]
        %v8703 = vld [vmem:[#allocation10 + $0x224] sm:$0xf]
        %v8704 = vld [vmem:[#allocation10 + $0x228] sm:$0xff]
        %v8705 = vld [vmem:[#allocation10 + $0x230] sm:$0xf]
        %v8706 = vld [vmem:[#allocation10 + $0x234] sm:$0xff]
        %v8707 = vld [vmem:[#allocation10 + $0x23c] sm:$0xf]
        %v8708 = vld [vmem:[%s14] sm:$0x7]
        %v8710 = vlaneseq
        %v8711 = vshrl.u32 %v8710, 7
        %v8712 = vsub.s32 0, %v8711
        %v8713 = vrot.slane %v8708, %v8712
        %v8714 = vlaneseq
        %v8715 = vshrl.u32 %v8714, 7
        %v8716 = vsub.s32 1, %v8715
        %v8717 = vrot.slane %v8708, %v8716
        %v8718 = vlaneseq
        %v8719 = vshrl.u32 %v8718, 7
        %v8720 = vsub.s32 2, %v8719
        %v8721 = vrot.slane %v8708, %v8720
        %v8821 = vunpack.c.l.b16 %v8612
        %v8822 = vunpack.c.h.b16 %v8612
        %v8823 = vunpack.c.l.b16 %v8613
        %v8824 = vunpack.c.l.b16 %v8614
        %v8825 = vunpack.c.h.b16 %v8614
        %v8826 = vunpack.c.l.b16 %v8615
        %v8827 = vunpack.c.l.b16 %v8616
        %v8828 = vunpack.c.h.b16 %v8616
        %v8829 = vunpack.c.l.b16 %v8617
        %v8830 = vunpack.c.l.b16 %v8618
        %v8831 = vunpack.c.h.b16 %v8618
        %v8832 = vunpack.c.l.b16 %v8619
        %v8833 = vunpack.c.l.b16 %v8620
        %v8834 = vunpack.c.h.b16 %v8620
        %v8835 = vunpack.c.l.b16 %v8621
        %v8836 = vunpack.c.l.b16 %v8622
        %v8837 = vunpack.c.h.b16 %v8622
        %v8838 = vunpack.c.l.b16 %v8623
        %v8839 = vunpack.c.l.b16 %v8624
        %v8840 = vunpack.c.h.b16 %v8624
        %v8841 = vunpack.c.l.b16 %v8625
        %v8842 = vunpack.c.l.b16 %v8626
        %v8843 = vunpack.c.h.b16 %v8626
        %v8844 = vunpack.c.l.b16 %v8627
        %v8845 = vunpack.c.l.b16 %v8628
        %v8846 = vunpack.c.h.b16 %v8628
        %v8847 = vunpack.c.l.b16 %v8629
        %v8848 = vunpack.c.l.b16 %v8630
        %v8849 = vunpack.c.h.b16 %v8630
        %v8850 = vunpack.c.l.b16 %v8631
        %v8851 = vunpack.c.l.b16 %v8632
        %v8852 = vunpack.c.h.b16 %v8632
        %v8853 = vunpack.c.l.b16 %v8633
        %v8854 = vunpack.c.l.b16 %v8634
        %v8855 = vunpack.c.h.b16 %v8634
        %v8856 = vunpack.c.l.b16 %v8635
        %v8857 = vunpack.c.l.b16 %v8636
        %v8858 = vunpack.c.h.b16 %v8636
        %v8859 = vunpack.c.l.b16 %v8637
        %v8860 = vunpack.c.l.b16 %v8638
        %v8861 = vunpack.c.h.b16 %v8638
        %v8862 = vunpack.c.l.b16 %v8639
        %v8863 = vunpack.c.l.b16 %v8640
        %v8864 = vunpack.c.h.b16 %v8640
        %v8865 = vunpack.c.l.b16 %v8641
        %v8866 = vunpack.c.l.b16 %v8642
        %v8867 = vunpack.c.h.b16 %v8642
        %v8868 = vunpack.c.l.b16 %v8643
        %v8869 = vunpack.c.l.b16 %v8644
        %v8870 = vunpack.c.h.b16 %v8644
        %v8871 = vunpack.c.l.b16 %v8645
        %v8872 = vunpack.c.l.b16 %v8646
        %v8873 = vunpack.c.h.b16 %v8646
        %v8874 = vunpack.c.l.b16 %v8647
        %v8875 = vunpack.c.l.b16 %v8648
        %v8876 = vunpack.c.h.b16 %v8648
        %v8877 = vunpack.c.l.b16 %v8649
        %v8878 = vunpack.c.l.b16 %v8650
        %v8879 = vunpack.c.h.b16 %v8650
        %v8880 = vunpack.c.l.b16 %v8651
        %v8881 = vunpack.c.l.b16 %v8652
        %v8882 = vunpack.c.h.b16 %v8652
        %v8883 = vunpack.c.l.b16 %v8653
        %v8884 = vunpack.c.l.b16 %v8654
        %v8885 = vunpack.c.h.b16 %v8654
        %v8886 = vunpack.c.l.b16 %v8655
        %v8887 = vunpack.c.l.b16 %v8656
        %v8888 = vunpack.c.h.b16 %v8656
        %v8889 = vunpack.c.l.b16 %v8657
        %v8890 = vunpack.c.l.b16 %v8658
        %v8891 = vunpack.c.h.b16 %v8658
        %v8892 = vunpack.c.l.b16 %v8659
        %v8893 = vunpack.c.l.b16 %v8660
        %v8894 = vunpack.c.h.b16 %v8660
        %v8895 = vunpack.c.l.b16 %v8661
        %v8896 = vunpack.c.l.b16 %v8662
        %v8897 = vunpack.c.h.b16 %v8662
        %v8898 = vunpack.c.l.b16 %v8663
        %v8899 = vunpack.c.l.b16 %v8664
        %v8900 = vunpack.c.h.b16 %v8664
        %v8901 = vunpack.c.l.b16 %v8665
        %v8902 = vunpack.c.l.b16 %v8666
        %v8903 = vunpack.c.h.b16 %v8666
        %v8904 = vunpack.c.l.b16 %v8667
        %v8905 = vunpack.c.l.b16 %v8668
        %v8906 = vunpack.c.h.b16 %v8668
        %v8907 = vunpack.c.l.b16 %v8669
        %v8908 = vunpack.c.l.b16 %v8670
        %v8909 = vunpack.c.h.b16 %v8670
        %v8910 = vunpack.c.l.b16 %v8671
        %v8911 = vunpack.c.l.b16 %v8672
        %v8912 = vunpack.c.h.b16 %v8672
        %v8913 = vunpack.c.l.b16 %v8673
        %v8914 = vunpack.c.l.b16 %v8674
        %v8915 = vunpack.c.h.b16 %v8674
        %v8916 = vunpack.c.l.b16 %v8675
        %v8917 = vunpack.c.l.b16 %v8676
        %v8918 = vunpack.c.h.b16 %v8676
        %v8919 = vunpack.c.l.b16 %v8677
        %v8920 = vunpack.c.l.b16 %v8678
        %v8921 = vunpack.c.h.b16 %v8678
        %v8922 = vunpack.c.l.b16 %v8679
        %v8923 = vunpack.c.l.b16 %v8680
        %v8924 = vunpack.c.h.b16 %v8680
        %v8925 = vunpack.c.l.b16 %v8681
        %v8926 = vunpack.c.l.b16 %v8682
        %v8927 = vunpack.c.h.b16 %v8682
        %v8928 = vunpack.c.l.b16 %v8683
        %v8929 = vunpack.c.l.b16 %v8684
        %v8930 = vunpack.c.h.b16 %v8684
        %v8931 = vunpack.c.l.b16 %v8685
        %v8932 = vunpack.c.l.b16 %v8686
        %v8933 = vunpack.c.h.b16 %v8686
        %v8934 = vunpack.c.l.b16 %v8687
        %v8935 = vunpack.c.l.b16 %v8688
        %v8936 = vunpack.c.h.b16 %v8688
        %v8937 = vunpack.c.l.b16 %v8689
        %v8938 = vunpack.c.l.b16 %v8690
        %v8939 = vunpack.c.h.b16 %v8690
        %v8940 = vunpack.c.l.b16 %v8691
        %v8941 = vunpack.c.l.b16 %v8692
        %v8942 = vunpack.c.h.b16 %v8692
        %v8943 = vunpack.c.l.b16 %v8693
        %v8944 = vunpack.c.l.b16 %v8694
        %v8945 = vunpack.c.h.b16 %v8694
        %v8946 = vunpack.c.l.b16 %v8695
        %v8947 = vunpack.c.l.b16 %v8696
        %v8948 = vunpack.c.h.b16 %v8696
        %v8949 = vunpack.c.l.b16 %v8697
        %v8950 = vunpack.c.l.b16 %v8698
        %v8951 = vunpack.c.h.b16 %v8698
        %v8952 = vunpack.c.l.b16 %v8699
        %v8953 = vunpack.c.l.b16 %v8700
        %v8954 = vunpack.c.h.b16 %v8700
        %v8955 = vunpack.c.l.b16 %v8701
        %v8956 = vunpack.c.l.b16 %v8702
        %v8957 = vunpack.c.h.b16 %v8702
        %v8958 = vunpack.c.l.b16 %v8703
        %v8959 = vunpack.c.l.b16 %v8704
        %v8960 = vunpack.c.h.b16 %v8704
        %v8961 = vunpack.c.l.b16 %v8705
        %v8962 = vunpack.c.l.b16 %v8706
        %v8963 = vunpack.c.h.b16 %v8706
        %v8964 = vunpack.c.l.b16 %v8707
        %v8965 = vpack.c.b16 %v8824, %v8821
        %v8966 = vpack.c.b16 %v8825, %v8822
        %v8967 = vpack.c.b16 %v8826, %v8823
        %v8968 = vpack.c.b16 %v8830, %v8827
        %v8969 = vpack.c.b16 %v8831, %v8828
        %v8970 = vpack.c.b16 %v8832, %v8829
        %v8971 = vpack.c.b16 %v8836, %v8833
        %v8972 = vpack.c.b16 %v8837, %v8834
        %v8973 = vpack.c.b16 %v8838, %v8835
        %v8974 = vpack.c.b16 %v8842, %v8839
        %v8975 = vpack.c.b16 %v8843, %v8840
        %v8976 = vpack.c.b16 %v8844, %v8841
        %v8977 = vpack.c.b16 %v8848, %v8845
        %v8978 = vpack.c.b16 %v8849, %v8846
        %v8979 = vpack.c.b16 %v8850, %v8847
        %v8980 = vpack.c.b16 %v8854, %v8851
        %v8981 = vpack.c.b16 %v8855, %v8852
        %v8982 = vpack.c.b16 %v8856, %v8853
        %v8983 = vpack.c.b16 %v8860, %v8857
        %v8984 = vpack.c.b16 %v8861, %v8858
        %v8985 = vpack.c.b16 %v8862, %v8859
        %v8986 = vpack.c.b16 %v8866, %v8863
        %v8987 = vpack.c.b16 %v8867, %v8864
        %v8988 = vpack.c.b16 %v8868, %v8865
        %v8989 = vpack.c.b16 %v8872, %v8869
        %v8990 = vpack.c.b16 %v8873, %v8870
        %v8991 = vpack.c.b16 %v8874, %v8871
        %v8992 = vpack.c.b16 %v8878, %v8875
        %v8993 = vpack.c.b16 %v8879, %v8876
        %v8994 = vpack.c.b16 %v8880, %v8877
        %v8995 = vpack.c.b16 %v8884, %v8881
        %v8996 = vpack.c.b16 %v8885, %v8882
        %v8997 = vpack.c.b16 %v8886, %v8883
        %v8998 = vpack.c.b16 %v8890, %v8887
        %v8999 = vpack.c.b16 %v8891, %v8888
        %v9000 = vpack.c.b16 %v8892, %v8889
        %v9001 = vpack.c.b16 %v8896, %v8893
        %v9002 = vpack.c.b16 %v8897, %v8894
        %v9003 = vpack.c.b16 %v8898, %v8895
        %v9004 = vpack.c.b16 %v8902, %v8899
        %v9005 = vpack.c.b16 %v8903, %v8900
        %v9006 = vpack.c.b16 %v8904, %v8901
        %v9007 = vpack.c.b16 %v8908, %v8905
        %v9008 = vpack.c.b16 %v8909, %v8906
        %v9009 = vpack.c.b16 %v8910, %v8907
        %v9010 = vpack.c.b16 %v8914, %v8911
        %v9011 = vpack.c.b16 %v8915, %v8912
        %v9012 = vpack.c.b16 %v8916, %v8913
        %v9013 = vpack.c.b16 %v8920, %v8917
        %v9014 = vpack.c.b16 %v8921, %v8918
        %v9015 = vpack.c.b16 %v8922, %v8919
        %v9016 = vpack.c.b16 %v8926, %v8923
        %v9017 = vpack.c.b16 %v8927, %v8924
        %v9018 = vpack.c.b16 %v8928, %v8925
        %v9019 = vpack.c.b16 %v8932, %v8929
        %v9020 = vpack.c.b16 %v8933, %v8930
        %v9021 = vpack.c.b16 %v8934, %v8931
        %v9022 = vpack.c.b16 %v8938, %v8935
        %v9023 = vpack.c.b16 %v8939, %v8936
        %v9024 = vpack.c.b16 %v8940, %v8937
        %v9025 = vpack.c.b16 %v8944, %v8941
        %v9026 = vpack.c.b16 %v8945, %v8942
        %v9027 = vpack.c.b16 %v8946, %v8943
        %v9028 = vpack.c.b16 %v8950, %v8947
        %v9029 = vpack.c.b16 %v8951, %v8948
        %v9030 = vpack.c.b16 %v8952, %v8949
        %v9031 = vpack.c.b16 %v8956, %v8953
        %v9032 = vpack.c.b16 %v8957, %v8954
        %v9033 = vpack.c.b16 %v8958, %v8955
        %v9034 = vpack.c.b16 %v8962, %v8959
        %v9035 = vpack.c.b16 %v8963, %v8960
        %v9036 = vpack.c.b16 %v8964, %v8961
        %9109 = vmatprep.subr.bf16.mxu0 %v8966
        %9110 = vmatpush1.bf16.msra.mxu0 %v8965
        %9111 = vmatprep.subr.bf16.mxu0 %v8969
        %9112 = vmatpush1.bf16.msra.mxu0 %v8968
        %9113 = vmatprep.subr.bf16.mxu0 %v8972
        %9114 = vmatpush1.bf16.msra.mxu0 %v8971
        %9115 = vmatprep.subr.bf16.mxu0 %v8975
        %9116 = vmatpush1.bf16.msra.mxu0 %v8974
        %9117 = vmatprep.subr.bf16.mxu0 %v8978
        %9118 = vmatpush1.bf16.msra.mxu0 %v8977
        %9119 = vmatprep.subr.bf16.mxu0 %v8981
        %9120 = vmatpush1.bf16.msra.mxu0 %v8980
        %9121 = vmatprep.subr.bf16.mxu0 %v8984
        %9122 = vmatpush1.bf16.msra.mxu0 %v8983
        %9123 = vmatprep.subr.bf16.mxu0 %v8987
        %9124 = vmatpush1.bf16.msra.mxu0 %v8986
        %9125 = vmatprep.subr.bf16.mxu0 %v8990
        %9126 = vmatpush1.bf16.msra.mxu0 %v8989
        %9127 = vmatprep.subr.bf16.mxu0 %v8993
        %9128 = vmatpush1.bf16.msra.mxu0 %v8992
        %9129 = vmatprep.subr.bf16.mxu0 %v8996
        %9130 = vmatpush1.bf16.msra.mxu0 %v8995
        %9131 = vmatprep.subr.bf16.mxu0 %v8999
        %9132 = vmatpush1.bf16.msra.mxu0 %v8998
        %9133 = vmatprep.subr.bf16.mxu0 %v9002
        %9134 = vmatpush1.bf16.msra.mxu0 %v9001
        %9135 = vmatprep.subr.bf16.mxu0 %v9005
        %9136 = vmatpush1.bf16.msra.mxu0 %v9004
        %9137 = vmatprep.subr.bf16.mxu0 %v9008
        %9138 = vmatpush1.bf16.msra.mxu0 %v9007
        %9139 = vmatprep.subr.bf16.mxu0 %v9011
        %9140 = vmatpush1.bf16.msra.mxu0 %v9010
        %9141 = vmatprep.mubr.bf16.mxu0 %v8517
        %9142 = vmatmul.mubr.bf16.gmra.mrb[0].mxu0 %v8516
        %v9143 = vpop.f32.mrb[0].mxu0
        %v9144 = vadd.f32 %v8713, %v9143
        %v9145 = vpop.f32.mrb[0].mxu0
        %v9146 = vadd.f32 %v8717, %v9145
        %v9147 = vpop.f32.mrb[0].mxu0
        %v9148 = vadd.f32 %v8713, %v9147
        %v9149 = vpop.f32.mrb[0].mxu0
        %v9150 = vadd.f32 %v8717, %v9149
        %9151 = vmatprep.mubr.bf16.mxu0 %v8520
        %9152 = vmatmul.mubr.bf16.gmra.mrb[0].mxu0 %v8519
        %v9153 = vpop.f32.mrb[0].mxu0
        %v9154 = vadd.f32 %v8713, %v9153
        %v9155 = vpop.f32.mrb[0].mxu0
        %v9156 = vadd.f32 %v8717, %v9155
        %v9157 = vpop.f32.mrb[0].mxu0
        %v9158 = vadd.f32 %v8713, %v9157
        %v9159 = vpop.f32.mrb[0].mxu0
        %v9160 = vadd.f32 %v8717, %v9159
        %9161 = vmatprep.mubr.bf16.mxu0 %v8523
        %9162 = vmatmul.mubr.bf16.gmra.mrb[0].mxu0 %v8522
        %v9163 = vpop.f32.mrb[0].mxu0
        %v9164 = vadd.f32 %v8713, %v9163
        %v9165 = vpop.f32.mrb[0].mxu0
        %v9166 = vadd.f32 %v8717, %v9165
        %v9167 = vpop.f32.mrb[0].mxu0
        %v9168 = vadd.f32 %v8713, %v9167
        %v9169 = vpop.f32.mrb[0].mxu0
        %v9170 = vadd.f32 %v8717, %v9169
        %9171 = vmatprep.mubr.bf16.mxu0 %v8526
        %9172 = vmatmul.mubr.bf16.gmra.mrb[0].mxu0 %v8525
        %v9173 = vpop.f32.mrb[0].mxu0
        %v9174 = vadd.f32 %v8713, %v9173
        %v9175 = vpop.f32.mrb[0].mxu0
        %v9176 = vadd.f32 %v8717, %v9175
        %v9177 = vpop.f32.mrb[0].mxu0
        %v9178 = vadd.f32 %v8713, %v9177
        %v9179 = vpop.f32.mrb[0].mxu0
        %v9180 = vadd.f32 %v8717, %v9179
        %9181 = vmatprep.mubr.bf16.mxu0 %v8529
        %9182 = vmatmul.mubr.bf16.gmra.mrb[0].mxu0 %v8528
        %v9183 = vpop.f32.mrb[0].mxu0
        %v9184 = vadd.f32 %v8713, %v9183
        %v9185 = vpop.f32.mrb[0].mxu0
        %v9186 = vadd.f32 %v8717, %v9185
        %v9187 = vpop.f32.mrb[0].mxu0
        %v9188 = vadd.f32 %v8713, %v9187
        %v9189 = vpop.f32.mrb[0].mxu0
        %v9190 = vadd.f32 %v8717, %v9189
        %9191 = vmatprep.mubr.bf16.mxu0 %v8532
        %9192 = vmatmul.mubr.bf16.gmra.mrb[0].mxu0 %v8531
        %v9193 = vpop.f32.mrb[0].mxu0
        %v9194 = vadd.f32 %v8713, %v9193
        %v9195 = vpop.f32.mrb[0].mxu0
        %v9196 = vadd.f32 %v8717, %v9195
        %v9197 = vpop.f32.mrb[0].mxu0
        %v9198 = vadd.f32 %v8713, %v9197
        %v9199 = vpop.f32.mrb[0].mxu0
        %v9200 = vadd.f32 %v8717, %v9199
        %9201 = vmatprep.mubr.bf16.mxu0 %v8535
        %9202 = vmatmul.mubr.bf16.gmra.mrb[0].mxu0 %v8534
        %v9203 = vpop.f32.mrb[0].mxu0
        %v9204 = vadd.f32 %v8713, %v9203
        %v9205 = vpop.f32.mrb[0].mxu0
        %v9206 = vadd.f32 %v8717, %v9205
        %v9207 = vpop.f32.mrb[0].mxu0
        %v9208 = vadd.f32 %v8713, %v9207
        %v9209 = vpop.f32.mrb[0].mxu0
        %v9210 = vadd.f32 %v8717, %v9209
        %9211 = vmatprep.mubr.bf16.mxu0 %v8538
        %9212 = vmatmul.mubr.bf16.gmra.mrb[0].mxu0 %v8537
        %v9213 = vpop.f32.mrb[0].mxu0
        %v9214 = vadd.f32 %v8713, %v9213
        %v9215 = vpop.f32.mrb[0].mxu0
        %v9216 = vadd.f32 %v8717, %v9215
        %v9217 = vpop.f32.mrb[0].mxu0
        %v9218 = vadd.f32 %v8713, %v9217
        %v9219 = vpop.f32.mrb[0].mxu0
        %v9220 = vadd.f32 %v8717, %v9219
        %9221 = vmatprep.mubr.bf16.mxu0 %v8541
        %9222 = vmatmul.mubr.bf16.gmra.mrb[0].mxu0 %v8540
        %v9223 = vpop.f32.mrb[0].mxu0
        %v9224 = vadd.f32 %v8713, %v9223
        %v9225 = vpop.f32.mrb[0].mxu0
        %v9226 = vadd.f32 %v8717, %v9225
        %v9227 = vpop.f32.mrb[0].mxu0
        %v9228 = vadd.f32 %v8713, %v9227
        %v9229 = vpop.f32.mrb[0].mxu0
        %v9230 = vadd.f32 %v8717, %v9229
        %9231 = vmatprep.mubr.bf16.mxu0 %v8544
        %9232 = vmatmul.mubr.bf16.gmra.mrb[0].mxu0 %v8543
        %v9233 = vpop.f32.mrb[0].mxu0
        %v9234 = vadd.f32 %v8713, %v9233
        %v9235 = vpop.f32.mrb[0].mxu0
        %v9236 = vadd.f32 %v8717, %v9235
        %v9237 = vpop.f32.mrb[0].mxu0
        %v9238 = vadd.f32 %v8713, %v9237
        %v9239 = vpop.f32.mrb[0].mxu0
        %v9240 = vadd.f32 %v8717, %v9239
        %9241 = vmatprep.mubr.bf16.mxu0 %v8547
        %9242 = vmatmul.mubr.bf16.gmra.mrb[0].mxu0 %v8546
        %v9243 = vpop.f32.mrb[0].mxu0
        %v9244 = vadd.f32 %v8713, %v9243
        %v9245 = vpop.f32.mrb[0].mxu0
        %v9246 = vadd.f32 %v8717, %v9245
        %v9247 = vpop.f32.mrb[0].mxu0
        %v9248 = vadd.f32 %v8713, %v9247
        %v9249 = vpop.f32.mrb[0].mxu0
        %v9250 = vadd.f32 %v8717, %v9249
        %9251 = vmatprep.mubr.bf16.mxu0 %v8550
        %9252 = vmatmul.mubr.bf16.gmra.mrb[0].mxu0 %v8549
        %v9253 = vpop.f32.mrb[0].mxu0
        %v9254 = vadd.f32 %v8713, %v9253
        %v9255 = vpop.f32.mrb[0].mxu0
        %v9256 = vadd.f32 %v8717, %v9255
        %v9257 = vpop.f32.mrb[0].mxu0
        %v9258 = vadd.f32 %v8713, %v9257
        %v9259 = vpop.f32.mrb[0].mxu0
        %v9260 = vadd.f32 %v8717, %v9259
        %9261 = vmatprep.mubr.bf16.mxu0 %v8553
        %9262 = vmatmul.mubr.bf16.gmra.mrb[0].mxu0 %v8552
        %v9263 = vpop.f32.mrb[0].mxu0
        %v9264 = vadd.f32 %v8713, %v9263
        %v9265 = vpop.f32.mrb[0].mxu0
        %v9266 = vadd.f32 %v8717, %v9265
        %v9267 = vpop.f32.mrb[0].mxu0
        %v9268 = vadd.f32 %v8713, %v9267
        %v9269 = vpop.f32.mrb[0].mxu0
        %v9270 = vadd.f32 %v8717, %v9269
        %9271 = vmatprep.mubr.bf16.mxu0 %v8556
        %9272 = vmatmul.mubr.bf16.gmra.mrb[0].mxu0 %v8555
        %v9273 = vpop.f32.mrb[0].mxu0
        %v9274 = vadd.f32 %v8713, %v9273
        %v9275 = vpop.f32.mrb[0].mxu0
        %v9276 = vadd.f32 %v8717, %v9275
        %v9277 = vpop.f32.mrb[0].mxu0
        %v9278 = vadd.f32 %v8713, %v9277
        %v9279 = vpop.f32.mrb[0].mxu0
        %v9280 = vadd.f32 %v8717, %v9279
        %9281 = vmatprep.mubr.bf16.mxu0 %v8559
        %9282 = vmatmul.mubr.bf16.gmra.mrb[0].mxu0 %v8558
        %v9283 = vpop.f32.mrb[0].mxu0
        %v9284 = vadd.f32 %v8713, %v9283
        %v9285 = vpop.f32.mrb[0].mxu0
        %v9286 = vadd.f32 %v8717, %v9285
        %v9287 = vpop.f32.mrb[0].mxu0
        %v9288 = vadd.f32 %v8713, %v9287
        %v9289 = vpop.f32.mrb[0].mxu0
        %v9290 = vadd.f32 %v8717, %v9289
        %9291 = vmatprep.mubr.bf16.mxu0 %v8562
        %9292 = vmatmul.mubr.bf16.gmra.mrb[0].mxu0 %v8561
        %v9293 = vpop.f32.mrb[0].mxu0
        %v9294 = vadd.f32 %v8713, %v9293
        %v9295 = vpop.f32.mrb[0].mxu0
        %v9296 = vadd.f32 %v8717, %v9295
        %v9297 = vpop.f32.mrb[0].mxu0
        %v9298 = vadd.f32 %v8713, %v9297
        %v9299 = vpop.f32.mrb[0].mxu0
        %v9300 = vadd.f32 %v8717, %v9299
        %9301 = vmatprep.mubr.bf16.mxu0 %v8565
        %9302 = vmatmul.mubr.bf16.gmra.mrb[0].mxu0 %v8564
        %v9303 = vpop.f32.mrb[0].mxu0
        %v9304 = vadd.f32 %v8713, %v9303
        %v9305 = vpop.f32.mrb[0].mxu0
        %v9306 = vadd.f32 %v8717, %v9305
        %v9307 = vpop.f32.mrb[0].mxu0
        %v9308 = vadd.f32 %v8713, %v9307
        %v9309 = vpop.f32.mrb[0].mxu0
        %v9310 = vadd.f32 %v8717, %v9309
        %9311 = vmatprep.mubr.bf16.mxu0 %v8568
        %9312 = vmatmul.mubr.bf16.gmra.mrb[0].mxu0 %v8567
        %v9313 = vpop.f32.mrb[0].mxu0
        %v9314 = vadd.f32 %v8713, %v9313
        %v9315 = vpop.f32.mrb[0].mxu0
        %v9316 = vadd.f32 %v8717, %v9315
        %v9317 = vpop.f32.mrb[0].mxu0
        %v9318 = vadd.f32 %v8713, %v9317
        %v9319 = vpop.f32.mrb[0].mxu0
        %v9320 = vadd.f32 %v8717, %v9319
        %9321 = vmatprep.mubr.bf16.mxu0 %v8571
        %9322 = vmatmul.mubr.bf16.gmra.mrb[0].mxu0 %v8570
        %v9323 = vpop.f32.mrb[0].mxu0
        %v9324 = vadd.f32 %v8713, %v9323
        %v9325 = vpop.f32.mrb[0].mxu0
        %v9326 = vadd.f32 %v8717, %v9325
        %v9327 = vpop.f32.mrb[0].mxu0
        %v9328 = vadd.f32 %v8713, %v9327
        %v9329 = vpop.f32.mrb[0].mxu0
        %v9330 = vadd.f32 %v8717, %v9329
        %9331 = vmatprep.mubr.bf16.mxu0 %v8574
        %9332 = vmatmul.mubr.bf16.gmra.mrb[0].mxu0 %v8573
        %v9333 = vpop.f32.mrb[0].mxu0
        %v9334 = vadd.f32 %v8713, %v9333
        %v9335 = vpop.f32.mrb[0].mxu0
        %v9336 = vadd.f32 %v8717, %v9335
        %v9337 = vpop.f32.mrb[0].mxu0
        %v9338 = vadd.f32 %v8713, %v9337
        %v9339 = vpop.f32.mrb[0].mxu0
        %v9340 = vadd.f32 %v8717, %v9339
        %9341 = vmatprep.mubr.bf16.mxu0 %v8577
        %9342 = vmatmul.mubr.bf16.gmra.mrb[0].mxu0 %v8576
        %v9343 = vpop.f32.mrb[0].mxu0
        %v9344 = vadd.f32 %v8713, %v9343
        %v9345 = vpop.f32.mrb[0].mxu0
        %v9346 = vadd.f32 %v8717, %v9345
        %v9347 = vpop.f32.mrb[0].mxu0
        %v9348 = vadd.f32 %v8713, %v9347
        %v9349 = vpop.f32.mrb[0].mxu0
        %v9350 = vadd.f32 %v8717, %v9349
        %9351 = vmatprep.mubr.bf16.mxu0 %v8580
        %9352 = vmatmul.mubr.bf16.gmra.mrb[0].mxu0 %v8579
        %v9353 = vpop.f32.mrb[0].mxu0
        %v9354 = vadd.f32 %v8713, %v9353
        %v9355 = vpop.f32.mrb[0].mxu0
        %v9356 = vadd.f32 %v8717, %v9355
        %v9357 = vpop.f32.mrb[0].mxu0
        %v9358 = vadd.f32 %v8713, %v9357
        %v9359 = vpop.f32.mrb[0].mxu0
        %v9360 = vadd.f32 %v8717, %v9359
        %9361 = vmatprep.mubr.bf16.mxu0 %v8583
        %9362 = vmatmul.mubr.bf16.gmra.mrb[0].mxu0 %v8582
        %v9363 = vpop.f32.mrb[0].mxu0
        %v9364 = vadd.f32 %v8713, %v9363
        %v9365 = vpop.f32.mrb[0].mxu0
        %v9366 = vadd.f32 %v8717, %v9365
        %v9367 = vpop.f32.mrb[0].mxu0
        %v9368 = vadd.f32 %v8713, %v9367
        %v9369 = vpop.f32.mrb[0].mxu0
        %v9370 = vadd.f32 %v8717, %v9369
        %9371 = vmatprep.mubr.bf16.mxu0 %v8586
        %9372 = vmatmul.mubr.bf16.gmra.mrb[0].mxu0 %v8585
        %v9373 = vpop.f32.mrb[0].mxu0
        %v9374 = vadd.f32 %v8713, %v9373
        %v9375 = vpop.f32.mrb[0].mxu0
        %v9376 = vadd.f32 %v8717, %v9375
        %v9377 = vpop.f32.mrb[0].mxu0
        %v9378 = vadd.f32 %v8713, %v9377
        %v9379 = vpop.f32.mrb[0].mxu0
        %v9380 = vadd.f32 %v8717, %v9379
        %9381 = vmatprep.mubr.bf16.mxu0 %v8589
        %9382 = vmatmul.mubr.bf16.gmra.mrb[0].mxu0 %v8588
        %v9383 = vpop.f32.mrb[0].mxu0
        %v9384 = vadd.f32 %v8713, %v9383
        %v9385 = vpop.f32.mrb[0].mxu0
        %v9386 = vadd.f32 %v8717, %v9385
        %v9387 = vpop.f32.mrb[0].mxu0
        %v9388 = vadd.f32 %v8713, %v9387
        %v9389 = vpop.f32.mrb[0].mxu0
        %v9390 = vadd.f32 %v8717, %v9389
        %9391 = vmatprep.mubr.bf16.mxu0 %v8592
        %9392 = vmatmul.mubr.bf16.gmra.mrb[0].mxu0 %v8591
        %v9393 = vpop.f32.mrb[0].mxu0
        %v9394 = vadd.f32 %v8713, %v9393
        %v9395 = vpop.f32.mrb[0].mxu0
        %v9396 = vadd.f32 %v8717, %v9395
        %v9397 = vpop.f32.mrb[0].mxu0
        %v9398 = vadd.f32 %v8713, %v9397
        %v9399 = vpop.f32.mrb[0].mxu0
        %v9400 = vadd.f32 %v8717, %v9399
        %9401 = vmatprep.mubr.bf16.mxu0 %v8595
        %9402 = vmatmul.mubr.bf16.gmra.mrb[0].mxu0 %v8594
        %v9403 = vpop.f32.mrb[0].mxu0
        %v9404 = vadd.f32 %v8713, %v9403
        %v9405 = vpop.f32.mrb[0].mxu0
        %v9406 = vadd.f32 %v8717, %v9405
        %v9407 = vpop.f32.mrb[0].mxu0
        %v9408 = vadd.f32 %v8713, %v9407
        %v9409 = vpop.f32.mrb[0].mxu0
        %v9410 = vadd.f32 %v8717, %v9409
        %9411 = vmatprep.mubr.bf16.mxu0 %v8598
        %9412 = vmatmul.mubr.bf16.gmra.mrb[0].mxu0 %v8597
        %v9413 = vpop.f32.mrb[0].mxu0
        %v9414 = vadd.f32 %v8713, %v9413
        %v9415 = vpop.f32.mrb[0].mxu0
        %v9416 = vadd.f32 %v8717, %v9415
        %v9417 = vpop.f32.mrb[0].mxu0
        %v9418 = vadd.f32 %v8713, %v9417
        %v9419 = vpop.f32.mrb[0].mxu0
        %v9420 = vadd.f32 %v8717, %v9419
        %9421 = vmatprep.mubr.bf16.mxu0 %v8601
        %9422 = vmatmul.mubr.bf16.gmra.mrb[0].mxu0 %v8600
        %v9423 = vpop.f32.mrb[0].mxu0
        %v9424 = vadd.f32 %v8713, %v9423
        %v9425 = vpop.f32.mrb[0].mxu0
        %v9426 = vadd.f32 %v8717, %v9425
        %v9427 = vpop.f32.mrb[0].mxu0
        %v9428 = vadd.f32 %v8713, %v9427
        %v9429 = vpop.f32.mrb[0].mxu0
        %v9430 = vadd.f32 %v8717, %v9429
        %9431 = vmatprep.mubr.bf16.mxu0 %v8604
        %9432 = vmatmul.mubr.bf16.gmra.mrb[0].mxu0 %v8603
        %v9433 = vpop.f32.mrb[0].mxu0
        %v9434 = vadd.f32 %v8713, %v9433
        %v9435 = vpop.f32.mrb[0].mxu0
        %v9436 = vadd.f32 %v8717, %v9435
        %v9437 = vpop.f32.mrb[0].mxu0
        %v9438 = vadd.f32 %v8713, %v9437
        %v9439 = vpop.f32.mrb[0].mxu0
        %v9440 = vadd.f32 %v8717, %v9439
        %9441 = vmatprep.mubr.bf16.mxu0 %v8607
        %9442 = vmatmul.mubr.bf16.gmra.mrb[0].mxu0 %v8606
        %v9443 = vpop.f32.mrb[0].mxu0
        %v9444 = vadd.f32 %v8713, %v9443
        %v9445 = vpop.f32.mrb[0].mxu0
        %v9446 = vadd.f32 %v8717, %v9445
        %v9447 = vpop.f32.mrb[0].mxu0
        %v9448 = vadd.f32 %v8713, %v9447
        %v9449 = vpop.f32.mrb[0].mxu0
        %v9450 = vadd.f32 %v8717, %v9449
        %9451 = vmatprep.mubr.bf16.mxu0 %v8610
        %9452 = vmatmul.mubr.bf16.gmra.mrb[0].mxu0 %v8609
        %v9453 = vpop.f32.mrb[0].mxu0
        %v9454 = vadd.f32 %v8713, %v9453
        %v9455 = vpop.f32.mrb[0].mxu0
        %v9456 = vadd.f32 %v8717, %v9455
        %v9457 = vpop.f32.mrb[0].mxu0
        %v9458 = vadd.f32 %v8713, %v9457
        %v9459 = vpop.f32.mrb[0].mxu0
        %v9460 = vadd.f32 %v8717, %v9459
        %9461 = vdwg.mxu0
        %9462 = vmatprep.subr.bf16.mxu0 %v9014
        %9463 = vmatpush1.bf16.msra.mxu0 %v9013
        %9464 = vmatprep.subr.bf16.mxu0 %v9017
        %9465 = vmatpush1.bf16.msra.mxu0 %v9016
        %9466 = vmatprep.subr.bf16.mxu0 %v9020
        %9467 = vmatpush1.bf16.msra.mxu0 %v9019
        %9468 = vmatprep.subr.bf16.mxu0 %v9023
        %9469 = vmatpush1.bf16.msra.mxu0 %v9022
        %9470 = vmatprep.subr.bf16.mxu0 %v9026
        %9471 = vmatpush1.bf16.msra.mxu0 %v9025
        %9472 = vmatprep.subr.bf16.mxu0 %v9029
        %9473 = vmatpush1.bf16.msra.mxu0 %v9028
        %9474 = vmatprep.subr.bf16.mxu0 %v9032
        %9475 = vmatpush1.bf16.msra.mxu0 %v9031
        %9476 = vmatprep.subr.bf16.mxu0 %v9035
        %9477 = vmatpush1.bf16.msra.mxu0 %v9034
        %9478 = vmatprep.subr.bf16.mxu0 0
        %9479 = vmatpush1.bf16.msra.mxu0 0
        %9480 = vmatprep.subr.bf16.mxu0 0
        %9481 = vmatpush1.bf16.msra.mxu0 0
        %9482 = vmatprep.subr.bf16.mxu0 0
        %9483 = vmatpush1.bf16.msra.mxu0 0
        %9484 = vmatprep.subr.bf16.mxu0 0
        %9485 = vmatpush1.bf16.msra.mxu0 0
        %9486 = vmatprep.subr.bf16.mxu0 0
        %9487 = vmatpush1.bf16.msra.mxu0 0
        %9488 = vmatprep.subr.bf16.mxu0 0
        %9489 = vmatpush1.bf16.msra.mxu0 0
        %9490 = vmatprep.subr.bf16.mxu0 0
        %9491 = vmatpush1.bf16.msra.mxu0 0
        %9492 = vmatprep.subr.bf16.mxu0 0
        %9493 = vmatpush1.bf16.msra.mxu0 0
        %9494 = vmatprep.mubr.bf16.mxu0 0
        %9495 = vmatmul.mubr.bf16.gmra.mrb[0].mxu0 %v8518
        %v9496 = vpop.f32.mrb[0].mxu0
        %v9497 = vadd.f32 %v9144, %v9496
        %v9498 = vpop.f32.mrb[0].mxu0
        %v9499 = vadd.f32 %v9146, %v9498
        %v9500 = vpop.f32.mrb[0].mxu0
        %v9501 = vadd.f32 %v9148, %v9500
        %v9502 = vpop.f32.mrb[0].mxu0
        %v9503 = vadd.f32 %v9150, %v9502
        %9504 = vmatprep.mubr.bf16.mxu0 0
        %9505 = vmatmul.mubr.bf16.gmra.mrb[0].mxu0 %v8521
        %v9506 = vpop.f32.mrb[0].mxu0
        %v9507 = vadd.f32 %v9154, %v9506
        %v9508 = vpop.f32.mrb[0].mxu0
        %v9509 = vadd.f32 %v9156, %v9508
        %v9510 = vpop.f32.mrb[0].mxu0
        %v9511 = vadd.f32 %v9158, %v9510
        %v9512 = vpop.f32.mrb[0].mxu0
        %v9513 = vadd.f32 %v9160, %v9512
        %9514 = vmatprep.mubr.bf16.mxu0 0
        %9515 = vmatmul.mubr.bf16.gmra.mrb[0].mxu0 %v8524
        %v9516 = vpop.f32.mrb[0].mxu0
        %v9517 = vadd.f32 %v9164, %v9516
        %v9518 = vpop.f32.mrb[0].mxu0
        %v9519 = vadd.f32 %v9166, %v9518
        %v9520 = vpop.f32.mrb[0].mxu0
        %v9521 = vadd.f32 %v9168, %v9520
        %v9522 = vpop.f32.mrb[0].mxu0
        %v9523 = vadd.f32 %v9170, %v9522
        %9524 = vmatprep.mubr.bf16.mxu0 0
        %9525 = vmatmul.mubr.bf16.gmra.mrb[0].mxu0 %v8527
        %v9526 = vpop.f32.mrb[0].mxu0
        %v9527 = vadd.f32 %v9174, %v9526
        %v9528 = vpop.f32.mrb[0].mxu0
        %v9529 = vadd.f32 %v9176, %v9528
        %v9530 = vpop.f32.mrb[0].mxu0
        %v9531 = vadd.f32 %v9178, %v9530
        %v9532 = vpop.f32.mrb[0].mxu0
        %v9533 = vadd.f32 %v9180, %v9532
        %9534 = vmatprep.mubr.bf16.mxu0 0
        %9535 = vmatmul.mubr.bf16.gmra.mrb[0].mxu0 %v8530
        %v9536 = vpop.f32.mrb[0].mxu0
        %v9537 = vadd.f32 %v9184, %v9536
        %v9538 = vpop.f32.mrb[0].mxu0
        %v9539 = vadd.f32 %v9186, %v9538
        %v9540 = vpop.f32.mrb[0].mxu0
        %v9541 = vadd.f32 %v9188, %v9540
        %v9542 = vpop.f32.mrb[0].mxu0
        %v9543 = vadd.f32 %v9190, %v9542
        %9544 = vmatprep.mubr.bf16.mxu0 0
        %9545 = vmatmul.mubr.bf16.gmra.mrb[0].mxu0 %v8533
        %v9546 = vpop.f32.mrb[0].mxu0
        %v9547 = vadd.f32 %v9194, %v9546
        %v9548 = vpop.f32.mrb[0].mxu0
        %v9549 = vadd.f32 %v9196, %v9548
        %v9550 = vpop.f32.mrb[0].mxu0
        %v9551 = vadd.f32 %v9198, %v9550
        %v9552 = vpop.f32.mrb[0].mxu0
        %v9553 = vadd.f32 %v9200, %v9552
        %9554 = vmatprep.mubr.bf16.mxu0 0
        %9555 = vmatmul.mubr.bf16.gmra.mrb[0].mxu0 %v8536
        %v9556 = vpop.f32.mrb[0].mxu0
        %v9557 = vadd.f32 %v9204, %v9556
        %v9558 = vpop.f32.mrb[0].mxu0
        %v9559 = vadd.f32 %v9206, %v9558
        %v9560 = vpop.f32.mrb[0].mxu0
        %v9561 = vadd.f32 %v9208, %v9560
        %v9562 = vpop.f32.mrb[0].mxu0
        %v9563 = vadd.f32 %v9210, %v9562
        %9564 = vmatprep.mubr.bf16.mxu0 0
        %9565 = vmatmul.mubr.bf16.gmra.mrb[0].mxu0 %v8539
        %v9566 = vpop.f32.mrb[0].mxu0
        %v9567 = vadd.f32 %v9214, %v9566
        %v9568 = vpop.f32.mrb[0].mxu0
        %v9569 = vadd.f32 %v9216, %v9568
        %v9570 = vpop.f32.mrb[0].mxu0
        %v9571 = vadd.f32 %v9218, %v9570
        %v9572 = vpop.f32.mrb[0].mxu0
        %v9573 = vadd.f32 %v9220, %v9572
        %9574 = vmatprep.mubr.bf16.mxu0 0
        %9575 = vmatmul.mubr.bf16.gmra.mrb[0].mxu0 %v8542
        %v9576 = vpop.f32.mrb[0].mxu0
        %v9577 = vadd.f32 %v9224, %v9576
        %v9578 = vpop.f32.mrb[0].mxu0
        %v9579 = vadd.f32 %v9226, %v9578
        %v9580 = vpop.f32.mrb[0].mxu0
        %v9581 = vadd.f32 %v9228, %v9580
        %v9582 = vpop.f32.mrb[0].mxu0
        %v9583 = vadd.f32 %v9230, %v9582
        %9584 = vmatprep.mubr.bf16.mxu0 0
        %9585 = vmatmul.mubr.bf16.gmra.mrb[0].mxu0 %v8545
        %v9586 = vpop.f32.mrb[0].mxu0
        %v9587 = vadd.f32 %v9234, %v9586
        %v9588 = vpop.f32.mrb[0].mxu0
        %v9589 = vadd.f32 %v9236, %v9588
        %v9590 = vpop.f32.mrb[0].mxu0
        %v9591 = vadd.f32 %v9238, %v9590
        %v9592 = vpop.f32.mrb[0].mxu0
        %v9593 = vadd.f32 %v9240, %v9592
        %9594 = vmatprep.mubr.bf16.mxu0 0
        %9595 = vmatmul.mubr.bf16.gmra.mrb[0].mxu0 %v8548
        %v9596 = vpop.f32.mrb[0].mxu0
        %v9597 = vadd.f32 %v9244, %v9596
        %v9598 = vpop.f32.mrb[0].mxu0
        %v9599 = vadd.f32 %v9246, %v9598
        %v9600 = vpop.f32.mrb[0].mxu0
        %v9601 = vadd.f32 %v9248, %v9600
        %v9602 = vpop.f32.mrb[0].mxu0
        %v9603 = vadd.f32 %v9250, %v9602
        %9604 = vmatprep.mubr.bf16.mxu0 0
        %9605 = vmatmul.mubr.bf16.gmra.mrb[0].mxu0 %v8551
        %v9606 = vpop.f32.mrb[0].mxu0
        %v9607 = vadd.f32 %v9254, %v9606
        %v9608 = vpop.f32.mrb[0].mxu0
        %v9609 = vadd.f32 %v9256, %v9608
        %v9610 = vpop.f32.mrb[0].mxu0
        %v9611 = vadd.f32 %v9258, %v9610
        %v9612 = vpop.f32.mrb[0].mxu0
        %v9613 = vadd.f32 %v9260, %v9612
        %9614 = vmatprep.mubr.bf16.mxu0 0
        %9615 = vmatmul.mubr.bf16.gmra.mrb[0].mxu0 %v8554
        %v9616 = vpop.f32.mrb[0].mxu0
        %v9617 = vadd.f32 %v9264, %v9616
        %v9618 = vpop.f32.mrb[0].mxu0
        %v9619 = vadd.f32 %v9266, %v9618
        %v9620 = vpop.f32.mrb[0].mxu0
        %v9621 = vadd.f32 %v9268, %v9620
        %v9622 = vpop.f32.mrb[0].mxu0
        %v9623 = vadd.f32 %v9270, %v9622
        %9624 = vmatprep.mubr.bf16.mxu0 0
        %9625 = vmatmul.mubr.bf16.gmra.mrb[0].mxu0 %v8557
        %v9626 = vpop.f32.mrb[0].mxu0
        %v9627 = vadd.f32 %v9274, %v9626
        %v9628 = vpop.f32.mrb[0].mxu0
        %v9629 = vadd.f32 %v9276, %v9628
        %v9630 = vpop.f32.mrb[0].mxu0
        %v9631 = vadd.f32 %v9278, %v9630
        %v9632 = vpop.f32.mrb[0].mxu0
        %v9633 = vadd.f32 %v9280, %v9632
        %9634 = vmatprep.mubr.bf16.mxu0 0
        %9635 = vmatmul.mubr.bf16.gmra.mrb[0].mxu0 %v8560
        %v9636 = vpop.f32.mrb[0].mxu0
        %v9637 = vadd.f32 %v9284, %v9636
        %v9638 = vpop.f32.mrb[0].mxu0
        %v9639 = vadd.f32 %v9286, %v9638
        %v9640 = vpop.f32.mrb[0].mxu0
        %v9641 = vadd.f32 %v9288, %v9640
        %v9642 = vpop.f32.mrb[0].mxu0
        %v9643 = vadd.f32 %v9290, %v9642
        %9644 = vmatprep.mubr.bf16.mxu0 0
        %9645 = vmatmul.mubr.bf16.gmra.mrb[0].mxu0 %v8563
        %v9646 = vpop.f32.mrb[0].mxu0
        %v9647 = vadd.f32 %v9294, %v9646
        %v9648 = vpop.f32.mrb[0].mxu0
        %v9649 = vadd.f32 %v9296, %v9648
        %v9650 = vpop.f32.mrb[0].mxu0
        %v9651 = vadd.f32 %v9298, %v9650
        %v9652 = vpop.f32.mrb[0].mxu0
        %v9653 = vadd.f32 %v9300, %v9652
        %9654 = vmatprep.mubr.bf16.mxu0 0
        %9655 = vmatmul.mubr.bf16.gmra.mrb[0].mxu0 %v8566
        %v9656 = vpop.f32.mrb[0].mxu0
        %v9657 = vadd.f32 %v9304, %v9656
        %v9658 = vpop.f32.mrb[0].mxu0
        %v9659 = vadd.f32 %v9306, %v9658
        %v9660 = vpop.f32.mrb[0].mxu0
        %v9661 = vadd.f32 %v9308, %v9660
        %v9662 = vpop.f32.mrb[0].mxu0
        %v9663 = vadd.f32 %v9310, %v9662
        %9664 = vmatprep.mubr.bf16.mxu0 0
        %9665 = vmatmul.mubr.bf16.gmra.mrb[0].mxu0 %v8569
        %v9666 = vpop.f32.mrb[0].mxu0
        %v9667 = vadd.f32 %v9314, %v9666
        %v9668 = vpop.f32.mrb[0].mxu0
        %v9669 = vadd.f32 %v9316, %v9668
        %v9670 = vpop.f32.mrb[0].mxu0
        %v9671 = vadd.f32 %v9318, %v9670
        %v9672 = vpop.f32.mrb[0].mxu0
        %v9673 = vadd.f32 %v9320, %v9672
        %9674 = vmatprep.mubr.bf16.mxu0 0
        %9675 = vmatmul.mubr.bf16.gmra.mrb[0].mxu0 %v8572
        %v9676 = vpop.f32.mrb[0].mxu0
        %v9677 = vadd.f32 %v9324, %v9676
        %v9678 = vpop.f32.mrb[0].mxu0
        %v9679 = vadd.f32 %v9326, %v9678
        %v9680 = vpop.f32.mrb[0].mxu0
        %v9681 = vadd.f32 %v9328, %v9680
        %v9682 = vpop.f32.mrb[0].mxu0
        %v9683 = vadd.f32 %v9330, %v9682
        %9684 = vmatprep.mubr.bf16.mxu0 0
        %9685 = vmatmul.mubr.bf16.gmra.mrb[0].mxu0 %v8575
        %v9686 = vpop.f32.mrb[0].mxu0
        %v9687 = vadd.f32 %v9334, %v9686
        %v9688 = vpop.f32.mrb[0].mxu0
        %v9689 = vadd.f32 %v9336, %v9688
        %v9690 = vpop.f32.mrb[0].mxu0
        %v9691 = vadd.f32 %v9338, %v9690
        %v9692 = vpop.f32.mrb[0].mxu0
        %v9693 = vadd.f32 %v9340, %v9692
        %9694 = vmatprep.mubr.bf16.mxu0 0
        %9695 = vmatmul.mubr.bf16.gmra.mrb[0].mxu0 %v8578
        %v9696 = vpop.f32.mrb[0].mxu0
        %v9697 = vadd.f32 %v9344, %v9696
        %v9698 = vpop.f32.mrb[0].mxu0
        %v9699 = vadd.f32 %v9346, %v9698
        %v9700 = vpop.f32.mrb[0].mxu0
        %v9701 = vadd.f32 %v9348, %v9700
        %v9702 = vpop.f32.mrb[0].mxu0
        %v9703 = vadd.f32 %v9350, %v9702
        %9704 = vmatprep.mubr.bf16.mxu0 0
        %9705 = vmatmul.mubr.bf16.gmra.mrb[0].mxu0 %v8581
        %v9706 = vpop.f32.mrb[0].mxu0
        %v9707 = vadd.f32 %v9354, %v9706
        %v9708 = vpop.f32.mrb[0].mxu0
        %v9709 = vadd.f32 %v9356, %v9708
        %v9710 = vpop.f32.mrb[0].mxu0
        %v9711 = vadd.f32 %v9358, %v9710
        %v9712 = vpop.f32.mrb[0].mxu0
        %v9713 = vadd.f32 %v9360, %v9712
        %9714 = vmatprep.mubr.bf16.mxu0 0
        %9715 = vmatmul.mubr.bf16.gmra.mrb[0].mxu0 %v8584
        %v9716 = vpop.f32.mrb[0].mxu0
        %v9717 = vadd.f32 %v9364, %v9716
        %v9718 = vpop.f32.mrb[0].mxu0
        %v9719 = vadd.f32 %v9366, %v9718
        %v9720 = vpop.f32.mrb[0].mxu0
        %v9721 = vadd.f32 %v9368, %v9720
        %v9722 = vpop.f32.mrb[0].mxu0
        %v9723 = vadd.f32 %v9370, %v9722
        %9724 = vmatprep.mubr.bf16.mxu0 0
        %9725 = vmatmul.mubr.bf16.gmra.mrb[0].mxu0 %v8587
        %v9726 = vpop.f32.mrb[0].mxu0
        %v9727 = vadd.f32 %v9374, %v9726
        %v9728 = vpop.f32.mrb[0].mxu0
        %v9729 = vadd.f32 %v9376, %v9728
        %v9730 = vpop.f32.mrb[0].mxu0
        %v9731 = vadd.f32 %v9378, %v9730
        %v9732 = vpop.f32.mrb[0].mxu0
        %v9733 = vadd.f32 %v9380, %v9732
        %9734 = vmatprep.mubr.bf16.mxu0 0
        %9735 = vmatmul.mubr.bf16.gmra.mrb[0].mxu0 %v8590
        %v9736 = vpop.f32.mrb[0].mxu0
        %v9737 = vadd.f32 %v9384, %v9736
        %v9738 = vpop.f32.mrb[0].mxu0
        %v9739 = vadd.f32 %v9386, %v9738
        %v9740 = vpop.f32.mrb[0].mxu0
        %v9741 = vadd.f32 %v9388, %v9740
        %v9742 = vpop.f32.mrb[0].mxu0
        %v9743 = vadd.f32 %v9390, %v9742
        %9744 = vmatprep.mubr.bf16.mxu0 0
        %9745 = vmatmul.mubr.bf16.gmra.mrb[0].mxu0 %v8593
        %v9746 = vpop.f32.mrb[0].mxu0
        %v9747 = vadd.f32 %v9394, %v9746
        %v9748 = vpop.f32.mrb[0].mxu0
        %v9749 = vadd.f32 %v9396, %v9748
        %v9750 = vpop.f32.mrb[0].mxu0
        %v9751 = vadd.f32 %v9398, %v9750
        %v9752 = vpop.f32.mrb[0].mxu0
        %v9753 = vadd.f32 %v9400, %v9752
        %9754 = vmatprep.mubr.bf16.mxu0 0
        %9755 = vmatmul.mubr.bf16.gmra.mrb[0].mxu0 %v8596
        %v9756 = vpop.f32.mrb[0].mxu0
        %v9757 = vadd.f32 %v9404, %v9756
        %v9758 = vpop.f32.mrb[0].mxu0
        %v9759 = vadd.f32 %v9406, %v9758
        %v9760 = vpop.f32.mrb[0].mxu0
        %v9761 = vadd.f32 %v9408, %v9760
        %v9762 = vpop.f32.mrb[0].mxu0
        %v9763 = vadd.f32 %v9410, %v9762
        %9764 = vmatprep.mubr.bf16.mxu0 0
        %9765 = vmatmul.mubr.bf16.gmra.mrb[0].mxu0 %v8599
        %v9766 = vpop.f32.mrb[0].mxu0
        %v9767 = vadd.f32 %v9414, %v9766
        %v9768 = vpop.f32.mrb[0].mxu0
        %v9769 = vadd.f32 %v9416, %v9768
        %v9770 = vpop.f32.mrb[0].mxu0
        %v9771 = vadd.f32 %v9418, %v9770
        %v9772 = vpop.f32.mrb[0].mxu0
        %v9773 = vadd.f32 %v9420, %v9772
        %9774 = vmatprep.mubr.bf16.mxu0 0
        %9775 = vmatmul.mubr.bf16.gmra.mrb[0].mxu0 %v8602
        %v9776 = vpop.f32.mrb[0].mxu0
        %v9777 = vadd.f32 %v9424, %v9776
        %v9778 = vpop.f32.mrb[0].mxu0
        %v9779 = vadd.f32 %v9426, %v9778
        %v9780 = vpop.f32.mrb[0].mxu0
        %v9781 = vadd.f32 %v9428, %v9780
        %v9782 = vpop.f32.mrb[0].mxu0
        %v9783 = vadd.f32 %v9430, %v9782
        %9784 = vmatprep.mubr.bf16.mxu0 0
        %9785 = vmatmul.mubr.bf16.gmra.mrb[0].mxu0 %v8605
        %v9786 = vpop.f32.mrb[0].mxu0
        %v9787 = vadd.f32 %v9434, %v9786
        %v9788 = vpop.f32.mrb[0].mxu0
        %v9789 = vadd.f32 %v9436, %v9788
        %v9790 = vpop.f32.mrb[0].mxu0
        %v9791 = vadd.f32 %v9438, %v9790
        %v9792 = vpop.f32.mrb[0].mxu0
        %v9793 = vadd.f32 %v9440, %v9792
        %9794 = vmatprep.mubr.bf16.mxu0 0
        %9795 = vmatmul.mubr.bf16.gmra.mrb[0].mxu0 %v8608
        %v9796 = vpop.f32.mrb[0].mxu0
        %v9797 = vadd.f32 %v9444, %v9796
        %v9798 = vpop.f32.mrb[0].mxu0
        %v9799 = vadd.f32 %v9446, %v9798
        %v9800 = vpop.f32.mrb[0].mxu0
        %v9801 = vadd.f32 %v9448, %v9800
        %v9802 = vpop.f32.mrb[0].mxu0
        %v9803 = vadd.f32 %v9450, %v9802
        %9804 = vmatprep.mubr.bf16.mxu0 0
        %9805 = vmatmul.mubr.bf16.gmra.mrb[0].mxu0 %v8611
        %v9806 = vpop.f32.mrb[0].mxu0
        %v9807 = vadd.f32 %v9454, %v9806
        %v9808 = vpop.f32.mrb[0].mxu0
        %v9809 = vadd.f32 %v9456, %v9808
        %v9810 = vpop.f32.mrb[0].mxu0
        %v9811 = vadd.f32 %v9458, %v9810
        %v9812 = vpop.f32.mrb[0].mxu0
        %v9813 = vadd.f32 %v9460, %v9812
        %9814 = vdwg.mxu0
        %9815 = vmatprep.subr.bf16.mxu0 0
        %9816 = vmatpush1.bf16.msra.mxu0 %v8967
        %9817 = vmatprep.subr.bf16.mxu0 0
        %9818 = vmatpush1.bf16.msra.mxu0 %v8970
        %9819 = vmatprep.subr.bf16.mxu0 0
        %9820 = vmatpush1.bf16.msra.mxu0 %v8973
        %9821 = vmatprep.subr.bf16.mxu0 0
        %9822 = vmatpush1.bf16.msra.mxu0 %v8976
        %9823 = vmatprep.subr.bf16.mxu0 0
        %9824 = vmatpush1.bf16.msra.mxu0 %v8979
        %9825 = vmatprep.subr.bf16.mxu0 0
        %9826 = vmatpush1.bf16.msra.mxu0 %v8982
        %9827 = vmatprep.subr.bf16.mxu0 0
        %9828 = vmatpush1.bf16.msra.mxu0 %v8985
        %9829 = vmatprep.subr.bf16.mxu0 0
        %9830 = vmatpush1.bf16.msra.mxu0 %v8988
        %9831 = vmatprep.subr.bf16.mxu0 0
        %9832 = vmatpush1.bf16.msra.mxu0 %v8991
        %9833 = vmatprep.subr.bf16.mxu0 0
        %9834 = vmatpush1.bf16.msra.mxu0 %v8994
        %9835 = vmatprep.subr.bf16.mxu0 0
        %9836 = vmatpush1.bf16.msra.mxu0 %v8997
        %9837 = vmatprep.subr.bf16.mxu0 0
        %9838 = vmatpush1.bf16.msra.mxu0 %v9000
        %9839 = vmatprep.subr.bf16.mxu0 0
        %9840 = vmatpush1.bf16.msra.mxu0 %v9003
        %9841 = vmatprep.subr.bf16.mxu0 0
        %9842 = vmatpush1.bf16.msra.mxu0 %v9006
        %9843 = vmatprep.subr.bf16.mxu0 0
        %9844 = vmatpush1.bf16.msra.mxu0 %v9009
        %9845 = vmatprep.subr.bf16.mxu0 0
        %9846 = vmatpush1.bf16.msra.mxu0 %v9012
        %9847 = vmatprep.mubr.bf16.mxu0 %v8517
        %9848 = vmatmul.mubr.bf16.gmra.mrb[0].mxu0 %v8516
        %v9849 = vpop.f32.mrb[0].mxu0
        %v9850 = vadd.f32 %v8721, %v9849
        %v9851 = vpop.f32.mrb[0].mxu0
        %v9852 = vpop.f32.mrb[0].mxu0
        %v9853 = vadd.f32 %v8721, %v9852
        %v9854 = vpop.f32.mrb[0].mxu0
        %9855 = vmatprep.mubr.bf16.mxu0 %v8520
        %9856 = vmatmul.mubr.bf16.gmra.mrb[0].mxu0 %v8519
        %v9857 = vpop.f32.mrb[0].mxu0
        %v9858 = vadd.f32 %v8721, %v9857
        %v9859 = vpop.f32.mrb[0].mxu0
        %v9860 = vpop.f32.mrb[0].mxu0
        %v9861 = vadd.f32 %v8721, %v9860
        %v9862 = vpop.f32.mrb[0].mxu0
        %9863 = vmatprep.mubr.bf16.mxu0 %v8523
        %9864 = vmatmul.mubr.bf16.gmra.mrb[0].mxu0 %v8522
        %v9865 = vpop.f32.mrb[0].mxu0
        %v9866 = vadd.f32 %v8721, %v9865
        %v9867 = vpop.f32.mrb[0].mxu0
        %v9868 = vpop.f32.mrb[0].mxu0
        %v9869 = vadd.f32 %v8721, %v9868
        %v9870 = vpop.f32.mrb[0].mxu0
        %9871 = vmatprep.mubr.bf16.mxu0 %v8526
        %9872 = vmatmul.mubr.bf16.gmra.mrb[0].mxu0 %v8525
        %v9873 = vpop.f32.mrb[0].mxu0
        %v9874 = vadd.f32 %v8721, %v9873
        %v9875 = vpop.f32.mrb[0].mxu0
        %v9876 = vpop.f32.mrb[0].mxu0
        %v9877 = vadd.f32 %v8721, %v9876
        %v9878 = vpop.f32.mrb[0].mxu0
        %9879 = vmatprep.mubr.bf16.mxu0 %v8529
        %9880 = vmatmul.mubr.bf16.gmra.mrb[0].mxu0 %v8528
        %v9881 = vpop.f32.mrb[0].mxu0
        %v9882 = vadd.f32 %v8721, %v9881
        %v9883 = vpop.f32.mrb[0].mxu0
        %v9884 = vpop.f32.mrb[0].mxu0
        %v9885 = vadd.f32 %v8721, %v9884
        %v9886 = vpop.f32.mrb[0].mxu0
        %9887 = vmatprep.mubr.bf16.mxu0 %v8532
        %9888 = vmatmul.mubr.bf16.gmra.mrb[0].mxu0 %v8531
        %v9889 = vpop.f32.mrb[0].mxu0
        %v9890 = vadd.f32 %v8721, %v9889
        %v9891 = vpop.f32.mrb[0].mxu0
        %v9892 = vpop.f32.mrb[0].mxu0
        %v9893 = vadd.f32 %v8721, %v9892
        %v9894 = vpop.f32.mrb[0].mxu0
        %9895 = vmatprep.mubr.bf16.mxu0 %v8535
        %9896 = vmatmul.mubr.bf16.gmra.mrb[0].mxu0 %v8534
        %v9897 = vpop.f32.mrb[0].mxu0
        %v9898 = vadd.f32 %v8721, %v9897
        %v9899 = vpop.f32.mrb[0].mxu0
        %v9900 = vpop.f32.mrb[0].mxu0
        %v9901 = vadd.f32 %v8721, %v9900
        %v9902 = vpop.f32.mrb[0].mxu0
        %9903 = vmatprep.mubr.bf16.mxu0 %v8538
        %9904 = vmatmul.mubr.bf16.gmra.mrb[0].mxu0 %v8537
        %v9905 = vpop.f32.mrb[0].mxu0
        %v9906 = vadd.f32 %v8721, %v9905
        %v9907 = vpop.f32.mrb[0].mxu0
        %v9908 = vpop.f32.mrb[0].mxu0
        %v9909 = vadd.f32 %v8721, %v9908
        %v9910 = vpop.f32.mrb[0].mxu0
        %9911 = vmatprep.mubr.bf16.mxu0 %v8541
        %9912 = vmatmul.mubr.bf16.gmra.mrb[0].mxu0 %v8540
        %v9913 = vpop.f32.mrb[0].mxu0
        %v9914 = vadd.f32 %v8721, %v9913
        %v9915 = vpop.f32.mrb[0].mxu0
        %v9916 = vpop.f32.mrb[0].mxu0
        %v9917 = vadd.f32 %v8721, %v9916
        %v9918 = vpop.f32.mrb[0].mxu0
        %9919 = vmatprep.mubr.bf16.mxu0 %v8544
        %9920 = vmatmul.mubr.bf16.gmra.mrb[0].mxu0 %v8543
        %v9921 = vpop.f32.mrb[0].mxu0
        %v9922 = vadd.f32 %v8721, %v9921
        %v9923 = vpop.f32.mrb[0].mxu0
        %v9924 = vpop.f32.mrb[0].mxu0
        %v9925 = vadd.f32 %v8721, %v9924
        %v9926 = vpop.f32.mrb[0].mxu0
        %9927 = vmatprep.mubr.bf16.mxu0 %v8547
        %9928 = vmatmul.mubr.bf16.gmra.mrb[0].mxu0 %v8546
        %v9929 = vpop.f32.mrb[0].mxu0
        %v9930 = vadd.f32 %v8721, %v9929
        %v9931 = vpop.f32.mrb[0].mxu0
        %v9932 = vpop.f32.mrb[0].mxu0
        %v9933 = vadd.f32 %v8721, %v9932
        %v9934 = vpop.f32.mrb[0].mxu0
        %9935 = vmatprep.mubr.bf16.mxu0 %v8550
        %9936 = vmatmul.mubr.bf16.gmra.mrb[0].mxu0 %v8549
        %v9937 = vpop.f32.mrb[0].mxu0
        %v9938 = vadd.f32 %v8721, %v9937
        %v9939 = vpop.f32.mrb[0].mxu0
        %v9940 = vpop.f32.mrb[0].mxu0
        %v9941 = vadd.f32 %v8721, %v9940
        %v9942 = vpop.f32.mrb[0].mxu0
        %9943 = vmatprep.mubr.bf16.mxu0 %v8553
        %9944 = vmatmul.mubr.bf16.gmra.mrb[0].mxu0 %v8552
        %v9945 = vpop.f32.mrb[0].mxu0
        %v9946 = vadd.f32 %v8721, %v9945
        %v9947 = vpop.f32.mrb[0].mxu0
        %v9948 = vpop.f32.mrb[0].mxu0
        %v9949 = vadd.f32 %v8721, %v9948
        %v9950 = vpop.f32.mrb[0].mxu0
        %9951 = vmatprep.mubr.bf16.mxu0 %v8556
        %9952 = vmatmul.mubr.bf16.gmra.mrb[0].mxu0 %v8555
        %v9953 = vpop.f32.mrb[0].mxu0
        %v9954 = vadd.f32 %v8721, %v9953
        %v9955 = vpop.f32.mrb[0].mxu0
        %v9956 = vpop.f32.mrb[0].mxu0
        %v9957 = vadd.f32 %v8721, %v9956
        %v9958 = vpop.f32.mrb[0].mxu0
        %9959 = vmatprep.mubr.bf16.mxu0 %v8559
        %9960 = vmatmul.mubr.bf16.gmra.mrb[0].mxu0 %v8558
        %v9961 = vpop.f32.mrb[0].mxu0
        %v9962 = vadd.f32 %v8721, %v9961
        %v9963 = vpop.f32.mrb[0].mxu0
        %v9964 = vpop.f32.mrb[0].mxu0
        %v9965 = vadd.f32 %v8721, %v9964
        %v9966 = vpop.f32.mrb[0].mxu0
        %9967 = vmatprep.mubr.bf16.mxu0 %v8562
        %9968 = vmatmul.mubr.bf16.gmra.mrb[0].mxu0 %v8561
        %v9969 = vpop.f32.mrb[0].mxu0
        %v9970 = vadd.f32 %v8721, %v9969
        %v9971 = vpop.f32.mrb[0].mxu0
        %v9972 = vpop.f32.mrb[0].mxu0
        %v9973 = vadd.f32 %v8721, %v9972
        %v9974 = vpop.f32.mrb[0].mxu0
        %9975 = vmatprep.mubr.bf16.mxu0 %v8565
        %9976 = vmatmul.mubr.bf16.gmra.mrb[0].mxu0 %v8564
        %v9977 = vpop.f32.mrb[0].mxu0
        %v9978 = vadd.f32 %v8721, %v9977
        %v9979 = vpop.f32.mrb[0].mxu0
        %v9980 = vpop.f32.mrb[0].mxu0
        %v9981 = vadd.f32 %v8721, %v9980
        %v9982 = vpop.f32.mrb[0].mxu0
        %9983 = vmatprep.mubr.bf16.mxu0 %v8568
        %9984 = vmatmul.mubr.bf16.gmra.mrb[0].mxu0 %v8567
        %v9985 = vpop.f32.mrb[0].mxu0
        %v9986 = vadd.f32 %v8721, %v9985
        %v9987 = vpop.f32.mrb[0].mxu0
        %v9988 = vpop.f32.mrb[0].mxu0
        %v9989 = vadd.f32 %v8721, %v9988
        %v9990 = vpop.f32.mrb[0].mxu0
        %9991 = vmatprep.mubr.bf16.mxu0 %v8571
        %9992 = vmatmul.mubr.bf16.gmra.mrb[0].mxu0 %v8570
        %v9993 = vpop.f32.mrb[0].mxu0
        %v9994 = vadd.f32 %v8721, %v9993
        %v9995 = vpop.f32.mrb[0].mxu0
        %v9996 = vpop.f32.mrb[0].mxu0
        %v9997 = vadd.f32 %v8721, %v9996
        %v9998 = vpop.f32.mrb[0].mxu0
        %9999 = vmatprep.mubr.bf16.mxu0 %v8574
        %10000 = vmatmul.mubr.bf16.gmra.mrb[0].mxu0 %v8573
        %v10001 = vpop.f32.mrb[0].mxu0
        %v10002 = vadd.f32 %v8721, %v10001
        %v10003 = vpop.f32.mrb[0].mxu0
        %v10004 = vpop.f32.mrb[0].mxu0
        %v10005 = vadd.f32 %v8721, %v10004
        %v10006 = vpop.f32.mrb[0].mxu0
        %10007 = vmatprep.mubr.bf16.mxu0 %v8577
        %10008 = vmatmul.mubr.bf16.gmra.mrb[0].mxu0 %v8576
        %v10009 = vpop.f32.mrb[0].mxu0
        %v10010 = vadd.f32 %v8721, %v10009
        %v10011 = vpop.f32.mrb[0].mxu0
        %v10012 = vpop.f32.mrb[0].mxu0
        %v10013 = vadd.f32 %v8721, %v10012
        %v10014 = vpop.f32.mrb[0].mxu0
        %10015 = vmatprep.mubr.bf16.mxu0 %v8580
        %10016 = vmatmul.mubr.bf16.gmra.mrb[0].mxu0 %v8579
        %v10017 = vpop.f32.mrb[0].mxu0
        %v10018 = vadd.f32 %v8721, %v10017
        %v10019 = vpop.f32.mrb[0].mxu0
        %v10020 = vpop.f32.mrb[0].mxu0
        %v10021 = vadd.f32 %v8721, %v10020
        %v10022 = vpop.f32.mrb[0].mxu0
        %10023 = vmatprep.mubr.bf16.mxu0 %v8583
        %10024 = vmatmul.mubr.bf16.gmra.mrb[0].mxu0 %v8582
        %v10025 = vpop.f32.mrb[0].mxu0
        %v10026 = vadd.f32 %v8721, %v10025
        %v10027 = vpop.f32.mrb[0].mxu0
        %v10028 = vpop.f32.mrb[0].mxu0
        %v10029 = vadd.f32 %v8721, %v10028
        %v10030 = vpop.f32.mrb[0].mxu0
        %10031 = vmatprep.mubr.bf16.mxu0 %v8586
        %10032 = vmatmul.mubr.bf16.gmra.mrb[0].mxu0 %v8585
        %v10033 = vpop.f32.mrb[0].mxu0
        %v10034 = vadd.f32 %v8721, %v10033
        %v10035 = vpop.f32.mrb[0].mxu0
        %v10036 = vpop.f32.mrb[0].mxu0
        %v10037 = vadd.f32 %v8721, %v10036
        %v10038 = vpop.f32.mrb[0].mxu0
        %10039 = vmatprep.mubr.bf16.mxu0 %v8589
        %10040 = vmatmul.mubr.bf16.gmra.mrb[0].mxu0 %v8588
        %v10041 = vpop.f32.mrb[0].mxu0
        %v10042 = vadd.f32 %v8721, %v10041
        %v10043 = vpop.f32.mrb[0].mxu0
        %v10044 = vpop.f32.mrb[0].mxu0
        %v10045 = vadd.f32 %v8721, %v10044
        %v10046 = vpop.f32.mrb[0].mxu0
        %10047 = vmatprep.mubr.bf16.mxu0 %v8592
        %10048 = vmatmul.mubr.bf16.gmra.mrb[0].mxu0 %v8591
        %v10049 = vpop.f32.mrb[0].mxu0
        %v10050 = vadd.f32 %v8721, %v10049
        %v10051 = vpop.f32.mrb[0].mxu0
        %v10052 = vpop.f32.mrb[0].mxu0
        %v10053 = vadd.f32 %v8721, %v10052
        %v10054 = vpop.f32.mrb[0].mxu0
        %10055 = vmatprep.mubr.bf16.mxu0 %v8595
        %10056 = vmatmul.mubr.bf16.gmra.mrb[0].mxu0 %v8594
        %v10057 = vpop.f32.mrb[0].mxu0
        %v10058 = vadd.f32 %v8721, %v10057
        %v10059 = vpop.f32.mrb[0].mxu0
        %v10060 = vpop.f32.mrb[0].mxu0
        %v10061 = vadd.f32 %v8721, %v10060
        %v10062 = vpop.f32.mrb[0].mxu0
        %10063 = vmatprep.mubr.bf16.mxu0 %v8598
        %10064 = vmatmul.mubr.bf16.gmra.mrb[0].mxu0 %v8597
        %v10065 = vpop.f32.mrb[0].mxu0
        %v10066 = vadd.f32 %v8721, %v10065
        %v10067 = vpop.f32.mrb[0].mxu0
        %v10068 = vpop.f32.mrb[0].mxu0
        %v10069 = vadd.f32 %v8721, %v10068
        %v10070 = vpop.f32.mrb[0].mxu0
        %10071 = vmatprep.mubr.bf16.mxu0 %v8601
        %10072 = vmatmul.mubr.bf16.gmra.mrb[0].mxu0 %v8600
        %v10073 = vpop.f32.mrb[0].mxu0
        %v10074 = vadd.f32 %v8721, %v10073
        %v10075 = vpop.f32.mrb[0].mxu0
        %v10076 = vpop.f32.mrb[0].mxu0
        %v10077 = vadd.f32 %v8721, %v10076
        %v10078 = vpop.f32.mrb[0].mxu0
        %10079 = vmatprep.mubr.bf16.mxu0 %v8604
        %10080 = vmatmul.mubr.bf16.gmra.mrb[0].mxu0 %v8603
        %v10081 = vpop.f32.mrb[0].mxu0
        %v10082 = vadd.f32 %v8721, %v10081
        %v10083 = vpop.f32.mrb[0].mxu0
        %v10084 = vpop.f32.mrb[0].mxu0
        %v10085 = vadd.f32 %v8721, %v10084
        %v10086 = vpop.f32.mrb[0].mxu0
        %10087 = vmatprep.mubr.bf16.mxu0 %v8607
        %10088 = vmatmul.mubr.bf16.gmra.mrb[0].mxu0 %v8606
        %v10089 = vpop.f32.mrb[0].mxu0
        %v10090 = vadd.f32 %v8721, %v10089
        %v10091 = vpop.f32.mrb[0].mxu0
        %v10092 = vpop.f32.mrb[0].mxu0
        %v10093 = vadd.f32 %v8721, %v10092
        %v10094 = vpop.f32.mrb[0].mxu0
        %10095 = vmatprep.mubr.bf16.mxu0 %v8610
        %10096 = vmatmul.mubr.bf16.gmra.mrb[0].mxu0 %v8609
        %v10097 = vpop.f32.mrb[0].mxu0
        %v10098 = vadd.f32 %v8721, %v10097
        %v10099 = vpop.f32.mrb[0].mxu0
        %v10100 = vpop.f32.mrb[0].mxu0
        %v10101 = vadd.f32 %v8721, %v10100
        %v10102 = vpop.f32.mrb[0].mxu0
        %10103 = vdwg.mxu0
        %10104 = vmatprep.subr.bf16.mxu0 0
        %10105 = vmatpush1.bf16.msra.mxu0 %v9015
        %10106 = vmatprep.subr.bf16.mxu0 0
        %10107 = vmatpush1.bf16.msra.mxu0 %v9018
        %10108 = vmatprep.subr.bf16.mxu0 0
        %10109 = vmatpush1.bf16.msra.mxu0 %v9021
        %10110 = vmatprep.subr.bf16.mxu0 0
        %10111 = vmatpush1.bf16.msra.mxu0 %v9024
        %10112 = vmatprep.subr.bf16.mxu0 0
        %10113 = vmatpush1.bf16.msra.mxu0 %v9027
        %10114 = vmatprep.subr.bf16.mxu0 0
        %10115 = vmatpush1.bf16.msra.mxu0 %v9030
        %10116 = vmatprep.subr.bf16.mxu0 0
        %10117 = vmatpush1.bf16.msra.mxu0 %v9033
        %10118 = vmatprep.subr.bf16.mxu0 0
        %10119 = vmatpush1.bf16.msra.mxu0 %v9036
        %10120 = vmatprep.subr.bf16.mxu0 0
        %10121 = vmatpush1.bf16.msra.mxu0 0
        %10122 = vmatprep.subr.bf16.mxu0 0
        %10123 = vmatpush1.bf16.msra.mxu0 0
        %10124 = vmatprep.subr.bf16.mxu0 0
        %10125 = vmatpush1.bf16.msra.mxu0 0
        %10126 = vmatprep.subr.bf16.mxu0 0
        %10127 = vmatpush1.bf16.msra.mxu0 0
        %10128 = vmatprep.subr.bf16.mxu0 0
        %10129 = vmatpush1.bf16.msra.mxu0 0
        %10130 = vmatprep.subr.bf16.mxu0 0
        %10131 = vmatpush1.bf16.msra.mxu0 0
        %10132 = vmatprep.subr.bf16.mxu0 0
        %10133 = vmatpush1.bf16.msra.mxu0 0
        %10134 = vmatprep.subr.bf16.mxu0 0
        %10135 = vmatpush1.bf16.msra.mxu0 0
        %10136 = vmatprep.mubr.bf16.mxu0 0
        %10137 = vmatmul.mubr.bf16.gmra.mrb[0].mxu0 %v8518
        %v10138 = vpop.f32.mrb[0].mxu0
        %v10139 = vadd.f32 %v9850, %v10138
        %v10140 = vpop.f32.mrb[0].mxu0
        %v10141 = vpop.f32.mrb[0].mxu0
        %v10142 = vadd.f32 %v9853, %v10141
        %v10143 = vpop.f32.mrb[0].mxu0
        %10144 = vmatprep.mubr.bf16.mxu0 0
        %10145 = vmatmul.mubr.bf16.gmra.mrb[0].mxu0 %v8521
        %v10146 = vpop.f32.mrb[0].mxu0
        %v10147 = vadd.f32 %v9858, %v10146
        %v10148 = vpop.f32.mrb[0].mxu0
        %v10149 = vpop.f32.mrb[0].mxu0
        %v10150 = vadd.f32 %v9861, %v10149
        %v10151 = vpop.f32.mrb[0].mxu0
        %10152 = vmatprep.mubr.bf16.mxu0 0
        %10153 = vmatmul.mubr.bf16.gmra.mrb[0].mxu0 %v8524
        %v10154 = vpop.f32.mrb[0].mxu0
        %v10155 = vadd.f32 %v9866, %v10154
        %v10156 = vpop.f32.mrb[0].mxu0
        %v10157 = vpop.f32.mrb[0].mxu0
        %v10158 = vadd.f32 %v9869, %v10157
        %v10159 = vpop.f32.mrb[0].mxu0
        %10160 = vmatprep.mubr.bf16.mxu0 0
        %10161 = vmatmul.mubr.bf16.gmra.mrb[0].mxu0 %v8527
        %v10162 = vpop.f32.mrb[0].mxu0
        %v10163 = vadd.f32 %v9874, %v10162
        %v10164 = vpop.f32.mrb[0].mxu0
        %v10165 = vpop.f32.mrb[0].mxu0
        %v10166 = vadd.f32 %v9877, %v10165
        %v10167 = vpop.f32.mrb[0].mxu0
        %10168 = vmatprep.mubr.bf16.mxu0 0
        %10169 = vmatmul.mubr.bf16.gmra.mrb[0].mxu0 %v8530
        %v10170 = vpop.f32.mrb[0].mxu0
        %v10171 = vadd.f32 %v9882, %v10170
        %v10172 = vpop.f32.mrb[0].mxu0
        %v10173 = vpop.f32.mrb[0].mxu0
        %v10174 = vadd.f32 %v9885, %v10173
        %v10175 = vpop.f32.mrb[0].mxu0
        %10176 = vmatprep.mubr.bf16.mxu0 0
        %10177 = vmatmul.mubr.bf16.gmra.mrb[0].mxu0 %v8533
        %v10178 = vpop.f32.mrb[0].mxu0
        %v10179 = vadd.f32 %v9890, %v10178
        %v10180 = vpop.f32.mrb[0].mxu0
        %v10181 = vpop.f32.mrb[0].mxu0
        %v10182 = vadd.f32 %v9893, %v10181
        %v10183 = vpop.f32.mrb[0].mxu0
        %10184 = vmatprep.mubr.bf16.mxu0 0
        %10185 = vmatmul.mubr.bf16.gmra.mrb[0].mxu0 %v8536
        %v10186 = vpop.f32.mrb[0].mxu0
        %v10187 = vadd.f32 %v9898, %v10186
        %v10188 = vpop.f32.mrb[0].mxu0
        %v10189 = vpop.f32.mrb[0].mxu0
        %v10190 = vadd.f32 %v9901, %v10189
        %v10191 = vpop.f32.mrb[0].mxu0
        %10192 = vmatprep.mubr.bf16.mxu0 0
        %10193 = vmatmul.mubr.bf16.gmra.mrb[0].mxu0 %v8539
        %v10194 = vpop.f32.mrb[0].mxu0
        %v10195 = vadd.f32 %v9906, %v10194
        %v10196 = vpop.f32.mrb[0].mxu0
        %v10197 = vpop.f32.mrb[0].mxu0
        %v10198 = vadd.f32 %v9909, %v10197
        %v10199 = vpop.f32.mrb[0].mxu0
        %10200 = vmatprep.mubr.bf16.mxu0 0
        %10201 = vmatmul.mubr.bf16.gmra.mrb[0].mxu0 %v8542
        %v10202 = vpop.f32.mrb[0].mxu0
        %v10203 = vadd.f32 %v9914, %v10202
        %v10204 = vpop.f32.mrb[0].mxu0
        %v10205 = vpop.f32.mrb[0].mxu0
        %v10206 = vadd.f32 %v9917, %v10205
        %v10207 = vpop.f32.mrb[0].mxu0
        %10208 = vmatprep.mubr.bf16.mxu0 0
        %10209 = vmatmul.mubr.bf16.gmra.mrb[0].mxu0 %v8545
        %v10210 = vpop.f32.mrb[0].mxu0
        %v10211 = vadd.f32 %v9922, %v10210
        %v10212 = vpop.f32.mrb[0].mxu0
        %v10213 = vpop.f32.mrb[0].mxu0
        %v10214 = vadd.f32 %v9925, %v10213
        %v10215 = vpop.f32.mrb[0].mxu0
        %10216 = vmatprep.mubr.bf16.mxu0 0
        %10217 = vmatmul.mubr.bf16.gmra.mrb[0].mxu0 %v8548
        %v10218 = vpop.f32.mrb[0].mxu0
        %v10219 = vadd.f32 %v9930, %v10218
        %v10220 = vpop.f32.mrb[0].mxu0
        %v10221 = vpop.f32.mrb[0].mxu0
        %v10222 = vadd.f32 %v9933, %v10221
        %v10223 = vpop.f32.mrb[0].mxu0
        %10224 = vmatprep.mubr.bf16.mxu0 0
        %10225 = vmatmul.mubr.bf16.gmra.mrb[0].mxu0 %v8551
        %v10226 = vpop.f32.mrb[0].mxu0
        %v10227 = vadd.f32 %v9938, %v10226
        %v10228 = vpop.f32.mrb[0].mxu0
        %v10229 = vpop.f32.mrb[0].mxu0
        %v10230 = vadd.f32 %v9941, %v10229
        %v10231 = vpop.f32.mrb[0].mxu0
        %10232 = vmatprep.mubr.bf16.mxu0 0
        %10233 = vmatmul.mubr.bf16.gmra.mrb[0].mxu0 %v8554
        %v10234 = vpop.f32.mrb[0].mxu0
        %v10235 = vadd.f32 %v9946, %v10234
        %v10236 = vpop.f32.mrb[0].mxu0
        %v10237 = vpop.f32.mrb[0].mxu0
        %v10238 = vadd.f32 %v9949, %v10237
        %v10239 = vpop.f32.mrb[0].mxu0
        %10240 = vmatprep.mubr.bf16.mxu0 0
        %10241 = vmatmul.mubr.bf16.gmra.mrb[0].mxu0 %v8557
        %v10242 = vpop.f32.mrb[0].mxu0
        %v10243 = vadd.f32 %v9954, %v10242
        %v10244 = vpop.f32.mrb[0].mxu0
        %v10245 = vpop.f32.mrb[0].mxu0
        %v10246 = vadd.f32 %v9957, %v10245
        %v10247 = vpop.f32.mrb[0].mxu0
        %10248 = vmatprep.mubr.bf16.mxu0 0
        %10249 = vmatmul.mubr.bf16.gmra.mrb[0].mxu0 %v8560
        %v10250 = vpop.f32.mrb[0].mxu0
        %v10251 = vadd.f32 %v9962, %v10250
        %v10252 = vpop.f32.mrb[0].mxu0
        %v10253 = vpop.f32.mrb[0].mxu0
        %v10254 = vadd.f32 %v9965, %v10253
        %v10255 = vpop.f32.mrb[0].mxu0
        %10256 = vmatprep.mubr.bf16.mxu0 0
        %10257 = vmatmul.mubr.bf16.gmra.mrb[0].mxu0 %v8563
        %v10258 = vpop.f32.mrb[0].mxu0
        %v10259 = vadd.f32 %v9970, %v10258
        %v10260 = vpop.f32.mrb[0].mxu0
        %v10261 = vpop.f32.mrb[0].mxu0
        %v10262 = vadd.f32 %v9973, %v10261
        %v10263 = vpop.f32.mrb[0].mxu0
        %10264 = vmatprep.mubr.bf16.mxu0 0
        %10265 = vmatmul.mubr.bf16.gmra.mrb[0].mxu0 %v8566
        %v10266 = vpop.f32.mrb[0].mxu0
        %v10267 = vadd.f32 %v9978, %v10266
        %v10268 = vpop.f32.mrb[0].mxu0
        %v10269 = vpop.f32.mrb[0].mxu0
        %v10270 = vadd.f32 %v9981, %v10269
        %v10271 = vpop.f32.mrb[0].mxu0
        %10272 = vmatprep.mubr.bf16.mxu0 0
        %10273 = vmatmul.mubr.bf16.gmra.mrb[0].mxu0 %v8569
        %v10274 = vpop.f32.mrb[0].mxu0
        %v10275 = vadd.f32 %v9986, %v10274
        %v10276 = vpop.f32.mrb[0].mxu0
        %v10277 = vpop.f32.mrb[0].mxu0
        %v10278 = vadd.f32 %v9989, %v10277
        %v10279 = vpop.f32.mrb[0].mxu0
        %10280 = vmatprep.mubr.bf16.mxu0 0
        %10281 = vmatmul.mubr.bf16.gmra.mrb[0].mxu0 %v8572
        %v10282 = vpop.f32.mrb[0].mxu0
        %v10283 = vadd.f32 %v9994, %v10282
        %v10284 = vpop.f32.mrb[0].mxu0
        %v10285 = vpop.f32.mrb[0].mxu0
        %v10286 = vadd.f32 %v9997, %v10285
        %v10287 = vpop.f32.mrb[0].mxu0
        %10288 = vmatprep.mubr.bf16.mxu0 0
        %10289 = vmatmul.mubr.bf16.gmra.mrb[0].mxu0 %v8575
        %v10290 = vpop.f32.mrb[0].mxu0
        %v10291 = vadd.f32 %v10002, %v10290
        %v10292 = vpop.f32.mrb[0].mxu0
        %v10293 = vpop.f32.mrb[0].mxu0
        %v10294 = vadd.f32 %v10005, %v10293
        %v10295 = vpop.f32.mrb[0].mxu0
        %10296 = vmatprep.mubr.bf16.mxu0 0
        %10297 = vmatmul.mubr.bf16.gmra.mrb[0].mxu0 %v8578
        %v10298 = vpop.f32.mrb[0].mxu0
        %v10299 = vadd.f32 %v10010, %v10298
        %v10300 = vpop.f32.mrb[0].mxu0
        %v10301 = vpop.f32.mrb[0].mxu0
        %v10302 = vadd.f32 %v10013, %v10301
        %v10303 = vpop.f32.mrb[0].mxu0
        %10304 = vmatprep.mubr.bf16.mxu0 0
        %10305 = vmatmul.mubr.bf16.gmra.mrb[0].mxu0 %v8581
        %v10306 = vpop.f32.mrb[0].mxu0
        %v10307 = vadd.f32 %v10018, %v10306
        %v10308 = vpop.f32.mrb[0].mxu0
        %v10309 = vpop.f32.mrb[0].mxu0
        %v10310 = vadd.f32 %v10021, %v10309
        %v10311 = vpop.f32.mrb[0].mxu0
        %10312 = vmatprep.mubr.bf16.mxu0 0
        %10313 = vmatmul.mubr.bf16.gmra.mrb[0].mxu0 %v8584
        %v10314 = vpop.f32.mrb[0].mxu0
        %v10315 = vadd.f32 %v10026, %v10314
        %v10316 = vpop.f32.mrb[0].mxu0
        %v10317 = vpop.f32.mrb[0].mxu0
        %v10318 = vadd.f32 %v10029, %v10317
        %v10319 = vpop.f32.mrb[0].mxu0
        %10320 = vmatprep.mubr.bf16.mxu0 0
        %10321 = vmatmul.mubr.bf16.gmra.mrb[0].mxu0 %v8587
        %v10322 = vpop.f32.mrb[0].mxu0
        %v10323 = vadd.f32 %v10034, %v10322
        %v10324 = vpop.f32.mrb[0].mxu0
        %v10325 = vpop.f32.mrb[0].mxu0
        %v10326 = vadd.f32 %v10037, %v10325
        %v10327 = vpop.f32.mrb[0].mxu0
        %10328 = vmatprep.mubr.bf16.mxu0 0
        %10329 = vmatmul.mubr.bf16.gmra.mrb[0].mxu0 %v8590
        %v10330 = vpop.f32.mrb[0].mxu0
        %v10331 = vadd.f32 %v10042, %v10330
        %v10332 = vpop.f32.mrb[0].mxu0
        %v10333 = vpop.f32.mrb[0].mxu0
        %v10334 = vadd.f32 %v10045, %v10333
        %v10335 = vpop.f32.mrb[0].mxu0
        %10336 = vmatprep.mubr.bf16.mxu0 0
        %10337 = vmatmul.mubr.bf16.gmra.mrb[0].mxu0 %v8593
        %v10338 = vpop.f32.mrb[0].mxu0
        %v10339 = vadd.f32 %v10050, %v10338
        %v10340 = vpop.f32.mrb[0].mxu0
        %v10341 = vpop.f32.mrb[0].mxu0
        %v10342 = vadd.f32 %v10053, %v10341
        %v10343 = vpop.f32.mrb[0].mxu0
        %10344 = vmatprep.mubr.bf16.mxu0 0
        %10345 = vmatmul.mubr.bf16.gmra.mrb[0].mxu0 %v8596
        %v10346 = vpop.f32.mrb[0].mxu0
        %v10347 = vadd.f32 %v10058, %v10346
        %v10348 = vpop.f32.mrb[0].mxu0
        %v10349 = vpop.f32.mrb[0].mxu0
        %v10350 = vadd.f32 %v10061, %v10349
        %v10351 = vpop.f32.mrb[0].mxu0
        %10352 = vmatprep.mubr.bf16.mxu0 0
        %10353 = vmatmul.mubr.bf16.gmra.mrb[0].mxu0 %v8599
        %v10354 = vpop.f32.mrb[0].mxu0
        %v10355 = vadd.f32 %v10066, %v10354
        %v10356 = vpop.f32.mrb[0].mxu0
        %v10357 = vpop.f32.mrb[0].mxu0
        %v10358 = vadd.f32 %v10069, %v10357
        %v10359 = vpop.f32.mrb[0].mxu0
        %10360 = vmatprep.mubr.bf16.mxu0 0
        %10361 = vmatmul.mubr.bf16.gmra.mrb[0].mxu0 %v8602
        %v10362 = vpop.f32.mrb[0].mxu0
        %v10363 = vadd.f32 %v10074, %v10362
        %v10364 = vpop.f32.mrb[0].mxu0
        %v10365 = vpop.f32.mrb[0].mxu0
        %v10366 = vadd.f32 %v10077, %v10365
        %v10367 = vpop.f32.mrb[0].mxu0
        %10368 = vmatprep.mubr.bf16.mxu0 0
        %10369 = vmatmul.mubr.bf16.gmra.mrb[0].mxu0 %v8605
        %v10370 = vpop.f32.mrb[0].mxu0
        %v10371 = vadd.f32 %v10082, %v10370
        %v10372 = vpop.f32.mrb[0].mxu0
        %v10373 = vpop.f32.mrb[0].mxu0
        %v10374 = vadd.f32 %v10085, %v10373
        %v10375 = vpop.f32.mrb[0].mxu0
        %10376 = vmatprep.mubr.bf16.mxu0 0
        %10377 = vmatmul.mubr.bf16.gmra.mrb[0].mxu0 %v8608
        %v10378 = vpop.f32.mrb[0].mxu0
        %v10379 = vadd.f32 %v10090, %v10378
        %v10380 = vpop.f32.mrb[0].mxu0
        %v10381 = vpop.f32.mrb[0].mxu0
        %v10382 = vadd.f32 %v10093, %v10381
        %v10383 = vpop.f32.mrb[0].mxu0
        %10384 = vmatprep.mubr.bf16.mxu0 0
        %10385 = vmatmul.mubr.bf16.gmra.mrb[0].mxu0 %v8611
        %v10386 = vpop.f32.mrb[0].mxu0
        %v10387 = vadd.f32 %v10098, %v10386
        %v10388 = vpop.f32.mrb[0].mxu0
        %v10389 = vpop.f32.mrb[0].mxu0
        %v10390 = vadd.f32 %v10101, %v10389
        %v10391 = vpop.f32.mrb[0].mxu0
        %10392 = vdwg.mxu0
        %v10393 = vmax.f32 %v9497, 0.0
        %v10394 = vmax.f32 %v9499, 0.0
        %v10395 = vmax.f32 %v10139, 0.0
        %v10396 = vmax.f32 %v9501, 0.0
        %v10397 = vmax.f32 %v9503, 0.0
        %v10398 = vmax.f32 %v10142, 0.0
        %v10399 = vmax.f32 %v9507, 0.0
        %v10400 = vmax.f32 %v9509, 0.0
        %v10401 = vmax.f32 %v10147, 0.0
        %v10402 = vmax.f32 %v9511, 0.0
        %v10403 = vmax.f32 %v9513, 0.0
        %v10404 = vmax.f32 %v10150, 0.0
        %v10405 = vmax.f32 %v9517, 0.0
        %v10406 = vmax.f32 %v9519, 0.0
        %v10407 = vmax.f32 %v10155, 0.0
        %v10408 = vmax.f32 %v9521, 0.0
        %v10409 = vmax.f32 %v9523, 0.0
        %v10410 = vmax.f32 %v10158, 0.0
        %v10411 = vmax.f32 %v9527, 0.0
        %v10412 = vmax.f32 %v9529, 0.0
        %v10413 = vmax.f32 %v10163, 0.0
        %v10414 = vmax.f32 %v9531, 0.0
        %v10415 = vmax.f32 %v9533, 0.0
        %v10416 = vmax.f32 %v10166, 0.0
        %v10417 = vmax.f32 %v9537, 0.0
        %v10418 = vmax.f32 %v9539, 0.0
        %v10419 = vmax.f32 %v10171, 0.0
        %v10420 = vmax.f32 %v9541, 0.0
        %v10421 = vmax.f32 %v9543, 0.0
        %v10422 = vmax.f32 %v10174, 0.0
        %v10423 = vmax.f32 %v9547, 0.0
        %v10424 = vmax.f32 %v9549, 0.0
        %v10425 = vmax.f32 %v10179, 0.0
        %v10426 = vmax.f32 %v9551, 0.0
        %v10427 = vmax.f32 %v9553, 0.0
        %v10428 = vmax.f32 %v10182, 0.0
        %v10429 = vmax.f32 %v9557, 0.0
        %v10430 = vmax.f32 %v9559, 0.0
        %v10431 = vmax.f32 %v10187, 0.0
        %v10432 = vmax.f32 %v9561, 0.0
        %v10433 = vmax.f32 %v9563, 0.0
        %v10434 = vmax.f32 %v10190, 0.0
        %v10435 = vmax.f32 %v9567, 0.0
        %v10436 = vmax.f32 %v9569, 0.0
        %v10437 = vmax.f32 %v10195, 0.0
        %v10438 = vmax.f32 %v9571, 0.0
        %v10439 = vmax.f32 %v9573, 0.0
        %v10440 = vmax.f32 %v10198, 0.0
        %v10441 = vmax.f32 %v9577, 0.0
        %v10442 = vmax.f32 %v9579, 0.0
        %v10443 = vmax.f32 %v10203, 0.0
        %v10444 = vmax.f32 %v9581, 0.0
        %v10445 = vmax.f32 %v9583, 0.0
        %v10446 = vmax.f32 %v10206, 0.0
        %v10447 = vmax.f32 %v9587, 0.0
        %v10448 = vmax.f32 %v9589, 0.0
        %v10449 = vmax.f32 %v10211, 0.0
        %v10450 = vmax.f32 %v9591, 0.0
        %v10451 = vmax.f32 %v9593, 0.0
        %v10452 = vmax.f32 %v10214, 0.0
        %v10453 = vmax.f32 %v9597, 0.0
        %v10454 = vmax.f32 %v9599, 0.0
        %v10455 = vmax.f32 %v10219, 0.0
        %v10456 = vmax.f32 %v9601, 0.0
        %v10457 = vmax.f32 %v9603, 0.0
        %v10458 = vmax.f32 %v10222, 0.0
        %v10459 = vmax.f32 %v9607, 0.0
        %v10460 = vmax.f32 %v9609, 0.0
        %v10461 = vmax.f32 %v10227, 0.0
        %v10462 = vmax.f32 %v9611, 0.0
        %v10463 = vmax.f32 %v9613, 0.0
        %v10464 = vmax.f32 %v10230, 0.0
        %v10465 = vmax.f32 %v9617, 0.0
        %v10466 = vmax.f32 %v9619, 0.0
        %v10467 = vmax.f32 %v10235, 0.0
        %v10468 = vmax.f32 %v9621, 0.0
        %v10469 = vmax.f32 %v9623, 0.0
        %v10470 = vmax.f32 %v10238, 0.0
        %v10471 = vmax.f32 %v9627, 0.0
        %v10472 = vmax.f32 %v9629, 0.0
        %v10473 = vmax.f32 %v10243, 0.0
        %v10474 = vmax.f32 %v9631, 0.0
        %v10475 = vmax.f32 %v9633, 0.0
        %v10476 = vmax.f32 %v10246, 0.0
        %v10477 = vmax.f32 %v9637, 0.0
        %v10478 = vmax.f32 %v9639, 0.0
        %v10479 = vmax.f32 %v10251, 0.0
        %v10480 = vmax.f32 %v9641, 0.0
        %v10481 = vmax.f32 %v9643, 0.0
        %v10482 = vmax.f32 %v10254, 0.0
        %v10483 = vmax.f32 %v9647, 0.0
        %v10484 = vmax.f32 %v9649, 0.0
        %v10485 = vmax.f32 %v10259, 0.0
        %v10486 = vmax.f32 %v9651, 0.0
        %v10487 = vmax.f32 %v9653, 0.0
        %v10488 = vmax.f32 %v10262, 0.0
        %v10489 = vmax.f32 %v9657, 0.0
        %v10490 = vmax.f32 %v9659, 0.0
        %v10491 = vmax.f32 %v10267, 0.0
        %v10492 = vmax.f32 %v9661, 0.0
        %v10493 = vmax.f32 %v9663, 0.0
        %v10494 = vmax.f32 %v10270, 0.0
        %v10495 = vmax.f32 %v9667, 0.0
        %v10496 = vmax.f32 %v9669, 0.0
        %v10497 = vmax.f32 %v10275, 0.0
        %v10498 = vmax.f32 %v9671, 0.0
        %v10499 = vmax.f32 %v9673, 0.0
        %v10500 = vmax.f32 %v10278, 0.0
        %v10501 = vmax.f32 %v9677, 0.0
        %v10502 = vmax.f32 %v9679, 0.0
        %v10503 = vmax.f32 %v10283, 0.0
        %v10504 = vmax.f32 %v9681, 0.0
        %v10505 = vmax.f32 %v9683, 0.0
        %v10506 = vmax.f32 %v10286, 0.0
        %v10507 = vmax.f32 %v9687, 0.0
        %v10508 = vmax.f32 %v9689, 0.0
        %v10509 = vmax.f32 %v10291, 0.0
        %v10510 = vmax.f32 %v9691, 0.0
        %v10511 = vmax.f32 %v9693, 0.0
        %v10512 = vmax.f32 %v10294, 0.0
        %v10513 = vmax.f32 %v9697, 0.0
        %v10514 = vmax.f32 %v9699, 0.0
        %v10515 = vmax.f32 %v10299, 0.0
        %v10516 = vmax.f32 %v9701, 0.0
        %v10517 = vmax.f32 %v9703, 0.0
        %v10518 = vmax.f32 %v10302, 0.0
        %v10519 = vmax.f32 %v9707, 0.0
        %v10520 = vmax.f32 %v9709, 0.0
        %v10521 = vmax.f32 %v10307, 0.0
        %v10522 = vmax.f32 %v9711, 0.0
        %v10523 = vmax.f32 %v9713, 0.0
        %v10524 = vmax.f32 %v10310, 0.0
        %v10525 = vmax.f32 %v9717, 0.0
        %v10526 = vmax.f32 %v9719, 0.0
        %v10527 = vmax.f32 %v10315, 0.0
        %v10528 = vmax.f32 %v9721, 0.0
        %v10529 = vmax.f32 %v9723, 0.0
        %v10530 = vmax.f32 %v10318, 0.0
        %v10531 = vmax.f32 %v9727, 0.0
        %v10532 = vmax.f32 %v9729, 0.0
        %v10533 = vmax.f32 %v10323, 0.0
        %v10534 = vmax.f32 %v9731, 0.0
        %v10535 = vmax.f32 %v9733, 0.0
        %v10536 = vmax.f32 %v10326, 0.0
        %v10537 = vmax.f32 %v9737, 0.0
        %v10538 = vmax.f32 %v9739, 0.0
        %v10539 = vmax.f32 %v10331, 0.0
        %v10540 = vmax.f32 %v9741, 0.0
        %v10541 = vmax.f32 %v9743, 0.0
        %v10542 = vmax.f32 %v10334, 0.0
        %v10543 = vmax.f32 %v9747, 0.0
        %v10544 = vmax.f32 %v9749, 0.0
        %v10545 = vmax.f32 %v10339, 0.0
        %v10546 = vmax.f32 %v9751, 0.0
        %v10547 = vmax.f32 %v9753, 0.0
        %v10548 = vmax.f32 %v10342, 0.0
        %v10549 = vmax.f32 %v9757, 0.0
        %v10550 = vmax.f32 %v9759, 0.0
        %v10551 = vmax.f32 %v10347, 0.0
        %v10552 = vmax.f32 %v9761, 0.0
        %v10553 = vmax.f32 %v9763, 0.0
        %v10554 = vmax.f32 %v10350, 0.0
        %v10555 = vmax.f32 %v9767, 0.0
        %v10556 = vmax.f32 %v9769, 0.0
        %v10557 = vmax.f32 %v10355, 0.0
        %v10558 = vmax.f32 %v9771, 0.0
        %v10559 = vmax.f32 %v9773, 0.0
        %v10560 = vmax.f32 %v10358, 0.0
        %v10561 = vmax.f32 %v9777, 0.0
        %v10562 = vmax.f32 %v9779, 0.0
        %v10563 = vmax.f32 %v10363, 0.0
        %v10564 = vmax.f32 %v9781, 0.0
        %v10565 = vmax.f32 %v9783, 0.0
        %v10566 = vmax.f32 %v10366, 0.0
        %v10567 = vmax.f32 %v9787, 0.0
        %v10568 = vmax.f32 %v9789, 0.0
        %v10569 = vmax.f32 %v10371, 0.0
        %v10570 = vmax.f32 %v9791, 0.0
        %v10571 = vmax.f32 %v9793, 0.0
        %v10572 = vmax.f32 %v10374, 0.0
        %v10573 = vmax.f32 %v9797, 0.0
        %v10574 = vmax.f32 %v9799, 0.0
        %v10575 = vmax.f32 %v10379, 0.0
        %v10576 = vmax.f32 %v9801, 0.0
        %v10577 = vmax.f32 %v9803, 0.0
        %v10578 = vmax.f32 %v10382, 0.0
        %v10579 = vmax.f32 %v9807, 0.0
        %v10580 = vmax.f32 %v9809, 0.0
        %v10581 = vmax.f32 %v10387, 0.0
        %v10582 = vmax.f32 %v9811, 0.0
        %v10583 = vmax.f32 %v9813, 0.0
        %v10584 = vmax.f32 %v10390, 0.0
        %v10585 = vpack.c.bf16 %v10396, %v10393
        %v10586 = vpack.c.bf16 %v10397, %v10394
        %v10587 = vpack.c.bf16 %v10398, %v10395
        %v10588 = vpack.c.bf16 %v10402, %v10399
        %v10589 = vpack.c.bf16 %v10403, %v10400
        %v10590 = vpack.c.bf16 %v10404, %v10401
        %v10591 = vpack.c.bf16 %v10408, %v10405
        %v10592 = vpack.c.bf16 %v10409, %v10406
        %v10593 = vpack.c.bf16 %v10410, %v10407
        %v10594 = vpack.c.bf16 %v10414, %v10411
        %v10595 = vpack.c.bf16 %v10415, %v10412
        %v10596 = vpack.c.bf16 %v10416, %v10413
        %v10597 = vpack.c.bf16 %v10420, %v10417
        %v10598 = vpack.c.bf16 %v10421, %v10418
        %v10599 = vpack.c.bf16 %v10422, %v10419
        %v10600 = vpack.c.bf16 %v10426, %v10423
        %v10601 = vpack.c.bf16 %v10427, %v10424
        %v10602 = vpack.c.bf16 %v10428, %v10425
        %v10603 = vpack.c.bf16 %v10432, %v10429
        %v10604 = vpack.c.bf16 %v10433, %v10430
        %v10605 = vpack.c.bf16 %v10434, %v10431
        %v10606 = vpack.c.bf16 %v10438, %v10435
        %v10607 = vpack.c.bf16 %v10439, %v10436
        %v10608 = vpack.c.bf16 %v10440, %v10437
        %v10609 = vpack.c.bf16 %v10444, %v10441
        %v10610 = vpack.c.bf16 %v10445, %v10442
        %v10611 = vpack.c.bf16 %v10446, %v10443
        %v10612 = vpack.c.bf16 %v10450, %v10447
        %v10613 = vpack.c.bf16 %v10451, %v10448
        %v10614 = vpack.c.bf16 %v10452, %v10449
        %v10615 = vpack.c.bf16 %v10456, %v10453
        %v10616 = vpack.c.bf16 %v10457, %v10454
        %v10617 = vpack.c.bf16 %v10458, %v10455
        %v10618 = vpack.c.bf16 %v10462, %v10459
        %v10619 = vpack.c.bf16 %v10463, %v10460
        %v10620 = vpack.c.bf16 %v10464, %v10461
        %v10621 = vpack.c.bf16 %v10468, %v10465
        %v10622 = vpack.c.bf16 %v10469, %v10466
        %v10623 = vpack.c.bf16 %v10470, %v10467
        %v10624 = vpack.c.bf16 %v10474, %v10471
        %v10625 = vpack.c.bf16 %v10475, %v10472
        %v10626 = vpack.c.bf16 %v10476, %v10473
        %v10627 = vpack.c.bf16 %v10480, %v10477
        %v10628 = vpack.c.bf16 %v10481, %v10478
        %v10629 = vpack.c.bf16 %v10482, %v10479
        %v10630 = vpack.c.bf16 %v10486, %v10483
        %v10631 = vpack.c.bf16 %v10487, %v10484
        %v10632 = vpack.c.bf16 %v10488, %v10485
        %v10633 = vpack.c.bf16 %v10492, %v10489
        %v10634 = vpack.c.bf16 %v10493, %v10490
        %v10635 = vpack.c.bf16 %v10494, %v10491
        %v10636 = vpack.c.bf16 %v10498, %v10495
        %v10637 = vpack.c.bf16 %v10499, %v10496
        %v10638 = vpack.c.bf16 %v10500, %v10497
        %v10639 = vpack.c.bf16 %v10504, %v10501
        %v10640 = vpack.c.bf16 %v10505, %v10502
        %v10641 = vpack.c.bf16 %v10506, %v10503
        %v10642 = vpack.c.bf16 %v10510, %v10507
        %v10643 = vpack.c.bf16 %v10511, %v10508
        %v10644 = vpack.c.bf16 %v10512, %v10509
        %v10645 = vpack.c.bf16 %v10516, %v10513
        %v10646 = vpack.c.bf16 %v10517, %v10514
        %v10647 = vpack.c.bf16 %v10518, %v10515
        %v10648 = vpack.c.bf16 %v10522, %v10519
        %v10649 = vpack.c.bf16 %v10523, %v10520
        %v10650 = vpack.c.bf16 %v10524, %v10521
        %v10651 = vpack.c.bf16 %v10528, %v10525
        %v10652 = vpack.c.bf16 %v10529, %v10526
        %v10653 = vpack.c.bf16 %v10530, %v10527
        %v10654 = vpack.c.bf16 %v10534, %v10531
        %v10655 = vpack.c.bf16 %v10535, %v10532
        %v10656 = vpack.c.bf16 %v10536, %v10533
        %v10657 = vpack.c.bf16 %v10540, %v10537
        %v10658 = vpack.c.bf16 %v10541, %v10538
        %v10659 = vpack.c.bf16 %v10542, %v10539
        %v10660 = vpack.c.bf16 %v10546, %v10543
        %v10661 = vpack.c.bf16 %v10547, %v10544
        %v10662 = vpack.c.bf16 %v10548, %v10545
        %v10663 = vpack.c.bf16 %v10552, %v10549
        %v10664 = vpack.c.bf16 %v10553, %v10550
        %v10665 = vpack.c.bf16 %v10554, %v10551
        %v10666 = vpack.c.bf16 %v10558, %v10555
        %v10667 = vpack.c.bf16 %v10559, %v10556
        %v10668 = vpack.c.bf16 %v10560, %v10557
        %v10669 = vpack.c.bf16 %v10564, %v10561
        %v10670 = vpack.c.bf16 %v10565, %v10562
        %v10671 = vpack.c.bf16 %v10566, %v10563
        %v10672 = vpack.c.bf16 %v10570, %v10567
        %v10673 = vpack.c.bf16 %v10571, %v10568
        %v10674 = vpack.c.bf16 %v10572, %v10569
        %v10675 = vpack.c.bf16 %v10576, %v10573
        %v10676 = vpack.c.bf16 %v10577, %v10574
        %v10677 = vpack.c.bf16 %v10578, %v10575
        %v10678 = vpack.c.bf16 %v10582, %v10579
        %v10679 = vpack.c.bf16 %v10583, %v10580
        %v10680 = vpack.c.bf16 %v10584, %v10581
        %v10681 = vld [vmem:[%s15] sm:$0xf]
        %v10682 = vld [vmem:[%s15 + $0x4] sm:$0xf]
        %v10683 = vld [vmem:[%s15 + $0x8] sm:$0xf]
        %v10684 = vld [vmem:[%s15 + $0xc] sm:$0xf]
        %v10685 = vld [vmem:[%s15 + $0x10] sm:$0xf]
        %v10686 = vld [vmem:[%s15 + $0x14] sm:$0xf]
        %v10687 = vld [vmem:[%s15 + $0x18] sm:$0xf]
        %v10688 = vld [vmem:[%s15 + $0x1c] sm:$0xf]
        %v10689 = vld [vmem:[%s15 + $0x20] sm:$0xf]
        %v10690 = vld [vmem:[%s15 + $0x24] sm:$0xf]
        %v10691 = vld [vmem:[%s15 + $0x28] sm:$0xf]
        %v10692 = vld [vmem:[%s15 + $0x2c] sm:$0xf]
        %v10693 = vld [vmem:[%s15 + $0x30] sm:$0xf]
        %v10694 = vld [vmem:[%s15 + $0x34] sm:$0xf]
        %v10695 = vld [vmem:[%s15 + $0x38] sm:$0xf]
        %v10696 = vld [vmem:[%s15 + $0x3c] sm:$0xf]
        %v10697 = vld [vmem:[%s15 + $0x40] sm:$0xf]
        %v10698 = vld [vmem:[%s15 + $0x44] sm:$0xf]
        %v10699 = vld [vmem:[%s15 + $0x48] sm:$0xf]
        %v10700 = vld [vmem:[%s15 + $0x4c] sm:$0xf]
        %v10701 = vld [vmem:[%s15 + $0x50] sm:$0xf]
        %v10702 = vld [vmem:[%s15 + $0x54] sm:$0xf]
        %v10703 = vld [vmem:[%s15 + $0x58] sm:$0xf]
        %v10704 = vld [vmem:[%s15 + $0x5c] sm:$0xf]
        %v10705 = vld [vmem:[%s15 + $0x60] sm:$0xf]
        %v10706 = vld [vmem:[%s15 + $0x64] sm:$0xf]
        %v10707 = vld [vmem:[%s15 + $0x68] sm:$0xf]
        %v10708 = vld [vmem:[%s15 + $0x6c] sm:$0xf]
        %v10709 = vld [vmem:[%s15 + $0x70] sm:$0xf]
        %v10710 = vld [vmem:[%s15 + $0x74] sm:$0xf]
        %v10711 = vld [vmem:[%s15 + $0x78] sm:$0xf]
        %v10712 = vld [vmem:[%s15 + $0x7c] sm:$0xf]
        %v10713 = vld [vmem:[%s15 + $0x80] sm:$0xf]
        %v10714 = vld [vmem:[%s15 + $0x84] sm:$0xf]
        %v10715 = vld [vmem:[%s15 + $0x88] sm:$0xf]
        %v10716 = vld [vmem:[%s15 + $0x8c] sm:$0xf]
        %v10717 = vld [vmem:[%s15 + $0x90] sm:$0xf]
        %v10718 = vld [vmem:[%s15 + $0x94] sm:$0xf]
        %v10719 = vld [vmem:[%s15 + $0x98] sm:$0xf]
        %v10720 = vld [vmem:[%s15 + $0x9c] sm:$0xf]
        %v10721 = vld [vmem:[%s15 + $0xa0] sm:$0xf]
        %v10722 = vld [vmem:[%s15 + $0xa4] sm:$0xf]
        %v10723 = vld [vmem:[%s15 + $0xa8] sm:$0xf]
        %v10724 = vld [vmem:[%s15 + $0xac] sm:$0xf]
        %v10725 = vld [vmem:[%s15 + $0xb0] sm:$0xf]
        %v10726 = vld [vmem:[%s15 + $0xb4] sm:$0xf]
        %v10727 = vld [vmem:[%s15 + $0xb8] sm:$0xf]
        %v10728 = vld [vmem:[%s15 + $0xbc] sm:$0xf]
        %v10729 = vld [vmem:[%s16] sm:$0x1]
        %v10731 = vlaneseq
        %v10732 = vshrl.u32 %v10731, 7
        %v10733 = vsub.s32 0, %v10732
        %v10734 = vrot.slane %v10729, %v10733
        %v10784 = vunpack.c.l.b16 %v10681
        %v10785 = vunpack.c.l.b16 %v10682
        %v10786 = vunpack.c.l.b16 %v10683
        %v10787 = vunpack.c.l.b16 %v10684
        %v10788 = vunpack.c.l.b16 %v10685
        %v10789 = vunpack.c.l.b16 %v10686
        %v10790 = vunpack.c.l.b16 %v10687
        %v10791 = vunpack.c.l.b16 %v10688
        %v10792 = vunpack.c.l.b16 %v10689
        %v10793 = vunpack.c.l.b16 %v10690
        %v10794 = vunpack.c.l.b16 %v10691
        %v10795 = vunpack.c.l.b16 %v10692
        %v10796 = vunpack.c.l.b16 %v10693
        %v10797 = vunpack.c.l.b16 %v10694
        %v10798 = vunpack.c.l.b16 %v10695
        %v10799 = vunpack.c.l.b16 %v10696
        %v10800 = vunpack.c.l.b16 %v10697
        %v10801 = vunpack.c.l.b16 %v10698
        %v10802 = vunpack.c.l.b16 %v10699
        %v10803 = vunpack.c.l.b16 %v10700
        %v10804 = vunpack.c.l.b16 %v10701
        %v10805 = vunpack.c.l.b16 %v10702
        %v10806 = vunpack.c.l.b16 %v10703
        %v10807 = vunpack.c.l.b16 %v10704
        %v10808 = vunpack.c.l.b16 %v10705
        %v10809 = vunpack.c.l.b16 %v10706
        %v10810 = vunpack.c.l.b16 %v10707
        %v10811 = vunpack.c.l.b16 %v10708
        %v10812 = vunpack.c.l.b16 %v10709
        %v10813 = vunpack.c.l.b16 %v10710
        %v10814 = vunpack.c.l.b16 %v10711
        %v10815 = vunpack.c.l.b16 %v10712
        %v10816 = vunpack.c.l.b16 %v10713
        %v10817 = vunpack.c.l.b16 %v10714
        %v10818 = vunpack.c.l.b16 %v10715
        %v10819 = vunpack.c.l.b16 %v10716
        %v10820 = vunpack.c.l.b16 %v10717
        %v10821 = vunpack.c.l.b16 %v10718
        %v10822 = vunpack.c.l.b16 %v10719
        %v10823 = vunpack.c.l.b16 %v10720
        %v10824 = vunpack.c.l.b16 %v10721
        %v10825 = vunpack.c.l.b16 %v10722
        %v10826 = vunpack.c.l.b16 %v10723
        %v10827 = vunpack.c.l.b16 %v10724
        %v10828 = vunpack.c.l.b16 %v10725
        %v10829 = vunpack.c.l.b16 %v10726
        %v10830 = vunpack.c.l.b16 %v10727
        %v10831 = vunpack.c.l.b16 %v10728
        %v10832 = vpack.c.b16 %v10785, %v10784
        %v10833 = vpack.c.b16 %v10787, %v10786
        %v10834 = vpack.c.b16 %v10789, %v10788
        %v10835 = vpack.c.b16 %v10791, %v10790
        %v10836 = vpack.c.b16 %v10793, %v10792
        %v10837 = vpack.c.b16 %v10795, %v10794
        %v10838 = vpack.c.b16 %v10797, %v10796
        %v10839 = vpack.c.b16 %v10799, %v10798
        %v10840 = vpack.c.b16 %v10801, %v10800
        %v10841 = vpack.c.b16 %v10803, %v10802
        %v10842 = vpack.c.b16 %v10805, %v10804
        %v10843 = vpack.c.b16 %v10807, %v10806
        %v10844 = vpack.c.b16 %v10809, %v10808
        %v10845 = vpack.c.b16 %v10811, %v10810
        %v10846 = vpack.c.b16 %v10813, %v10812
        %v10847 = vpack.c.b16 %v10815, %v10814
        %v10848 = vpack.c.b16 %v10817, %v10816
        %v10849 = vpack.c.b16 %v10819, %v10818
        %v10850 = vpack.c.b16 %v10821, %v10820
        %v10851 = vpack.c.b16 %v10823, %v10822
        %v10852 = vpack.c.b16 %v10825, %v10824
        %v10853 = vpack.c.b16 %v10827, %v10826
        %v10854 = vpack.c.b16 %v10829, %v10828
        %v10855 = vpack.c.b16 %v10831, %v10830
        %10880 = vmatprep.subr.bf16.mxu0 0
        %10881 = vmatpush1.bf16.msra.mxu0 %v10832
        %10882 = vmatprep.subr.bf16.mxu0 0
        %10883 = vmatpush1.bf16.msra.mxu0 %v10833
        %10884 = vmatprep.subr.bf16.mxu0 0
        %10885 = vmatpush1.bf16.msra.mxu0 %v10834
        %10886 = vmatprep.subr.bf16.mxu0 0
        %10887 = vmatpush1.bf16.msra.mxu0 %v10835
        %10888 = vmatprep.subr.bf16.mxu0 0
        %10889 = vmatpush1.bf16.msra.mxu0 %v10836
        %10890 = vmatprep.subr.bf16.mxu0 0
        %10891 = vmatpush1.bf16.msra.mxu0 %v10837
        %10892 = vmatprep.subr.bf16.mxu0 0
        %10893 = vmatpush1.bf16.msra.mxu0 %v10838
        %10894 = vmatprep.subr.bf16.mxu0 0
        %10895 = vmatpush1.bf16.msra.mxu0 %v10839
        %10896 = vmatprep.subr.bf16.mxu0 0
        %10897 = vmatpush1.bf16.msra.mxu0 %v10840
        %10898 = vmatprep.subr.bf16.mxu0 0
        %10899 = vmatpush1.bf16.msra.mxu0 %v10841
        %10900 = vmatprep.subr.bf16.mxu0 0
        %10901 = vmatpush1.bf16.msra.mxu0 %v10842
        %10902 = vmatprep.subr.bf16.mxu0 0
        %10903 = vmatpush1.bf16.msra.mxu0 %v10843
        %10904 = vmatprep.subr.bf16.mxu0 0
        %10905 = vmatpush1.bf16.msra.mxu0 %v10844
        %10906 = vmatprep.subr.bf16.mxu0 0
        %10907 = vmatpush1.bf16.msra.mxu0 %v10845
        %10908 = vmatprep.subr.bf16.mxu0 0
        %10909 = vmatpush1.bf16.msra.mxu0 %v10846
        %10910 = vmatprep.subr.bf16.mxu0 0
        %10911 = vmatpush1.bf16.msra.mxu0 %v10847
        %10912 = vmatprep.mubr.bf16.mxu0 %v10586
        %10913 = vmatmul.mubr.bf16.gmra.mrb[0].mxu0 %v10585
        %v10914 = vpop.f32.mrb[0].mxu0
        %v10915 = vadd.f32 %v10734, %v10914
        %v10916 = vpop.f32.mrb[0].mxu0
        %v10917 = vpop.f32.mrb[0].mxu0
        %v10918 = vadd.f32 %v10734, %v10917
        %v10919 = vpop.f32.mrb[0].mxu0
        %10920 = vmatprep.mubr.bf16.mxu0 %v10589
        %10921 = vmatmul.mubr.bf16.gmra.mrb[0].mxu0 %v10588
        %v10922 = vpop.f32.mrb[0].mxu0
        %v10923 = vadd.f32 %v10734, %v10922
        %v10924 = vpop.f32.mrb[0].mxu0
        %v10925 = vpop.f32.mrb[0].mxu0
        %v10926 = vadd.f32 %v10734, %v10925
        %v10927 = vpop.f32.mrb[0].mxu0
        %10928 = vmatprep.mubr.bf16.mxu0 %v10592
        %10929 = vmatmul.mubr.bf16.gmra.mrb[0].mxu0 %v10591
        %v10930 = vpop.f32.mrb[0].mxu0
        %v10931 = vadd.f32 %v10734, %v10930
        %v10932 = vpop.f32.mrb[0].mxu0
        %v10933 = vpop.f32.mrb[0].mxu0
        %v10934 = vadd.f32 %v10734, %v10933
        %v10935 = vpop.f32.mrb[0].mxu0
        %10936 = vmatprep.mubr.bf16.mxu0 %v10595
        %10937 = vmatmul.mubr.bf16.gmra.mrb[0].mxu0 %v10594
        %v10938 = vpop.f32.mrb[0].mxu0
        %v10939 = vadd.f32 %v10734, %v10938
        %v10940 = vpop.f32.mrb[0].mxu0
        %v10941 = vpop.f32.mrb[0].mxu0
        %v10942 = vadd.f32 %v10734, %v10941
        %v10943 = vpop.f32.mrb[0].mxu0
        %10944 = vmatprep.mubr.bf16.mxu0 %v10598
        %10945 = vmatmul.mubr.bf16.gmra.mrb[0].mxu0 %v10597
        %v10946 = vpop.f32.mrb[0].mxu0
        %v10947 = vadd.f32 %v10734, %v10946
        %v10948 = vpop.f32.mrb[0].mxu0
        %v10949 = vpop.f32.mrb[0].mxu0
        %v10950 = vadd.f32 %v10734, %v10949
        %v10951 = vpop.f32.mrb[0].mxu0
        %10952 = vmatprep.mubr.bf16.mxu0 %v10601
        %10953 = vmatmul.mubr.bf16.gmra.mrb[0].mxu0 %v10600
        %v10954 = vpop.f32.mrb[0].mxu0
        %v10955 = vadd.f32 %v10734, %v10954
        %v10956 = vpop.f32.mrb[0].mxu0
        %v10957 = vpop.f32.mrb[0].mxu0
        %v10958 = vadd.f32 %v10734, %v10957
        %v10959 = vpop.f32.mrb[0].mxu0
        %10960 = vmatprep.mubr.bf16.mxu0 %v10604
        %10961 = vmatmul.mubr.bf16.gmra.mrb[0].mxu0 %v10603
        %v10962 = vpop.f32.mrb[0].mxu0
        %v10963 = vadd.f32 %v10734, %v10962
        %v10964 = vpop.f32.mrb[0].mxu0
        %v10965 = vpop.f32.mrb[0].mxu0
        %v10966 = vadd.f32 %v10734, %v10965
        %v10967 = vpop.f32.mrb[0].mxu0
        %10968 = vmatprep.mubr.bf16.mxu0 %v10607
        %10969 = vmatmul.mubr.bf16.gmra.mrb[0].mxu0 %v10606
        %v10970 = vpop.f32.mrb[0].mxu0
        %v10971 = vadd.f32 %v10734, %v10970
        %v10972 = vpop.f32.mrb[0].mxu0
        %v10973 = vpop.f32.mrb[0].mxu0
        %v10974 = vadd.f32 %v10734, %v10973
        %v10975 = vpop.f32.mrb[0].mxu0
        %10976 = vmatprep.mubr.bf16.mxu0 %v10610
        %10977 = vmatmul.mubr.bf16.gmra.mrb[0].mxu0 %v10609
        %v10978 = vpop.f32.mrb[0].mxu0
        %v10979 = vadd.f32 %v10734, %v10978
        %v10980 = vpop.f32.mrb[0].mxu0
        %v10981 = vpop.f32.mrb[0].mxu0
        %v10982 = vadd.f32 %v10734, %v10981
        %v10983 = vpop.f32.mrb[0].mxu0
        %10984 = vmatprep.mubr.bf16.mxu0 %v10613
        %10985 = vmatmul.mubr.bf16.gmra.mrb[0].mxu0 %v10612
        %v10986 = vpop.f32.mrb[0].mxu0
        %v10987 = vadd.f32 %v10734, %v10986
        %v10988 = vpop.f32.mrb[0].mxu0
        %v10989 = vpop.f32.mrb[0].mxu0
        %v10990 = vadd.f32 %v10734, %v10989
        %v10991 = vpop.f32.mrb[0].mxu0
        %10992 = vmatprep.mubr.bf16.mxu0 %v10616
        %10993 = vmatmul.mubr.bf16.gmra.mrb[0].mxu0 %v10615
        %v10994 = vpop.f32.mrb[0].mxu0
        %v10995 = vadd.f32 %v10734, %v10994
        %v10996 = vpop.f32.mrb[0].mxu0
        %v10997 = vpop.f32.mrb[0].mxu0
        %v10998 = vadd.f32 %v10734, %v10997
        %v10999 = vpop.f32.mrb[0].mxu0
        %11000 = vmatprep.mubr.bf16.mxu0 %v10619
        %11001 = vmatmul.mubr.bf16.gmra.mrb[0].mxu0 %v10618
        %v11002 = vpop.f32.mrb[0].mxu0
        %v11003 = vadd.f32 %v10734, %v11002
        %v11004 = vpop.f32.mrb[0].mxu0
        %v11005 = vpop.f32.mrb[0].mxu0
        %v11006 = vadd.f32 %v10734, %v11005
        %v11007 = vpop.f32.mrb[0].mxu0
        %11008 = vmatprep.mubr.bf16.mxu0 %v10622
        %11009 = vmatmul.mubr.bf16.gmra.mrb[0].mxu0 %v10621
        %v11010 = vpop.f32.mrb[0].mxu0
        %v11011 = vadd.f32 %v10734, %v11010
        %v11012 = vpop.f32.mrb[0].mxu0
        %v11013 = vpop.f32.mrb[0].mxu0
        %v11014 = vadd.f32 %v10734, %v11013
        %v11015 = vpop.f32.mrb[0].mxu0
        %11016 = vmatprep.mubr.bf16.mxu0 %v10625
        %11017 = vmatmul.mubr.bf16.gmra.mrb[0].mxu0 %v10624
        %v11018 = vpop.f32.mrb[0].mxu0
        %v11019 = vadd.f32 %v10734, %v11018
        %v11020 = vpop.f32.mrb[0].mxu0
        %v11021 = vpop.f32.mrb[0].mxu0
        %v11022 = vadd.f32 %v10734, %v11021
        %v11023 = vpop.f32.mrb[0].mxu0
        %11024 = vmatprep.mubr.bf16.mxu0 %v10628
        %11025 = vmatmul.mubr.bf16.gmra.mrb[0].mxu0 %v10627
        %v11026 = vpop.f32.mrb[0].mxu0
        %v11027 = vadd.f32 %v10734, %v11026
        %v11028 = vpop.f32.mrb[0].mxu0
        %v11029 = vpop.f32.mrb[0].mxu0
        %v11030 = vadd.f32 %v10734, %v11029
        %v11031 = vpop.f32.mrb[0].mxu0
        %11032 = vmatprep.mubr.bf16.mxu0 %v10631
        %11033 = vmatmul.mubr.bf16.gmra.mrb[0].mxu0 %v10630
        %v11034 = vpop.f32.mrb[0].mxu0
        %v11035 = vadd.f32 %v10734, %v11034
        %v11036 = vpop.f32.mrb[0].mxu0
        %v11037 = vpop.f32.mrb[0].mxu0
        %v11038 = vadd.f32 %v10734, %v11037
        %v11039 = vpop.f32.mrb[0].mxu0
        %11040 = vmatprep.mubr.bf16.mxu0 %v10634
        %11041 = vmatmul.mubr.bf16.gmra.mrb[0].mxu0 %v10633
        %v11042 = vpop.f32.mrb[0].mxu0
        %v11043 = vadd.f32 %v10734, %v11042
        %v11044 = vpop.f32.mrb[0].mxu0
        %v11045 = vpop.f32.mrb[0].mxu0
        %v11046 = vadd.f32 %v10734, %v11045
        %v11047 = vpop.f32.mrb[0].mxu0
        %11048 = vmatprep.mubr.bf16.mxu0 %v10637
        %11049 = vmatmul.mubr.bf16.gmra.mrb[0].mxu0 %v10636
        %v11050 = vpop.f32.mrb[0].mxu0
        %v11051 = vadd.f32 %v10734, %v11050
        %v11052 = vpop.f32.mrb[0].mxu0
        %v11053 = vpop.f32.mrb[0].mxu0
        %v11054 = vadd.f32 %v10734, %v11053
        %v11055 = vpop.f32.mrb[0].mxu0
        %11056 = vmatprep.mubr.bf16.mxu0 %v10640
        %11057 = vmatmul.mubr.bf16.gmra.mrb[0].mxu0 %v10639
        %v11058 = vpop.f32.mrb[0].mxu0
        %v11059 = vadd.f32 %v10734, %v11058
        %v11060 = vpop.f32.mrb[0].mxu0
        %v11061 = vpop.f32.mrb[0].mxu0
        %v11062 = vadd.f32 %v10734, %v11061
        %v11063 = vpop.f32.mrb[0].mxu0
        %11064 = vmatprep.mubr.bf16.mxu0 %v10643
        %11065 = vmatmul.mubr.bf16.gmra.mrb[0].mxu0 %v10642
        %v11066 = vpop.f32.mrb[0].mxu0
        %v11067 = vadd.f32 %v10734, %v11066
        %v11068 = vpop.f32.mrb[0].mxu0
        %v11069 = vpop.f32.mrb[0].mxu0
        %v11070 = vadd.f32 %v10734, %v11069
        %v11071 = vpop.f32.mrb[0].mxu0
        %11072 = vmatprep.mubr.bf16.mxu0 %v10646
        %11073 = vmatmul.mubr.bf16.gmra.mrb[0].mxu0 %v10645
        %v11074 = vpop.f32.mrb[0].mxu0
        %v11075 = vadd.f32 %v10734, %v11074
        %v11076 = vpop.f32.mrb[0].mxu0
        %v11077 = vpop.f32.mrb[0].mxu0
        %v11078 = vadd.f32 %v10734, %v11077
        %v11079 = vpop.f32.mrb[0].mxu0
        %11080 = vmatprep.mubr.bf16.mxu0 %v10649
        %11081 = vmatmul.mubr.bf16.gmra.mrb[0].mxu0 %v10648
        %v11082 = vpop.f32.mrb[0].mxu0
        %v11083 = vadd.f32 %v10734, %v11082
        %v11084 = vpop.f32.mrb[0].mxu0
        %v11085 = vpop.f32.mrb[0].mxu0
        %v11086 = vadd.f32 %v10734, %v11085
        %v11087 = vpop.f32.mrb[0].mxu0
        %11088 = vmatprep.mubr.bf16.mxu0 %v10652
        %11089 = vmatmul.mubr.bf16.gmra.mrb[0].mxu0 %v10651
        %v11090 = vpop.f32.mrb[0].mxu0
        %v11091 = vadd.f32 %v10734, %v11090
        %v11092 = vpop.f32.mrb[0].mxu0
        %v11093 = vpop.f32.mrb[0].mxu0
        %v11094 = vadd.f32 %v10734, %v11093
        %v11095 = vpop.f32.mrb[0].mxu0
        %11096 = vmatprep.mubr.bf16.mxu0 %v10655
        %11097 = vmatmul.mubr.bf16.gmra.mrb[0].mxu0 %v10654
        %v11098 = vpop.f32.mrb[0].mxu0
        %v11099 = vadd.f32 %v10734, %v11098
        %v11100 = vpop.f32.mrb[0].mxu0
        %v11101 = vpop.f32.mrb[0].mxu0
        %v11102 = vadd.f32 %v10734, %v11101
        %v11103 = vpop.f32.mrb[0].mxu0
        %11104 = vmatprep.mubr.bf16.mxu0 %v10658
        %11105 = vmatmul.mubr.bf16.gmra.mrb[0].mxu0 %v10657
        %v11106 = vpop.f32.mrb[0].mxu0
        %v11107 = vadd.f32 %v10734, %v11106
        %v11108 = vpop.f32.mrb[0].mxu0
        %v11109 = vpop.f32.mrb[0].mxu0
        %v11110 = vadd.f32 %v10734, %v11109
        %v11111 = vpop.f32.mrb[0].mxu0
        %11112 = vmatprep.mubr.bf16.mxu0 %v10661
        %11113 = vmatmul.mubr.bf16.gmra.mrb[0].mxu0 %v10660
        %v11114 = vpop.f32.mrb[0].mxu0
        %v11115 = vadd.f32 %v10734, %v11114
        %v11116 = vpop.f32.mrb[0].mxu0
        %v11117 = vpop.f32.mrb[0].mxu0
        %v11118 = vadd.f32 %v10734, %v11117
        %v11119 = vpop.f32.mrb[0].mxu0
        %11120 = vmatprep.mubr.bf16.mxu0 %v10664
        %11121 = vmatmul.mubr.bf16.gmra.mrb[0].mxu0 %v10663
        %v11122 = vpop.f32.mrb[0].mxu0
        %v11123 = vadd.f32 %v10734, %v11122
        %v11124 = vpop.f32.mrb[0].mxu0
        %v11125 = vpop.f32.mrb[0].mxu0
        %v11126 = vadd.f32 %v10734, %v11125
        %v11127 = vpop.f32.mrb[0].mxu0
        %11128 = vmatprep.mubr.bf16.mxu0 %v10667
        %11129 = vmatmul.mubr.bf16.gmra.mrb[0].mxu0 %v10666
        %v11130 = vpop.f32.mrb[0].mxu0
        %v11131 = vadd.f32 %v10734, %v11130
        %v11132 = vpop.f32.mrb[0].mxu0
        %v11133 = vpop.f32.mrb[0].mxu0
        %v11134 = vadd.f32 %v10734, %v11133
        %v11135 = vpop.f32.mrb[0].mxu0
        %11136 = vmatprep.mubr.bf16.mxu0 %v10670
        %11137 = vmatmul.mubr.bf16.gmra.mrb[0].mxu0 %v10669
        %v11138 = vpop.f32.mrb[0].mxu0
        %v11139 = vadd.f32 %v10734, %v11138
        %v11140 = vpop.f32.mrb[0].mxu0
        %v11141 = vpop.f32.mrb[0].mxu0
        %v11142 = vadd.f32 %v10734, %v11141
        %v11143 = vpop.f32.mrb[0].mxu0
        %11144 = vmatprep.mubr.bf16.mxu0 %v10673
        %11145 = vmatmul.mubr.bf16.gmra.mrb[0].mxu0 %v10672
        %v11146 = vpop.f32.mrb[0].mxu0
        %v11147 = vadd.f32 %v10734, %v11146
        %v11148 = vpop.f32.mrb[0].mxu0
        %v11149 = vpop.f32.mrb[0].mxu0
        %v11150 = vadd.f32 %v10734, %v11149
        %v11151 = vpop.f32.mrb[0].mxu0
        %11152 = vmatprep.mubr.bf16.mxu0 %v10676
        %11153 = vmatmul.mubr.bf16.gmra.mrb[0].mxu0 %v10675
        %v11154 = vpop.f32.mrb[0].mxu0
        %v11155 = vadd.f32 %v10734, %v11154
        %v11156 = vpop.f32.mrb[0].mxu0
        %v11157 = vpop.f32.mrb[0].mxu0
        %v11158 = vadd.f32 %v10734, %v11157
        %v11159 = vpop.f32.mrb[0].mxu0
        %11160 = vmatprep.mubr.bf16.mxu0 %v10679
        %11161 = vmatmul.mubr.bf16.gmra.mrb[0].mxu0 %v10678
        %v11162 = vpop.f32.mrb[0].mxu0
        %v11163 = vadd.f32 %v10734, %v11162
        %v11164 = vpop.f32.mrb[0].mxu0
        %v11165 = vpop.f32.mrb[0].mxu0
        %v11166 = vadd.f32 %v10734, %v11165
        %v11167 = vpop.f32.mrb[0].mxu0
        %11168 = vdwg.mxu0
        %11169 = vmatprep.subr.bf16.mxu0 0
        %11170 = vmatpush1.bf16.msra.mxu0 %v10848
        %11171 = vmatprep.subr.bf16.mxu0 0
        %11172 = vmatpush1.bf16.msra.mxu0 %v10849
        %11173 = vmatprep.subr.bf16.mxu0 0
        %11174 = vmatpush1.bf16.msra.mxu0 %v10850
        %11175 = vmatprep.subr.bf16.mxu0 0
        %11176 = vmatpush1.bf16.msra.mxu0 %v10851
        %11177 = vmatprep.subr.bf16.mxu0 0
        %11178 = vmatpush1.bf16.msra.mxu0 %v10852
        %11179 = vmatprep.subr.bf16.mxu0 0
        %11180 = vmatpush1.bf16.msra.mxu0 %v10853
        %11181 = vmatprep.subr.bf16.mxu0 0
        %11182 = vmatpush1.bf16.msra.mxu0 %v10854
        %11183 = vmatprep.subr.bf16.mxu0 0
        %11184 = vmatpush1.bf16.msra.mxu0 %v10855
        %11185 = vmatprep.subr.bf16.mxu0 0
        %11186 = vmatpush1.bf16.msra.mxu0 0
        %11187 = vmatprep.subr.bf16.mxu0 0
        %11188 = vmatpush1.bf16.msra.mxu0 0
        %11189 = vmatprep.subr.bf16.mxu0 0
        %11190 = vmatpush1.bf16.msra.mxu0 0
        %11191 = vmatprep.subr.bf16.mxu0 0
        %11192 = vmatpush1.bf16.msra.mxu0 0
        %11193 = vmatprep.subr.bf16.mxu0 0
        %11194 = vmatpush1.bf16.msra.mxu0 0
        %11195 = vmatprep.subr.bf16.mxu0 0
        %11196 = vmatpush1.bf16.msra.mxu0 0
        %11197 = vmatprep.subr.bf16.mxu0 0
        %11198 = vmatpush1.bf16.msra.mxu0 0
        %11199 = vmatprep.subr.bf16.mxu0 0
        %11200 = vmatpush1.bf16.msra.mxu0 0
        %11201 = vmatprep.mubr.bf16.mxu0 0
        %11202 = vmatmul.mubr.bf16.gmra.mrb[0].mxu0 %v10587
        %v11203 = vpop.f32.mrb[0].mxu0
        %v11204 = vadd.f32 %v10915, %v11203
        %v11205 = vpop.f32.mrb[0].mxu0
        %v11206 = vpop.f32.mrb[0].mxu0
        %v11207 = vadd.f32 %v10918, %v11206
        %v11208 = vpop.f32.mrb[0].mxu0
        %11209 = vmatprep.mubr.bf16.mxu0 0
        %11210 = vmatmul.mubr.bf16.gmra.mrb[0].mxu0 %v10590
        %v11211 = vpop.f32.mrb[0].mxu0
        %v11212 = vadd.f32 %v10923, %v11211
        %v11213 = vpop.f32.mrb[0].mxu0
        %v11214 = vpop.f32.mrb[0].mxu0
        %v11215 = vadd.f32 %v10926, %v11214
        %v11216 = vpop.f32.mrb[0].mxu0
        %11217 = vmatprep.mubr.bf16.mxu0 0
        %11218 = vmatmul.mubr.bf16.gmra.mrb[0].mxu0 %v10593
        %v11219 = vpop.f32.mrb[0].mxu0
        %v11220 = vadd.f32 %v10931, %v11219
        %v11221 = vpop.f32.mrb[0].mxu0
        %v11222 = vpop.f32.mrb[0].mxu0
        %v11223 = vadd.f32 %v10934, %v11222
        %v11224 = vpop.f32.mrb[0].mxu0
        %11225 = vmatprep.mubr.bf16.mxu0 0
        %11226 = vmatmul.mubr.bf16.gmra.mrb[0].mxu0 %v10596
        %v11227 = vpop.f32.mrb[0].mxu0
        %v11228 = vadd.f32 %v10939, %v11227
        %v11229 = vpop.f32.mrb[0].mxu0
        %v11230 = vpop.f32.mrb[0].mxu0
        %v11231 = vadd.f32 %v10942, %v11230
        %v11232 = vpop.f32.mrb[0].mxu0
        %11233 = vmatprep.mubr.bf16.mxu0 0
        %11234 = vmatmul.mubr.bf16.gmra.mrb[0].mxu0 %v10599
        %v11235 = vpop.f32.mrb[0].mxu0
        %v11236 = vadd.f32 %v10947, %v11235
        %v11237 = vpop.f32.mrb[0].mxu0
        %v11238 = vpop.f32.mrb[0].mxu0
        %v11239 = vadd.f32 %v10950, %v11238
        %v11240 = vpop.f32.mrb[0].mxu0
        %11241 = vmatprep.mubr.bf16.mxu0 0
        %11242 = vmatmul.mubr.bf16.gmra.mrb[0].mxu0 %v10602
        %v11243 = vpop.f32.mrb[0].mxu0
        %v11244 = vadd.f32 %v10955, %v11243
        %v11245 = vpop.f32.mrb[0].mxu0
        %v11246 = vpop.f32.mrb[0].mxu0
        %v11247 = vadd.f32 %v10958, %v11246
        %v11248 = vpop.f32.mrb[0].mxu0
        %11249 = vmatprep.mubr.bf16.mxu0 0
        %11250 = vmatmul.mubr.bf16.gmra.mrb[0].mxu0 %v10605
        %v11251 = vpop.f32.mrb[0].mxu0
        %v11252 = vadd.f32 %v10963, %v11251
        %v11253 = vpop.f32.mrb[0].mxu0
        %v11254 = vpop.f32.mrb[0].mxu0
        %v11255 = vadd.f32 %v10966, %v11254
        %v11256 = vpop.f32.mrb[0].mxu0
        %11257 = vmatprep.mubr.bf16.mxu0 0
        %11258 = vmatmul.mubr.bf16.gmra.mrb[0].mxu0 %v10608
        %v11259 = vpop.f32.mrb[0].mxu0
        %v11260 = vadd.f32 %v10971, %v11259
        %v11261 = vpop.f32.mrb[0].mxu0
        %v11262 = vpop.f32.mrb[0].mxu0
        %v11263 = vadd.f32 %v10974, %v11262
        %v11264 = vpop.f32.mrb[0].mxu0
        %11265 = vmatprep.mubr.bf16.mxu0 0
        %11266 = vmatmul.mubr.bf16.gmra.mrb[0].mxu0 %v10611
        %v11267 = vpop.f32.mrb[0].mxu0
        %v11268 = vadd.f32 %v10979, %v11267
        %v11269 = vpop.f32.mrb[0].mxu0
        %v11270 = vpop.f32.mrb[0].mxu0
        %v11271 = vadd.f32 %v10982, %v11270
        %v11272 = vpop.f32.mrb[0].mxu0
        %11273 = vmatprep.mubr.bf16.mxu0 0
        %11274 = vmatmul.mubr.bf16.gmra.mrb[0].mxu0 %v10614
        %v11275 = vpop.f32.mrb[0].mxu0
        %v11276 = vadd.f32 %v10987, %v11275
        %v11277 = vpop.f32.mrb[0].mxu0
        %v11278 = vpop.f32.mrb[0].mxu0
        %v11279 = vadd.f32 %v10990, %v11278
        %v11280 = vpop.f32.mrb[0].mxu0
        %11281 = vmatprep.mubr.bf16.mxu0 0
        %11282 = vmatmul.mubr.bf16.gmra.mrb[0].mxu0 %v10617
        %v11283 = vpop.f32.mrb[0].mxu0
        %v11284 = vadd.f32 %v10995, %v11283
        %v11285 = vpop.f32.mrb[0].mxu0
        %v11286 = vpop.f32.mrb[0].mxu0
        %v11287 = vadd.f32 %v10998, %v11286
        %v11288 = vpop.f32.mrb[0].mxu0
        %11289 = vmatprep.mubr.bf16.mxu0 0
        %11290 = vmatmul.mubr.bf16.gmra.mrb[0].mxu0 %v10620
        %v11291 = vpop.f32.mrb[0].mxu0
        %v11292 = vadd.f32 %v11003, %v11291
        %v11293 = vpop.f32.mrb[0].mxu0
        %v11294 = vpop.f32.mrb[0].mxu0
        %v11295 = vadd.f32 %v11006, %v11294
        %v11296 = vpop.f32.mrb[0].mxu0
        %11297 = vmatprep.mubr.bf16.mxu0 0
        %11298 = vmatmul.mubr.bf16.gmra.mrb[0].mxu0 %v10623
        %v11299 = vpop.f32.mrb[0].mxu0
        %v11300 = vadd.f32 %v11011, %v11299
        %v11301 = vpop.f32.mrb[0].mxu0
        %v11302 = vpop.f32.mrb[0].mxu0
        %v11303 = vadd.f32 %v11014, %v11302
        %v11304 = vpop.f32.mrb[0].mxu0
        %11305 = vmatprep.mubr.bf16.mxu0 0
        %11306 = vmatmul.mubr.bf16.gmra.mrb[0].mxu0 %v10626
        %v11307 = vpop.f32.mrb[0].mxu0
        %v11308 = vadd.f32 %v11019, %v11307
        %v11309 = vpop.f32.mrb[0].mxu0
        %v11310 = vpop.f32.mrb[0].mxu0
        %v11311 = vadd.f32 %v11022, %v11310
        %v11312 = vpop.f32.mrb[0].mxu0
        %11313 = vmatprep.mubr.bf16.mxu0 0
        %11314 = vmatmul.mubr.bf16.gmra.mrb[0].mxu0 %v10629
        %v11315 = vpop.f32.mrb[0].mxu0
        %v11316 = vadd.f32 %v11027, %v11315
        %v11317 = vpop.f32.mrb[0].mxu0
        %v11318 = vpop.f32.mrb[0].mxu0
        %v11319 = vadd.f32 %v11030, %v11318
        %v11320 = vpop.f32.mrb[0].mxu0
        %11321 = vmatprep.mubr.bf16.mxu0 0
        %11322 = vmatmul.mubr.bf16.gmra.mrb[0].mxu0 %v10632
        %v11323 = vpop.f32.mrb[0].mxu0
        %v11324 = vadd.f32 %v11035, %v11323
        %v11325 = vpop.f32.mrb[0].mxu0
        %v11326 = vpop.f32.mrb[0].mxu0
        %v11327 = vadd.f32 %v11038, %v11326
        %v11328 = vpop.f32.mrb[0].mxu0
        %11329 = vmatprep.mubr.bf16.mxu0 0
        %11330 = vmatmul.mubr.bf16.gmra.mrb[0].mxu0 %v10635
        %v11331 = vpop.f32.mrb[0].mxu0
        %v11332 = vadd.f32 %v11043, %v11331
        %v11333 = vpop.f32.mrb[0].mxu0
        %v11334 = vpop.f32.mrb[0].mxu0
        %v11335 = vadd.f32 %v11046, %v11334
        %v11336 = vpop.f32.mrb[0].mxu0
        %11337 = vmatprep.mubr.bf16.mxu0 0
        %11338 = vmatmul.mubr.bf16.gmra.mrb[0].mxu0 %v10638
        %v11339 = vpop.f32.mrb[0].mxu0
        %v11340 = vadd.f32 %v11051, %v11339
        %v11341 = vpop.f32.mrb[0].mxu0
        %v11342 = vpop.f32.mrb[0].mxu0
        %v11343 = vadd.f32 %v11054, %v11342
        %v11344 = vpop.f32.mrb[0].mxu0
        %11345 = vmatprep.mubr.bf16.mxu0 0
        %11346 = vmatmul.mubr.bf16.gmra.mrb[0].mxu0 %v10641
        %v11347 = vpop.f32.mrb[0].mxu0
        %v11348 = vadd.f32 %v11059, %v11347
        %v11349 = vpop.f32.mrb[0].mxu0
        %v11350 = vpop.f32.mrb[0].mxu0
        %v11351 = vadd.f32 %v11062, %v11350
        %v11352 = vpop.f32.mrb[0].mxu0
        %11353 = vmatprep.mubr.bf16.mxu0 0
        %11354 = vmatmul.mubr.bf16.gmra.mrb[0].mxu0 %v10644
        %v11355 = vpop.f32.mrb[0].mxu0
        %v11356 = vadd.f32 %v11067, %v11355
        %v11357 = vpop.f32.mrb[0].mxu0
        %v11358 = vpop.f32.mrb[0].mxu0
        %v11359 = vadd.f32 %v11070, %v11358
        %v11360 = vpop.f32.mrb[0].mxu0
        %11361 = vmatprep.mubr.bf16.mxu0 0
        %11362 = vmatmul.mubr.bf16.gmra.mrb[0].mxu0 %v10647
        %v11363 = vpop.f32.mrb[0].mxu0
        %v11364 = vadd.f32 %v11075, %v11363
        %v11365 = vpop.f32.mrb[0].mxu0
        %v11366 = vpop.f32.mrb[0].mxu0
        %v11367 = vadd.f32 %v11078, %v11366
        %v11368 = vpop.f32.mrb[0].mxu0
        %11369 = vmatprep.mubr.bf16.mxu0 0
        %11370 = vmatmul.mubr.bf16.gmra.mrb[0].mxu0 %v10650
        %v11371 = vpop.f32.mrb[0].mxu0
        %v11372 = vadd.f32 %v11083, %v11371
        %v11373 = vpop.f32.mrb[0].mxu0
        %v11374 = vpop.f32.mrb[0].mxu0
        %v11375 = vadd.f32 %v11086, %v11374
        %v11376 = vpop.f32.mrb[0].mxu0
        %11377 = vmatprep.mubr.bf16.mxu0 0
        %11378 = vmatmul.mubr.bf16.gmra.mrb[0].mxu0 %v10653
        %v11379 = vpop.f32.mrb[0].mxu0
        %v11380 = vadd.f32 %v11091, %v11379
        %v11381 = vpop.f32.mrb[0].mxu0
        %v11382 = vpop.f32.mrb[0].mxu0
        %v11383 = vadd.f32 %v11094, %v11382
        %v11384 = vpop.f32.mrb[0].mxu0
        %11385 = vmatprep.mubr.bf16.mxu0 0
        %11386 = vmatmul.mubr.bf16.gmra.mrb[0].mxu0 %v10656
        %v11387 = vpop.f32.mrb[0].mxu0
        %v11388 = vadd.f32 %v11099, %v11387
        %v11389 = vpop.f32.mrb[0].mxu0
        %v11390 = vpop.f32.mrb[0].mxu0
        %v11391 = vadd.f32 %v11102, %v11390
        %v11392 = vpop.f32.mrb[0].mxu0
        %11393 = vmatprep.mubr.bf16.mxu0 0
        %11394 = vmatmul.mubr.bf16.gmra.mrb[0].mxu0 %v10659
        %v11395 = vpop.f32.mrb[0].mxu0
        %v11396 = vadd.f32 %v11107, %v11395
        %v11397 = vpop.f32.mrb[0].mxu0
        %v11398 = vpop.f32.mrb[0].mxu0
        %v11399 = vadd.f32 %v11110, %v11398
        %v11400 = vpop.f32.mrb[0].mxu0
        %11401 = vmatprep.mubr.bf16.mxu0 0
        %11402 = vmatmul.mubr.bf16.gmra.mrb[0].mxu0 %v10662
        %v11403 = vpop.f32.mrb[0].mxu0
        %v11404 = vadd.f32 %v11115, %v11403
        %v11405 = vpop.f32.mrb[0].mxu0
        %v11406 = vpop.f32.mrb[0].mxu0
        %v11407 = vadd.f32 %v11118, %v11406
        %v11408 = vpop.f32.mrb[0].mxu0
        %11409 = vmatprep.mubr.bf16.mxu0 0
        %11410 = vmatmul.mubr.bf16.gmra.mrb[0].mxu0 %v10665
        %v11411 = vpop.f32.mrb[0].mxu0
        %v11412 = vadd.f32 %v11123, %v11411
        %v11413 = vpop.f32.mrb[0].mxu0
        %v11414 = vpop.f32.mrb[0].mxu0
        %v11415 = vadd.f32 %v11126, %v11414
        %v11416 = vpop.f32.mrb[0].mxu0
        %11417 = vmatprep.mubr.bf16.mxu0 0
        %11418 = vmatmul.mubr.bf16.gmra.mrb[0].mxu0 %v10668
        %v11419 = vpop.f32.mrb[0].mxu0
        %v11420 = vadd.f32 %v11131, %v11419
        %v11421 = vpop.f32.mrb[0].mxu0
        %v11422 = vpop.f32.mrb[0].mxu0
        %v11423 = vadd.f32 %v11134, %v11422
        %v11424 = vpop.f32.mrb[0].mxu0
        %11425 = vmatprep.mubr.bf16.mxu0 0
        %11426 = vmatmul.mubr.bf16.gmra.mrb[0].mxu0 %v10671
        %v11427 = vpop.f32.mrb[0].mxu0
        %v11428 = vadd.f32 %v11139, %v11427
        %v11429 = vpop.f32.mrb[0].mxu0
        %v11430 = vpop.f32.mrb[0].mxu0
        %v11431 = vadd.f32 %v11142, %v11430
        %v11432 = vpop.f32.mrb[0].mxu0
        %11433 = vmatprep.mubr.bf16.mxu0 0
        %11434 = vmatmul.mubr.bf16.gmra.mrb[0].mxu0 %v10674
        %v11435 = vpop.f32.mrb[0].mxu0
        %v11436 = vadd.f32 %v11147, %v11435
        %v11437 = vpop.f32.mrb[0].mxu0
        %v11438 = vpop.f32.mrb[0].mxu0
        %v11439 = vadd.f32 %v11150, %v11438
        %v11440 = vpop.f32.mrb[0].mxu0
        %11441 = vmatprep.mubr.bf16.mxu0 0
        %11442 = vmatmul.mubr.bf16.gmra.mrb[0].mxu0 %v10677
        %v11443 = vpop.f32.mrb[0].mxu0
        %v11444 = vadd.f32 %v11155, %v11443
        %v11445 = vpop.f32.mrb[0].mxu0
        %v11446 = vpop.f32.mrb[0].mxu0
        %v11447 = vadd.f32 %v11158, %v11446
        %v11448 = vpop.f32.mrb[0].mxu0
        %11449 = vmatprep.mubr.bf16.mxu0 0
        %11450 = vmatmul.mubr.bf16.gmra.mrb[0].mxu0 %v10680
        %v11451 = vpop.f32.mrb[0].mxu0
        %v11452 = vadd.f32 %v11163, %v11451
        %v11453 = vpop.f32.mrb[0].mxu0
        %v11454 = vpop.f32.mrb[0].mxu0
        %v11455 = vadd.f32 %v11166, %v11454
        %v11456 = vpop.f32.mrb[0].mxu0
        %11457 = vdwg.mxu0
        %vm11458 = vcmask 15360
        %11459 = vst.msk [vmem:[%s634] sm:$0xff] %vm11458, %v11204
        %11460 = vst.msk [vmem:[%s634 + $0x8] sm:$0xff] %vm11458, %v11207
        %11461 = vst.msk [vmem:[%s634 + $0x10] sm:$0xff] %vm11458, %v11212
        %11462 = vst.msk [vmem:[%s634 + $0x18] sm:$0xff] %vm11458, %v11215
        %11463 = vst.msk [vmem:[%s634 + $0x20] sm:$0xff] %vm11458, %v11220
        %11464 = vst.msk [vmem:[%s634 + $0x28] sm:$0xff] %vm11458, %v11223
        %11465 = vst.msk [vmem:[%s634 + $0x30] sm:$0xff] %vm11458, %v11228
        %11466 = vst.msk [vmem:[%s634 + $0x38] sm:$0xff] %vm11458, %v11231
        %11467 = vst.msk [vmem:[%s634 + $0x40] sm:$0xff] %vm11458, %v11236
        %11468 = vst.msk [vmem:[%s634 + $0x48] sm:$0xff] %vm11458, %v11239
        %11469 = vst.msk [vmem:[%s634 + $0x50] sm:$0xff] %vm11458, %v11244
        %11470 = vst.msk [vmem:[%s634 + $0x58] sm:$0xff] %vm11458, %v11247
        %11471 = vst.msk [vmem:[%s634 + $0x60] sm:$0xff] %vm11458, %v11252
        %11472 = vst.msk [vmem:[%s634 + $0x68] sm:$0xff] %vm11458, %v11255
        %11473 = vst.msk [vmem:[%s634 + $0x70] sm:$0xff] %vm11458, %v11260
        %11474 = vst.msk [vmem:[%s634 + $0x78] sm:$0xff] %vm11458, %v11263
        %11475 = vst.msk [vmem:[%s634 + $0x80] sm:$0xff] %vm11458, %v11268
        %11476 = vst.msk [vmem:[%s634 + $0x88] sm:$0xff] %vm11458, %v11271
        %11477 = vst.msk [vmem:[%s634 + $0x90] sm:$0xff] %vm11458, %v11276
        %11478 = vst.msk [vmem:[%s634 + $0x98] sm:$0xff] %vm11458, %v11279
        %11479 = vst.msk [vmem:[%s634 + $0xa0] sm:$0xff] %vm11458, %v11284
        %11480 = vst.msk [vmem:[%s634 + $0xa8] sm:$0xff] %vm11458, %v11287
        %11481 = vst.msk [vmem:[%s634 + $0xb0] sm:$0xff] %vm11458, %v11292
        %11482 = vst.msk [vmem:[%s634 + $0xb8] sm:$0xff] %vm11458, %v11295
        %11483 = vst.msk [vmem:[%s634 + $0xc0] sm:$0xff] %vm11458, %v11300
        %11484 = vst.msk [vmem:[%s634 + $0xc8] sm:$0xff] %vm11458, %v11303
        %11485 = vst.msk [vmem:[%s634 + $0xd0] sm:$0xff] %vm11458, %v11308
        %11486 = vst.msk [vmem:[%s634 + $0xd8] sm:$0xff] %vm11458, %v11311
        %11487 = vst.msk [vmem:[%s634 + $0xe0] sm:$0xff] %vm11458, %v11316
        %11488 = vst.msk [vmem:[%s634 + $0xe8] sm:$0xff] %vm11458, %v11319
        %11489 = vst.msk [vmem:[%s634 + $0xf0] sm:$0xff] %vm11458, %v11324
        %11490 = vst.msk [vmem:[%s634 + $0xf8] sm:$0xff] %vm11458, %v11327
        %11491 = vst.msk [vmem:[%s634 + $0x100] sm:$0xff] %vm11458, %v11332
        %11492 = vst.msk [vmem:[%s634 + $0x108] sm:$0xff] %vm11458, %v11335
        %11493 = vst.msk [vmem:[%s634 + $0x110] sm:$0xff] %vm11458, %v11340
        %11494 = vst.msk [vmem:[%s634 + $0x118] sm:$0xff] %vm11458, %v11343
        %11495 = vst.msk [vmem:[%s634 + $0x120] sm:$0xff] %vm11458, %v11348
        %11496 = vst.msk [vmem:[%s634 + $0x128] sm:$0xff] %vm11458, %v11351
        %11497 = vst.msk [vmem:[%s634 + $0x130] sm:$0xff] %vm11458, %v11356
        %11498 = vst.msk [vmem:[%s634 + $0x138] sm:$0xff] %vm11458, %v11359
        %11499 = vst.msk [vmem:[%s634 + $0x140] sm:$0xff] %vm11458, %v11364
        %11500 = vst.msk [vmem:[%s634 + $0x148] sm:$0xff] %vm11458, %v11367
        %11501 = vst.msk [vmem:[%s634 + $0x150] sm:$0xff] %vm11458, %v11372
        %11502 = vst.msk [vmem:[%s634 + $0x158] sm:$0xff] %vm11458, %v11375
        %11503 = vst.msk [vmem:[%s634 + $0x160] sm:$0xff] %vm11458, %v11380
        %11504 = vst.msk [vmem:[%s634 + $0x168] sm:$0xff] %vm11458, %v11383
        %11505 = vst.msk [vmem:[%s634 + $0x170] sm:$0xff] %vm11458, %v11388
        %11506 = vst.msk [vmem:[%s634 + $0x178] sm:$0xff] %vm11458, %v11391
        %11507 = vst.msk [vmem:[%s634 + $0x180] sm:$0xff] %vm11458, %v11396
        %11508 = vst.msk [vmem:[%s634 + $0x188] sm:$0xff] %vm11458, %v11399
        %11509 = vst.msk [vmem:[%s634 + $0x190] sm:$0xff] %vm11458, %v11404
        %11510 = vst.msk [vmem:[%s634 + $0x198] sm:$0xff] %vm11458, %v11407
        %11511 = vst.msk [vmem:[%s634 + $0x1a0] sm:$0xff] %vm11458, %v11412
        %11512 = vst.msk [vmem:[%s634 + $0x1a8] sm:$0xff] %vm11458, %v11415
        %11513 = vst.msk [vmem:[%s634 + $0x1b0] sm:$0xff] %vm11458, %v11420
        %11514 = vst.msk [vmem:[%s634 + $0x1b8] sm:$0xff] %vm11458, %v11423
        %11515 = vst.msk [vmem:[%s634 + $0x1c0] sm:$0xff] %vm11458, %v11428
        %11516 = vst.msk [vmem:[%s634 + $0x1c8] sm:$0xff] %vm11458, %v11431
        %11517 = vst.msk [vmem:[%s634 + $0x1d0] sm:$0xff] %vm11458, %v11436
        %11518 = vst.msk [vmem:[%s634 + $0x1d8] sm:$0xff] %vm11458, %v11439
        %11519 = vst.msk [vmem:[%s634 + $0x1e0] sm:$0xff] %vm11458, %v11444
        %11520 = vst.msk [vmem:[%s634 + $0x1e8] sm:$0xff] %vm11458, %v11447
        %11521 = vst.msk [vmem:[%s634 + $0x1f0] sm:$0xff] %vm11458, %v11452
        %11522 = vst.msk [vmem:[%s634 + $0x1f8] sm:$0xff] %vm11458, %v11455
        %s11523 = smul.u32 64, %s32
        %p11524 = scmp.lt.s32.totalorder %s11523, 127
        %s11525 = scalar_select %p11524, %s11523, 127
        %s11526 = smul.addr %s11525, 8
        %s11527 = scalar_lea.vmem %s17, %s11526
        // Predicated region
        $region113: #{tpu_custom_call.1} parent=87 // pred_check
          %p11528 = pneg %p412
        $region114: #{tpu_custom_call.1} parent=87 // pred_check_branch
          %11530 = sbr.rel (%p11528) target = $region116
        $region115: #{tpu_custom_call.1} parent=87 // pred_region
          %s11531 = smul.u32 64, %s32
        $region116: #{tpu_custom_call.1} parent=87 // pred_fallthru
          _
      $region88: #{tpu_custom_call.1} parent=5 // pred_fallthru
        _
      %p11532 = scmp.le.s32.totalorder 2, %s27
      // Predicated region
      $region117: #{tpu_custom_call.1} parent=5 // pred_check
        %p11533 = pneg %p11532
      $region118: #{tpu_custom_call.1} parent=5 // pred_check_branch
        %11535 = sbr.rel (%p11533) target = $region120
      $region119: #{tpu_custom_call.1} parent=5 // pred_region
        %s11536 = ssub.s32 %s27, 2
        // Predicated region
        $region121: #{tpu_custom_call.1} parent=119 // pred_check
          %p11537 = pneg %p418
        $region122: #{tpu_custom_call.1} parent=119 // pred_check_branch
          %11539 = sbr.rel (%p11537) target = $region124
        $region123: #{tpu_custom_call.1} parent=119 // pred_region
          %s11540 = smul.u32 64, %s33
          %p11541 = scmp.lt.s32.totalorder %s11540, 127
          %s11542 = scalar_select %p11541, %s11540, 127
          %s11543 = smul.addr %s11542, 8
          %s11544 = scalar_lea.vmem %s17, %s11543
        $region124: #{tpu_custom_call.1} parent=119 // pred_fallthru
          _
      $region120: #{tpu_custom_call.1} parent=5 // pred_fallthru
        _
    $region6: #{tpu_custom_call.1} parent=1 // loop_footer
      %s31 = sadd.s32 1, %s27
    $region7: #{tpu_custom_call.1} parent=1 // loop_footer_branch
      %26 = sbr.rel target = $region3
    $region8: #{tpu_custom_call.1} parent=1 // loop_exit
      _
    %11545 = vsyncpa [#allocation3], 1
    %s11546 = scalar_lea.sflag [#allocation3], 1
    %11547 = vsyncpa %s11546, 1
    %11548 = vsyncpa [#allocation5], 1
    %11549 = vsyncpa [#allocation8], 1
    %11550 = vsyncpa [#allocation11], 1

</llo_original>
